<compile_context>
chip_gen: v7x
topology: tpu7x:2x2x1
jax: 0.10.0
libtpu: 0.0.40
codegen_flags: <defaults>
</compile_context>

<pallas_src>
import math
import functools

import jax
import jax.numpy as jnp
from jax.experimental import pallas as pl
from jax.experimental.pallas import tpu as pltpu

# ---------------- configuration (consistent with PARSeq.__init__ at small size) ----------------
CHARSET = "0123456789"
VOCAB = len(CHARSET) + 3          # [E] + charset + [B] + [P] -> 13
NUM_CLASSES = VOCAB - 2           # charset + EOS -> 11
HEAD_PAD = 128                    # lane-dense padded head width
BOS_ID = len(CHARSET) + 1         # 11
MAX_LABEL_LEN = 7                 # -> num_steps = 8
IMG_SIZE = (16, 16)
PATCH = (4, 4)
IN_CHANS = 3
EMBED_DIM = 32
ENC_HEADS = 4
ENC_MLP_RATIO = 4
ENC_DEPTH = 2
DEC_HEADS = 4
DEC_MLP_RATIO = 4
DEC_DEPTH = 2
ENC_LN_EPS = 1e-6                 # timm ViT default
DEC_LN_EPS = 1e-5                 # nn.LayerNorm default

GRID_H = IMG_SIZE[0] // PATCH[0]
GRID_W = IMG_SIZE[1] // PATCH[1]
L_MEM = GRID_H * GRID_W                      # 16 memory tokens
CPP = IN_CHANS * PATCH[0] * PATCH[1]         # 48 raw patch features
CPP_PAD = 128                                # lane-dense im2col feature dim
SLAB_W = 128
MAX_B_TILE = 128                             # VMEM-budgeted (v7x-safe: ~3 MiB activations)


# ------------------------------ one-time parameter packing ------------------------------
class _MatSlab:
    """Packs 2-D weights row-wise into one (R, 128) bf16 slab; 16-row aligned offsets."""

    def __init__(self):
        self.chunks, self.index, self.off = [], {}, 0

    def add(self, name, mat):
        mat = jnp.asarray(mat, jnp.float32)
        k, n = mat.shape
        kp = -(-k // 16) * 16
        buf = jnp.zeros((kp, SLAB_W), jnp.float32).at[:k, :n].set(mat)
        self.chunks.append(buf)
        self.index[name] = (self.off, k, n)
        self.off += kp

    def finish(self):
        return jnp.concatenate(self.chunks, axis=0).astype(jnp.bfloat16), self.index


class _VecSlab:
    """Packs 1-D vectors (biases / LN params) into rows of one (r, 128) f32 slab."""

    def __init__(self):
        self.rows, self.index = [], {}

    def add(self, name, vec):
        vec = jnp.asarray(vec, jnp.float32).reshape(-1)
        n = vec.shape[0]
        self.index[name] = (len(self.rows), n)
        self.rows.append(jnp.pad(vec, (0, SLAB_W - n)))

    def finish(self):
        rows = jnp.stack(self.rows, axis=0)
        pad = (-rows.shape[0]) % 8
        if pad:
            rows = jnp.pad(rows, ((0, pad), (0, 0)))
        return rows, self.index


def pack_params(params):
    """One-time packing of the parameter pytree into two VMEM-resident slabs.

    Folds the 1/sqrt(head_dim) attention scale into Q projections, pre-computes the NAR
    content context sqrt(D)*text_embed[BOS], and pads patch/head weights to lane-dense widths.
    """
    D = EMBED_DIM
    scale = 1.0 / math.sqrt(D // ENC_HEADS)
    w, v = _MatSlab(), _VecSlab()

    w.add("patch_w", jnp.pad(params["patch_w"], ((0, CPP_PAD - CPP), (0, 0))))
    v.add("patch_b", params["patch_b"])
    w.add("pos_embed", params["pos_embed"][0])

    for i, bp in enumerate(params["enc_blocks"]):
        p = f"enc{i}_"
        v.add(p + "ln1_g", bp["ln1_g"]); v.add(p + "ln1_b", bp["ln1_b"])
        w.add(p + "wq", bp["wqkv"][:, :D] * scale)          # scale folded into Wq
        w.add(p + "wk", bp["wqkv"][:, D:2 * D])
        w.add(p + "wv", bp["wqkv"][:, 2 * D:])
        v.add(p + "bq", bp["bqkv"][:D] * scale)
        v.add(p + "bk", bp["bqkv"][D:2 * D])
        v.add(p + "bv", bp["bqkv"][2 * D:])
        w.add(p + "wo", bp["wo"]); v.add(p + "bo", bp["bo"])
        v.add(p + "ln2_g", bp["ln2_g"]); v.add(p + "ln2_b", bp["ln2_b"])
        w.add(p + "fc1", bp["fc1_w"]); v.add(p + "fc1_b", bp["fc1_b"])
        w.add(p + "fc2", bp["fc2_w"]); v.add(p + "fc2_b", bp["fc2_b"])

    v.add("enc_norm_g", params["enc_norm_g"]); v.add("enc_norm_b", params["enc_norm_b"])
    v.add("bos_embed", math.sqrt(D) * params["text_embed"][BOS_ID])   # NAR content context

    for i, lp in enumerate(params["dec_layers"]):
        p = f"dec{i}_"
        v.add(p + "normc_g", lp["normc_g"]); v.add(p + "normc_b", lp["normc_b"])
        # NAR path: decoder self-attn always has a single (BOS) key/value, so only its
        # V / out projections are ever used (softmax over one key == 1, Q irrelevant).
        w.add(p + "sa_wv", lp["sa_wqkv"][:, 2 * D:]); v.add(p + "sa_bv", lp["sa_bqkv"][2 * D:])
        w.add(p + "sa_wo", lp["sa_wo"]); v.add(p + "sa_bo", lp["sa_bo"])
        v.add(p + "norm1_g", lp["norm1_g"]); v.add(p + "norm1_b", lp["norm1_b"])
        w.add(p + "ca_wq", lp["ca_wqkv"][:, :D] * scale)
        v.add(p + "ca_bq", lp["ca_bqkv"][:D] * scale)
        w.add(p + "ca_wk", lp["ca_wqkv"][:, D:2 * D]); v.add(p + "ca_bk", lp["ca_bqkv"][D:2 * D])
        w.add(p + "ca_wv", lp["ca_wqkv"][:, 2 * D:]); v.add(p + "ca_bv", lp["ca_bqkv"][2 * D:])
        w.add(p + "ca_wo", lp["ca_wo"]); v.add(p + "ca_bo", lp["ca_bo"])
        v.add(p + "norm2_g", lp["norm2_g"]); v.add(p + "norm2_b", lp["norm2_b"])
        w.add(p + "fc1", lp["fc1_w"]); v.add(p + "fc1_b", lp["fc1_b"])
        w.add(p + "fc2", lp["fc2_w"]); v.add(p + "fc2_b", lp["fc2_b"])

    v.add("dec_norm_g", params["dec_norm_g"]); v.add("dec_norm_b", params["dec_norm_b"])
    w.add("pos_queries", params["pos_queries"][0])
    w.add("head_w", jnp.pad(params["head_w"], ((0, 0), (0, HEAD_PAD - NUM_CLASSES))))
    v.add("head_b", jnp.pad(params["head_b"], (0, HEAD_PAD - NUM_CLASSES)))

    wslab, widx = w.finish()
    vslab, vidx = v.finish()
    return wslab, vslab, widx, vidx


# ------------------------------ in-kernel math helpers ------------------------------
_GELU_K = math.sqrt(2.0 / math.pi)


def _gelu(x):
    # tanh-approximate GELU (tanh runs on the EUP); ~1e-3 vs PyTorch's exact erf GELU.
    return 0.5 * x * (1.0 + jnp.tanh(_GELU_K * (x + 0.044715 * x * x * x)))


def _ln(x, g, b, eps):
    mu = jnp.mean(x, axis=-1, keepdims=True)
    var = jnp.mean(jnp.square(x - mu), axis=-1, keepdims=True)
    return (x - mu) * jax.lax.rsqrt(var + eps) * g + b


def _mm(a, b):
    # bf16 operands, f32 accumulation (MXU-native on v5e/v6e/v7x).
    return jnp.dot(a.astype(jnp.bfloat16), b.astype(jnp.bfloat16),
                   preferred_element_type=jnp.float32)


def _softmax_last(s):
    s = s - jnp.max(s, axis=-1, keepdims=True)
    e = jnp.exp(s)
    return e * pl.reciprocal(jnp.sum(e, axis=-1, keepdims=True), approx=True)


def _attn_core(q, k, v, wo, bo, num_heads):
    """Attention on already-projected q/k/v (q carries the 1/sqrt(dh) scale).

    q: (B, Lq, D), k/v: (B, Lk, D).  Image-batched dot_generals; static per-head loop;
    per-head contexts concatenated and sent through a single (M, D) @ (D, D) out-projection.
    """
    B, Lq, D = q.shape
    dh = D // num_heads
    ctx = []
    for h in range(num_heads):                       # static 4-iteration loop
        sl = slice(h * dh, (h + 1) * dh)
        s = jnp.einsum('bqd,bkd->bqk', q[..., sl].astype(jnp.bfloat16),
                       k[..., sl].astype(jnp.bfloat16),
                       preferred_element_type=jnp.float32)
        p = _softmax_last(s)
        ctx.append(jnp.einsum('bqk,bkd->bqd', p.astype(jnp.bfloat16),
                              v[..., sl].astype(jnp.bfloat16),
                              preferred_element_type=jnp.float32))
    ctx = jnp.concatenate(ctx, axis=-1).reshape(B * Lq, D)
    return (_mm(ctx, wo) + bo).reshape(B, Lq, D)


def _cross_attn_single_query(qh, k_mem, v_mem, wo, bo, num_heads):
    """Cross-attention for a single query position per image (content stream, Lq=1).

    qh: (B, D) (scaled), k_mem/v_mem: (B, L, D).  Uses VPU broadcast-multiply-reduce instead
    of a degenerate M=1 batched matmul; negligible work (content stream only, layer 0 only).
    """
    B, D = qh.shape
    Lk = k_mem.shape[1]
    dh = D // num_heads
    prod = jax.lax.broadcast_in_dim(qh, (B, Lk, D), (0, 2)) * k_mem        # (B, L, D)
    ctx = []
    for h in range(num_heads):
        sl = slice(h * dh, (h + 1) * dh)
        s = jnp.sum(prod[..., sl], axis=-1)                                # (B, L)
        s = s - jnp.max(s, axis=-1, keepdims=True)
        e = jnp.exp(s)
        p = e * pl.reciprocal(jnp.sum(e, axis=-1, keepdims=True), approx=True)
        pb = jax.lax.broadcast_in_dim(p, (B, Lk, dh), (0, 1))
        ctx.append(jnp.sum(pb * v_mem[..., sl], axis=1))                   # (B, dh)
    ctx = jnp.concatenate(ctx, axis=-1)                                    # (B, D)
    return _mm(ctx, wo) + bo


# ------------------------------ the single fused kernel ------------------------------
def _parseq_kernel(x_ref, w_ref, v_ref, o_ref, *, widx, vidx, b_tile, num_steps):
    D = EMBED_DIM
    BT = b_tile
    L = L_MEM
    S = num_steps

    def W(name):
        off, k, n = widx[name]
        return w_ref[off:off + k, :n]                 # bf16 (k, n)

    def V(name):
        row, n = vidx[name]
        return v_ref[row:row + 1, :n]                 # f32 (1, n)

    # ---------------- ViT encoder (no class token, global_pool='') ----------------
    x = x_ref[...].reshape(BT * L, CPP_PAD)                                  # bf16
    mem = _mm(x, W("patch_w")) + V("patch_b")                                # (BT*L, D) f32
    mem = (mem.reshape(BT, L, D) + W("pos_embed").astype(jnp.float32)).reshape(BT * L, D)

    for i in range(ENC_DEPTH):
        p = f"enc{i}_"
        h = _ln(mem, V(p + "ln1_g"), V(p + "ln1_b"), ENC_LN_EPS)
        q = (_mm(h, W(p + "wq")) + V(p + "bq")).reshape(BT, L, D)
        k = (_mm(h, W(p + "wk")) + V(p + "bk")).reshape(BT, L, D)
        v = (_mm(h, W(p + "wv")) + V(p + "bv")).reshape(BT, L, D)
        att = _attn_core(q, k, v, W(p + "wo"), V(p + "bo"), ENC_HEADS)
        mem = mem + att.reshape(BT * L, D)
        h = _ln(mem, V(p + "ln2_g"), V(p + "ln2_b"), ENC_LN_EPS)
        h = _gelu(_mm(h, W(p + "fc1")) + V(p + "fc1_b"))
        mem = mem + _mm(h, W(p + "fc2")) + V(p + "fc2_b")

    mem = _ln(mem, V("enc_norm_g"), V("enc_norm_b"), ENC_LN_EPS)             # (BT*L, D)

    # ---------------- PARSeq decoder, NAR path (single-BOS content context) ----------------
    pos_q = W("pos_queries")[:S, :].astype(jnp.float32)                      # (S, D)
    query = jax.lax.broadcast_in_dim(pos_q, (BT, S, D), (1, 2))              # (BT, S, D)
    content = jnp.broadcast_to(V("bos_embed"), (BT, D))                      # (BT, D)

    for i in range(DEC_DEPTH):
        p = f"dec{i}_"
        cn = _ln(content, V(p + "normc_g"), V(p + "normc_b"), DEC_LN_EPS)    # (BT, D)
        # Self-attention against a single key: softmax == 1 -> context is the projected V row,
        # independent of the (normed) query, so norm_q is never needed on this path.
        sa = _mm(_mm(cn, W(p + "sa_wv")) + V(p + "sa_bv"), W(p + "sa_wo")) + V(p + "sa_bo")
        # Memory K/V projected once per layer; shared by query & content streams.
        k_mem = (_mm(mem, W(p + "ca_wk")) + V(p + "ca_bk")).reshape(BT, L, D)
        v_mem = (_mm(mem, W(p + "ca_wv")) + V(p + "ca_bv")).reshape(BT, L, D)

        # ---- query stream ----
        tgt = query + jax.lax.broadcast_in_dim(sa, (BT, S, D), (0, 2))
        h = _ln(tgt, V(p + "norm1_g"), V(p + "norm1_b"), DEC_LN_EPS)
        qh = (_mm(h.reshape(BT * S, D), W(p + "ca_wq")) + V(p + "ca_bq")).reshape(BT, S, D)
        tgt = tgt + _attn_core(qh, k_mem, v_mem, W(p + "ca_wo"), V(p + "ca_bo"), DEC_HEADS)
        h = _ln(tgt, V(p + "norm2_g"), V(p + "norm2_b"), DEC_LN_EPS).reshape(BT * S, D)
        h = _gelu(_mm(h, W(p + "fc1")) + V(p + "fc1_b"))
        query = tgt + (_mm(h, W(p + "fc2")) + V(p + "fc2_b")).reshape(BT, S, D)

        # ---- content stream (only while another layer will consume it) ----
        if i != DEC_DEPTH - 1:
            c = content + sa
            hc = _ln(c, V(p + "norm1_g"), V(p + "norm1_b"), DEC_LN_EPS)
            qc = _mm(hc, W(p + "ca_wq")) + V(p + "ca_bq")
            c = c + _cross_attn_single_query(qc, k_mem, v_mem,
                                             W(p + "ca_wo"), V(p + "ca_bo"), DEC_HEADS)
            hc = _ln(c, V(p + "norm2_g"), V(p + "norm2_b"), DEC_LN_EPS)
            hc = _gelu(_mm(hc, W(p + "fc1")) + V(p + "fc1_b"))
            content = c + _mm(hc, W(p + "fc2")) + V(p + "fc2_b")

    query = _ln(query, V("dec_norm_g"), V("dec_norm_b"), DEC_LN_EPS)

    # ---------------- head (lane-dense 128-wide; sliced to NUM_CLASSES outside) ----------------
    logits = _mm(query.reshape(BT * S, D), W("head_w")) + V("head_b")
    o_ref[...] = logits.reshape(BT, S, HEAD_PAD)


# ------------------------------ cost estimate (advisory) ------------------------------
def _cost_estimate(b, num_steps):
    D, L, S = EMBED_DIM, L_MEM, num_steps
    Hm = D * ENC_MLP_RATIO
    mm = lambda m, k, n: 2 * m * k * n
    per = mm(L, CPP_PAD, D)
    per += ENC_DEPTH * (4 * mm(L, D, D) + 4 * L * L * D + mm(L, D, Hm) + mm(L, Hm, D))
    per += DEC_DEPTH * (2 * mm(L, D, D) + 2 * mm(1, D, D) + 2 * mm(S, D, D)
                        + 4 * S * L * D + mm(S, D, Hm) + mm(S, Hm, D))
    per += mm(S, D, HEAD_PAD)
    transc = (ENC_DEPTH * (ENC_HEADS * L * L + L * Hm)
              + DEC_DEPTH * (DEC_HEADS * S * L + S * Hm))
    return int(b * per), int(b * transc)


# ------------------------------ JAX wrapper ------------------------------
def make_parseq_forward(widx, vidx, max_length=None):
    max_length = MAX_LABEL_LEN if max_length is None else min(max_length, MAX_LABEL_LEN)
    num_steps = max_length + 1

    @jax.jit
    def forward(wslab, vslab, images):
        B = images.shape[0]
        # >=2 grid steps whenever possible (v7x has 2 TensorCores); tile capped for VMEM.
        b_tile = min(MAX_B_TILE, max(1, pl.cdiv(B, 2)))
        n_tiles = pl.cdiv(B, b_tile)
        b_pad = n_tiles * b_tile

        # Conv2d(stride == kernel) == im2col + matmul; (C, ph, pw)-ordered patch features,
        # padded to a lane-dense 128 and cast to bf16 (MXU input dtype) once, outside the grid.
        ph, pw = PATCH
        x = images.reshape(B, IN_CHANS, GRID_H, ph, GRID_W, pw).transpose(0, 2, 4, 1, 3, 5)
        x = x.reshape(B, L_MEM, CPP)
        x = jnp.pad(x, ((0, b_pad - B), (0, 0), (0, CPP_PAD - CPP))).astype(jnp.bfloat16)

        flops, transc = _cost_estimate(b_pad, num_steps)
        bytes_acc = (x.size * 2 + wslab.size * 2 + vslab.size * 4
                     + b_pad * num_steps * HEAD_PAD * 4)

        kernel = functools.partial(_parseq_kernel, widx=widx, vidx=vidx,
                                   b_tile=b_tile, num_steps=num_steps)
        out = pl.pallas_call(
            kernel,
            out_shape=jax.ShapeDtypeStruct((b_pad, num_steps, HEAD_PAD), jnp.float32),
            grid=(n_tiles,),
            in_specs=[
                pl.BlockSpec((b_tile, L_MEM, CPP_PAD), lambda i: (i, 0, 0)),
                pl.BlockSpec(wslab.shape, lambda i: (0, 0)),   # resident weight slab (bf16)
                pl.BlockSpec(vslab.shape, lambda i: (0, 0)),   # resident bias/LN slab (f32)
            ],
            out_specs=pl.BlockSpec((b_tile, num_steps, HEAD_PAD), lambda i: (i, 0, 0)),
            compiler_params=pltpu.CompilerParams(dimension_semantics=("parallel",)),
            cost_estimate=pl.CostEstimate(flops=flops, transcendentals=transc,
                                          bytes_accessed=int(bytes_acc)),
        )(x, wslab, vslab)
        return out[:B, :, :NUM_CLASSES]

    return forward


# ------------------------------ parameter init (mirrors the PyTorch module) ------------------------------
def init_params(key):
    D = EMBED_DIM
    keys = iter(jax.random.split(key, 256))

    def tn(shape, std=0.02):
        return (std * jax.random.truncated_normal(next(keys), -2.0, 2.0, shape)).astype(jnp.float32)

    def zeros(*shape):
        return jnp.zeros(shape, jnp.float32)

    def ones(*shape):
        return jnp.ones(shape, jnp.float32)

    enc_hidden = D * ENC_MLP_RATIO
    enc_blocks = [dict(ln1_g=ones(D), ln1_b=zeros(D),
                       wqkv=tn((D, 3 * D)), bqkv=zeros(3 * D), wo=tn((D, D)), bo=zeros(D),
                       ln2_g=ones(D), ln2_b=zeros(D),
                       fc1_w=tn((D, enc_hidden)), fc1_b=zeros(enc_hidden),
                       fc2_w=tn((enc_hidden, D)), fc2_b=zeros(D))
                  for _ in range(ENC_DEPTH)]

    dec_hidden = D * DEC_MLP_RATIO
    dec_layers = [dict(normq_g=ones(D), normq_b=zeros(D),        # unused on the NAR path
                       normc_g=ones(D), normc_b=zeros(D),
                       sa_wqkv=tn((D, 3 * D)), sa_bqkv=zeros(3 * D), sa_wo=tn((D, D)), sa_bo=zeros(D),
                       ca_wqkv=tn((D, 3 * D)), ca_bqkv=zeros(3 * D), ca_wo=tn((D, D)), ca_bo=zeros(D),
                       norm1_g=ones(D), norm1_b=zeros(D),
                       norm2_g=ones(D), norm2_b=zeros(D),
                       fc1_w=tn((D, dec_hidden)), fc1_b=zeros(dec_hidden),
                       fc2_w=tn((dec_hidden, D)), fc2_b=zeros(D))
                  for _ in range(DEC_DEPTH)]

    return dict(
        patch_w=tn((CPP, D)), patch_b=zeros(D),
        pos_embed=tn((1, L_MEM, D)),
        enc_blocks=enc_blocks,
        enc_norm_g=ones(D), enc_norm_b=zeros(D),
        dec_layers=dec_layers,
        dec_norm_g=ones(D), dec_norm_b=zeros(D),
        text_embed=tn((VOCAB, D)),
        pos_queries=tn((1, MAX_LABEL_LEN + 1, D)),
        head_w=tn((D, NUM_CLASSES)), head_b=zeros(NUM_CLASSES),
    )


# ------------------------------ main ------------------------------
if __name__ == "__main__":
    root = jax.random.PRNGKey(0)
    pkey, ikey = jax.random.split(root)
    params = init_params(pkey)
    wslab, vslab, widx, vidx = pack_params(params)          # one-time packing (load time)
    parseq_forward = make_parseq_forward(widx, vidx)

    B = 4                                                    # -> b_tile=2, grid=(2,)
    images = jax.random.normal(ikey, (B, IN_CHANS, IMG_SIZE[0], IMG_SIZE[1]), jnp.float32)

    logits = parseq_forward(wslab, vslab, images)
    logits = jax.block_until_ready(logits)

    assert logits.shape == (B, MAX_LABEL_LEN + 1, NUM_CLASSES), logits.shape
    assert bool(jnp.all(jnp.isfinite(logits)))
    print("KERNEL_OK")
</pallas_src>

<mosaic_0001>
module attributes {stable_mosaic.version = 11 : i64} {
  func.func @_parseq_kernel(%arg0: i32, %arg1: memref<2x16x128xbf16, #tpu.memory_space<vmem>>, %arg2: memref<1472x128xbf16, #tpu.memory_space<vmem>>, %arg3: memref<56x128xf32, #tpu.memory_space<vmem>>, %arg4: memref<2x8x128xf32, #tpu.memory_space<vmem>>) attributes {dimension_semantics = [#tpu.dimension_semantics<parallel>], iteration_bounds = array<i64: 2>, scalar_prefetch = 0 : i64, scratch_operands = 0 : i64, tpu.core_type = #tpu.core_type<tc>, window_params = [{transform_indices = @transform_0, window_bounds = array<i64: 2, 16, 128>}, {pipeline_mode = #tpu.pipeline_mode<synchronous>, transform_indices = @transform_1, window_bounds = array<i64: 1472, 128>}, {pipeline_mode = #tpu.pipeline_mode<synchronous>, transform_indices = @transform_2, window_bounds = array<i64: 56, 128>}, {transform_indices = @transform_3, window_bounds = array<i64: 2, 8, 128>}]} {
    %c0 = arith.constant 0 : index
    %c0_0 = arith.constant 0 : index
    %c0_1 = arith.constant 0 : index
    %0 = vector.load %arg1[%c0, %c0_0, %c0_1] : memref<2x16x128xbf16, #tpu.memory_space<vmem>>, vector<2x16x128xbf16>
    %1 = vector.shape_cast %0 : vector<2x16x128xbf16> to vector<32x128xbf16>
    %c0_2 = arith.constant 0 : index
    %c0_3 = arith.constant 0 : index
    %2 = vector.load %arg2[%c0_2, %c0_3] : memref<1472x128xbf16, #tpu.memory_space<vmem>>, vector<128x32xbf16>
    %cst = arith.constant dense<0.000000e+00> : vector<32x32xf32>
    %3 = tpu.matmul %1, %2, %cst {dimension_numbers = #tpu.dot_dimension_numbers<[1], [0], [0], [1], [0, 0, 1, 1], [], []>} : vector<32x128xbf16>, vector<128x32xbf16>, vector<32x32xf32> -> vector<32x32xf32>
    %c0_4 = arith.constant 0 : index
    %c0_5 = arith.constant 0 : index
    %4 = vector.load %arg3[%c0_4, %c0_5] : memref<56x128xf32, #tpu.memory_space<vmem>>, vector<1x32xf32>
    %5 = vector.broadcast %4 : vector<1x32xf32> to vector<32x32xf32>
    %6 = arith.addf %3, %5 : vector<32x32xf32>
    %7 = vector.shape_cast %6 : vector<32x32xf32> to vector<2x16x32xf32>
    %c128 = arith.constant 128 : index
    %c0_6 = arith.constant 0 : index
    %8 = vector.load %arg2[%c128, %c0_6] : memref<1472x128xbf16, #tpu.memory_space<vmem>>, vector<16x32xbf16>
    %9 = arith.extf %8 : vector<16x32xbf16> to vector<16x32xf32>
    %10 = vector.shape_cast %9 : vector<16x32xf32> to vector<1x16x32xf32>
    %11 = vector.broadcast %10 : vector<1x16x32xf32> to vector<2x16x32xf32>
    %12 = arith.addf %7, %11 : vector<2x16x32xf32>
    %13 = vector.shape_cast %12 : vector<2x16x32xf32> to vector<32x32xf32>
    %c1 = arith.constant 1 : index
    %c0_7 = arith.constant 0 : index
    %14 = vector.load %arg3[%c1, %c0_7] : memref<56x128xf32, #tpu.memory_space<vmem>>, vector<1x32xf32>
    %c2 = arith.constant 2 : index
    %c0_8 = arith.constant 0 : index
    %15 = vector.load %arg3[%c2, %c0_8] : memref<56x128xf32, #tpu.memory_space<vmem>>, vector<1x32xf32>
    %cst_9 = arith.constant dense<0.000000e+00> : vector<32xf32>
    %16 = vector.multi_reduction <add>, %13, %cst_9 [1] : vector<32x32xf32> to vector<32xf32>
    %17 = vector.shape_cast %16 : vector<32xf32> to vector<32x1xf32>
    %cst_10 = arith.constant 3.200000e+01 : f32
    %18 = vector.broadcast %cst_10 : f32 to vector<32x1xf32>
    %19 = arith.divf %17, %18 : vector<32x1xf32>
    %20 = vector.broadcast %19 : vector<32x1xf32> to vector<32x32xf32>
    %21 = arith.subf %13, %20 : vector<32x32xf32>
    %22 = arith.mulf %21, %21 : vector<32x32xf32>
    %cst_11 = arith.constant dense<0.000000e+00> : vector<32xf32>
    %23 = vector.multi_reduction <add>, %22, %cst_11 [1] : vector<32x32xf32> to vector<32xf32>
    %24 = vector.shape_cast %23 : vector<32xf32> to vector<32x1xf32>
    %cst_12 = arith.constant 3.200000e+01 : f32
    %25 = vector.broadcast %cst_12 : f32 to vector<32x1xf32>
    %26 = arith.divf %24, %25 : vector<32x1xf32>
    %27 = vector.broadcast %19 : vector<32x1xf32> to vector<32x32xf32>
    %28 = arith.subf %13, %27 : vector<32x32xf32>
    %cst_13 = arith.constant 9.99999997E-7 : f32
    %29 = vector.broadcast %cst_13 : f32 to vector<32x1xf32>
    %30 = arith.addf %26, %29 : vector<32x1xf32>
    %31 = math.rsqrt %30 : vector<32x1xf32>
    %32 = vector.broadcast %31 : vector<32x1xf32> to vector<32x32xf32>
    %33 = arith.mulf %28, %32 : vector<32x32xf32>
    %34 = vector.broadcast %14 : vector<1x32xf32> to vector<32x32xf32>
    %35 = arith.mulf %33, %34 : vector<32x32xf32>
    %36 = vector.broadcast %15 : vector<1x32xf32> to vector<32x32xf32>
    %37 = arith.addf %35, %36 : vector<32x32xf32>
    %c144 = arith.constant 144 : index
    %c0_14 = arith.constant 0 : index
    %38 = vector.load %arg2[%c144, %c0_14] : memref<1472x128xbf16, #tpu.memory_space<vmem>>, vector<32x32xbf16>
    %39 = arith.truncf %37 : vector<32x32xf32> to vector<32x32xbf16>
    %cst_15 = arith.constant dense<0.000000e+00> : vector<32x32xf32>
    %40 = tpu.matmul %39, %38, %cst_15 {dimension_numbers = #tpu.dot_dimension_numbers<[1], [0], [0], [1], [0, 0, 1, 1], [], []>} : vector<32x32xbf16>, vector<32x32xbf16>, vector<32x32xf32> -> vector<32x32xf32>
    %c3 = arith.constant 3 : index
    %c0_16 = arith.constant 0 : index
    %41 = vector.load %arg3[%c3, %c0_16] : memref<56x128xf32, #tpu.memory_space<vmem>>, vector<1x32xf32>
    %42 = vector.broadcast %41 : vector<1x32xf32> to vector<32x32xf32>
    %43 = arith.addf %40, %42 : vector<32x32xf32>
    %44 = vector.shape_cast %43 : vector<32x32xf32> to vector<2x16x32xf32>
    %c176 = arith.constant 176 : index
    %c0_17 = arith.constant 0 : index
    %45 = vector.load %arg2[%c176, %c0_17] : memref<1472x128xbf16, #tpu.memory_space<vmem>>, vector<32x32xbf16>
    %46 = arith.truncf %37 : vector<32x32xf32> to vector<32x32xbf16>
    %cst_18 = arith.constant dense<0.000000e+00> : vector<32x32xf32>
    %47 = tpu.matmul %46, %45, %cst_18 {dimension_numbers = #tpu.dot_dimension_numbers<[1], [0], [0], [1], [0, 0, 1, 1], [], []>} : vector<32x32xbf16>, vector<32x32xbf16>, vector<32x32xf32> -> vector<32x32xf32>
    %c4 = arith.constant 4 : index
    %c0_19 = arith.constant 0 : index
    %48 = vector.load %arg3[%c4, %c0_19] : memref<56x128xf32, #tpu.memory_space<vmem>>, vector<1x32xf32>
    %49 = vector.broadcast %48 : vector<1x32xf32> to vector<32x32xf32>
    %50 = arith.addf %47, %49 : vector<32x32xf32>
    %51 = vector.shape_cast %50 : vector<32x32xf32> to vector<2x16x32xf32>
    %c208 = arith.constant 208 : index
    %c0_20 = arith.constant 0 : index
    %52 = vector.load %arg2[%c208, %c0_20] : memref<1472x128xbf16, #tpu.memory_space<vmem>>, vector<32x32xbf16>
    %53 = arith.truncf %37 : vector<32x32xf32> to vector<32x32xbf16>
    %cst_21 = arith.constant dense<0.000000e+00> : vector<32x32xf32>
    %54 = tpu.matmul %53, %52, %cst_21 {dimension_numbers = #tpu.dot_dimension_numbers<[1], [0], [0], [1], [0, 0, 1, 1], [], []>} : vector<32x32xbf16>, vector<32x32xbf16>, vector<32x32xf32> -> vector<32x32xf32>
    %c5 = arith.constant 5 : index
    %c0_22 = arith.constant 0 : index
    %55 = vector.load %arg3[%c5, %c0_22] : memref<56x128xf32, #tpu.memory_space<vmem>>, vector<1x32xf32>
    %56 = vector.broadcast %55 : vector<1x32xf32> to vector<32x32xf32>
    %57 = arith.addf %54, %56 : vector<32x32xf32>
    %58 = vector.shape_cast %57 : vector<32x32xf32> to vector<2x16x32xf32>
    %c240 = arith.constant 240 : index
    %c0_23 = arith.constant 0 : index
    %59 = vector.load %arg2[%c240, %c0_23] : memref<1472x128xbf16, #tpu.memory_space<vmem>>, vector<32x32xbf16>
    %c6 = arith.constant 6 : index
    %c0_24 = arith.constant 0 : index
    %60 = vector.load %arg3[%c6, %c0_24] : memref<56x128xf32, #tpu.memory_space<vmem>>, vector<1x32xf32>
    %61 = vector.extract_strided_slice %44 {offsets = [0, 0, 0], sizes = [2, 16, 8], strides = [1, 1, 1]} : vector<2x16x32xf32> to vector<2x16x8xf32>
    %62 = arith.truncf %61 : vector<2x16x8xf32> to vector<2x16x8xbf16>
    %63 = vector.extract_strided_slice %51 {offsets = [0, 0, 0], sizes = [2, 16, 8], strides = [1, 1, 1]} : vector<2x16x32xf32> to vector<2x16x8xf32>
    %64 = arith.truncf %63 : vector<2x16x8xf32> to vector<2x16x8xbf16>
    "tpu.trace_start"() <{level = 10 : i32, message = "bqd,bkd->bqk"}> : () -> ()
    %cst_25 = arith.constant dense<0.000000e+00> : vector<2x16x16xf32>
    %65 = tpu.matmul %62, %64, %cst_25 {dimension_numbers = #tpu.dot_dimension_numbers<[2], [2], [1], [1], [0, 0, 0, 1, 1, 1], [0], [0]>} : vector<2x16x8xbf16>, vector<2x16x8xbf16>, vector<2x16x16xf32> -> vector<2x16x16xf32>
    "tpu.trace_stop"() : () -> ()
    %cst_26 = arith.constant dense<0xFF800000> : vector<2x16xf32>
    %66 = vector.multi_reduction <maximumf>, %65, %cst_26 [2] : vector<2x16x16xf32> to vector<2x16xf32>
    %67 = vector.shape_cast %66 : vector<2x16xf32> to vector<2x16x1xf32>
    %68 = vector.broadcast %67 : vector<2x16x1xf32> to vector<2x16x16xf32>
    %69 = arith.subf %65, %68 : vector<2x16x16xf32>
    %70 = math.exp %69 : vector<2x16x16xf32>
    %cst_27 = arith.constant dense<0.000000e+00> : vector<2x16xf32>
    %71 = vector.multi_reduction <add>, %70, %cst_27 [2] : vector<2x16x16xf32> to vector<2x16xf32>
    %72 = vector.shape_cast %71 : vector<2x16xf32> to vector<2x16x1xf32>
    %73 = tpu.reciprocal %72 {approx = true} : vector<2x16x1xf32> -> vector<2x16x1xf32>
    %74 = vector.broadcast %73 : vector<2x16x1xf32> to vector<2x16x16xf32>
    %75 = arith.mulf %70, %74 : vector<2x16x16xf32>
    %76 = arith.truncf %75 : vector<2x16x16xf32> to vector<2x16x16xbf16>
    %77 = vector.extract_strided_slice %58 {offsets = [0, 0, 0], sizes = [2, 16, 8], strides = [1, 1, 1]} : vector<2x16x32xf32> to vector<2x16x8xf32>
    %78 = arith.truncf %77 : vector<2x16x8xf32> to vector<2x16x8xbf16>
    "tpu.trace_start"() <{level = 10 : i32, message = "bqk,bkd->bqd"}> : () -> ()
    %cst_28 = arith.constant dense<0.000000e+00> : vector<2x16x8xf32>
    %79 = tpu.matmul %76, %78, %cst_28 {dimension_numbers = #tpu.dot_dimension_numbers<[2], [1], [1], [2], [0, 0, 0, 1, 1, 2], [0], [0]>} : vector<2x16x16xbf16>, vector<2x16x8xbf16>, vector<2x16x8xf32> -> vector<2x16x8xf32>
    "tpu.trace_stop"() : () -> ()
    %80 = vector.extract_strided_slice %44 {offsets = [0, 0, 8], sizes = [2, 16, 8], strides = [1, 1, 1]} : vector<2x16x32xf32> to vector<2x16x8xf32>
    %81 = arith.truncf %80 : vector<2x16x8xf32> to vector<2x16x8xbf16>
    %82 = vector.extract_strided_slice %51 {offsets = [0, 0, 8], sizes = [2, 16, 8], strides = [1, 1, 1]} : vector<2x16x32xf32> to vector<2x16x8xf32>
    %83 = arith.truncf %82 : vector<2x16x8xf32> to vector<2x16x8xbf16>
    "tpu.trace_start"() <{level = 10 : i32, message = "bqd,bkd->bqk"}> : () -> ()
    %cst_29 = arith.constant dense<0.000000e+00> : vector<2x16x16xf32>
    %84 = tpu.matmul %81, %83, %cst_29 {dimension_numbers = #tpu.dot_dimension_numbers<[2], [2], [1], [1], [0, 0, 0, 1, 1, 1], [0], [0]>} : vector<2x16x8xbf16>, vector<2x16x8xbf16>, vector<2x16x16xf32> -> vector<2x16x16xf32>
    "tpu.trace_stop"() : () -> ()
    %cst_30 = arith.constant dense<0xFF800000> : vector<2x16xf32>
    %85 = vector.multi_reduction <maximumf>, %84, %cst_30 [2] : vector<2x16x16xf32> to vector<2x16xf32>
    %86 = vector.shape_cast %85 : vector<2x16xf32> to vector<2x16x1xf32>
    %87 = vector.broadcast %86 : vector<2x16x1xf32> to vector<2x16x16xf32>
    %88 = arith.subf %84, %87 : vector<2x16x16xf32>
    %89 = math.exp %88 : vector<2x16x16xf32>
    %cst_31 = arith.constant dense<0.000000e+00> : vector<2x16xf32>
    %90 = vector.multi_reduction <add>, %89, %cst_31 [2] : vector<2x16x16xf32> to vector<2x16xf32>
    %91 = vector.shape_cast %90 : vector<2x16xf32> to vector<2x16x1xf32>
    %92 = tpu.reciprocal %91 {approx = true} : vector<2x16x1xf32> -> vector<2x16x1xf32>
    %93 = vector.broadcast %92 : vector<2x16x1xf32> to vector<2x16x16xf32>
    %94 = arith.mulf %89, %93 : vector<2x16x16xf32>
    %95 = arith.truncf %94 : vector<2x16x16xf32> to vector<2x16x16xbf16>
    %96 = vector.extract_strided_slice %58 {offsets = [0, 0, 8], sizes = [2, 16, 8], strides = [1, 1, 1]} : vector<2x16x32xf32> to vector<2x16x8xf32>
    %97 = arith.truncf %96 : vector<2x16x8xf32> to vector<2x16x8xbf16>
    "tpu.trace_start"() <{level = 10 : i32, message = "bqk,bkd->bqd"}> : () -> ()
    %cst_32 = arith.constant dense<0.000000e+00> : vector<2x16x8xf32>
    %98 = tpu.matmul %95, %97, %cst_32 {dimension_numbers = #tpu.dot_dimension_numbers<[2], [1], [1], [2], [0, 0, 0, 1, 1, 2], [0], [0]>} : vector<2x16x16xbf16>, vector<2x16x8xbf16>, vector<2x16x8xf32> -> vector<2x16x8xf32>
    "tpu.trace_stop"() : () -> ()
    %99 = vector.extract_strided_slice %44 {offsets = [0, 0, 16], sizes = [2, 16, 8], strides = [1, 1, 1]} : vector<2x16x32xf32> to vector<2x16x8xf32>
    %100 = arith.truncf %99 : vector<2x16x8xf32> to vector<2x16x8xbf16>
    %101 = vector.extract_strided_slice %51 {offsets = [0, 0, 16], sizes = [2, 16, 8], strides = [1, 1, 1]} : vector<2x16x32xf32> to vector<2x16x8xf32>
    %102 = arith.truncf %101 : vector<2x16x8xf32> to vector<2x16x8xbf16>
    "tpu.trace_start"() <{level = 10 : i32, message = "bqd,bkd->bqk"}> : () -> ()
    %cst_33 = arith.constant dense<0.000000e+00> : vector<2x16x16xf32>
    %103 = tpu.matmul %100, %102, %cst_33 {dimension_numbers = #tpu.dot_dimension_numbers<[2], [2], [1], [1], [0, 0, 0, 1, 1, 1], [0], [0]>} : vector<2x16x8xbf16>, vector<2x16x8xbf16>, vector<2x16x16xf32> -> vector<2x16x16xf32>
    "tpu.trace_stop"() : () -> ()
    %cst_34 = arith.constant dense<0xFF800000> : vector<2x16xf32>
    %104 = vector.multi_reduction <maximumf>, %103, %cst_34 [2] : vector<2x16x16xf32> to vector<2x16xf32>
    %105 = vector.shape_cast %104 : vector<2x16xf32> to vector<2x16x1xf32>
    %106 = vector.broadcast %105 : vector<2x16x1xf32> to vector<2x16x16xf32>
    %107 = arith.subf %103, %106 : vector<2x16x16xf32>
    %108 = math.exp %107 : vector<2x16x16xf32>
    %cst_35 = arith.constant dense<0.000000e+00> : vector<2x16xf32>
    %109 = vector.multi_reduction <add>, %108, %cst_35 [2] : vector<2x16x16xf32> to vector<2x16xf32>
    %110 = vector.shape_cast %109 : vector<2x16xf32> to vector<2x16x1xf32>
    %111 = tpu.reciprocal %110 {approx = true} : vector<2x16x1xf32> -> vector<2x16x1xf32>
    %112 = vector.broadcast %111 : vector<2x16x1xf32> to vector<2x16x16xf32>
    %113 = arith.mulf %108, %112 : vector<2x16x16xf32>
    %114 = arith.truncf %113 : vector<2x16x16xf32> to vector<2x16x16xbf16>
    %115 = vector.extract_strided_slice %58 {offsets = [0, 0, 16], sizes = [2, 16, 8], strides = [1, 1, 1]} : vector<2x16x32xf32> to vector<2x16x8xf32>
    %116 = arith.truncf %115 : vector<2x16x8xf32> to vector<2x16x8xbf16>
    "tpu.trace_start"() <{level = 10 : i32, message = "bqk,bkd->bqd"}> : () -> ()
    %cst_36 = arith.constant dense<0.000000e+00> : vector<2x16x8xf32>
    %117 = tpu.matmul %114, %116, %cst_36 {dimension_numbers = #tpu.dot_dimension_numbers<[2], [1], [1], [2], [0, 0, 0, 1, 1, 2], [0], [0]>} : vector<2x16x16xbf16>, vector<2x16x8xbf16>, vector<2x16x8xf32> -> vector<2x16x8xf32>
    "tpu.trace_stop"() : () -> ()
    %118 = vector.extract_strided_slice %44 {offsets = [0, 0, 24], sizes = [2, 16, 8], strides = [1, 1, 1]} : vector<2x16x32xf32> to vector<2x16x8xf32>
    %119 = arith.truncf %118 : vector<2x16x8xf32> to vector<2x16x8xbf16>
    %120 = vector.extract_strided_slice %51 {offsets = [0, 0, 24], sizes = [2, 16, 8], strides = [1, 1, 1]} : vector<2x16x32xf32> to vector<2x16x8xf32>
    %121 = arith.truncf %120 : vector<2x16x8xf32> to vector<2x16x8xbf16>
    "tpu.trace_start"() <{level = 10 : i32, message = "bqd,bkd->bqk"}> : () -> ()
    %cst_37 = arith.constant dense<0.000000e+00> : vector<2x16x16xf32>
    %122 = tpu.matmul %119, %121, %cst_37 {dimension_numbers = #tpu.dot_dimension_numbers<[2], [2], [1], [1], [0, 0, 0, 1, 1, 1], [0], [0]>} : vector<2x16x8xbf16>, vector<2x16x8xbf16>, vector<2x16x16xf32> -> vector<2x16x16xf32>
    "tpu.trace_stop"() : () -> ()
    %cst_38 = arith.constant dense<0xFF800000> : vector<2x16xf32>
    %123 = vector.multi_reduction <maximumf>, %122, %cst_38 [2] : vector<2x16x16xf32> to vector<2x16xf32>
    %124 = vector.shape_cast %123 : vector<2x16xf32> to vector<2x16x1xf32>
    %125 = vector.broadcast %124 : vector<2x16x1xf32> to vector<2x16x16xf32>
    %126 = arith.subf %122, %125 : vector<2x16x16xf32>
    %127 = math.exp %126 : vector<2x16x16xf32>
    %cst_39 = arith.constant dense<0.000000e+00> : vector<2x16xf32>
    %128 = vector.multi_reduction <add>, %127, %cst_39 [2] : vector<2x16x16xf32> to vector<2x16xf32>
    %129 = vector.shape_cast %128 : vector<2x16xf32> to vector<2x16x1xf32>
    %130 = tpu.reciprocal %129 {approx = true} : vector<2x16x1xf32> -> vector<2x16x1xf32>
    %131 = vector.broadcast %130 : vector<2x16x1xf32> to vector<2x16x16xf32>
    %132 = arith.mulf %127, %131 : vector<2x16x16xf32>
    %133 = arith.truncf %132 : vector<2x16x16xf32> to vector<2x16x16xbf16>
    %134 = vector.extract_strided_slice %58 {offsets = [0, 0, 24], sizes = [2, 16, 8], strides = [1, 1, 1]} : vector<2x16x32xf32> to vector<2x16x8xf32>
    %135 = arith.truncf %134 : vector<2x16x8xf32> to vector<2x16x8xbf16>
    "tpu.trace_start"() <{level = 10 : i32, message = "bqk,bkd->bqd"}> : () -> ()
    %cst_40 = arith.constant dense<0.000000e+00> : vector<2x16x8xf32>
    %136 = tpu.matmul %133, %135, %cst_40 {dimension_numbers = #tpu.dot_dimension_numbers<[2], [1], [1], [2], [0, 0, 0, 1, 1, 2], [0], [0]>} : vector<2x16x16xbf16>, vector<2x16x8xbf16>, vector<2x16x8xf32> -> vector<2x16x8xf32>
    "tpu.trace_stop"() : () -> ()
    %137 = tpu.concatenate %79, %98, %117, %136 in 2 : vector<2x16x8xf32>, vector<2x16x8xf32>, vector<2x16x8xf32>, vector<2x16x8xf32> -> vector<2x16x32xf32>
    %138 = vector.shape_cast %137 : vector<2x16x32xf32> to vector<32x32xf32>
    %139 = arith.truncf %138 : vector<32x32xf32> to vector<32x32xbf16>
    %cst_41 = arith.constant dense<0.000000e+00> : vector<32x32xf32>
    %140 = tpu.matmul %139, %59, %cst_41 {dimension_numbers = #tpu.dot_dimension_numbers<[1], [0], [0], [1], [0, 0, 1, 1], [], []>} : vector<32x32xbf16>, vector<32x32xbf16>, vector<32x32xf32> -> vector<32x32xf32>
    %141 = vector.broadcast %60 : vector<1x32xf32> to vector<32x32xf32>
    %142 = arith.addf %140, %141 : vector<32x32xf32>
    %143 = vector.shape_cast %142 : vector<32x32xf32> to vector<2x16x32xf32>
    %144 = vector.shape_cast %143 : vector<2x16x32xf32> to vector<32x32xf32>
    %145 = arith.addf %13, %144 : vector<32x32xf32>
    %c7 = arith.constant 7 : index
    %c0_42 = arith.constant 0 : index
    %146 = vector.load %arg3[%c7, %c0_42] : memref<56x128xf32, #tpu.memory_space<vmem>>, vector<1x32xf32>
    %c8 = arith.constant 8 : index
    %c0_43 = arith.constant 0 : index
    %147 = vector.load %arg3[%c8, %c0_43] : memref<56x128xf32, #tpu.memory_space<vmem>>, vector<1x32xf32>
    %cst_44 = arith.constant dense<0.000000e+00> : vector<32xf32>
    %148 = vector.multi_reduction <add>, %145, %cst_44 [1] : vector<32x32xf32> to vector<32xf32>
    %149 = vector.shape_cast %148 : vector<32xf32> to vector<32x1xf32>
    %cst_45 = arith.constant 3.200000e+01 : f32
    %150 = vector.broadcast %cst_45 : f32 to vector<32x1xf32>
    %151 = arith.divf %149, %150 : vector<32x1xf32>
    %152 = vector.broadcast %151 : vector<32x1xf32> to vector<32x32xf32>
    %153 = arith.subf %145, %152 : vector<32x32xf32>
    %154 = arith.mulf %153, %153 : vector<32x32xf32>
    %cst_46 = arith.constant dense<0.000000e+00> : vector<32xf32>
    %155 = vector.multi_reduction <add>, %154, %cst_46 [1] : vector<32x32xf32> to vector<32xf32>
    %156 = vector.shape_cast %155 : vector<32xf32> to vector<32x1xf32>
    %cst_47 = arith.constant 3.200000e+01 : f32
    %157 = vector.broadcast %cst_47 : f32 to vector<32x1xf32>
    %158 = arith.divf %156, %157 : vector<32x1xf32>
    %159 = vector.broadcast %151 : vector<32x1xf32> to vector<32x32xf32>
    %160 = arith.subf %145, %159 : vector<32x32xf32>
    %cst_48 = arith.constant 9.99999997E-7 : f32
    %161 = vector.broadcast %cst_48 : f32 to vector<32x1xf32>
    %162 = arith.addf %158, %161 : vector<32x1xf32>
    %163 = math.rsqrt %162 : vector<32x1xf32>
    %164 = vector.broadcast %163 : vector<32x1xf32> to vector<32x32xf32>
    %165 = arith.mulf %160, %164 : vector<32x32xf32>
    %166 = vector.broadcast %146 : vector<1x32xf32> to vector<32x32xf32>
    %167 = arith.mulf %165, %166 : vector<32x32xf32>
    %168 = vector.broadcast %147 : vector<1x32xf32> to vector<32x32xf32>
    %169 = arith.addf %167, %168 : vector<32x32xf32>
    %c272 = arith.constant 272 : index
    %c0_49 = arith.constant 0 : index
    %170 = vector.load %arg2[%c272, %c0_49] : memref<1472x128xbf16, #tpu.memory_space<vmem>>, vector<32x128xbf16>
    %171 = arith.truncf %169 : vector<32x32xf32> to vector<32x32xbf16>
    %cst_50 = arith.constant dense<0.000000e+00> : vector<32x128xf32>
    %172 = tpu.matmul %171, %170, %cst_50 {dimension_numbers = #tpu.dot_dimension_numbers<[1], [0], [0], [1], [0, 0, 1, 1], [], []>} : vector<32x32xbf16>, vector<32x128xbf16>, vector<32x128xf32> -> vector<32x128xf32>
    %c9 = arith.constant 9 : index
    %c0_51 = arith.constant 0 : index
    %173 = vector.load %arg3[%c9, %c0_51] : memref<56x128xf32, #tpu.memory_space<vmem>>, vector<1x128xf32>
    %174 = vector.broadcast %173 : vector<1x128xf32> to vector<32x128xf32>
    %175 = arith.addf %172, %174 : vector<32x128xf32>
    %cst_52 = arith.constant 5.000000e-01 : f32
    %176 = vector.broadcast %cst_52 : f32 to vector<32x128xf32>
    %177 = arith.mulf %176, %175 : vector<32x128xf32>
    %cst_53 = arith.constant 4.471500e-02 : f32
    %178 = vector.broadcast %cst_53 : f32 to vector<32x128xf32>
    %179 = arith.mulf %178, %175 : vector<32x128xf32>
    %180 = arith.mulf %179, %175 : vector<32x128xf32>
    %181 = arith.mulf %180, %175 : vector<32x128xf32>
    %182 = arith.addf %175, %181 : vector<32x128xf32>
    %cst_54 = arith.constant 0.797884583 : f32
    %183 = vector.broadcast %cst_54 : f32 to vector<32x128xf32>
    %184 = arith.mulf %183, %182 : vector<32x128xf32>
    %185 = math.tanh %184 : vector<32x128xf32>
    %cst_55 = arith.constant 1.000000e+00 : f32
    %186 = vector.broadcast %cst_55 : f32 to vector<32x128xf32>
    %187 = arith.addf %186, %185 : vector<32x128xf32>
    %188 = arith.mulf %177, %187 : vector<32x128xf32>
    %c304 = arith.constant 304 : index
    %c0_56 = arith.constant 0 : index
    %189 = vector.load %arg2[%c304, %c0_56] : memref<1472x128xbf16, #tpu.memory_space<vmem>>, vector<128x32xbf16>
    %190 = arith.truncf %188 : vector<32x128xf32> to vector<32x128xbf16>
    %cst_57 = arith.constant dense<0.000000e+00> : vector<32x32xf32>
    %191 = tpu.matmul %190, %189, %cst_57 {dimension_numbers = #tpu.dot_dimension_numbers<[1], [0], [0], [1], [0, 0, 1, 1], [], []>} : vector<32x128xbf16>, vector<128x32xbf16>, vector<32x32xf32> -> vector<32x32xf32>
    %192 = arith.addf %145, %191 : vector<32x32xf32>
    %c10 = arith.constant 10 : index
    %c0_58 = arith.constant 0 : index
    %193 = vector.load %arg3[%c10, %c0_58] : memref<56x128xf32, #tpu.memory_space<vmem>>, vector<1x32xf32>
    %194 = vector.broadcast %193 : vector<1x32xf32> to vector<32x32xf32>
    %195 = arith.addf %192, %194 : vector<32x32xf32>
    %c11 = arith.constant 11 : index
    %c0_59 = arith.constant 0 : index
    %196 = vector.load %arg3[%c11, %c0_59] : memref<56x128xf32, #tpu.memory_space<vmem>>, vector<1x32xf32>
    %c12 = arith.constant 12 : index
    %c0_60 = arith.constant 0 : index
    %197 = vector.load %arg3[%c12, %c0_60] : memref<56x128xf32, #tpu.memory_space<vmem>>, vector<1x32xf32>
    %cst_61 = arith.constant dense<0.000000e+00> : vector<32xf32>
    %198 = vector.multi_reduction <add>, %195, %cst_61 [1] : vector<32x32xf32> to vector<32xf32>
    %199 = vector.shape_cast %198 : vector<32xf32> to vector<32x1xf32>
    %cst_62 = arith.constant 3.200000e+01 : f32
    %200 = vector.broadcast %cst_62 : f32 to vector<32x1xf32>
    %201 = arith.divf %199, %200 : vector<32x1xf32>
    %202 = vector.broadcast %201 : vector<32x1xf32> to vector<32x32xf32>
    %203 = arith.subf %195, %202 : vector<32x32xf32>
    %204 = arith.mulf %203, %203 : vector<32x32xf32>
    %cst_63 = arith.constant dense<0.000000e+00> : vector<32xf32>
    %205 = vector.multi_reduction <add>, %204, %cst_63 [1] : vector<32x32xf32> to vector<32xf32>
    %206 = vector.shape_cast %205 : vector<32xf32> to vector<32x1xf32>
    %cst_64 = arith.constant 3.200000e+01 : f32
    %207 = vector.broadcast %cst_64 : f32 to vector<32x1xf32>
    %208 = arith.divf %206, %207 : vector<32x1xf32>
    %209 = vector.broadcast %201 : vector<32x1xf32> to vector<32x32xf32>
    %210 = arith.subf %195, %209 : vector<32x32xf32>
    %cst_65 = arith.constant 9.99999997E-7 : f32
    %211 = vector.broadcast %cst_65 : f32 to vector<32x1xf32>
    %212 = arith.addf %208, %211 : vector<32x1xf32>
    %213 = math.rsqrt %212 : vector<32x1xf32>
    %214 = vector.broadcast %213 : vector<32x1xf32> to vector<32x32xf32>
    %215 = arith.mulf %210, %214 : vector<32x32xf32>
    %216 = vector.broadcast %196 : vector<1x32xf32> to vector<32x32xf32>
    %217 = arith.mulf %215, %216 : vector<32x32xf32>
    %218 = vector.broadcast %197 : vector<1x32xf32> to vector<32x32xf32>
    %219 = arith.addf %217, %218 : vector<32x32xf32>
    %c432 = arith.constant 432 : index
    %c0_66 = arith.constant 0 : index
    %220 = vector.load %arg2[%c432, %c0_66] : memref<1472x128xbf16, #tpu.memory_space<vmem>>, vector<32x32xbf16>
    %221 = arith.truncf %219 : vector<32x32xf32> to vector<32x32xbf16>
    %cst_67 = arith.constant dense<0.000000e+00> : vector<32x32xf32>
    %222 = tpu.matmul %221, %220, %cst_67 {dimension_numbers = #tpu.dot_dimension_numbers<[1], [0], [0], [1], [0, 0, 1, 1], [], []>} : vector<32x32xbf16>, vector<32x32xbf16>, vector<32x32xf32> -> vector<32x32xf32>
    %c13 = arith.constant 13 : index
    %c0_68 = arith.constant 0 : index
    %223 = vector.load %arg3[%c13, %c0_68] : memref<56x128xf32, #tpu.memory_space<vmem>>, vector<1x32xf32>
    %224 = vector.broadcast %223 : vector<1x32xf32> to vector<32x32xf32>
    %225 = arith.addf %222, %224 : vector<32x32xf32>
    %226 = vector.shape_cast %225 : vector<32x32xf32> to vector<2x16x32xf32>
    %c464 = arith.constant 464 : index
    %c0_69 = arith.constant 0 : index
    %227 = vector.load %arg2[%c464, %c0_69] : memref<1472x128xbf16, #tpu.memory_space<vmem>>, vector<32x32xbf16>
    %228 = arith.truncf %219 : vector<32x32xf32> to vector<32x32xbf16>
    %cst_70 = arith.constant dense<0.000000e+00> : vector<32x32xf32>
    %229 = tpu.matmul %228, %227, %cst_70 {dimension_numbers = #tpu.dot_dimension_numbers<[1], [0], [0], [1], [0, 0, 1, 1], [], []>} : vector<32x32xbf16>, vector<32x32xbf16>, vector<32x32xf32> -> vector<32x32xf32>
    %c14 = arith.constant 14 : index
    %c0_71 = arith.constant 0 : index
    %230 = vector.load %arg3[%c14, %c0_71] : memref<56x128xf32, #tpu.memory_space<vmem>>, vector<1x32xf32>
    %231 = vector.broadcast %230 : vector<1x32xf32> to vector<32x32xf32>
    %232 = arith.addf %229, %231 : vector<32x32xf32>
    %233 = vector.shape_cast %232 : vector<32x32xf32> to vector<2x16x32xf32>
    %c496 = arith.constant 496 : index
    %c0_72 = arith.constant 0 : index
    %234 = vector.load %arg2[%c496, %c0_72] : memref<1472x128xbf16, #tpu.memory_space<vmem>>, vector<32x32xbf16>
    %235 = arith.truncf %219 : vector<32x32xf32> to vector<32x32xbf16>
    %cst_73 = arith.constant dense<0.000000e+00> : vector<32x32xf32>
    %236 = tpu.matmul %235, %234, %cst_73 {dimension_numbers = #tpu.dot_dimension_numbers<[1], [0], [0], [1], [0, 0, 1, 1], [], []>} : vector<32x32xbf16>, vector<32x32xbf16>, vector<32x32xf32> -> vector<32x32xf32>
    %c15 = arith.constant 15 : index
    %c0_74 = arith.constant 0 : index
    %237 = vector.load %arg3[%c15, %c0_74] : memref<56x128xf32, #tpu.memory_space<vmem>>, vector<1x32xf32>
    %238 = vector.broadcast %237 : vector<1x32xf32> to vector<32x32xf32>
    %239 = arith.addf %236, %238 : vector<32x32xf32>
    %240 = vector.shape_cast %239 : vector<32x32xf32> to vector<2x16x32xf32>
    %c528 = arith.constant 528 : index
    %c0_75 = arith.constant 0 : index
    %241 = vector.load %arg2[%c528, %c0_75] : memref<1472x128xbf16, #tpu.memory_space<vmem>>, vector<32x32xbf16>
    %c16 = arith.constant 16 : index
    %c0_76 = arith.constant 0 : index
    %242 = vector.load %arg3[%c16, %c0_76] : memref<56x128xf32, #tpu.memory_space<vmem>>, vector<1x32xf32>
    %243 = vector.extract_strided_slice %226 {offsets = [0, 0, 0], sizes = [2, 16, 8], strides = [1, 1, 1]} : vector<2x16x32xf32> to vector<2x16x8xf32>
    %244 = arith.truncf %243 : vector<2x16x8xf32> to vector<2x16x8xbf16>
    %245 = vector.extract_strided_slice %233 {offsets = [0, 0, 0], sizes = [2, 16, 8], strides = [1, 1, 1]} : vector<2x16x32xf32> to vector<2x16x8xf32>
    %246 = arith.truncf %245 : vector<2x16x8xf32> to vector<2x16x8xbf16>
    "tpu.trace_start"() <{level = 10 : i32, message = "bqd,bkd->bqk"}> : () -> ()
    %cst_77 = arith.constant dense<0.000000e+00> : vector<2x16x16xf32>
    %247 = tpu.matmul %244, %246, %cst_77 {dimension_numbers = #tpu.dot_dimension_numbers<[2], [2], [1], [1], [0, 0, 0, 1, 1, 1], [0], [0]>} : vector<2x16x8xbf16>, vector<2x16x8xbf16>, vector<2x16x16xf32> -> vector<2x16x16xf32>
    "tpu.trace_stop"() : () -> ()
    %cst_78 = arith.constant dense<0xFF800000> : vector<2x16xf32>
    %248 = vector.multi_reduction <maximumf>, %247, %cst_78 [2] : vector<2x16x16xf32> to vector<2x16xf32>
    %249 = vector.shape_cast %248 : vector<2x16xf32> to vector<2x16x1xf32>
    %250 = vector.broadcast %249 : vector<2x16x1xf32> to vector<2x16x16xf32>
    %251 = arith.subf %247, %250 : vector<2x16x16xf32>
    %252 = math.exp %251 : vector<2x16x16xf32>
    %cst_79 = arith.constant dense<0.000000e+00> : vector<2x16xf32>
    %253 = vector.multi_reduction <add>, %252, %cst_79 [2] : vector<2x16x16xf32> to vector<2x16xf32>
    %254 = vector.shape_cast %253 : vector<2x16xf32> to vector<2x16x1xf32>
    %255 = tpu.reciprocal %254 {approx = true} : vector<2x16x1xf32> -> vector<2x16x1xf32>
    %256 = vector.broadcast %255 : vector<2x16x1xf32> to vector<2x16x16xf32>
    %257 = arith.mulf %252, %256 : vector<2x16x16xf32>
    %258 = arith.truncf %257 : vector<2x16x16xf32> to vector<2x16x16xbf16>
    %259 = vector.extract_strided_slice %240 {offsets = [0, 0, 0], sizes = [2, 16, 8], strides = [1, 1, 1]} : vector<2x16x32xf32> to vector<2x16x8xf32>
    %260 = arith.truncf %259 : vector<2x16x8xf32> to vector<2x16x8xbf16>
    "tpu.trace_start"() <{level = 10 : i32, message = "bqk,bkd->bqd"}> : () -> ()
    %cst_80 = arith.constant dense<0.000000e+00> : vector<2x16x8xf32>
    %261 = tpu.matmul %258, %260, %cst_80 {dimension_numbers = #tpu.dot_dimension_numbers<[2], [1], [1], [2], [0, 0, 0, 1, 1, 2], [0], [0]>} : vector<2x16x16xbf16>, vector<2x16x8xbf16>, vector<2x16x8xf32> -> vector<2x16x8xf32>
    "tpu.trace_stop"() : () -> ()
    %262 = vector.extract_strided_slice %226 {offsets = [0, 0, 8], sizes = [2, 16, 8], strides = [1, 1, 1]} : vector<2x16x32xf32> to vector<2x16x8xf32>
    %263 = arith.truncf %262 : vector<2x16x8xf32> to vector<2x16x8xbf16>
    %264 = vector.extract_strided_slice %233 {offsets = [0, 0, 8], sizes = [2, 16, 8], strides = [1, 1, 1]} : vector<2x16x32xf32> to vector<2x16x8xf32>
    %265 = arith.truncf %264 : vector<2x16x8xf32> to vector<2x16x8xbf16>
    "tpu.trace_start"() <{level = 10 : i32, message = "bqd,bkd->bqk"}> : () -> ()
    %cst_81 = arith.constant dense<0.000000e+00> : vector<2x16x16xf32>
    %266 = tpu.matmul %263, %265, %cst_81 {dimension_numbers = #tpu.dot_dimension_numbers<[2], [2], [1], [1], [0, 0, 0, 1, 1, 1], [0], [0]>} : vector<2x16x8xbf16>, vector<2x16x8xbf16>, vector<2x16x16xf32> -> vector<2x16x16xf32>
    "tpu.trace_stop"() : () -> ()
    %cst_82 = arith.constant dense<0xFF800000> : vector<2x16xf32>
    %267 = vector.multi_reduction <maximumf>, %266, %cst_82 [2] : vector<2x16x16xf32> to vector<2x16xf32>
    %268 = vector.shape_cast %267 : vector<2x16xf32> to vector<2x16x1xf32>
    %269 = vector.broadcast %268 : vector<2x16x1xf32> to vector<2x16x16xf32>
    %270 = arith.subf %266, %269 : vector<2x16x16xf32>
    %271 = math.exp %270 : vector<2x16x16xf32>
    %cst_83 = arith.constant dense<0.000000e+00> : vector<2x16xf32>
    %272 = vector.multi_reduction <add>, %271, %cst_83 [2] : vector<2x16x16xf32> to vector<2x16xf32>
    %273 = vector.shape_cast %272 : vector<2x16xf32> to vector<2x16x1xf32>
    %274 = tpu.reciprocal %273 {approx = true} : vector<2x16x1xf32> -> vector<2x16x1xf32>
    %275 = vector.broadcast %274 : vector<2x16x1xf32> to vector<2x16x16xf32>
    %276 = arith.mulf %271, %275 : vector<2x16x16xf32>
    %277 = arith.truncf %276 : vector<2x16x16xf32> to vector<2x16x16xbf16>
    %278 = vector.extract_strided_slice %240 {offsets = [0, 0, 8], sizes = [2, 16, 8], strides = [1, 1, 1]} : vector<2x16x32xf32> to vector<2x16x8xf32>
    %279 = arith.truncf %278 : vector<2x16x8xf32> to vector<2x16x8xbf16>
    "tpu.trace_start"() <{level = 10 : i32, message = "bqk,bkd->bqd"}> : () -> ()
    %cst_84 = arith.constant dense<0.000000e+00> : vector<2x16x8xf32>
    %280 = tpu.matmul %277, %279, %cst_84 {dimension_numbers = #tpu.dot_dimension_numbers<[2], [1], [1], [2], [0, 0, 0, 1, 1, 2], [0], [0]>} : vector<2x16x16xbf16>, vector<2x16x8xbf16>, vector<2x16x8xf32> -> vector<2x16x8xf32>
    "tpu.trace_stop"() : () -> ()
    %281 = vector.extract_strided_slice %226 {offsets = [0, 0, 16], sizes = [2, 16, 8], strides = [1, 1, 1]} : vector<2x16x32xf32> to vector<2x16x8xf32>
    %282 = arith.truncf %281 : vector<2x16x8xf32> to vector<2x16x8xbf16>
    %283 = vector.extract_strided_slice %233 {offsets = [0, 0, 16], sizes = [2, 16, 8], strides = [1, 1, 1]} : vector<2x16x32xf32> to vector<2x16x8xf32>
    %284 = arith.truncf %283 : vector<2x16x8xf32> to vector<2x16x8xbf16>
    "tpu.trace_start"() <{level = 10 : i32, message = "bqd,bkd->bqk"}> : () -> ()
    %cst_85 = arith.constant dense<0.000000e+00> : vector<2x16x16xf32>
    %285 = tpu.matmul %282, %284, %cst_85 {dimension_numbers = #tpu.dot_dimension_numbers<[2], [2], [1], [1], [0, 0, 0, 1, 1, 1], [0], [0]>} : vector<2x16x8xbf16>, vector<2x16x8xbf16>, vector<2x16x16xf32> -> vector<2x16x16xf32>
    "tpu.trace_stop"() : () -> ()
    %cst_86 = arith.constant dense<0xFF800000> : vector<2x16xf32>
    %286 = vector.multi_reduction <maximumf>, %285, %cst_86 [2] : vector<2x16x16xf32> to vector<2x16xf32>
    %287 = vector.shape_cast %286 : vector<2x16xf32> to vector<2x16x1xf32>
    %288 = vector.broadcast %287 : vector<2x16x1xf32> to vector<2x16x16xf32>
    %289 = arith.subf %285, %288 : vector<2x16x16xf32>
    %290 = math.exp %289 : vector<2x16x16xf32>
    %cst_87 = arith.constant dense<0.000000e+00> : vector<2x16xf32>
    %291 = vector.multi_reduction <add>, %290, %cst_87 [2] : vector<2x16x16xf32> to vector<2x16xf32>
    %292 = vector.shape_cast %291 : vector<2x16xf32> to vector<2x16x1xf32>
    %293 = tpu.reciprocal %292 {approx = true} : vector<2x16x1xf32> -> vector<2x16x1xf32>
    %294 = vector.broadcast %293 : vector<2x16x1xf32> to vector<2x16x16xf32>
    %295 = arith.mulf %290, %294 : vector<2x16x16xf32>
    %296 = arith.truncf %295 : vector<2x16x16xf32> to vector<2x16x16xbf16>
    %297 = vector.extract_strided_slice %240 {offsets = [0, 0, 16], sizes = [2, 16, 8], strides = [1, 1, 1]} : vector<2x16x32xf32> to vector<2x16x8xf32>
    %298 = arith.truncf %297 : vector<2x16x8xf32> to vector<2x16x8xbf16>
    "tpu.trace_start"() <{level = 10 : i32, message = "bqk,bkd->bqd"}> : () -> ()
    %cst_88 = arith.constant dense<0.000000e+00> : vector<2x16x8xf32>
    %299 = tpu.matmul %296, %298, %cst_88 {dimension_numbers = #tpu.dot_dimension_numbers<[2], [1], [1], [2], [0, 0, 0, 1, 1, 2], [0], [0]>} : vector<2x16x16xbf16>, vector<2x16x8xbf16>, vector<2x16x8xf32> -> vector<2x16x8xf32>
    "tpu.trace_stop"() : () -> ()
    %300 = vector.extract_strided_slice %226 {offsets = [0, 0, 24], sizes = [2, 16, 8], strides = [1, 1, 1]} : vector<2x16x32xf32> to vector<2x16x8xf32>
    %301 = arith.truncf %300 : vector<2x16x8xf32> to vector<2x16x8xbf16>
    %302 = vector.extract_strided_slice %233 {offsets = [0, 0, 24], sizes = [2, 16, 8], strides = [1, 1, 1]} : vector<2x16x32xf32> to vector<2x16x8xf32>
    %303 = arith.truncf %302 : vector<2x16x8xf32> to vector<2x16x8xbf16>
    "tpu.trace_start"() <{level = 10 : i32, message = "bqd,bkd->bqk"}> : () -> ()
    %cst_89 = arith.constant dense<0.000000e+00> : vector<2x16x16xf32>
    %304 = tpu.matmul %301, %303, %cst_89 {dimension_numbers = #tpu.dot_dimension_numbers<[2], [2], [1], [1], [0, 0, 0, 1, 1, 1], [0], [0]>} : vector<2x16x8xbf16>, vector<2x16x8xbf16>, vector<2x16x16xf32> -> vector<2x16x16xf32>
    "tpu.trace_stop"() : () -> ()
    %cst_90 = arith.constant dense<0xFF800000> : vector<2x16xf32>
    %305 = vector.multi_reduction <maximumf>, %304, %cst_90 [2] : vector<2x16x16xf32> to vector<2x16xf32>
    %306 = vector.shape_cast %305 : vector<2x16xf32> to vector<2x16x1xf32>
    %307 = vector.broadcast %306 : vector<2x16x1xf32> to vector<2x16x16xf32>
    %308 = arith.subf %304, %307 : vector<2x16x16xf32>
    %309 = math.exp %308 : vector<2x16x16xf32>
    %cst_91 = arith.constant dense<0.000000e+00> : vector<2x16xf32>
    %310 = vector.multi_reduction <add>, %309, %cst_91 [2] : vector<2x16x16xf32> to vector<2x16xf32>
    %311 = vector.shape_cast %310 : vector<2x16xf32> to vector<2x16x1xf32>
    %312 = tpu.reciprocal %311 {approx = true} : vector<2x16x1xf32> -> vector<2x16x1xf32>
    %313 = vector.broadcast %312 : vector<2x16x1xf32> to vector<2x16x16xf32>
    %314 = arith.mulf %309, %313 : vector<2x16x16xf32>
    %315 = arith.truncf %314 : vector<2x16x16xf32> to vector<2x16x16xbf16>
    %316 = vector.extract_strided_slice %240 {offsets = [0, 0, 24], sizes = [2, 16, 8], strides = [1, 1, 1]} : vector<2x16x32xf32> to vector<2x16x8xf32>
    %317 = arith.truncf %316 : vector<2x16x8xf32> to vector<2x16x8xbf16>
    "tpu.trace_start"() <{level = 10 : i32, message = "bqk,bkd->bqd"}> : () -> ()
    %cst_92 = arith.constant dense<0.000000e+00> : vector<2x16x8xf32>
    %318 = tpu.matmul %315, %317, %cst_92 {dimension_numbers = #tpu.dot_dimension_numbers<[2], [1], [1], [2], [0, 0, 0, 1, 1, 2], [0], [0]>} : vector<2x16x16xbf16>, vector<2x16x8xbf16>, vector<2x16x8xf32> -> vector<2x16x8xf32>
    "tpu.trace_stop"() : () -> ()
    %319 = tpu.concatenate %261, %280, %299, %318 in 2 : vector<2x16x8xf32>, vector<2x16x8xf32>, vector<2x16x8xf32>, vector<2x16x8xf32> -> vector<2x16x32xf32>
    %320 = vector.shape_cast %319 : vector<2x16x32xf32> to vector<32x32xf32>
    %321 = arith.truncf %320 : vector<32x32xf32> to vector<32x32xbf16>
    %cst_93 = arith.constant dense<0.000000e+00> : vector<32x32xf32>
    %322 = tpu.matmul %321, %241, %cst_93 {dimension_numbers = #tpu.dot_dimension_numbers<[1], [0], [0], [1], [0, 0, 1, 1], [], []>} : vector<32x32xbf16>, vector<32x32xbf16>, vector<32x32xf32> -> vector<32x32xf32>
    %323 = vector.broadcast %242 : vector<1x32xf32> to vector<32x32xf32>
    %324 = arith.addf %322, %323 : vector<32x32xf32>
    %325 = vector.shape_cast %324 : vector<32x32xf32> to vector<2x16x32xf32>
    %326 = vector.shape_cast %325 : vector<2x16x32xf32> to vector<32x32xf32>
    %327 = arith.addf %195, %326 : vector<32x32xf32>
    %c17 = arith.constant 17 : index
    %c0_94 = arith.constant 0 : index
    %328 = vector.load %arg3[%c17, %c0_94] : memref<56x128xf32, #tpu.memory_space<vmem>>, vector<1x32xf32>
    %c18 = arith.constant 18 : index
    %c0_95 = arith.constant 0 : index
    %329 = vector.load %arg3[%c18, %c0_95] : memref<56x128xf32, #tpu.memory_space<vmem>>, vector<1x32xf32>
    %cst_96 = arith.constant dense<0.000000e+00> : vector<32xf32>
    %330 = vector.multi_reduction <add>, %327, %cst_96 [1] : vector<32x32xf32> to vector<32xf32>
    %331 = vector.shape_cast %330 : vector<32xf32> to vector<32x1xf32>
    %cst_97 = arith.constant 3.200000e+01 : f32
    %332 = vector.broadcast %cst_97 : f32 to vector<32x1xf32>
    %333 = arith.divf %331, %332 : vector<32x1xf32>
    %334 = vector.broadcast %333 : vector<32x1xf32> to vector<32x32xf32>
    %335 = arith.subf %327, %334 : vector<32x32xf32>
    %336 = arith.mulf %335, %335 : vector<32x32xf32>
    %cst_98 = arith.constant dense<0.000000e+00> : vector<32xf32>
    %337 = vector.multi_reduction <add>, %336, %cst_98 [1] : vector<32x32xf32> to vector<32xf32>
    %338 = vector.shape_cast %337 : vector<32xf32> to vector<32x1xf32>
    %cst_99 = arith.constant 3.200000e+01 : f32
    %339 = vector.broadcast %cst_99 : f32 to vector<32x1xf32>
    %340 = arith.divf %338, %339 : vector<32x1xf32>
    %341 = vector.broadcast %333 : vector<32x1xf32> to vector<32x32xf32>
    %342 = arith.subf %327, %341 : vector<32x32xf32>
    %cst_100 = arith.constant 9.99999997E-7 : f32
    %343 = vector.broadcast %cst_100 : f32 to vector<32x1xf32>
    %344 = arith.addf %340, %343 : vector<32x1xf32>
    %345 = math.rsqrt %344 : vector<32x1xf32>
    %346 = vector.broadcast %345 : vector<32x1xf32> to vector<32x32xf32>
    %347 = arith.mulf %342, %346 : vector<32x32xf32>
    %348 = vector.broadcast %328 : vector<1x32xf32> to vector<32x32xf32>
    %349 = arith.mulf %347, %348 : vector<32x32xf32>
    %350 = vector.broadcast %329 : vector<1x32xf32> to vector<32x32xf32>
    %351 = arith.addf %349, %350 : vector<32x32xf32>
    %c560 = arith.constant 560 : index
    %c0_101 = arith.constant 0 : index
    %352 = vector.load %arg2[%c560, %c0_101] : memref<1472x128xbf16, #tpu.memory_space<vmem>>, vector<32x128xbf16>
    %353 = arith.truncf %351 : vector<32x32xf32> to vector<32x32xbf16>
    %cst_102 = arith.constant dense<0.000000e+00> : vector<32x128xf32>
    %354 = tpu.matmul %353, %352, %cst_102 {dimension_numbers = #tpu.dot_dimension_numbers<[1], [0], [0], [1], [0, 0, 1, 1], [], []>} : vector<32x32xbf16>, vector<32x128xbf16>, vector<32x128xf32> -> vector<32x128xf32>
    %c19 = arith.constant 19 : index
    %c0_103 = arith.constant 0 : index
    %355 = vector.load %arg3[%c19, %c0_103] : memref<56x128xf32, #tpu.memory_space<vmem>>, vector<1x128xf32>
    %356 = vector.broadcast %355 : vector<1x128xf32> to vector<32x128xf32>
    %357 = arith.addf %354, %356 : vector<32x128xf32>
    %cst_104 = arith.constant 5.000000e-01 : f32
    %358 = vector.broadcast %cst_104 : f32 to vector<32x128xf32>
    %359 = arith.mulf %358, %357 : vector<32x128xf32>
    %cst_105 = arith.constant 4.471500e-02 : f32
    %360 = vector.broadcast %cst_105 : f32 to vector<32x128xf32>
    %361 = arith.mulf %360, %357 : vector<32x128xf32>
    %362 = arith.mulf %361, %357 : vector<32x128xf32>
    %363 = arith.mulf %362, %357 : vector<32x128xf32>
    %364 = arith.addf %357, %363 : vector<32x128xf32>
    %cst_106 = arith.constant 0.797884583 : f32
    %365 = vector.broadcast %cst_106 : f32 to vector<32x128xf32>
    %366 = arith.mulf %365, %364 : vector<32x128xf32>
    %367 = math.tanh %366 : vector<32x128xf32>
    %cst_107 = arith.constant 1.000000e+00 : f32
    %368 = vector.broadcast %cst_107 : f32 to vector<32x128xf32>
    %369 = arith.addf %368, %367 : vector<32x128xf32>
    %370 = arith.mulf %359, %369 : vector<32x128xf32>
    %c592 = arith.constant 592 : index
    %c0_108 = arith.constant 0 : index
    %371 = vector.load %arg2[%c592, %c0_108] : memref<1472x128xbf16, #tpu.memory_space<vmem>>, vector<128x32xbf16>
    %372 = arith.truncf %370 : vector<32x128xf32> to vector<32x128xbf16>
    %cst_109 = arith.constant dense<0.000000e+00> : vector<32x32xf32>
    %373 = tpu.matmul %372, %371, %cst_109 {dimension_numbers = #tpu.dot_dimension_numbers<[1], [0], [0], [1], [0, 0, 1, 1], [], []>} : vector<32x128xbf16>, vector<128x32xbf16>, vector<32x32xf32> -> vector<32x32xf32>
    %374 = arith.addf %327, %373 : vector<32x32xf32>
    %c20 = arith.constant 20 : index
    %c0_110 = arith.constant 0 : index
    %375 = vector.load %arg3[%c20, %c0_110] : memref<56x128xf32, #tpu.memory_space<vmem>>, vector<1x32xf32>
    %376 = vector.broadcast %375 : vector<1x32xf32> to vector<32x32xf32>
    %377 = arith.addf %374, %376 : vector<32x32xf32>
    %c21 = arith.constant 21 : index
    %c0_111 = arith.constant 0 : index
    %378 = vector.load %arg3[%c21, %c0_111] : memref<56x128xf32, #tpu.memory_space<vmem>>, vector<1x32xf32>
    %c22 = arith.constant 22 : index
    %c0_112 = arith.constant 0 : index
    %379 = vector.load %arg3[%c22, %c0_112] : memref<56x128xf32, #tpu.memory_space<vmem>>, vector<1x32xf32>
    %cst_113 = arith.constant dense<0.000000e+00> : vector<32xf32>
    %380 = vector.multi_reduction <add>, %377, %cst_113 [1] : vector<32x32xf32> to vector<32xf32>
    %381 = vector.shape_cast %380 : vector<32xf32> to vector<32x1xf32>
    %cst_114 = arith.constant 3.200000e+01 : f32
    %382 = vector.broadcast %cst_114 : f32 to vector<32x1xf32>
    %383 = arith.divf %381, %382 : vector<32x1xf32>
    %384 = vector.broadcast %383 : vector<32x1xf32> to vector<32x32xf32>
    %385 = arith.subf %377, %384 : vector<32x32xf32>
    %386 = arith.mulf %385, %385 : vector<32x32xf32>
    %cst_115 = arith.constant dense<0.000000e+00> : vector<32xf32>
    %387 = vector.multi_reduction <add>, %386, %cst_115 [1] : vector<32x32xf32> to vector<32xf32>
    %388 = vector.shape_cast %387 : vector<32xf32> to vector<32x1xf32>
    %cst_116 = arith.constant 3.200000e+01 : f32
    %389 = vector.broadcast %cst_116 : f32 to vector<32x1xf32>
    %390 = arith.divf %388, %389 : vector<32x1xf32>
    %391 = vector.broadcast %383 : vector<32x1xf32> to vector<32x32xf32>
    %392 = arith.subf %377, %391 : vector<32x32xf32>
    %cst_117 = arith.constant 9.99999997E-7 : f32
    %393 = vector.broadcast %cst_117 : f32 to vector<32x1xf32>
    %394 = arith.addf %390, %393 : vector<32x1xf32>
    %395 = math.rsqrt %394 : vector<32x1xf32>
    %396 = vector.broadcast %395 : vector<32x1xf32> to vector<32x32xf32>
    %397 = arith.mulf %392, %396 : vector<32x32xf32>
    %398 = vector.broadcast %378 : vector<1x32xf32> to vector<32x32xf32>
    %399 = arith.mulf %397, %398 : vector<32x32xf32>
    %400 = vector.broadcast %379 : vector<1x32xf32> to vector<32x32xf32>
    %401 = arith.addf %399, %400 : vector<32x32xf32>
    %c1424 = arith.constant 1424 : index
    %c0_118 = arith.constant 0 : index
    %402 = vector.load %arg2[%c1424, %c0_118] : memref<1472x128xbf16, #tpu.memory_space<vmem>>, vector<8x32xbf16>
    %403 = arith.extf %402 : vector<8x32xbf16> to vector<8x32xf32>
    %404 = vector.shape_cast %403 : vector<8x32xf32> to vector<1x8x32xf32>
    %405 = vector.broadcast %404 : vector<1x8x32xf32> to vector<2x8x32xf32>
    %c23 = arith.constant 23 : index
    %c0_119 = arith.constant 0 : index
    %406 = vector.load %arg3[%c23, %c0_119] : memref<56x128xf32, #tpu.memory_space<vmem>>, vector<1x32xf32>
    %407 = vector.shape_cast %406 : vector<1x32xf32> to vector<1x32xf32>
    %408 = vector.broadcast %407 : vector<1x32xf32> to vector<2x32xf32>
    %c24 = arith.constant 24 : index
    %c0_120 = arith.constant 0 : index
    %409 = vector.load %arg3[%c24, %c0_120] : memref<56x128xf32, #tpu.memory_space<vmem>>, vector<1x32xf32>
    %c25 = arith.constant 25 : index
    %c0_121 = arith.constant 0 : index
    %410 = vector.load %arg3[%c25, %c0_121] : memref<56x128xf32, #tpu.memory_space<vmem>>, vector<1x32xf32>
    %cst_122 = arith.constant dense<0.000000e+00> : vector<2xf32>
    %411 = vector.multi_reduction <add>, %408, %cst_122 [1] : vector<2x32xf32> to vector<2xf32>
    %412 = vector.shape_cast %411 : vector<2xf32> to vector<2x1xf32>
    %cst_123 = arith.constant 3.200000e+01 : f32
    %413 = vector.broadcast %cst_123 : f32 to vector<2x1xf32>
    %414 = arith.divf %412, %413 : vector<2x1xf32>
    %415 = vector.broadcast %414 : vector<2x1xf32> to vector<2x32xf32>
    %416 = arith.subf %408, %415 : vector<2x32xf32>
    %417 = arith.mulf %416, %416 : vector<2x32xf32>
    %cst_124 = arith.constant dense<0.000000e+00> : vector<2xf32>
    %418 = vector.multi_reduction <add>, %417, %cst_124 [1] : vector<2x32xf32> to vector<2xf32>
    %419 = vector.shape_cast %418 : vector<2xf32> to vector<2x1xf32>
    %cst_125 = arith.constant 3.200000e+01 : f32
    %420 = vector.broadcast %cst_125 : f32 to vector<2x1xf32>
    %421 = arith.divf %419, %420 : vector<2x1xf32>
    %422 = vector.broadcast %414 : vector<2x1xf32> to vector<2x32xf32>
    %423 = arith.subf %408, %422 : vector<2x32xf32>
    %cst_126 = arith.constant 9.99999974E-6 : f32
    %424 = vector.broadcast %cst_126 : f32 to vector<2x1xf32>
    %425 = arith.addf %421, %424 : vector<2x1xf32>
    %426 = math.rsqrt %425 : vector<2x1xf32>
    %427 = vector.broadcast %426 : vector<2x1xf32> to vector<2x32xf32>
    %428 = arith.mulf %423, %427 : vector<2x32xf32>
    %429 = vector.broadcast %409 : vector<1x32xf32> to vector<2x32xf32>
    %430 = arith.mulf %428, %429 : vector<2x32xf32>
    %431 = vector.broadcast %410 : vector<1x32xf32> to vector<2x32xf32>
    %432 = arith.addf %430, %431 : vector<2x32xf32>
    %c720 = arith.constant 720 : index
    %c0_127 = arith.constant 0 : index
    %433 = vector.load %arg2[%c720, %c0_127] : memref<1472x128xbf16, #tpu.memory_space<vmem>>, vector<32x32xbf16>
    %434 = arith.truncf %432 : vector<2x32xf32> to vector<2x32xbf16>
    %cst_128 = arith.constant dense<0.000000e+00> : vector<2x32xf32>
    %435 = tpu.matmul %434, %433, %cst_128 {dimension_numbers = #tpu.dot_dimension_numbers<[1], [0], [0], [1], [0, 0, 1, 1], [], []>} : vector<2x32xbf16>, vector<32x32xbf16>, vector<2x32xf32> -> vector<2x32xf32>
    %c26 = arith.constant 26 : index
    %c0_129 = arith.constant 0 : index
    %436 = vector.load %arg3[%c26, %c0_129] : memref<56x128xf32, #tpu.memory_space<vmem>>, vector<1x32xf32>
    %437 = vector.broadcast %436 : vector<1x32xf32> to vector<2x32xf32>
    %438 = arith.addf %435, %437 : vector<2x32xf32>
    %c752 = arith.constant 752 : index
    %c0_130 = arith.constant 0 : index
    %439 = vector.load %arg2[%c752, %c0_130] : memref<1472x128xbf16, #tpu.memory_space<vmem>>, vector<32x32xbf16>
    %440 = arith.truncf %438 : vector<2x32xf32> to vector<2x32xbf16>
    %cst_131 = arith.constant dense<0.000000e+00> : vector<2x32xf32>
    %441 = tpu.matmul %440, %439, %cst_131 {dimension_numbers = #tpu.dot_dimension_numbers<[1], [0], [0], [1], [0, 0, 1, 1], [], []>} : vector<2x32xbf16>, vector<32x32xbf16>, vector<2x32xf32> -> vector<2x32xf32>
    %c27 = arith.constant 27 : index
    %c0_132 = arith.constant 0 : index
    %442 = vector.load %arg3[%c27, %c0_132] : memref<56x128xf32, #tpu.memory_space<vmem>>, vector<1x32xf32>
    %443 = vector.broadcast %442 : vector<1x32xf32> to vector<2x32xf32>
    %444 = arith.addf %441, %443 : vector<2x32xf32>
    %c816 = arith.constant 816 : index
    %c0_133 = arith.constant 0 : index
    %445 = vector.load %arg2[%c816, %c0_133] : memref<1472x128xbf16, #tpu.memory_space<vmem>>, vector<32x32xbf16>
    %446 = arith.truncf %401 : vector<32x32xf32> to vector<32x32xbf16>
    %cst_134 = arith.constant dense<0.000000e+00> : vector<32x32xf32>
    %447 = tpu.matmul %446, %445, %cst_134 {dimension_numbers = #tpu.dot_dimension_numbers<[1], [0], [0], [1], [0, 0, 1, 1], [], []>} : vector<32x32xbf16>, vector<32x32xbf16>, vector<32x32xf32> -> vector<32x32xf32>
    %c31 = arith.constant 31 : index
    %c0_135 = arith.constant 0 : index
    %448 = vector.load %arg3[%c31, %c0_135] : memref<56x128xf32, #tpu.memory_space<vmem>>, vector<1x32xf32>
    %449 = vector.broadcast %448 : vector<1x32xf32> to vector<32x32xf32>
    %450 = arith.addf %447, %449 : vector<32x32xf32>
    %451 = vector.shape_cast %450 : vector<32x32xf32> to vector<2x16x32xf32>
    %c848 = arith.constant 848 : index
    %c0_136 = arith.constant 0 : index
    %452 = vector.load %arg2[%c848, %c0_136] : memref<1472x128xbf16, #tpu.memory_space<vmem>>, vector<32x32xbf16>
    %453 = arith.truncf %401 : vector<32x32xf32> to vector<32x32xbf16>
    %cst_137 = arith.constant dense<0.000000e+00> : vector<32x32xf32>
    %454 = tpu.matmul %453, %452, %cst_137 {dimension_numbers = #tpu.dot_dimension_numbers<[1], [0], [0], [1], [0, 0, 1, 1], [], []>} : vector<32x32xbf16>, vector<32x32xbf16>, vector<32x32xf32> -> vector<32x32xf32>
    %c32 = arith.constant 32 : index
    %c0_138 = arith.constant 0 : index
    %455 = vector.load %arg3[%c32, %c0_138] : memref<56x128xf32, #tpu.memory_space<vmem>>, vector<1x32xf32>
    %456 = vector.broadcast %455 : vector<1x32xf32> to vector<32x32xf32>
    %457 = arith.addf %454, %456 : vector<32x32xf32>
    %458 = vector.shape_cast %457 : vector<32x32xf32> to vector<2x16x32xf32>
    %459 = vector.shape_cast %444 : vector<2x32xf32> to vector<2x1x32xf32>
    %460 = vector.broadcast %459 : vector<2x1x32xf32> to vector<2x8x32xf32>
    %461 = arith.addf %405, %460 : vector<2x8x32xf32>
    %c28 = arith.constant 28 : index
    %c0_139 = arith.constant 0 : index
    %462 = vector.load %arg3[%c28, %c0_139] : memref<56x128xf32, #tpu.memory_space<vmem>>, vector<1x32xf32>
    %c29 = arith.constant 29 : index
    %c0_140 = arith.constant 0 : index
    %463 = vector.load %arg3[%c29, %c0_140] : memref<56x128xf32, #tpu.memory_space<vmem>>, vector<1x32xf32>
    %cst_141 = arith.constant dense<0.000000e+00> : vector<2x8xf32>
    %464 = vector.multi_reduction <add>, %461, %cst_141 [2] : vector<2x8x32xf32> to vector<2x8xf32>
    %465 = vector.shape_cast %464 : vector<2x8xf32> to vector<2x8x1xf32>
    %cst_142 = arith.constant 3.200000e+01 : f32
    %466 = vector.broadcast %cst_142 : f32 to vector<2x8x1xf32>
    %467 = arith.divf %465, %466 : vector<2x8x1xf32>
    %468 = vector.broadcast %467 : vector<2x8x1xf32> to vector<2x8x32xf32>
    %469 = arith.subf %461, %468 : vector<2x8x32xf32>
    %470 = arith.mulf %469, %469 : vector<2x8x32xf32>
    %cst_143 = arith.constant dense<0.000000e+00> : vector<2x8xf32>
    %471 = vector.multi_reduction <add>, %470, %cst_143 [2] : vector<2x8x32xf32> to vector<2x8xf32>
    %472 = vector.shape_cast %471 : vector<2x8xf32> to vector<2x8x1xf32>
    %cst_144 = arith.constant 3.200000e+01 : f32
    %473 = vector.broadcast %cst_144 : f32 to vector<2x8x1xf32>
    %474 = arith.divf %472, %473 : vector<2x8x1xf32>
    %475 = vector.broadcast %467 : vector<2x8x1xf32> to vector<2x8x32xf32>
    %476 = arith.subf %461, %475 : vector<2x8x32xf32>
    %cst_145 = arith.constant 9.99999974E-6 : f32
    %477 = vector.broadcast %cst_145 : f32 to vector<2x8x1xf32>
    %478 = arith.addf %474, %477 : vector<2x8x1xf32>
    %479 = math.rsqrt %478 : vector<2x8x1xf32>
    %480 = vector.broadcast %479 : vector<2x8x1xf32> to vector<2x8x32xf32>
    %481 = arith.mulf %476, %480 : vector<2x8x32xf32>
    %482 = vector.shape_cast %462 : vector<1x32xf32> to vector<1x1x32xf32>
    %483 = vector.broadcast %482 : vector<1x1x32xf32> to vector<2x8x32xf32>
    %484 = arith.mulf %481, %483 : vector<2x8x32xf32>
    %485 = vector.shape_cast %463 : vector<1x32xf32> to vector<1x1x32xf32>
    %486 = vector.broadcast %485 : vector<1x1x32xf32> to vector<2x8x32xf32>
    %487 = arith.addf %484, %486 : vector<2x8x32xf32>
    %488 = vector.shape_cast %487 : vector<2x8x32xf32> to vector<16x32xf32>
    %c784 = arith.constant 784 : index
    %c0_146 = arith.constant 0 : index
    %489 = vector.load %arg2[%c784, %c0_146] : memref<1472x128xbf16, #tpu.memory_space<vmem>>, vector<32x32xbf16>
    %490 = arith.truncf %488 : vector<16x32xf32> to vector<16x32xbf16>
    %cst_147 = arith.constant dense<0.000000e+00> : vector<16x32xf32>
    %491 = tpu.matmul %490, %489, %cst_147 {dimension_numbers = #tpu.dot_dimension_numbers<[1], [0], [0], [1], [0, 0, 1, 1], [], []>} : vector<16x32xbf16>, vector<32x32xbf16>, vector<16x32xf32> -> vector<16x32xf32>
    %c30 = arith.constant 30 : index
    %c0_148 = arith.constant 0 : index
    %492 = vector.load %arg3[%c30, %c0_148] : memref<56x128xf32, #tpu.memory_space<vmem>>, vector<1x32xf32>
    %493 = vector.broadcast %492 : vector<1x32xf32> to vector<16x32xf32>
    %494 = arith.addf %491, %493 : vector<16x32xf32>
    %495 = vector.shape_cast %494 : vector<16x32xf32> to vector<2x8x32xf32>
    %c880 = arith.constant 880 : index
    %c0_149 = arith.constant 0 : index
    %496 = vector.load %arg2[%c880, %c0_149] : memref<1472x128xbf16, #tpu.memory_space<vmem>>, vector<32x32xbf16>
    %c33 = arith.constant 33 : index
    %c0_150 = arith.constant 0 : index
    %497 = vector.load %arg3[%c33, %c0_150] : memref<56x128xf32, #tpu.memory_space<vmem>>, vector<1x32xf32>
    %498 = vector.extract_strided_slice %495 {offsets = [0, 0, 0], sizes = [2, 8, 8], strides = [1, 1, 1]} : vector<2x8x32xf32> to vector<2x8x8xf32>
    %499 = arith.truncf %498 : vector<2x8x8xf32> to vector<2x8x8xbf16>
    %500 = vector.extract_strided_slice %451 {offsets = [0, 0, 0], sizes = [2, 16, 8], strides = [1, 1, 1]} : vector<2x16x32xf32> to vector<2x16x8xf32>
    %501 = arith.truncf %500 : vector<2x16x8xf32> to vector<2x16x8xbf16>
    "tpu.trace_start"() <{level = 10 : i32, message = "bqd,bkd->bqk"}> : () -> ()
    %cst_151 = arith.constant dense<0.000000e+00> : vector<2x8x16xf32>
    %502 = tpu.matmul %499, %501, %cst_151 {dimension_numbers = #tpu.dot_dimension_numbers<[2], [2], [1], [1], [0, 0, 0, 1, 1, 1], [0], [0]>} : vector<2x8x8xbf16>, vector<2x16x8xbf16>, vector<2x8x16xf32> -> vector<2x8x16xf32>
    "tpu.trace_stop"() : () -> ()
    %cst_152 = arith.constant dense<0xFF800000> : vector<2x8xf32>
    %503 = vector.multi_reduction <maximumf>, %502, %cst_152 [2] : vector<2x8x16xf32> to vector<2x8xf32>
    %504 = vector.shape_cast %503 : vector<2x8xf32> to vector<2x8x1xf32>
    %505 = vector.broadcast %504 : vector<2x8x1xf32> to vector<2x8x16xf32>
    %506 = arith.subf %502, %505 : vector<2x8x16xf32>
    %507 = math.exp %506 : vector<2x8x16xf32>
    %cst_153 = arith.constant dense<0.000000e+00> : vector<2x8xf32>
    %508 = vector.multi_reduction <add>, %507, %cst_153 [2] : vector<2x8x16xf32> to vector<2x8xf32>
    %509 = vector.shape_cast %508 : vector<2x8xf32> to vector<2x8x1xf32>
    %510 = tpu.reciprocal %509 {approx = true} : vector<2x8x1xf32> -> vector<2x8x1xf32>
    %511 = vector.broadcast %510 : vector<2x8x1xf32> to vector<2x8x16xf32>
    %512 = arith.mulf %507, %511 : vector<2x8x16xf32>
    %513 = arith.truncf %512 : vector<2x8x16xf32> to vector<2x8x16xbf16>
    %514 = vector.extract_strided_slice %458 {offsets = [0, 0, 0], sizes = [2, 16, 8], strides = [1, 1, 1]} : vector<2x16x32xf32> to vector<2x16x8xf32>
    %515 = arith.truncf %514 : vector<2x16x8xf32> to vector<2x16x8xbf16>
    "tpu.trace_start"() <{level = 10 : i32, message = "bqk,bkd->bqd"}> : () -> ()
    %cst_154 = arith.constant dense<0.000000e+00> : vector<2x8x8xf32>
    %516 = tpu.matmul %513, %515, %cst_154 {dimension_numbers = #tpu.dot_dimension_numbers<[2], [1], [1], [2], [0, 0, 0, 1, 1, 2], [0], [0]>} : vector<2x8x16xbf16>, vector<2x16x8xbf16>, vector<2x8x8xf32> -> vector<2x8x8xf32>
    "tpu.trace_stop"() : () -> ()
    %517 = vector.extract_strided_slice %495 {offsets = [0, 0, 8], sizes = [2, 8, 8], strides = [1, 1, 1]} : vector<2x8x32xf32> to vector<2x8x8xf32>
    %518 = arith.truncf %517 : vector<2x8x8xf32> to vector<2x8x8xbf16>
    %519 = vector.extract_strided_slice %451 {offsets = [0, 0, 8], sizes = [2, 16, 8], strides = [1, 1, 1]} : vector<2x16x32xf32> to vector<2x16x8xf32>
    %520 = arith.truncf %519 : vector<2x16x8xf32> to vector<2x16x8xbf16>
    "tpu.trace_start"() <{level = 10 : i32, message = "bqd,bkd->bqk"}> : () -> ()
    %cst_155 = arith.constant dense<0.000000e+00> : vector<2x8x16xf32>
    %521 = tpu.matmul %518, %520, %cst_155 {dimension_numbers = #tpu.dot_dimension_numbers<[2], [2], [1], [1], [0, 0, 0, 1, 1, 1], [0], [0]>} : vector<2x8x8xbf16>, vector<2x16x8xbf16>, vector<2x8x16xf32> -> vector<2x8x16xf32>
    "tpu.trace_stop"() : () -> ()
    %cst_156 = arith.constant dense<0xFF800000> : vector<2x8xf32>
    %522 = vector.multi_reduction <maximumf>, %521, %cst_156 [2] : vector<2x8x16xf32> to vector<2x8xf32>
    %523 = vector.shape_cast %522 : vector<2x8xf32> to vector<2x8x1xf32>
    %524 = vector.broadcast %523 : vector<2x8x1xf32> to vector<2x8x16xf32>
    %525 = arith.subf %521, %524 : vector<2x8x16xf32>
    %526 = math.exp %525 : vector<2x8x16xf32>
    %cst_157 = arith.constant dense<0.000000e+00> : vector<2x8xf32>
    %527 = vector.multi_reduction <add>, %526, %cst_157 [2] : vector<2x8x16xf32> to vector<2x8xf32>
    %528 = vector.shape_cast %527 : vector<2x8xf32> to vector<2x8x1xf32>
    %529 = tpu.reciprocal %528 {approx = true} : vector<2x8x1xf32> -> vector<2x8x1xf32>
    %530 = vector.broadcast %529 : vector<2x8x1xf32> to vector<2x8x16xf32>
    %531 = arith.mulf %526, %530 : vector<2x8x16xf32>
    %532 = arith.truncf %531 : vector<2x8x16xf32> to vector<2x8x16xbf16>
    %533 = vector.extract_strided_slice %458 {offsets = [0, 0, 8], sizes = [2, 16, 8], strides = [1, 1, 1]} : vector<2x16x32xf32> to vector<2x16x8xf32>
    %534 = arith.truncf %533 : vector<2x16x8xf32> to vector<2x16x8xbf16>
    "tpu.trace_start"() <{level = 10 : i32, message = "bqk,bkd->bqd"}> : () -> ()
    %cst_158 = arith.constant dense<0.000000e+00> : vector<2x8x8xf32>
    %535 = tpu.matmul %532, %534, %cst_158 {dimension_numbers = #tpu.dot_dimension_numbers<[2], [1], [1], [2], [0, 0, 0, 1, 1, 2], [0], [0]>} : vector<2x8x16xbf16>, vector<2x16x8xbf16>, vector<2x8x8xf32> -> vector<2x8x8xf32>
    "tpu.trace_stop"() : () -> ()
    %536 = vector.extract_strided_slice %495 {offsets = [0, 0, 16], sizes = [2, 8, 8], strides = [1, 1, 1]} : vector<2x8x32xf32> to vector<2x8x8xf32>
    %537 = arith.truncf %536 : vector<2x8x8xf32> to vector<2x8x8xbf16>
    %538 = vector.extract_strided_slice %451 {offsets = [0, 0, 16], sizes = [2, 16, 8], strides = [1, 1, 1]} : vector<2x16x32xf32> to vector<2x16x8xf32>
    %539 = arith.truncf %538 : vector<2x16x8xf32> to vector<2x16x8xbf16>
    "tpu.trace_start"() <{level = 10 : i32, message = "bqd,bkd->bqk"}> : () -> ()
    %cst_159 = arith.constant dense<0.000000e+00> : vector<2x8x16xf32>
    %540 = tpu.matmul %537, %539, %cst_159 {dimension_numbers = #tpu.dot_dimension_numbers<[2], [2], [1], [1], [0, 0, 0, 1, 1, 1], [0], [0]>} : vector<2x8x8xbf16>, vector<2x16x8xbf16>, vector<2x8x16xf32> -> vector<2x8x16xf32>
    "tpu.trace_stop"() : () -> ()
    %cst_160 = arith.constant dense<0xFF800000> : vector<2x8xf32>
    %541 = vector.multi_reduction <maximumf>, %540, %cst_160 [2] : vector<2x8x16xf32> to vector<2x8xf32>
    %542 = vector.shape_cast %541 : vector<2x8xf32> to vector<2x8x1xf32>
    %543 = vector.broadcast %542 : vector<2x8x1xf32> to vector<2x8x16xf32>
    %544 = arith.subf %540, %543 : vector<2x8x16xf32>
    %545 = math.exp %544 : vector<2x8x16xf32>
    %cst_161 = arith.constant dense<0.000000e+00> : vector<2x8xf32>
    %546 = vector.multi_reduction <add>, %545, %cst_161 [2] : vector<2x8x16xf32> to vector<2x8xf32>
    %547 = vector.shape_cast %546 : vector<2x8xf32> to vector<2x8x1xf32>
    %548 = tpu.reciprocal %547 {approx = true} : vector<2x8x1xf32> -> vector<2x8x1xf32>
    %549 = vector.broadcast %548 : vector<2x8x1xf32> to vector<2x8x16xf32>
    %550 = arith.mulf %545, %549 : vector<2x8x16xf32>
    %551 = arith.truncf %550 : vector<2x8x16xf32> to vector<2x8x16xbf16>
    %552 = vector.extract_strided_slice %458 {offsets = [0, 0, 16], sizes = [2, 16, 8], strides = [1, 1, 1]} : vector<2x16x32xf32> to vector<2x16x8xf32>
    %553 = arith.truncf %552 : vector<2x16x8xf32> to vector<2x16x8xbf16>
    "tpu.trace_start"() <{level = 10 : i32, message = "bqk,bkd->bqd"}> : () -> ()
    %cst_162 = arith.constant dense<0.000000e+00> : vector<2x8x8xf32>
    %554 = tpu.matmul %551, %553, %cst_162 {dimension_numbers = #tpu.dot_dimension_numbers<[2], [1], [1], [2], [0, 0, 0, 1, 1, 2], [0], [0]>} : vector<2x8x16xbf16>, vector<2x16x8xbf16>, vector<2x8x8xf32> -> vector<2x8x8xf32>
    "tpu.trace_stop"() : () -> ()
    %555 = vector.extract_strided_slice %495 {offsets = [0, 0, 24], sizes = [2, 8, 8], strides = [1, 1, 1]} : vector<2x8x32xf32> to vector<2x8x8xf32>
    %556 = arith.truncf %555 : vector<2x8x8xf32> to vector<2x8x8xbf16>
    %557 = vector.extract_strided_slice %451 {offsets = [0, 0, 24], sizes = [2, 16, 8], strides = [1, 1, 1]} : vector<2x16x32xf32> to vector<2x16x8xf32>
    %558 = arith.truncf %557 : vector<2x16x8xf32> to vector<2x16x8xbf16>
    "tpu.trace_start"() <{level = 10 : i32, message = "bqd,bkd->bqk"}> : () -> ()
    %cst_163 = arith.constant dense<0.000000e+00> : vector<2x8x16xf32>
    %559 = tpu.matmul %556, %558, %cst_163 {dimension_numbers = #tpu.dot_dimension_numbers<[2], [2], [1], [1], [0, 0, 0, 1, 1, 1], [0], [0]>} : vector<2x8x8xbf16>, vector<2x16x8xbf16>, vector<2x8x16xf32> -> vector<2x8x16xf32>
    "tpu.trace_stop"() : () -> ()
    %cst_164 = arith.constant dense<0xFF800000> : vector<2x8xf32>
    %560 = vector.multi_reduction <maximumf>, %559, %cst_164 [2] : vector<2x8x16xf32> to vector<2x8xf32>
    %561 = vector.shape_cast %560 : vector<2x8xf32> to vector<2x8x1xf32>
    %562 = vector.broadcast %561 : vector<2x8x1xf32> to vector<2x8x16xf32>
    %563 = arith.subf %559, %562 : vector<2x8x16xf32>
    %564 = math.exp %563 : vector<2x8x16xf32>
    %cst_165 = arith.constant dense<0.000000e+00> : vector<2x8xf32>
    %565 = vector.multi_reduction <add>, %564, %cst_165 [2] : vector<2x8x16xf32> to vector<2x8xf32>
    %566 = vector.shape_cast %565 : vector<2x8xf32> to vector<2x8x1xf32>
    %567 = tpu.reciprocal %566 {approx = true} : vector<2x8x1xf32> -> vector<2x8x1xf32>
    %568 = vector.broadcast %567 : vector<2x8x1xf32> to vector<2x8x16xf32>
    %569 = arith.mulf %564, %568 : vector<2x8x16xf32>
    %570 = arith.truncf %569 : vector<2x8x16xf32> to vector<2x8x16xbf16>
    %571 = vector.extract_strided_slice %458 {offsets = [0, 0, 24], sizes = [2, 16, 8], strides = [1, 1, 1]} : vector<2x16x32xf32> to vector<2x16x8xf32>
    %572 = arith.truncf %571 : vector<2x16x8xf32> to vector<2x16x8xbf16>
    "tpu.trace_start"() <{level = 10 : i32, message = "bqk,bkd->bqd"}> : () -> ()
    %cst_166 = arith.constant dense<0.000000e+00> : vector<2x8x8xf32>
    %573 = tpu.matmul %570, %572, %cst_166 {dimension_numbers = #tpu.dot_dimension_numbers<[2], [1], [1], [2], [0, 0, 0, 1, 1, 2], [0], [0]>} : vector<2x8x16xbf16>, vector<2x16x8xbf16>, vector<2x8x8xf32> -> vector<2x8x8xf32>
    "tpu.trace_stop"() : () -> ()
    %574 = tpu.concatenate %516, %535, %554, %573 in 2 : vector<2x8x8xf32>, vector<2x8x8xf32>, vector<2x8x8xf32>, vector<2x8x8xf32> -> vector<2x8x32xf32>
    %575 = vector.shape_cast %574 : vector<2x8x32xf32> to vector<16x32xf32>
    %576 = arith.truncf %575 : vector<16x32xf32> to vector<16x32xbf16>
    %cst_167 = arith.constant dense<0.000000e+00> : vector<16x32xf32>
    %577 = tpu.matmul %576, %496, %cst_167 {dimension_numbers = #tpu.dot_dimension_numbers<[1], [0], [0], [1], [0, 0, 1, 1], [], []>} : vector<16x32xbf16>, vector<32x32xbf16>, vector<16x32xf32> -> vector<16x32xf32>
    %578 = vector.broadcast %497 : vector<1x32xf32> to vector<16x32xf32>
    %579 = arith.addf %577, %578 : vector<16x32xf32>
    %580 = vector.shape_cast %579 : vector<16x32xf32> to vector<2x8x32xf32>
    %581 = arith.addf %461, %580 : vector<2x8x32xf32>
    %c34 = arith.constant 34 : index
    %c0_168 = arith.constant 0 : index
    %582 = vector.load %arg3[%c34, %c0_168] : memref<56x128xf32, #tpu.memory_space<vmem>>, vector<1x32xf32>
    %c35 = arith.constant 35 : index
    %c0_169 = arith.constant 0 : index
    %583 = vector.load %arg3[%c35, %c0_169] : memref<56x128xf32, #tpu.memory_space<vmem>>, vector<1x32xf32>
    %cst_170 = arith.constant dense<0.000000e+00> : vector<2x8xf32>
    %584 = vector.multi_reduction <add>, %581, %cst_170 [2] : vector<2x8x32xf32> to vector<2x8xf32>
    %585 = vector.shape_cast %584 : vector<2x8xf32> to vector<2x8x1xf32>
    %cst_171 = arith.constant 3.200000e+01 : f32
    %586 = vector.broadcast %cst_171 : f32 to vector<2x8x1xf32>
    %587 = arith.divf %585, %586 : vector<2x8x1xf32>
    %588 = vector.broadcast %587 : vector<2x8x1xf32> to vector<2x8x32xf32>
    %589 = arith.subf %581, %588 : vector<2x8x32xf32>
    %590 = arith.mulf %589, %589 : vector<2x8x32xf32>
    %cst_172 = arith.constant dense<0.000000e+00> : vector<2x8xf32>
    %591 = vector.multi_reduction <add>, %590, %cst_172 [2] : vector<2x8x32xf32> to vector<2x8xf32>
    %592 = vector.shape_cast %591 : vector<2x8xf32> to vector<2x8x1xf32>
    %cst_173 = arith.constant 3.200000e+01 : f32
    %593 = vector.broadcast %cst_173 : f32 to vector<2x8x1xf32>
    %594 = arith.divf %592, %593 : vector<2x8x1xf32>
    %595 = vector.broadcast %587 : vector<2x8x1xf32> to vector<2x8x32xf32>
    %596 = arith.subf %581, %595 : vector<2x8x32xf32>
    %cst_174 = arith.constant 9.99999974E-6 : f32
    %597 = vector.broadcast %cst_174 : f32 to vector<2x8x1xf32>
    %598 = arith.addf %594, %597 : vector<2x8x1xf32>
    %599 = math.rsqrt %598 : vector<2x8x1xf32>
    %600 = vector.broadcast %599 : vector<2x8x1xf32> to vector<2x8x32xf32>
    %601 = arith.mulf %596, %600 : vector<2x8x32xf32>
    %602 = vector.shape_cast %582 : vector<1x32xf32> to vector<1x1x32xf32>
    %603 = vector.broadcast %602 : vector<1x1x32xf32> to vector<2x8x32xf32>
    %604 = arith.mulf %601, %603 : vector<2x8x32xf32>
    %605 = vector.shape_cast %583 : vector<1x32xf32> to vector<1x1x32xf32>
    %606 = vector.broadcast %605 : vector<1x1x32xf32> to vector<2x8x32xf32>
    %607 = arith.addf %604, %606 : vector<2x8x32xf32>
    %608 = vector.shape_cast %607 : vector<2x8x32xf32> to vector<16x32xf32>
    %c912 = arith.constant 912 : index
    %c0_175 = arith.constant 0 : index
    %609 = vector.load %arg2[%c912, %c0_175] : memref<1472x128xbf16, #tpu.memory_space<vmem>>, vector<32x128xbf16>
    %610 = arith.truncf %608 : vector<16x32xf32> to vector<16x32xbf16>
    %cst_176 = arith.constant dense<0.000000e+00> : vector<16x128xf32>
    %611 = tpu.matmul %610, %609, %cst_176 {dimension_numbers = #tpu.dot_dimension_numbers<[1], [0], [0], [1], [0, 0, 1, 1], [], []>} : vector<16x32xbf16>, vector<32x128xbf16>, vector<16x128xf32> -> vector<16x128xf32>
    %c36 = arith.constant 36 : index
    %c0_177 = arith.constant 0 : index
    %612 = vector.load %arg3[%c36, %c0_177] : memref<56x128xf32, #tpu.memory_space<vmem>>, vector<1x128xf32>
    %613 = vector.broadcast %612 : vector<1x128xf32> to vector<16x128xf32>
    %614 = arith.addf %611, %613 : vector<16x128xf32>
    %cst_178 = arith.constant 5.000000e-01 : f32
    %615 = vector.broadcast %cst_178 : f32 to vector<16x128xf32>
    %616 = arith.mulf %615, %614 : vector<16x128xf32>
    %cst_179 = arith.constant 4.471500e-02 : f32
    %617 = vector.broadcast %cst_179 : f32 to vector<16x128xf32>
    %618 = arith.mulf %617, %614 : vector<16x128xf32>
    %619 = arith.mulf %618, %614 : vector<16x128xf32>
    %620 = arith.mulf %619, %614 : vector<16x128xf32>
    %621 = arith.addf %614, %620 : vector<16x128xf32>
    %cst_180 = arith.constant 0.797884583 : f32
    %622 = vector.broadcast %cst_180 : f32 to vector<16x128xf32>
    %623 = arith.mulf %622, %621 : vector<16x128xf32>
    %624 = math.tanh %623 : vector<16x128xf32>
    %cst_181 = arith.constant 1.000000e+00 : f32
    %625 = vector.broadcast %cst_181 : f32 to vector<16x128xf32>
    %626 = arith.addf %625, %624 : vector<16x128xf32>
    %627 = arith.mulf %616, %626 : vector<16x128xf32>
    %c944 = arith.constant 944 : index
    %c0_182 = arith.constant 0 : index
    %628 = vector.load %arg2[%c944, %c0_182] : memref<1472x128xbf16, #tpu.memory_space<vmem>>, vector<128x32xbf16>
    %629 = arith.truncf %627 : vector<16x128xf32> to vector<16x128xbf16>
    %cst_183 = arith.constant dense<0.000000e+00> : vector<16x32xf32>
    %630 = tpu.matmul %629, %628, %cst_183 {dimension_numbers = #tpu.dot_dimension_numbers<[1], [0], [0], [1], [0, 0, 1, 1], [], []>} : vector<16x128xbf16>, vector<128x32xbf16>, vector<16x32xf32> -> vector<16x32xf32>
    %c37 = arith.constant 37 : index
    %c0_184 = arith.constant 0 : index
    %631 = vector.load %arg3[%c37, %c0_184] : memref<56x128xf32, #tpu.memory_space<vmem>>, vector<1x32xf32>
    %632 = vector.broadcast %631 : vector<1x32xf32> to vector<16x32xf32>
    %633 = arith.addf %630, %632 : vector<16x32xf32>
    %634 = vector.shape_cast %633 : vector<16x32xf32> to vector<2x8x32xf32>
    %635 = arith.addf %581, %634 : vector<2x8x32xf32>
    %636 = arith.addf %408, %444 : vector<2x32xf32>
    %c28_185 = arith.constant 28 : index
    %c0_186 = arith.constant 0 : index
    %637 = vector.load %arg3[%c28_185, %c0_186] : memref<56x128xf32, #tpu.memory_space<vmem>>, vector<1x32xf32>
    %c29_187 = arith.constant 29 : index
    %c0_188 = arith.constant 0 : index
    %638 = vector.load %arg3[%c29_187, %c0_188] : memref<56x128xf32, #tpu.memory_space<vmem>>, vector<1x32xf32>
    %cst_189 = arith.constant dense<0.000000e+00> : vector<2xf32>
    %639 = vector.multi_reduction <add>, %636, %cst_189 [1] : vector<2x32xf32> to vector<2xf32>
    %640 = vector.shape_cast %639 : vector<2xf32> to vector<2x1xf32>
    %cst_190 = arith.constant 3.200000e+01 : f32
    %641 = vector.broadcast %cst_190 : f32 to vector<2x1xf32>
    %642 = arith.divf %640, %641 : vector<2x1xf32>
    %643 = vector.broadcast %642 : vector<2x1xf32> to vector<2x32xf32>
    %644 = arith.subf %636, %643 : vector<2x32xf32>
    %645 = arith.mulf %644, %644 : vector<2x32xf32>
    %cst_191 = arith.constant dense<0.000000e+00> : vector<2xf32>
    %646 = vector.multi_reduction <add>, %645, %cst_191 [1] : vector<2x32xf32> to vector<2xf32>
    %647 = vector.shape_cast %646 : vector<2xf32> to vector<2x1xf32>
    %cst_192 = arith.constant 3.200000e+01 : f32
    %648 = vector.broadcast %cst_192 : f32 to vector<2x1xf32>
    %649 = arith.divf %647, %648 : vector<2x1xf32>
    %650 = vector.broadcast %642 : vector<2x1xf32> to vector<2x32xf32>
    %651 = arith.subf %636, %650 : vector<2x32xf32>
    %cst_193 = arith.constant 9.99999974E-6 : f32
    %652 = vector.broadcast %cst_193 : f32 to vector<2x1xf32>
    %653 = arith.addf %649, %652 : vector<2x1xf32>
    %654 = math.rsqrt %653 : vector<2x1xf32>
    %655 = vector.broadcast %654 : vector<2x1xf32> to vector<2x32xf32>
    %656 = arith.mulf %651, %655 : vector<2x32xf32>
    %657 = vector.broadcast %637 : vector<1x32xf32> to vector<2x32xf32>
    %658 = arith.mulf %656, %657 : vector<2x32xf32>
    %659 = vector.broadcast %638 : vector<1x32xf32> to vector<2x32xf32>
    %660 = arith.addf %658, %659 : vector<2x32xf32>
    %c784_194 = arith.constant 784 : index
    %c0_195 = arith.constant 0 : index
    %661 = vector.load %arg2[%c784_194, %c0_195] : memref<1472x128xbf16, #tpu.memory_space<vmem>>, vector<32x32xbf16>
    %662 = arith.truncf %660 : vector<2x32xf32> to vector<2x32xbf16>
    %cst_196 = arith.constant dense<0.000000e+00> : vector<2x32xf32>
    %663 = tpu.matmul %662, %661, %cst_196 {dimension_numbers = #tpu.dot_dimension_numbers<[1], [0], [0], [1], [0, 0, 1, 1], [], []>} : vector<2x32xbf16>, vector<32x32xbf16>, vector<2x32xf32> -> vector<2x32xf32>
    %c30_197 = arith.constant 30 : index
    %c0_198 = arith.constant 0 : index
    %664 = vector.load %arg3[%c30_197, %c0_198] : memref<56x128xf32, #tpu.memory_space<vmem>>, vector<1x32xf32>
    %665 = vector.broadcast %664 : vector<1x32xf32> to vector<2x32xf32>
    %666 = arith.addf %663, %665 : vector<2x32xf32>
    %c880_199 = arith.constant 880 : index
    %c0_200 = arith.constant 0 : index
    %667 = vector.load %arg2[%c880_199, %c0_200] : memref<1472x128xbf16, #tpu.memory_space<vmem>>, vector<32x32xbf16>
    %c33_201 = arith.constant 33 : index
    %c0_202 = arith.constant 0 : index
    %668 = vector.load %arg3[%c33_201, %c0_202] : memref<56x128xf32, #tpu.memory_space<vmem>>, vector<1x32xf32>
    %669 = vector.shape_cast %666 : vector<2x32xf32> to vector<2x1x32xf32>
    %670 = vector.broadcast %669 : vector<2x1x32xf32> to vector<2x16x32xf32>
    %671 = arith.mulf %670, %451 : vector<2x16x32xf32>
    %672 = vector.extract_strided_slice %671 {offsets = [0, 0, 0], sizes = [2, 16, 8], strides = [1, 1, 1]} : vector<2x16x32xf32> to vector<2x16x8xf32>
    %cst_203 = arith.constant dense<0.000000e+00> : vector<2x16xf32>
    %673 = vector.multi_reduction <add>, %672, %cst_203 [2] : vector<2x16x8xf32> to vector<2x16xf32>
    %cst_204 = arith.constant dense<0xFF800000> : vector<2xf32>
    %674 = vector.multi_reduction <maximumf>, %673, %cst_204 [1] : vector<2x16xf32> to vector<2xf32>
    %675 = vector.shape_cast %674 : vector<2xf32> to vector<2x1xf32>
    %676 = vector.broadcast %675 : vector<2x1xf32> to vector<2x16xf32>
    %677 = arith.subf %673, %676 : vector<2x16xf32>
    %678 = math.exp %677 : vector<2x16xf32>
    %cst_205 = arith.constant dense<0.000000e+00> : vector<2xf32>
    %679 = vector.multi_reduction <add>, %678, %cst_205 [1] : vector<2x16xf32> to vector<2xf32>
    %680 = vector.shape_cast %679 : vector<2xf32> to vector<2x1xf32>
    %681 = tpu.reciprocal %680 {approx = true} : vector<2x1xf32> -> vector<2x1xf32>
    %682 = vector.broadcast %681 : vector<2x1xf32> to vector<2x16xf32>
    %683 = arith.mulf %678, %682 : vector<2x16xf32>
    %684 = vector.shape_cast %683 : vector<2x16xf32> to vector<2x16x1xf32>
    %685 = vector.broadcast %684 : vector<2x16x1xf32> to vector<2x16x8xf32>
    %686 = vector.extract_strided_slice %458 {offsets = [0, 0, 0], sizes = [2, 16, 8], strides = [1, 1, 1]} : vector<2x16x32xf32> to vector<2x16x8xf32>
    %687 = arith.mulf %685, %686 : vector<2x16x8xf32>
    %cst_206 = arith.constant dense<0.000000e+00> : vector<2x8xf32>
    %688 = vector.multi_reduction <add>, %687, %cst_206 [1] : vector<2x16x8xf32> to vector<2x8xf32>
    %689 = vector.extract_strided_slice %671 {offsets = [0, 0, 8], sizes = [2, 16, 8], strides = [1, 1, 1]} : vector<2x16x32xf32> to vector<2x16x8xf32>
    %cst_207 = arith.constant dense<0.000000e+00> : vector<2x16xf32>
    %690 = vector.multi_reduction <add>, %689, %cst_207 [2] : vector<2x16x8xf32> to vector<2x16xf32>
    %cst_208 = arith.constant dense<0xFF800000> : vector<2xf32>
    %691 = vector.multi_reduction <maximumf>, %690, %cst_208 [1] : vector<2x16xf32> to vector<2xf32>
    %692 = vector.shape_cast %691 : vector<2xf32> to vector<2x1xf32>
    %693 = vector.broadcast %692 : vector<2x1xf32> to vector<2x16xf32>
    %694 = arith.subf %690, %693 : vector<2x16xf32>
    %695 = math.exp %694 : vector<2x16xf32>
    %cst_209 = arith.constant dense<0.000000e+00> : vector<2xf32>
    %696 = vector.multi_reduction <add>, %695, %cst_209 [1] : vector<2x16xf32> to vector<2xf32>
    %697 = vector.shape_cast %696 : vector<2xf32> to vector<2x1xf32>
    %698 = tpu.reciprocal %697 {approx = true} : vector<2x1xf32> -> vector<2x1xf32>
    %699 = vector.broadcast %698 : vector<2x1xf32> to vector<2x16xf32>
    %700 = arith.mulf %695, %699 : vector<2x16xf32>
    %701 = vector.shape_cast %700 : vector<2x16xf32> to vector<2x16x1xf32>
    %702 = vector.broadcast %701 : vector<2x16x1xf32> to vector<2x16x8xf32>
    %703 = vector.extract_strided_slice %458 {offsets = [0, 0, 8], sizes = [2, 16, 8], strides = [1, 1, 1]} : vector<2x16x32xf32> to vector<2x16x8xf32>
    %704 = arith.mulf %702, %703 : vector<2x16x8xf32>
    %cst_210 = arith.constant dense<0.000000e+00> : vector<2x8xf32>
    %705 = vector.multi_reduction <add>, %704, %cst_210 [1] : vector<2x16x8xf32> to vector<2x8xf32>
    %706 = vector.extract_strided_slice %671 {offsets = [0, 0, 16], sizes = [2, 16, 8], strides = [1, 1, 1]} : vector<2x16x32xf32> to vector<2x16x8xf32>
    %cst_211 = arith.constant dense<0.000000e+00> : vector<2x16xf32>
    %707 = vector.multi_reduction <add>, %706, %cst_211 [2] : vector<2x16x8xf32> to vector<2x16xf32>
    %cst_212 = arith.constant dense<0xFF800000> : vector<2xf32>
    %708 = vector.multi_reduction <maximumf>, %707, %cst_212 [1] : vector<2x16xf32> to vector<2xf32>
    %709 = vector.shape_cast %708 : vector<2xf32> to vector<2x1xf32>
    %710 = vector.broadcast %709 : vector<2x1xf32> to vector<2x16xf32>
    %711 = arith.subf %707, %710 : vector<2x16xf32>
    %712 = math.exp %711 : vector<2x16xf32>
    %cst_213 = arith.constant dense<0.000000e+00> : vector<2xf32>
    %713 = vector.multi_reduction <add>, %712, %cst_213 [1] : vector<2x16xf32> to vector<2xf32>
    %714 = vector.shape_cast %713 : vector<2xf32> to vector<2x1xf32>
    %715 = tpu.reciprocal %714 {approx = true} : vector<2x1xf32> -> vector<2x1xf32>
    %716 = vector.broadcast %715 : vector<2x1xf32> to vector<2x16xf32>
    %717 = arith.mulf %712, %716 : vector<2x16xf32>
    %718 = vector.shape_cast %717 : vector<2x16xf32> to vector<2x16x1xf32>
    %719 = vector.broadcast %718 : vector<2x16x1xf32> to vector<2x16x8xf32>
    %720 = vector.extract_strided_slice %458 {offsets = [0, 0, 16], sizes = [2, 16, 8], strides = [1, 1, 1]} : vector<2x16x32xf32> to vector<2x16x8xf32>
    %721 = arith.mulf %719, %720 : vector<2x16x8xf32>
    %cst_214 = arith.constant dense<0.000000e+00> : vector<2x8xf32>
    %722 = vector.multi_reduction <add>, %721, %cst_214 [1] : vector<2x16x8xf32> to vector<2x8xf32>
    %723 = vector.extract_strided_slice %671 {offsets = [0, 0, 24], sizes = [2, 16, 8], strides = [1, 1, 1]} : vector<2x16x32xf32> to vector<2x16x8xf32>
    %cst_215 = arith.constant dense<0.000000e+00> : vector<2x16xf32>
    %724 = vector.multi_reduction <add>, %723, %cst_215 [2] : vector<2x16x8xf32> to vector<2x16xf32>
    %cst_216 = arith.constant dense<0xFF800000> : vector<2xf32>
    %725 = vector.multi_reduction <maximumf>, %724, %cst_216 [1] : vector<2x16xf32> to vector<2xf32>
    %726 = vector.shape_cast %725 : vector<2xf32> to vector<2x1xf32>
    %727 = vector.broadcast %726 : vector<2x1xf32> to vector<2x16xf32>
    %728 = arith.subf %724, %727 : vector<2x16xf32>
    %729 = math.exp %728 : vector<2x16xf32>
    %cst_217 = arith.constant dense<0.000000e+00> : vector<2xf32>
    %730 = vector.multi_reduction <add>, %729, %cst_217 [1] : vector<2x16xf32> to vector<2xf32>
    %731 = vector.shape_cast %730 : vector<2xf32> to vector<2x1xf32>
    %732 = tpu.reciprocal %731 {approx = true} : vector<2x1xf32> -> vector<2x1xf32>
    %733 = vector.broadcast %732 : vector<2x1xf32> to vector<2x16xf32>
    %734 = arith.mulf %729, %733 : vector<2x16xf32>
    %735 = vector.shape_cast %734 : vector<2x16xf32> to vector<2x16x1xf32>
    %736 = vector.broadcast %735 : vector<2x16x1xf32> to vector<2x16x8xf32>
    %737 = vector.extract_strided_slice %458 {offsets = [0, 0, 24], sizes = [2, 16, 8], strides = [1, 1, 1]} : vector<2x16x32xf32> to vector<2x16x8xf32>
    %738 = arith.mulf %736, %737 : vector<2x16x8xf32>
    %cst_218 = arith.constant dense<0.000000e+00> : vector<2x8xf32>
    %739 = vector.multi_reduction <add>, %738, %cst_218 [1] : vector<2x16x8xf32> to vector<2x8xf32>
    %740 = tpu.concatenate %688, %705, %722, %739 in 1 : vector<2x8xf32>, vector<2x8xf32>, vector<2x8xf32>, vector<2x8xf32> -> vector<2x32xf32>
    %741 = arith.truncf %740 : vector<2x32xf32> to vector<2x32xbf16>
    %cst_219 = arith.constant dense<0.000000e+00> : vector<2x32xf32>
    %742 = tpu.matmul %741, %667, %cst_219 {dimension_numbers = #tpu.dot_dimension_numbers<[1], [0], [0], [1], [0, 0, 1, 1], [], []>} : vector<2x32xbf16>, vector<32x32xbf16>, vector<2x32xf32> -> vector<2x32xf32>
    %743 = vector.broadcast %668 : vector<1x32xf32> to vector<2x32xf32>
    %744 = arith.addf %742, %743 : vector<2x32xf32>
    %745 = arith.addf %636, %744 : vector<2x32xf32>
    %c34_220 = arith.constant 34 : index
    %c0_221 = arith.constant 0 : index
    %746 = vector.load %arg3[%c34_220, %c0_221] : memref<56x128xf32, #tpu.memory_space<vmem>>, vector<1x32xf32>
    %c35_222 = arith.constant 35 : index
    %c0_223 = arith.constant 0 : index
    %747 = vector.load %arg3[%c35_222, %c0_223] : memref<56x128xf32, #tpu.memory_space<vmem>>, vector<1x32xf32>
    %cst_224 = arith.constant dense<0.000000e+00> : vector<2xf32>
    %748 = vector.multi_reduction <add>, %745, %cst_224 [1] : vector<2x32xf32> to vector<2xf32>
    %749 = vector.shape_cast %748 : vector<2xf32> to vector<2x1xf32>
    %cst_225 = arith.constant 3.200000e+01 : f32
    %750 = vector.broadcast %cst_225 : f32 to vector<2x1xf32>
    %751 = arith.divf %749, %750 : vector<2x1xf32>
    %752 = vector.broadcast %751 : vector<2x1xf32> to vector<2x32xf32>
    %753 = arith.subf %745, %752 : vector<2x32xf32>
    %754 = arith.mulf %753, %753 : vector<2x32xf32>
    %cst_226 = arith.constant dense<0.000000e+00> : vector<2xf32>
    %755 = vector.multi_reduction <add>, %754, %cst_226 [1] : vector<2x32xf32> to vector<2xf32>
    %756 = vector.shape_cast %755 : vector<2xf32> to vector<2x1xf32>
    %cst_227 = arith.constant 3.200000e+01 : f32
    %757 = vector.broadcast %cst_227 : f32 to vector<2x1xf32>
    %758 = arith.divf %756, %757 : vector<2x1xf32>
    %759 = vector.broadcast %751 : vector<2x1xf32> to vector<2x32xf32>
    %760 = arith.subf %745, %759 : vector<2x32xf32>
    %cst_228 = arith.constant 9.99999974E-6 : f32
    %761 = vector.broadcast %cst_228 : f32 to vector<2x1xf32>
    %762 = arith.addf %758, %761 : vector<2x1xf32>
    %763 = math.rsqrt %762 : vector<2x1xf32>
    %764 = vector.broadcast %763 : vector<2x1xf32> to vector<2x32xf32>
    %765 = arith.mulf %760, %764 : vector<2x32xf32>
    %766 = vector.broadcast %746 : vector<1x32xf32> to vector<2x32xf32>
    %767 = arith.mulf %765, %766 : vector<2x32xf32>
    %768 = vector.broadcast %747 : vector<1x32xf32> to vector<2x32xf32>
    %769 = arith.addf %767, %768 : vector<2x32xf32>
    %c912_229 = arith.constant 912 : index
    %c0_230 = arith.constant 0 : index
    %770 = vector.load %arg2[%c912_229, %c0_230] : memref<1472x128xbf16, #tpu.memory_space<vmem>>, vector<32x128xbf16>
    %771 = arith.truncf %769 : vector<2x32xf32> to vector<2x32xbf16>
    %cst_231 = arith.constant dense<0.000000e+00> : vector<2x128xf32>
    %772 = tpu.matmul %771, %770, %cst_231 {dimension_numbers = #tpu.dot_dimension_numbers<[1], [0], [0], [1], [0, 0, 1, 1], [], []>} : vector<2x32xbf16>, vector<32x128xbf16>, vector<2x128xf32> -> vector<2x128xf32>
    %c36_232 = arith.constant 36 : index
    %c0_233 = arith.constant 0 : index
    %773 = vector.load %arg3[%c36_232, %c0_233] : memref<56x128xf32, #tpu.memory_space<vmem>>, vector<1x128xf32>
    %774 = vector.broadcast %773 : vector<1x128xf32> to vector<2x128xf32>
    %775 = arith.addf %772, %774 : vector<2x128xf32>
    %cst_234 = arith.constant 5.000000e-01 : f32
    %776 = vector.broadcast %cst_234 : f32 to vector<2x128xf32>
    %777 = arith.mulf %776, %775 : vector<2x128xf32>
    %cst_235 = arith.constant 4.471500e-02 : f32
    %778 = vector.broadcast %cst_235 : f32 to vector<2x128xf32>
    %779 = arith.mulf %778, %775 : vector<2x128xf32>
    %780 = arith.mulf %779, %775 : vector<2x128xf32>
    %781 = arith.mulf %780, %775 : vector<2x128xf32>
    %782 = arith.addf %775, %781 : vector<2x128xf32>
    %cst_236 = arith.constant 0.797884583 : f32
    %783 = vector.broadcast %cst_236 : f32 to vector<2x128xf32>
    %784 = arith.mulf %783, %782 : vector<2x128xf32>
    %785 = math.tanh %784 : vector<2x128xf32>
    %cst_237 = arith.constant 1.000000e+00 : f32
    %786 = vector.broadcast %cst_237 : f32 to vector<2x128xf32>
    %787 = arith.addf %786, %785 : vector<2x128xf32>
    %788 = arith.mulf %777, %787 : vector<2x128xf32>
    %c944_238 = arith.constant 944 : index
    %c0_239 = arith.constant 0 : index
    %789 = vector.load %arg2[%c944_238, %c0_239] : memref<1472x128xbf16, #tpu.memory_space<vmem>>, vector<128x32xbf16>
    %790 = arith.truncf %788 : vector<2x128xf32> to vector<2x128xbf16>
    %cst_240 = arith.constant dense<0.000000e+00> : vector<2x32xf32>
    %791 = tpu.matmul %790, %789, %cst_240 {dimension_numbers = #tpu.dot_dimension_numbers<[1], [0], [0], [1], [0, 0, 1, 1], [], []>} : vector<2x128xbf16>, vector<128x32xbf16>, vector<2x32xf32> -> vector<2x32xf32>
    %792 = arith.addf %745, %791 : vector<2x32xf32>
    %c37_241 = arith.constant 37 : index
    %c0_242 = arith.constant 0 : index
    %793 = vector.load %arg3[%c37_241, %c0_242] : memref<56x128xf32, #tpu.memory_space<vmem>>, vector<1x32xf32>
    %794 = vector.broadcast %793 : vector<1x32xf32> to vector<2x32xf32>
    %795 = arith.addf %792, %794 : vector<2x32xf32>
    %c38 = arith.constant 38 : index
    %c0_243 = arith.constant 0 : index
    %796 = vector.load %arg3[%c38, %c0_243] : memref<56x128xf32, #tpu.memory_space<vmem>>, vector<1x32xf32>
    %c39 = arith.constant 39 : index
    %c0_244 = arith.constant 0 : index
    %797 = vector.load %arg3[%c39, %c0_244] : memref<56x128xf32, #tpu.memory_space<vmem>>, vector<1x32xf32>
    %cst_245 = arith.constant dense<0.000000e+00> : vector<2xf32>
    %798 = vector.multi_reduction <add>, %795, %cst_245 [1] : vector<2x32xf32> to vector<2xf32>
    %799 = vector.shape_cast %798 : vector<2xf32> to vector<2x1xf32>
    %cst_246 = arith.constant 3.200000e+01 : f32
    %800 = vector.broadcast %cst_246 : f32 to vector<2x1xf32>
    %801 = arith.divf %799, %800 : vector<2x1xf32>
    %802 = vector.broadcast %801 : vector<2x1xf32> to vector<2x32xf32>
    %803 = arith.subf %795, %802 : vector<2x32xf32>
    %804 = arith.mulf %803, %803 : vector<2x32xf32>
    %cst_247 = arith.constant dense<0.000000e+00> : vector<2xf32>
    %805 = vector.multi_reduction <add>, %804, %cst_247 [1] : vector<2x32xf32> to vector<2xf32>
    %806 = vector.shape_cast %805 : vector<2xf32> to vector<2x1xf32>
    %cst_248 = arith.constant 3.200000e+01 : f32
    %807 = vector.broadcast %cst_248 : f32 to vector<2x1xf32>
    %808 = arith.divf %806, %807 : vector<2x1xf32>
    %809 = vector.broadcast %801 : vector<2x1xf32> to vector<2x32xf32>
    %810 = arith.subf %795, %809 : vector<2x32xf32>
    %cst_249 = arith.constant 9.99999974E-6 : f32
    %811 = vector.broadcast %cst_249 : f32 to vector<2x1xf32>
    %812 = arith.addf %808, %811 : vector<2x1xf32>
    %813 = math.rsqrt %812 : vector<2x1xf32>
    %814 = vector.broadcast %813 : vector<2x1xf32> to vector<2x32xf32>
    %815 = arith.mulf %810, %814 : vector<2x32xf32>
    %816 = vector.broadcast %796 : vector<1x32xf32> to vector<2x32xf32>
    %817 = arith.mulf %815, %816 : vector<2x32xf32>
    %818 = vector.broadcast %797 : vector<1x32xf32> to vector<2x32xf32>
    %819 = arith.addf %817, %818 : vector<2x32xf32>
    %c1072 = arith.constant 1072 : index
    %c0_250 = arith.constant 0 : index
    %820 = vector.load %arg2[%c1072, %c0_250] : memref<1472x128xbf16, #tpu.memory_space<vmem>>, vector<32x32xbf16>
    %821 = arith.truncf %819 : vector<2x32xf32> to vector<2x32xbf16>
    %cst_251 = arith.constant dense<0.000000e+00> : vector<2x32xf32>
    %822 = tpu.matmul %821, %820, %cst_251 {dimension_numbers = #tpu.dot_dimension_numbers<[1], [0], [0], [1], [0, 0, 1, 1], [], []>} : vector<2x32xbf16>, vector<32x32xbf16>, vector<2x32xf32> -> vector<2x32xf32>
    %c40 = arith.constant 40 : index
    %c0_252 = arith.constant 0 : index
    %823 = vector.load %arg3[%c40, %c0_252] : memref<56x128xf32, #tpu.memory_space<vmem>>, vector<1x32xf32>
    %824 = vector.broadcast %823 : vector<1x32xf32> to vector<2x32xf32>
    %825 = arith.addf %822, %824 : vector<2x32xf32>
    %c1104 = arith.constant 1104 : index
    %c0_253 = arith.constant 0 : index
    %826 = vector.load %arg2[%c1104, %c0_253] : memref<1472x128xbf16, #tpu.memory_space<vmem>>, vector<32x32xbf16>
    %827 = arith.truncf %825 : vector<2x32xf32> to vector<2x32xbf16>
    %cst_254 = arith.constant dense<0.000000e+00> : vector<2x32xf32>
    %828 = tpu.matmul %827, %826, %cst_254 {dimension_numbers = #tpu.dot_dimension_numbers<[1], [0], [0], [1], [0, 0, 1, 1], [], []>} : vector<2x32xbf16>, vector<32x32xbf16>, vector<2x32xf32> -> vector<2x32xf32>
    %c41 = arith.constant 41 : index
    %c0_255 = arith.constant 0 : index
    %829 = vector.load %arg3[%c41, %c0_255] : memref<56x128xf32, #tpu.memory_space<vmem>>, vector<1x32xf32>
    %830 = vector.broadcast %829 : vector<1x32xf32> to vector<2x32xf32>
    %831 = arith.addf %828, %830 : vector<2x32xf32>
    %c1168 = arith.constant 1168 : index
    %c0_256 = arith.constant 0 : index
    %832 = vector.load %arg2[%c1168, %c0_256] : memref<1472x128xbf16, #tpu.memory_space<vmem>>, vector<32x32xbf16>
    %833 = arith.truncf %401 : vector<32x32xf32> to vector<32x32xbf16>
    %cst_257 = arith.constant dense<0.000000e+00> : vector<32x32xf32>
    %834 = tpu.matmul %833, %832, %cst_257 {dimension_numbers = #tpu.dot_dimension_numbers<[1], [0], [0], [1], [0, 0, 1, 1], [], []>} : vector<32x32xbf16>, vector<32x32xbf16>, vector<32x32xf32> -> vector<32x32xf32>
    %c45 = arith.constant 45 : index
    %c0_258 = arith.constant 0 : index
    %835 = vector.load %arg3[%c45, %c0_258] : memref<56x128xf32, #tpu.memory_space<vmem>>, vector<1x32xf32>
    %836 = vector.broadcast %835 : vector<1x32xf32> to vector<32x32xf32>
    %837 = arith.addf %834, %836 : vector<32x32xf32>
    %838 = vector.shape_cast %837 : vector<32x32xf32> to vector<2x16x32xf32>
    %c1200 = arith.constant 1200 : index
    %c0_259 = arith.constant 0 : index
    %839 = vector.load %arg2[%c1200, %c0_259] : memref<1472x128xbf16, #tpu.memory_space<vmem>>, vector<32x32xbf16>
    %840 = arith.truncf %401 : vector<32x32xf32> to vector<32x32xbf16>
    %cst_260 = arith.constant dense<0.000000e+00> : vector<32x32xf32>
    %841 = tpu.matmul %840, %839, %cst_260 {dimension_numbers = #tpu.dot_dimension_numbers<[1], [0], [0], [1], [0, 0, 1, 1], [], []>} : vector<32x32xbf16>, vector<32x32xbf16>, vector<32x32xf32> -> vector<32x32xf32>
    %c46 = arith.constant 46 : index
    %c0_261 = arith.constant 0 : index
    %842 = vector.load %arg3[%c46, %c0_261] : memref<56x128xf32, #tpu.memory_space<vmem>>, vector<1x32xf32>
    %843 = vector.broadcast %842 : vector<1x32xf32> to vector<32x32xf32>
    %844 = arith.addf %841, %843 : vector<32x32xf32>
    %845 = vector.shape_cast %844 : vector<32x32xf32> to vector<2x16x32xf32>
    %846 = vector.shape_cast %831 : vector<2x32xf32> to vector<2x1x32xf32>
    %847 = vector.broadcast %846 : vector<2x1x32xf32> to vector<2x8x32xf32>
    %848 = arith.addf %635, %847 : vector<2x8x32xf32>
    %c42 = arith.constant 42 : index
    %c0_262 = arith.constant 0 : index
    %849 = vector.load %arg3[%c42, %c0_262] : memref<56x128xf32, #tpu.memory_space<vmem>>, vector<1x32xf32>
    %c43 = arith.constant 43 : index
    %c0_263 = arith.constant 0 : index
    %850 = vector.load %arg3[%c43, %c0_263] : memref<56x128xf32, #tpu.memory_space<vmem>>, vector<1x32xf32>
    %cst_264 = arith.constant dense<0.000000e+00> : vector<2x8xf32>
    %851 = vector.multi_reduction <add>, %848, %cst_264 [2] : vector<2x8x32xf32> to vector<2x8xf32>
    %852 = vector.shape_cast %851 : vector<2x8xf32> to vector<2x8x1xf32>
    %cst_265 = arith.constant 3.200000e+01 : f32
    %853 = vector.broadcast %cst_265 : f32 to vector<2x8x1xf32>
    %854 = arith.divf %852, %853 : vector<2x8x1xf32>
    %855 = vector.broadcast %854 : vector<2x8x1xf32> to vector<2x8x32xf32>
    %856 = arith.subf %848, %855 : vector<2x8x32xf32>
    %857 = arith.mulf %856, %856 : vector<2x8x32xf32>
    %cst_266 = arith.constant dense<0.000000e+00> : vector<2x8xf32>
    %858 = vector.multi_reduction <add>, %857, %cst_266 [2] : vector<2x8x32xf32> to vector<2x8xf32>
    %859 = vector.shape_cast %858 : vector<2x8xf32> to vector<2x8x1xf32>
    %cst_267 = arith.constant 3.200000e+01 : f32
    %860 = vector.broadcast %cst_267 : f32 to vector<2x8x1xf32>
    %861 = arith.divf %859, %860 : vector<2x8x1xf32>
    %862 = vector.broadcast %854 : vector<2x8x1xf32> to vector<2x8x32xf32>
    %863 = arith.subf %848, %862 : vector<2x8x32xf32>
    %cst_268 = arith.constant 9.99999974E-6 : f32
    %864 = vector.broadcast %cst_268 : f32 to vector<2x8x1xf32>
    %865 = arith.addf %861, %864 : vector<2x8x1xf32>
    %866 = math.rsqrt %865 : vector<2x8x1xf32>
    %867 = vector.broadcast %866 : vector<2x8x1xf32> to vector<2x8x32xf32>
    %868 = arith.mulf %863, %867 : vector<2x8x32xf32>
    %869 = vector.shape_cast %849 : vector<1x32xf32> to vector<1x1x32xf32>
    %870 = vector.broadcast %869 : vector<1x1x32xf32> to vector<2x8x32xf32>
    %871 = arith.mulf %868, %870 : vector<2x8x32xf32>
    %872 = vector.shape_cast %850 : vector<1x32xf32> to vector<1x1x32xf32>
    %873 = vector.broadcast %872 : vector<1x1x32xf32> to vector<2x8x32xf32>
    %874 = arith.addf %871, %873 : vector<2x8x32xf32>
    %875 = vector.shape_cast %874 : vector<2x8x32xf32> to vector<16x32xf32>
    %c1136 = arith.constant 1136 : index
    %c0_269 = arith.constant 0 : index
    %876 = vector.load %arg2[%c1136, %c0_269] : memref<1472x128xbf16, #tpu.memory_space<vmem>>, vector<32x32xbf16>
    %877 = arith.truncf %875 : vector<16x32xf32> to vector<16x32xbf16>
    %cst_270 = arith.constant dense<0.000000e+00> : vector<16x32xf32>
    %878 = tpu.matmul %877, %876, %cst_270 {dimension_numbers = #tpu.dot_dimension_numbers<[1], [0], [0], [1], [0, 0, 1, 1], [], []>} : vector<16x32xbf16>, vector<32x32xbf16>, vector<16x32xf32> -> vector<16x32xf32>
    %c44 = arith.constant 44 : index
    %c0_271 = arith.constant 0 : index
    %879 = vector.load %arg3[%c44, %c0_271] : memref<56x128xf32, #tpu.memory_space<vmem>>, vector<1x32xf32>
    %880 = vector.broadcast %879 : vector<1x32xf32> to vector<16x32xf32>
    %881 = arith.addf %878, %880 : vector<16x32xf32>
    %882 = vector.shape_cast %881 : vector<16x32xf32> to vector<2x8x32xf32>
    %c1232 = arith.constant 1232 : index
    %c0_272 = arith.constant 0 : index
    %883 = vector.load %arg2[%c1232, %c0_272] : memref<1472x128xbf16, #tpu.memory_space<vmem>>, vector<32x32xbf16>
    %c47 = arith.constant 47 : index
    %c0_273 = arith.constant 0 : index
    %884 = vector.load %arg3[%c47, %c0_273] : memref<56x128xf32, #tpu.memory_space<vmem>>, vector<1x32xf32>
    %885 = vector.extract_strided_slice %882 {offsets = [0, 0, 0], sizes = [2, 8, 8], strides = [1, 1, 1]} : vector<2x8x32xf32> to vector<2x8x8xf32>
    %886 = arith.truncf %885 : vector<2x8x8xf32> to vector<2x8x8xbf16>
    %887 = vector.extract_strided_slice %838 {offsets = [0, 0, 0], sizes = [2, 16, 8], strides = [1, 1, 1]} : vector<2x16x32xf32> to vector<2x16x8xf32>
    %888 = arith.truncf %887 : vector<2x16x8xf32> to vector<2x16x8xbf16>
    "tpu.trace_start"() <{level = 10 : i32, message = "bqd,bkd->bqk"}> : () -> ()
    %cst_274 = arith.constant dense<0.000000e+00> : vector<2x8x16xf32>
    %889 = tpu.matmul %886, %888, %cst_274 {dimension_numbers = #tpu.dot_dimension_numbers<[2], [2], [1], [1], [0, 0, 0, 1, 1, 1], [0], [0]>} : vector<2x8x8xbf16>, vector<2x16x8xbf16>, vector<2x8x16xf32> -> vector<2x8x16xf32>
    "tpu.trace_stop"() : () -> ()
    %cst_275 = arith.constant dense<0xFF800000> : vector<2x8xf32>
    %890 = vector.multi_reduction <maximumf>, %889, %cst_275 [2] : vector<2x8x16xf32> to vector<2x8xf32>
    %891 = vector.shape_cast %890 : vector<2x8xf32> to vector<2x8x1xf32>
    %892 = vector.broadcast %891 : vector<2x8x1xf32> to vector<2x8x16xf32>
    %893 = arith.subf %889, %892 : vector<2x8x16xf32>
    %894 = math.exp %893 : vector<2x8x16xf32>
    %cst_276 = arith.constant dense<0.000000e+00> : vector<2x8xf32>
    %895 = vector.multi_reduction <add>, %894, %cst_276 [2] : vector<2x8x16xf32> to vector<2x8xf32>
    %896 = vector.shape_cast %895 : vector<2x8xf32> to vector<2x8x1xf32>
    %897 = tpu.reciprocal %896 {approx = true} : vector<2x8x1xf32> -> vector<2x8x1xf32>
    %898 = vector.broadcast %897 : vector<2x8x1xf32> to vector<2x8x16xf32>
    %899 = arith.mulf %894, %898 : vector<2x8x16xf32>
    %900 = arith.truncf %899 : vector<2x8x16xf32> to vector<2x8x16xbf16>
    %901 = vector.extract_strided_slice %845 {offsets = [0, 0, 0], sizes = [2, 16, 8], strides = [1, 1, 1]} : vector<2x16x32xf32> to vector<2x16x8xf32>
    %902 = arith.truncf %901 : vector<2x16x8xf32> to vector<2x16x8xbf16>
    "tpu.trace_start"() <{level = 10 : i32, message = "bqk,bkd->bqd"}> : () -> ()
    %cst_277 = arith.constant dense<0.000000e+00> : vector<2x8x8xf32>
    %903 = tpu.matmul %900, %902, %cst_277 {dimension_numbers = #tpu.dot_dimension_numbers<[2], [1], [1], [2], [0, 0, 0, 1, 1, 2], [0], [0]>} : vector<2x8x16xbf16>, vector<2x16x8xbf16>, vector<2x8x8xf32> -> vector<2x8x8xf32>
    "tpu.trace_stop"() : () -> ()
    %904 = vector.extract_strided_slice %882 {offsets = [0, 0, 8], sizes = [2, 8, 8], strides = [1, 1, 1]} : vector<2x8x32xf32> to vector<2x8x8xf32>
    %905 = arith.truncf %904 : vector<2x8x8xf32> to vector<2x8x8xbf16>
    %906 = vector.extract_strided_slice %838 {offsets = [0, 0, 8], sizes = [2, 16, 8], strides = [1, 1, 1]} : vector<2x16x32xf32> to vector<2x16x8xf32>
    %907 = arith.truncf %906 : vector<2x16x8xf32> to vector<2x16x8xbf16>
    "tpu.trace_start"() <{level = 10 : i32, message = "bqd,bkd->bqk"}> : () -> ()
    %cst_278 = arith.constant dense<0.000000e+00> : vector<2x8x16xf32>
    %908 = tpu.matmul %905, %907, %cst_278 {dimension_numbers = #tpu.dot_dimension_numbers<[2], [2], [1], [1], [0, 0, 0, 1, 1, 1], [0], [0]>} : vector<2x8x8xbf16>, vector<2x16x8xbf16>, vector<2x8x16xf32> -> vector<2x8x16xf32>
    "tpu.trace_stop"() : () -> ()
    %cst_279 = arith.constant dense<0xFF800000> : vector<2x8xf32>
    %909 = vector.multi_reduction <maximumf>, %908, %cst_279 [2] : vector<2x8x16xf32> to vector<2x8xf32>
    %910 = vector.shape_cast %909 : vector<2x8xf32> to vector<2x8x1xf32>
    %911 = vector.broadcast %910 : vector<2x8x1xf32> to vector<2x8x16xf32>
    %912 = arith.subf %908, %911 : vector<2x8x16xf32>
    %913 = math.exp %912 : vector<2x8x16xf32>
    %cst_280 = arith.constant dense<0.000000e+00> : vector<2x8xf32>
    %914 = vector.multi_reduction <add>, %913, %cst_280 [2] : vector<2x8x16xf32> to vector<2x8xf32>
    %915 = vector.shape_cast %914 : vector<2x8xf32> to vector<2x8x1xf32>
    %916 = tpu.reciprocal %915 {approx = true} : vector<2x8x1xf32> -> vector<2x8x1xf32>
    %917 = vector.broadcast %916 : vector<2x8x1xf32> to vector<2x8x16xf32>
    %918 = arith.mulf %913, %917 : vector<2x8x16xf32>
    %919 = arith.truncf %918 : vector<2x8x16xf32> to vector<2x8x16xbf16>
    %920 = vector.extract_strided_slice %845 {offsets = [0, 0, 8], sizes = [2, 16, 8], strides = [1, 1, 1]} : vector<2x16x32xf32> to vector<2x16x8xf32>
    %921 = arith.truncf %920 : vector<2x16x8xf32> to vector<2x16x8xbf16>
    "tpu.trace_start"() <{level = 10 : i32, message = "bqk,bkd->bqd"}> : () -> ()
    %cst_281 = arith.constant dense<0.000000e+00> : vector<2x8x8xf32>
    %922 = tpu.matmul %919, %921, %cst_281 {dimension_numbers = #tpu.dot_dimension_numbers<[2], [1], [1], [2], [0, 0, 0, 1, 1, 2], [0], [0]>} : vector<2x8x16xbf16>, vector<2x16x8xbf16>, vector<2x8x8xf32> -> vector<2x8x8xf32>
    "tpu.trace_stop"() : () -> ()
    %923 = vector.extract_strided_slice %882 {offsets = [0, 0, 16], sizes = [2, 8, 8], strides = [1, 1, 1]} : vector<2x8x32xf32> to vector<2x8x8xf32>
    %924 = arith.truncf %923 : vector<2x8x8xf32> to vector<2x8x8xbf16>
    %925 = vector.extract_strided_slice %838 {offsets = [0, 0, 16], sizes = [2, 16, 8], strides = [1, 1, 1]} : vector<2x16x32xf32> to vector<2x16x8xf32>
    %926 = arith.truncf %925 : vector<2x16x8xf32> to vector<2x16x8xbf16>
    "tpu.trace_start"() <{level = 10 : i32, message = "bqd,bkd->bqk"}> : () -> ()
    %cst_282 = arith.constant dense<0.000000e+00> : vector<2x8x16xf32>
    %927 = tpu.matmul %924, %926, %cst_282 {dimension_numbers = #tpu.dot_dimension_numbers<[2], [2], [1], [1], [0, 0, 0, 1, 1, 1], [0], [0]>} : vector<2x8x8xbf16>, vector<2x16x8xbf16>, vector<2x8x16xf32> -> vector<2x8x16xf32>
    "tpu.trace_stop"() : () -> ()
    %cst_283 = arith.constant dense<0xFF800000> : vector<2x8xf32>
    %928 = vector.multi_reduction <maximumf>, %927, %cst_283 [2] : vector<2x8x16xf32> to vector<2x8xf32>
    %929 = vector.shape_cast %928 : vector<2x8xf32> to vector<2x8x1xf32>
    %930 = vector.broadcast %929 : vector<2x8x1xf32> to vector<2x8x16xf32>
    %931 = arith.subf %927, %930 : vector<2x8x16xf32>
    %932 = math.exp %931 : vector<2x8x16xf32>
    %cst_284 = arith.constant dense<0.000000e+00> : vector<2x8xf32>
    %933 = vector.multi_reduction <add>, %932, %cst_284 [2] : vector<2x8x16xf32> to vector<2x8xf32>
    %934 = vector.shape_cast %933 : vector<2x8xf32> to vector<2x8x1xf32>
    %935 = tpu.reciprocal %934 {approx = true} : vector<2x8x1xf32> -> vector<2x8x1xf32>
    %936 = vector.broadcast %935 : vector<2x8x1xf32> to vector<2x8x16xf32>
    %937 = arith.mulf %932, %936 : vector<2x8x16xf32>
    %938 = arith.truncf %937 : vector<2x8x16xf32> to vector<2x8x16xbf16>
    %939 = vector.extract_strided_slice %845 {offsets = [0, 0, 16], sizes = [2, 16, 8], strides = [1, 1, 1]} : vector<2x16x32xf32> to vector<2x16x8xf32>
    %940 = arith.truncf %939 : vector<2x16x8xf32> to vector<2x16x8xbf16>
    "tpu.trace_start"() <{level = 10 : i32, message = "bqk,bkd->bqd"}> : () -> ()
    %cst_285 = arith.constant dense<0.000000e+00> : vector<2x8x8xf32>
    %941 = tpu.matmul %938, %940, %cst_285 {dimension_numbers = #tpu.dot_dimension_numbers<[2], [1], [1], [2], [0, 0, 0, 1, 1, 2], [0], [0]>} : vector<2x8x16xbf16>, vector<2x16x8xbf16>, vector<2x8x8xf32> -> vector<2x8x8xf32>
    "tpu.trace_stop"() : () -> ()
    %942 = vector.extract_strided_slice %882 {offsets = [0, 0, 24], sizes = [2, 8, 8], strides = [1, 1, 1]} : vector<2x8x32xf32> to vector<2x8x8xf32>
    %943 = arith.truncf %942 : vector<2x8x8xf32> to vector<2x8x8xbf16>
    %944 = vector.extract_strided_slice %838 {offsets = [0, 0, 24], sizes = [2, 16, 8], strides = [1, 1, 1]} : vector<2x16x32xf32> to vector<2x16x8xf32>
    %945 = arith.truncf %944 : vector<2x16x8xf32> to vector<2x16x8xbf16>
    "tpu.trace_start"() <{level = 10 : i32, message = "bqd,bkd->bqk"}> : () -> ()
    %cst_286 = arith.constant dense<0.000000e+00> : vector<2x8x16xf32>
    %946 = tpu.matmul %943, %945, %cst_286 {dimension_numbers = #tpu.dot_dimension_numbers<[2], [2], [1], [1], [0, 0, 0, 1, 1, 1], [0], [0]>} : vector<2x8x8xbf16>, vector<2x16x8xbf16>, vector<2x8x16xf32> -> vector<2x8x16xf32>
    "tpu.trace_stop"() : () -> ()
    %cst_287 = arith.constant dense<0xFF800000> : vector<2x8xf32>
    %947 = vector.multi_reduction <maximumf>, %946, %cst_287 [2] : vector<2x8x16xf32> to vector<2x8xf32>
    %948 = vector.shape_cast %947 : vector<2x8xf32> to vector<2x8x1xf32>
    %949 = vector.broadcast %948 : vector<2x8x1xf32> to vector<2x8x16xf32>
    %950 = arith.subf %946, %949 : vector<2x8x16xf32>
    %951 = math.exp %950 : vector<2x8x16xf32>
    %cst_288 = arith.constant dense<0.000000e+00> : vector<2x8xf32>
    %952 = vector.multi_reduction <add>, %951, %cst_288 [2] : vector<2x8x16xf32> to vector<2x8xf32>
    %953 = vector.shape_cast %952 : vector<2x8xf32> to vector<2x8x1xf32>
    %954 = tpu.reciprocal %953 {approx = true} : vector<2x8x1xf32> -> vector<2x8x1xf32>
    %955 = vector.broadcast %954 : vector<2x8x1xf32> to vector<2x8x16xf32>
    %956 = arith.mulf %951, %955 : vector<2x8x16xf32>
    %957 = arith.truncf %956 : vector<2x8x16xf32> to vector<2x8x16xbf16>
    %958 = vector.extract_strided_slice %845 {offsets = [0, 0, 24], sizes = [2, 16, 8], strides = [1, 1, 1]} : vector<2x16x32xf32> to vector<2x16x8xf32>
    %959 = arith.truncf %958 : vector<2x16x8xf32> to vector<2x16x8xbf16>
    "tpu.trace_start"() <{level = 10 : i32, message = "bqk,bkd->bqd"}> : () -> ()
    %cst_289 = arith.constant dense<0.000000e+00> : vector<2x8x8xf32>
    %960 = tpu.matmul %957, %959, %cst_289 {dimension_numbers = #tpu.dot_dimension_numbers<[2], [1], [1], [2], [0, 0, 0, 1, 1, 2], [0], [0]>} : vector<2x8x16xbf16>, vector<2x16x8xbf16>, vector<2x8x8xf32> -> vector<2x8x8xf32>
    "tpu.trace_stop"() : () -> ()
    %961 = tpu.concatenate %903, %922, %941, %960 in 2 : vector<2x8x8xf32>, vector<2x8x8xf32>, vector<2x8x8xf32>, vector<2x8x8xf32> -> vector<2x8x32xf32>
    %962 = vector.shape_cast %961 : vector<2x8x32xf32> to vector<16x32xf32>
    %963 = arith.truncf %962 : vector<16x32xf32> to vector<16x32xbf16>
    %cst_290 = arith.constant dense<0.000000e+00> : vector<16x32xf32>
    %964 = tpu.matmul %963, %883, %cst_290 {dimension_numbers = #tpu.dot_dimension_numbers<[1], [0], [0], [1], [0, 0, 1, 1], [], []>} : vector<16x32xbf16>, vector<32x32xbf16>, vector<16x32xf32> -> vector<16x32xf32>
    %965 = vector.broadcast %884 : vector<1x32xf32> to vector<16x32xf32>
    %966 = arith.addf %964, %965 : vector<16x32xf32>
    %967 = vector.shape_cast %966 : vector<16x32xf32> to vector<2x8x32xf32>
    %968 = arith.addf %848, %967 : vector<2x8x32xf32>
    %c48 = arith.constant 48 : index
    %c0_291 = arith.constant 0 : index
    %969 = vector.load %arg3[%c48, %c0_291] : memref<56x128xf32, #tpu.memory_space<vmem>>, vector<1x32xf32>
    %c49 = arith.constant 49 : index
    %c0_292 = arith.constant 0 : index
    %970 = vector.load %arg3[%c49, %c0_292] : memref<56x128xf32, #tpu.memory_space<vmem>>, vector<1x32xf32>
    %cst_293 = arith.constant dense<0.000000e+00> : vector<2x8xf32>
    %971 = vector.multi_reduction <add>, %968, %cst_293 [2] : vector<2x8x32xf32> to vector<2x8xf32>
    %972 = vector.shape_cast %971 : vector<2x8xf32> to vector<2x8x1xf32>
    %cst_294 = arith.constant 3.200000e+01 : f32
    %973 = vector.broadcast %cst_294 : f32 to vector<2x8x1xf32>
    %974 = arith.divf %972, %973 : vector<2x8x1xf32>
    %975 = vector.broadcast %974 : vector<2x8x1xf32> to vector<2x8x32xf32>
    %976 = arith.subf %968, %975 : vector<2x8x32xf32>
    %977 = arith.mulf %976, %976 : vector<2x8x32xf32>
    %cst_295 = arith.constant dense<0.000000e+00> : vector<2x8xf32>
    %978 = vector.multi_reduction <add>, %977, %cst_295 [2] : vector<2x8x32xf32> to vector<2x8xf32>
    %979 = vector.shape_cast %978 : vector<2x8xf32> to vector<2x8x1xf32>
    %cst_296 = arith.constant 3.200000e+01 : f32
    %980 = vector.broadcast %cst_296 : f32 to vector<2x8x1xf32>
    %981 = arith.divf %979, %980 : vector<2x8x1xf32>
    %982 = vector.broadcast %974 : vector<2x8x1xf32> to vector<2x8x32xf32>
    %983 = arith.subf %968, %982 : vector<2x8x32xf32>
    %cst_297 = arith.constant 9.99999974E-6 : f32
    %984 = vector.broadcast %cst_297 : f32 to vector<2x8x1xf32>
    %985 = arith.addf %981, %984 : vector<2x8x1xf32>
    %986 = math.rsqrt %985 : vector<2x8x1xf32>
    %987 = vector.broadcast %986 : vector<2x8x1xf32> to vector<2x8x32xf32>
    %988 = arith.mulf %983, %987 : vector<2x8x32xf32>
    %989 = vector.shape_cast %969 : vector<1x32xf32> to vector<1x1x32xf32>
    %990 = vector.broadcast %989 : vector<1x1x32xf32> to vector<2x8x32xf32>
    %991 = arith.mulf %988, %990 : vector<2x8x32xf32>
    %992 = vector.shape_cast %970 : vector<1x32xf32> to vector<1x1x32xf32>
    %993 = vector.broadcast %992 : vector<1x1x32xf32> to vector<2x8x32xf32>
    %994 = arith.addf %991, %993 : vector<2x8x32xf32>
    %995 = vector.shape_cast %994 : vector<2x8x32xf32> to vector<16x32xf32>
    %c1264 = arith.constant 1264 : index
    %c0_298 = arith.constant 0 : index
    %996 = vector.load %arg2[%c1264, %c0_298] : memref<1472x128xbf16, #tpu.memory_space<vmem>>, vector<32x128xbf16>
    %997 = arith.truncf %995 : vector<16x32xf32> to vector<16x32xbf16>
    %cst_299 = arith.constant dense<0.000000e+00> : vector<16x128xf32>
    %998 = tpu.matmul %997, %996, %cst_299 {dimension_numbers = #tpu.dot_dimension_numbers<[1], [0], [0], [1], [0, 0, 1, 1], [], []>} : vector<16x32xbf16>, vector<32x128xbf16>, vector<16x128xf32> -> vector<16x128xf32>
    %c50 = arith.constant 50 : index
    %c0_300 = arith.constant 0 : index
    %999 = vector.load %arg3[%c50, %c0_300] : memref<56x128xf32, #tpu.memory_space<vmem>>, vector<1x128xf32>
    %1000 = vector.broadcast %999 : vector<1x128xf32> to vector<16x128xf32>
    %1001 = arith.addf %998, %1000 : vector<16x128xf32>
    %cst_301 = arith.constant 5.000000e-01 : f32
    %1002 = vector.broadcast %cst_301 : f32 to vector<16x128xf32>
    %1003 = arith.mulf %1002, %1001 : vector<16x128xf32>
    %cst_302 = arith.constant 4.471500e-02 : f32
    %1004 = vector.broadcast %cst_302 : f32 to vector<16x128xf32>
    %1005 = arith.mulf %1004, %1001 : vector<16x128xf32>
    %1006 = arith.mulf %1005, %1001 : vector<16x128xf32>
    %1007 = arith.mulf %1006, %1001 : vector<16x128xf32>
    %1008 = arith.addf %1001, %1007 : vector<16x128xf32>
    %cst_303 = arith.constant 0.797884583 : f32
    %1009 = vector.broadcast %cst_303 : f32 to vector<16x128xf32>
    %1010 = arith.mulf %1009, %1008 : vector<16x128xf32>
    %1011 = math.tanh %1010 : vector<16x128xf32>
    %cst_304 = arith.constant 1.000000e+00 : f32
    %1012 = vector.broadcast %cst_304 : f32 to vector<16x128xf32>
    %1013 = arith.addf %1012, %1011 : vector<16x128xf32>
    %1014 = arith.mulf %1003, %1013 : vector<16x128xf32>
    %c1296 = arith.constant 1296 : index
    %c0_305 = arith.constant 0 : index
    %1015 = vector.load %arg2[%c1296, %c0_305] : memref<1472x128xbf16, #tpu.memory_space<vmem>>, vector<128x32xbf16>
    %1016 = arith.truncf %1014 : vector<16x128xf32> to vector<16x128xbf16>
    %cst_306 = arith.constant dense<0.000000e+00> : vector<16x32xf32>
    %1017 = tpu.matmul %1016, %1015, %cst_306 {dimension_numbers = #tpu.dot_dimension_numbers<[1], [0], [0], [1], [0, 0, 1, 1], [], []>} : vector<16x128xbf16>, vector<128x32xbf16>, vector<16x32xf32> -> vector<16x32xf32>
    %c51 = arith.constant 51 : index
    %c0_307 = arith.constant 0 : index
    %1018 = vector.load %arg3[%c51, %c0_307] : memref<56x128xf32, #tpu.memory_space<vmem>>, vector<1x32xf32>
    %1019 = vector.broadcast %1018 : vector<1x32xf32> to vector<16x32xf32>
    %1020 = arith.addf %1017, %1019 : vector<16x32xf32>
    %1021 = vector.shape_cast %1020 : vector<16x32xf32> to vector<2x8x32xf32>
    %1022 = arith.addf %968, %1021 : vector<2x8x32xf32>
    %c52 = arith.constant 52 : index
    %c0_308 = arith.constant 0 : index
    %1023 = vector.load %arg3[%c52, %c0_308] : memref<56x128xf32, #tpu.memory_space<vmem>>, vector<1x32xf32>
    %c53 = arith.constant 53 : index
    %c0_309 = arith.constant 0 : index
    %1024 = vector.load %arg3[%c53, %c0_309] : memref<56x128xf32, #tpu.memory_space<vmem>>, vector<1x32xf32>
    %cst_310 = arith.constant dense<0.000000e+00> : vector<2x8xf32>
    %1025 = vector.multi_reduction <add>, %1022, %cst_310 [2] : vector<2x8x32xf32> to vector<2x8xf32>
    %1026 = vector.shape_cast %1025 : vector<2x8xf32> to vector<2x8x1xf32>
    %cst_311 = arith.constant 3.200000e+01 : f32
    %1027 = vector.broadcast %cst_311 : f32 to vector<2x8x1xf32>
    %1028 = arith.divf %1026, %1027 : vector<2x8x1xf32>
    %1029 = vector.broadcast %1028 : vector<2x8x1xf32> to vector<2x8x32xf32>
    %1030 = arith.subf %1022, %1029 : vector<2x8x32xf32>
    %1031 = arith.mulf %1030, %1030 : vector<2x8x32xf32>
    %cst_312 = arith.constant dense<0.000000e+00> : vector<2x8xf32>
    %1032 = vector.multi_reduction <add>, %1031, %cst_312 [2] : vector<2x8x32xf32> to vector<2x8xf32>
    %1033 = vector.shape_cast %1032 : vector<2x8xf32> to vector<2x8x1xf32>
    %cst_313 = arith.constant 3.200000e+01 : f32
    %1034 = vector.broadcast %cst_313 : f32 to vector<2x8x1xf32>
    %1035 = arith.divf %1033, %1034 : vector<2x8x1xf32>
    %1036 = vector.broadcast %1028 : vector<2x8x1xf32> to vector<2x8x32xf32>
    %1037 = arith.subf %1022, %1036 : vector<2x8x32xf32>
    %cst_314 = arith.constant 9.99999974E-6 : f32
    %1038 = vector.broadcast %cst_314 : f32 to vector<2x8x1xf32>
    %1039 = arith.addf %1035, %1038 : vector<2x8x1xf32>
    %1040 = math.rsqrt %1039 : vector<2x8x1xf32>
    %1041 = vector.broadcast %1040 : vector<2x8x1xf32> to vector<2x8x32xf32>
    %1042 = arith.mulf %1037, %1041 : vector<2x8x32xf32>
    %1043 = vector.shape_cast %1023 : vector<1x32xf32> to vector<1x1x32xf32>
    %1044 = vector.broadcast %1043 : vector<1x1x32xf32> to vector<2x8x32xf32>
    %1045 = arith.mulf %1042, %1044 : vector<2x8x32xf32>
    %1046 = vector.shape_cast %1024 : vector<1x32xf32> to vector<1x1x32xf32>
    %1047 = vector.broadcast %1046 : vector<1x1x32xf32> to vector<2x8x32xf32>
    %1048 = arith.addf %1045, %1047 : vector<2x8x32xf32>
    %1049 = vector.shape_cast %1048 : vector<2x8x32xf32> to vector<16x32xf32>
    %c1440 = arith.constant 1440 : index
    %c0_315 = arith.constant 0 : index
    %1050 = vector.load %arg2[%c1440, %c0_315] : memref<1472x128xbf16, #tpu.memory_space<vmem>>, vector<32x128xbf16>
    %1051 = arith.truncf %1049 : vector<16x32xf32> to vector<16x32xbf16>
    %cst_316 = arith.constant dense<0.000000e+00> : vector<16x128xf32>
    %1052 = tpu.matmul %1051, %1050, %cst_316 {dimension_numbers = #tpu.dot_dimension_numbers<[1], [0], [0], [1], [0, 0, 1, 1], [], []>} : vector<16x32xbf16>, vector<32x128xbf16>, vector<16x128xf32> -> vector<16x128xf32>
    %c54 = arith.constant 54 : index
    %c0_317 = arith.constant 0 : index
    %1053 = vector.load %arg3[%c54, %c0_317] : memref<56x128xf32, #tpu.memory_space<vmem>>, vector<1x128xf32>
    %1054 = vector.broadcast %1053 : vector<1x128xf32> to vector<16x128xf32>
    %1055 = arith.addf %1052, %1054 : vector<16x128xf32>
    %1056 = vector.shape_cast %1055 : vector<16x128xf32> to vector<2x8x128xf32>
    %c0_318 = arith.constant 0 : index
    %c0_319 = arith.constant 0 : index
    %c0_320 = arith.constant 0 : index
    %1057 = vector.load %arg4[%c0_318, %c0_319, %c0_320] : memref<2x8x128xf32, #tpu.memory_space<vmem>>, vector<2x8x128xf32>
    tpu.vector_store %arg4[%c0_318, %c0_319, %c0_320], %1056 {strides = array<i32>} : memref<2x8x128xf32, #tpu.memory_space<vmem>>, vector<2x8x128xf32>,
    return
  }
  func.func @transform_0(%arg0: i32) -> (i32, i32, i32) {
    %c0_i32 = arith.constant 0 : i32
    %c0_i32_0 = arith.constant 0 : i32
    %c0_i32_1 = arith.constant 0 : i32
    return %arg0, %c0_i32, %c0_i32_0 : i32, i32, i32
  }
  func.func @transform_1(%arg0: i32) -> (i32, i32) {
    %c0_i32 = arith.constant 0 : i32
    %c0_i32_0 = arith.constant 0 : i32
    %c0_i32_1 = arith.constant 0 : i32
    return %c0_i32, %c0_i32_0 : i32, i32
  }
  func.func @transform_2(%arg0: i32) -> (i32, i32) {
    %c0_i32 = arith.constant 0 : i32
    %c0_i32_0 = arith.constant 0 : i32
    %c0_i32_1 = arith.constant 0 : i32
    return %c0_i32, %c0_i32_0 : i32, i32
  }
  func.func @transform_3(%arg0: i32) -> (i32, i32, i32) {
    %c0_i32 = arith.constant 0 : i32
    %c0_i32_0 = arith.constant 0 : i32
    %c0_i32_1 = arith.constant 0 : i32
    return %arg0, %c0_i32, %c0_i32_0 : i32, i32, i32
  }
}

</mosaic_0001>

<llo_original>
// kernel: forward.1
$region0: #{forward.1}
  #allocation0 [shape = 'u32[]', space=smem, size = 0x4, offset = 0x4, fixed_abs, tag = 'smem constant byte address 0x4 - core index']
  #allocation1 [shape = 'u32[144,128]{1,0:T(1,128)}', space=vmem, size = 0x12000, scoped, tag = 'internal scratch']
  %s0 = inlined_call_operand.vmem [shape: bf16[4,16,128], index: 0, kind: input, shape index: {}]
  %s1 = inlined_call_operand.vmem [shape: bf16[1472,128], index: 1, kind: input, shape index: {}]
  %s2 = inlined_call_operand.vmem [shape: f32[56,128], index: 2, kind: input, shape index: {}]
  %s3 = inlined_call_operand.hbm [shape: f32[4,8,128], index: 3, kind: output, shape index: {}]
  %s4 = sld [smem:[#allocation0]]
  $region45: #{forward.1} parent=0
    _
  %s6 = ssub.s32 1, %s4
  %s7 = scalar_select 0, %s6, %s4
  $region1: #{forward.1} parent=0
    #allocation2 [shape = 'u8[16384]{0}', space=vmem, size = 0x4000, scoped, tag = 'output window, operand 0']
    #allocation3 [shape = 's32[2]{0}', space=sflag, size = 0x8, scoped, tag = 'scoped memory for forward.1']
    %8 = vsyncpa [#allocation3], 0
    %s9 = scalar_lea.sflag [#allocation3], 1
    %10 = vsyncpa %s9, 0
    loop: start=0, step=1, limit=4
    $region2: #{forward.1} parent=1 // loop_pre_header
      _
    $region3: #{forward.1} parent=1 // loop_header
      %s12 = sphi 0, %s16
      %p13 = scmp.ge.s32.totalorder %s12, 4
      %s22 = sphi 0, %s24
      %s25 = sphi 0, %s22
      %s26 = sphi 0, %s25
      %s42 = sphi 0, %s26
      %s46 = sphi 0, %s46
      %s48 = sphi 0, %s46
      %s49 = sphi 0, %s48
      %s63 = sphi 0, %s49
      %s67 = sphi 0, %s67
      %s69 = sphi 0, %s67
      %s70 = sphi 0, %s69
      %s84 = sphi 0, %s70
      %s90 = sphi 0, %s92
      %s93 = sphi 0, %s90
      %s94 = sphi 0, %s93
      %s110 = sphi 0, %s94
    $region4: #{forward.1} parent=1 // loop_header_branch
      %15 = sbr.rel (%p13) target = $region8
    $region5: #{forward.1} parent=1 // loop_body
      %s17 = ssub.s32 %s12, 1
      %s18 = ssub.s32 %s12, 2
      %s19 = sadd.s32 %s12, 1
      %s20 = ssub.s32 %s12, %s19
      %p21 = scmp.eq.s32.totalorder %s20, 0
      %s23 = sadd.s32 %s22, 1
      %s24 = scalar_select %p21, %s22, %s23
      %p27 = pneg %p21
      %p28 = scmp.eq.s32.totalorder %s12, 1
      %p29 = por %p27, %p28
      %p30 = scmp.ne.s32.totalorder %s22, %s25
      %p31 = scmp.eq.s32.totalorder %s12, 0
      %p32 = por %p30, %p31
      %p33 = scmp.ne.s32.totalorder %s22, %s25
      %p34 = scmp.eq.s32.totalorder %s17, 1
      %p35 = por %p33, %p34
      %p36 = scmp.ne.s32.totalorder %s25, %s26
      %p37 = scmp.eq.s32.totalorder %s17, 0
      %p38 = por %p36, %p37
      %p39 = scmp.ne.s32.totalorder %s25, %s26
      %p40 = scmp.eq.s32.totalorder %s18, 1
      %p41 = por %p39, %p40
      %p43 = scmp.ne.s32.totalorder %s26, %s42
      %p44 = scmp.eq.s32.totalorder %s18, 0
      %p45 = por %p43, %p44
      %s47 = sadd.s32 %s46, 1
      %p50 = scmp.eq.s32.totalorder %s12, 1
      %p51 = scmp.ne.s32.totalorder %s46, %s48
      %p52 = scmp.eq.s32.totalorder %s12, 0
      %p53 = por %p51, %p52
      %p54 = scmp.ne.s32.totalorder %s46, %s48
      %p55 = scmp.eq.s32.totalorder %s17, 1
      %p56 = por %p54, %p55
      %p57 = scmp.ne.s32.totalorder %s48, %s49
      %p58 = scmp.eq.s32.totalorder %s17, 0
      %p59 = por %p57, %p58
      %p60 = scmp.ne.s32.totalorder %s48, %s49
      %p61 = scmp.eq.s32.totalorder %s18, 1
      %p62 = por %p60, %p61
      %p64 = scmp.ne.s32.totalorder %s49, %s63
      %p65 = scmp.eq.s32.totalorder %s18, 0
      %p66 = por %p64, %p65
      %s68 = sadd.s32 %s67, 1
      %p71 = scmp.eq.s32.totalorder %s12, 1
      %p72 = scmp.ne.s32.totalorder %s67, %s69
      %p73 = scmp.eq.s32.totalorder %s12, 0
      %p74 = por %p72, %p73
      %p75 = scmp.ne.s32.totalorder %s67, %s69
      %p76 = scmp.eq.s32.totalorder %s17, 1
      %p77 = por %p75, %p76
      %p78 = scmp.ne.s32.totalorder %s69, %s70
      %p79 = scmp.eq.s32.totalorder %s17, 0
      %p80 = por %p78, %p79
      %p81 = scmp.ne.s32.totalorder %s69, %s70
      %p82 = scmp.eq.s32.totalorder %s18, 1
      %p83 = por %p81, %p82
      %p85 = scmp.ne.s32.totalorder %s70, %s84
      %p86 = scmp.eq.s32.totalorder %s18, 0
      %p87 = por %p85, %p86
      %s88 = ssub.s32 %s12, %s19
      %p89 = scmp.eq.s32.totalorder %s88, 0
      %s91 = sadd.s32 %s90, 1
      %s92 = scalar_select %p89, %s90, %s91
      %p95 = pneg %p89
      %p96 = scmp.eq.s32.totalorder %s12, 1
      %p97 = por %p95, %p96
      %p98 = scmp.ne.s32.totalorder %s90, %s93
      %p99 = scmp.eq.s32.totalorder %s12, 0
      %p100 = por %p98, %p99
      %p101 = scmp.ne.s32.totalorder %s90, %s93
      %p102 = scmp.eq.s32.totalorder %s17, 1
      %p103 = por %p101, %p102
      %p104 = scmp.ne.s32.totalorder %s93, %s94
      %p105 = scmp.eq.s32.totalorder %s17, 0
      %p106 = por %p104, %p105
      %p107 = scmp.ne.s32.totalorder %s93, %s94
      %p108 = scmp.eq.s32.totalorder %s18, 1
      %p109 = por %p107, %p108
      %p111 = scmp.ne.s32.totalorder %s94, %s110
      %p112 = scmp.eq.s32.totalorder %s18, 0
      %p113 = por %p111, %p112
      %p114 = scmp.le.s32.totalorder 1, %s12
      %p115 = scmp.lt.s32.totalorder %s12, 3
      %p116 = pnand %p114, %p115
      %p117 = pneg %p116
      // Predicated region
      $region9: #{forward.1} parent=5 // pred_check
        _
      $region10: #{forward.1} parent=5 // pred_check_branch
        %119 = sbr.rel (%p116) target = $region12
      $region11: #{forward.1} parent=5 // pred_region
        %s120 = ssub.s32 %s12, 1
        // Predicated region
        $region13: #{forward.1} parent=11 // pred_check
          %p121 = pneg %p59
        $region14: #{forward.1} parent=11 // pred_check_branch
          %123 = sbr.rel (%p121) target = $region16
        $region15: #{forward.1} parent=11 // pred_region
          _
        $region16: #{forward.1} parent=11 // pred_fallthru
          _
        // Predicated region
        $region17: #{forward.1} parent=11 // pred_check
          %p124 = pneg %p80
        $region18: #{forward.1} parent=11 // pred_check_branch
          %126 = sbr.rel (%p124) target = $region20
        $region19: #{forward.1} parent=11 // pred_region
          _
        $region20: #{forward.1} parent=11 // pred_fallthru
          _
      $region12: #{forward.1} parent=5 // pred_fallthru
        _
      %p127 = scmp.lt.s32.totalorder %s12, 2
      // Predicated region
      $region21: #{forward.1} parent=5 // pred_check
        %p128 = pneg %p127
      $region22: #{forward.1} parent=5 // pred_check_branch
        %130 = sbr.rel (%p128) target = $region24
      $region23: #{forward.1} parent=5 // pred_region
        // Predicated region
        $region25: #{forward.1} parent=23 // pred_check
          %p131 = pneg %p32
        $region26: #{forward.1} parent=23 // pred_check_branch
          %133 = sbr.rel (%p131) target = $region28
        $region27: #{forward.1} parent=23 // pred_region
          %s134 = smul.u32 2, %s12
          %p135 = scmp.lt.s32.totalorder %s134, 3
          %s136 = scalar_select %p135, %s134, 3
          %s137 = smul.addr %s136, 2
          %s138 = smul.addr %s137, 4
          %s139 = scalar_lea.vmem %s0, %s138
          %s140 = smul.u32 2, %s12
        $region28: #{forward.1} parent=23 // pred_fallthru
          _
      $region24: #{forward.1} parent=5 // pred_fallthru
        _
      %p141 = scmp.le.s32.totalorder 1, %s12
      %p142 = scmp.lt.s32.totalorder %s12, 3
      %p143 = pnand %p141, %p142
      %p144 = pneg %p143
      // Predicated region
      $region29: #{forward.1} parent=5 // pred_check
        _
      $region30: #{forward.1} parent=5 // pred_check_branch
        %146 = sbr.rel (%p143) target = $region32
      $region31: #{forward.1} parent=5 // pred_region
        %s147 = ssub.s32 %s12, 1
        %s148 = smul.u32 2, %s17
        %p149 = scmp.lt.s32.totalorder %s148, 3
        %s150 = scalar_select %p149, %s148, 3
        %s151 = smul.addr %s150, 2
        %s152 = smul.addr %s151, 4
        %s153 = scalar_lea.vmem %s0, %s152
        %p154 = pneg %p38
        %p155 = pneg %p35
        %p156 = pneg %p59
        %p157 = pneg %p56
        %p158 = pneg %p80
        %p159 = pneg %p77
        %p160 = pneg %p106
        %p161 = pneg %p103
        %s162 = sand.u32 %s93, 1
        %s163 = scalar_lea.sflag [#allocation3], %s162
        %s164 = sand.u32 %s93, 1
        %s165 = smul.addr %s164, 16
        %s166 = scalar_lea.vmem [#allocation2], %s165
        %s167 = smul.u32 2, %s17
        %p168 = scmp.lt.s32.totalorder %s167, 3
        %s169 = scalar_select %p168, %s167, 3
        %s170 = smul.addr %s169, 2
        %s171 = smul.addr %s170, 4
        %s172 = scalar_lea.vmem %s0, %s171
        %s173 = smul.u32 2, %s17
        %s174 = smul.u32 2, %s17
        %v176 = vld [vmem:[%s172] sm:$0xf]
        %v177 = vld [vmem:[%s172 + $0x4] sm:$0xf]
        %v178 = vld [vmem:[%s172 + $0x8] sm:$0xf]
        %v179 = vld [vmem:[%s172 + $0xc] sm:$0xf]
        %v180 = vld [vmem:[%s1] sm:$0xf]
        %v181 = vld [vmem:[%s1 + $0x4] sm:$0xf]
        %v182 = vld [vmem:[%s1 + $0x8] sm:$0xf]
        %v183 = vld [vmem:[%s1 + $0xc] sm:$0xf]
        %v184 = vld [vmem:[%s1 + $0x10] sm:$0xf]
        %v185 = vld [vmem:[%s1 + $0x14] sm:$0xf]
        %v186 = vld [vmem:[%s1 + $0x18] sm:$0xf]
        %v187 = vld [vmem:[%s1 + $0x1c] sm:$0xf]
        %v188 = vld [vmem:[%s1 + $0x20] sm:$0xf]
        %v189 = vld [vmem:[%s1 + $0x24] sm:$0xf]
        %v190 = vld [vmem:[%s1 + $0x28] sm:$0xf]
        %v191 = vld [vmem:[%s1 + $0x2c] sm:$0xf]
        %v192 = vld [vmem:[%s1 + $0x30] sm:$0xf]
        %v193 = vld [vmem:[%s1 + $0x34] sm:$0xf]
        %v194 = vld [vmem:[%s1 + $0x38] sm:$0xf]
        %v195 = vld [vmem:[%s1 + $0x3c] sm:$0xf]
        %v196 = vld [vmem:[%s2] sm:$0x1]
        %v197 = vlaneseq
        %v198 = vshrl.u32 %v197, 7
        %v199 = vsub.s32 0, %v198
        %v200 = vrot.slane %v196, %v199
        %v205 = vunpack.c.l.b16 %v176
        %v206 = vunpack.c.l.b16 %v177
        %v207 = vunpack.c.l.b16 %v178
        %v208 = vunpack.c.l.b16 %v179
        %v209 = vpack.c.b16 %v206, %v205
        %v210 = vpack.c.b16 %v208, %v207
        %v229 = vunpack.c.l.b16 %v180
        %v230 = vunpack.c.l.b16 %v181
        %v231 = vunpack.c.l.b16 %v182
        %v232 = vunpack.c.l.b16 %v183
        %v233 = vunpack.c.l.b16 %v184
        %v234 = vunpack.c.l.b16 %v185
        %v235 = vunpack.c.l.b16 %v186
        %v236 = vunpack.c.l.b16 %v187
        %v237 = vunpack.c.l.b16 %v188
        %v238 = vunpack.c.l.b16 %v189
        %v239 = vunpack.c.l.b16 %v190
        %v240 = vunpack.c.l.b16 %v191
        %v241 = vunpack.c.l.b16 %v192
        %v242 = vunpack.c.l.b16 %v193
        %v243 = vunpack.c.l.b16 %v194
        %v244 = vunpack.c.l.b16 %v195
        %v245 = vpack.c.b16 %v230, %v229
        %v246 = vpack.c.b16 %v232, %v231
        %v247 = vpack.c.b16 %v234, %v233
        %v248 = vpack.c.b16 %v236, %v235
        %v249 = vpack.c.b16 %v238, %v237
        %v250 = vpack.c.b16 %v240, %v239
        %v251 = vpack.c.b16 %v242, %v241
        %v252 = vpack.c.b16 %v244, %v243
        %261 = vmatprep.subr.bf16.mxu0 0
        %262 = vmatpush1.bf16.msra.mxu0 %v245
        %263 = vmatprep.subr.bf16.mxu0 0
        %264 = vmatpush1.bf16.msra.mxu0 %v246
        %265 = vmatprep.subr.bf16.mxu0 0
        %266 = vmatpush1.bf16.msra.mxu0 %v247
        %267 = vmatprep.subr.bf16.mxu0 0
        %268 = vmatpush1.bf16.msra.mxu0 %v248
        %269 = vmatprep.subr.bf16.mxu0 0
        %270 = vmatpush1.bf16.msra.mxu0 %v249
        %271 = vmatprep.subr.bf16.mxu0 0
        %272 = vmatpush1.bf16.msra.mxu0 %v250
        %273 = vmatprep.subr.bf16.mxu0 0
        %274 = vmatpush1.bf16.msra.mxu0 %v251
        %275 = vmatprep.subr.bf16.mxu0 0
        %276 = vmatpush1.bf16.msra.mxu0 %v252
        %277 = vmatprep.subr.bf16.mxu0 0
        %278 = vmatpush1.bf16.msra.mxu0 0
        %279 = vmatprep.subr.bf16.mxu0 0
        %280 = vmatpush1.bf16.msra.mxu0 0
        %281 = vmatprep.subr.bf16.mxu0 0
        %282 = vmatpush1.bf16.msra.mxu0 0
        %283 = vmatprep.subr.bf16.mxu0 0
        %284 = vmatpush1.bf16.msra.mxu0 0
        %285 = vmatprep.subr.bf16.mxu0 0
        %286 = vmatpush1.bf16.msra.mxu0 0
        %287 = vmatprep.subr.bf16.mxu0 0
        %288 = vmatpush1.bf16.msra.mxu0 0
        %289 = vmatprep.subr.bf16.mxu0 0
        %290 = vmatpush1.bf16.msra.mxu0 0
        %291 = vmatprep.subr.bf16.mxu0 0
        %292 = vmatpush1.bf16.msra.mxu0 0
        %293 = vmatprep.mubr.bf16.mxu0 0
        %294 = vmatmul.mubr.bf16.gmra.mrb[0].mxu0 %v209
        %v295 = vpop.f32.mrb[0].mxu0
        %v296 = vadd.f32 %v200, %v295
        %v297 = vpop.f32.mrb[0].mxu0
        %v298 = vpop.f32.mrb[0].mxu0
        %v299 = vadd.f32 %v200, %v298
        %v300 = vpop.f32.mrb[0].mxu0
        %301 = vmatprep.mubr.bf16.mxu0 0
        %302 = vmatmul.mubr.bf16.gmra.mrb[0].mxu0 %v210
        %v303 = vpop.f32.mrb[0].mxu0
        %v304 = vadd.f32 %v200, %v303
        %v305 = vpop.f32.mrb[0].mxu0
        %v306 = vpop.f32.mrb[0].mxu0
        %v307 = vadd.f32 %v200, %v306
        %v308 = vpop.f32.mrb[0].mxu0
        %309 = vdwg.mxu0
        %v310 = vld [vmem:[%s1 + $0x40] sm:$0xf]
        %v311 = vld [vmem:[%s1 + $0x44] sm:$0xf]
        %v312 = vunpack.c.l.bf16 %v310
        %v313 = vunpack.c.l.bf16 %v311
        %v314 = vadd.f32 %v296, %v312
        %v315 = vadd.f32 %v299, %v313
        %v316 = vadd.f32 %v304, %v312
        %v317 = vadd.f32 %v307, %v313
        %v318 = vld [vmem:[%s2 + $0x1] sm:$0x1]
        %v319 = vld [vmem:[%s2 + $0x2] sm:$0x1]
        %vm320 = vcmask 261120
        %v321 = vsel %vm320, %v314, 0.0
        %322 = vadd.xlane.f32.xlu0 %v321
        %v323 = vpop.xlane.xlu0 %322
        %v324 = vsel %vm320, %v315, 0.0
        %325 = vadd.xlane.f32.xlu0 %v324
        %v326 = vpop.xlane.xlu0 %325
        %v327 = vsel %vm320, %v316, 0.0
        %328 = vadd.xlane.f32.xlu0 %v327
        %v329 = vpop.xlane.xlu0 %328
        %v330 = vsel %vm320, %v317, 0.0
        %331 = vadd.xlane.f32.xlu0 %v330
        %v332 = vpop.xlane.xlu0 %331
        %v333 = vrcp.pop 32.0
        %v334 = vmul.f32 %v323, %v333
        %v335 = vmul.f32 %v326, %v333
        %v336 = vmul.f32 %v329, %v333
        %v337 = vmul.f32 %v332, %v333
        %v338 = vsub.f32 %v314, %v334
        %v339 = vsub.f32 %v315, %v335
        %v340 = vsub.f32 %v316, %v336
        %v341 = vsub.f32 %v317, %v337
        %v342 = vmul.f32 %v338, %v338
        %v343 = vmul.f32 %v339, %v339
        %v344 = vmul.f32 %v340, %v340
        %v345 = vmul.f32 %v341, %v341
        %v346 = vsel %vm320, %v342, 0.0
        %347 = vadd.xlane.f32.xlu0 %v346
        %v348 = vpop.xlane.xlu0 %347
        %v349 = vsel %vm320, %v343, 0.0
        %350 = vadd.xlane.f32.xlu0 %v349
        %v351 = vpop.xlane.xlu0 %350
        %v352 = vsel %vm320, %v344, 0.0
        %353 = vadd.xlane.f32.xlu0 %v352
        %v354 = vpop.xlane.xlu0 %353
        %v355 = vsel %vm320, %v345, 0.0
        %356 = vadd.xlane.f32.xlu0 %v355
        %v357 = vpop.xlane.xlu0 %356
        %v358 = vmul.f32 %v348, %v333
        %v359 = vmul.f32 %v351, %v333
        %v360 = vmul.f32 %v354, %v333
        %v361 = vmul.f32 %v357, %v333
        %v362 = vadd.f32 %v358, 1e-06
        %v363 = vadd.f32 %v359, 1e-06
        %v364 = vadd.f32 %v360, 1e-06
        %v365 = vadd.f32 %v361, 1e-06
        %v366 = vrsqrt.pop %v362
        %v367 = vrsqrt.pop %v363
        %v368 = vrsqrt.pop %v364
        %v369 = vrsqrt.pop %v365
        %v370 = vmul.f32 %v338, %v366
        %v371 = vmul.f32 %v339, %v367
        %v372 = vmul.f32 %v340, %v368
        %v373 = vmul.f32 %v341, %v369
        %v374 = vlaneseq
        %v375 = vshrl.u32 %v374, 7
        %v376 = vsub.s32 0, %v375
        %v377 = vrot.slane %v318, %v376
        %v378 = vmul.f32 %v370, %v377
        %v379 = vmul.f32 %v371, %v377
        %v380 = vmul.f32 %v372, %v377
        %v381 = vmul.f32 %v373, %v377
        %v382 = vlaneseq
        %v383 = vshrl.u32 %v382, 7
        %v384 = vsub.s32 0, %v383
        %v385 = vrot.slane %v319, %v384
        %v386 = vadd.f32 %v378, %v385
        %v387 = vadd.f32 %v379, %v385
        %v388 = vadd.f32 %v380, %v385
        %v389 = vadd.f32 %v381, %v385
        %v390 = vld [vmem:[%s1 + $0x48] sm:$0xf]
        %v391 = vld [vmem:[%s1 + $0x4c] sm:$0xf]
        %v392 = vld [vmem:[%s1 + $0x50] sm:$0xf]
        %v393 = vld [vmem:[%s1 + $0x54] sm:$0xf]
        %v394 = vpack.c.bf16 %v387, %v386
        %v395 = vpack.c.bf16 %v389, %v388
        %v396 = vld [vmem:[%s2 + $0x3] sm:$0x1]
        %v397 = vlaneseq
        %v398 = vshrl.u32 %v397, 7
        %v399 = vsub.s32 0, %v398
        %v400 = vrot.slane %v396, %v399
        %v405 = vunpack.c.l.b16 %v390
        %v406 = vunpack.c.l.b16 %v391
        %v407 = vunpack.c.l.b16 %v392
        %v408 = vunpack.c.l.b16 %v393
        %v409 = vpack.c.b16 %v406, %v405
        %v410 = vpack.c.b16 %v408, %v407
        %v414 = vsel %vm320, %v394, 0
        %v417 = vsel %vm320, %v395, 0
        %419 = vmatprep.subr.bf16.mxu0 0
        %420 = vmatpush1.bf16.msra.mxu0 %v409
        %421 = vmatprep.subr.bf16.mxu0 0
        %422 = vmatpush1.bf16.msra.mxu0 %v410
        %423 = vmatprep.subr.bf16.mxu0 0
        %424 = vmatpush1.bf16.msra.mxu0 0
        %425 = vmatprep.subr.bf16.mxu0 0
        %426 = vmatpush1.bf16.msra.mxu0 0
        %427 = vmatprep.subr.bf16.mxu0 0
        %428 = vmatpush1.bf16.msra.mxu0 0
        %429 = vmatprep.subr.bf16.mxu0 0
        %430 = vmatpush1.bf16.msra.mxu0 0
        %431 = vmatprep.subr.bf16.mxu0 0
        %432 = vmatpush1.bf16.msra.mxu0 0
        %433 = vmatprep.subr.bf16.mxu0 0
        %434 = vmatpush1.bf16.msra.mxu0 0
        %435 = vmatprep.subr.bf16.mxu0 0
        %436 = vmatpush1.bf16.msra.mxu0 0
        %437 = vmatprep.subr.bf16.mxu0 0
        %438 = vmatpush1.bf16.msra.mxu0 0
        %439 = vmatprep.subr.bf16.mxu0 0
        %440 = vmatpush1.bf16.msra.mxu0 0
        %441 = vmatprep.subr.bf16.mxu0 0
        %442 = vmatpush1.bf16.msra.mxu0 0
        %443 = vmatprep.subr.bf16.mxu0 0
        %444 = vmatpush1.bf16.msra.mxu0 0
        %445 = vmatprep.subr.bf16.mxu0 0
        %446 = vmatpush1.bf16.msra.mxu0 0
        %447 = vmatprep.subr.bf16.mxu0 0
        %448 = vmatpush1.bf16.msra.mxu0 0
        %449 = vmatprep.subr.bf16.mxu0 0
        %450 = vmatpush1.bf16.msra.mxu0 0
        %451 = vmatprep.mubr.bf16.mxu0 0
        %452 = vmatmul.mubr.bf16.gmra.mrb[0].mxu0 %v414
        %v453 = vpop.f32.mrb[0].mxu0
        %v454 = vadd.f32 %v400, %v453
        %v455 = vpop.f32.mrb[0].mxu0
        %v456 = vpop.f32.mrb[0].mxu0
        %v457 = vadd.f32 %v400, %v456
        %v458 = vpop.f32.mrb[0].mxu0
        %459 = vmatprep.mubr.bf16.mxu0 0
        %460 = vmatmul.mubr.bf16.gmra.mrb[0].mxu0 %v417
        %v461 = vpop.f32.mrb[0].mxu0
        %v462 = vadd.f32 %v400, %v461
        %v463 = vpop.f32.mrb[0].mxu0
        %v464 = vpop.f32.mrb[0].mxu0
        %v465 = vadd.f32 %v400, %v464
        %v466 = vpop.f32.mrb[0].mxu0
        %467 = vdwg.mxu0
        %v468 = vld [vmem:[%s1 + $0x58] sm:$0xf]
        %v469 = vld [vmem:[%s1 + $0x5c] sm:$0xf]
        %v470 = vld [vmem:[%s1 + $0x60] sm:$0xf]
        %v471 = vld [vmem:[%s1 + $0x64] sm:$0xf]
        %v472 = vld [vmem:[%s2 + $0x4] sm:$0x1]
        %v473 = vlaneseq
        %v474 = vshrl.u32 %v473, 7
        %v475 = vsub.s32 0, %v474
        %v476 = vrot.slane %v472, %v475
        %v481 = vunpack.c.l.b16 %v468
        %v482 = vunpack.c.l.b16 %v469
        %v483 = vunpack.c.l.b16 %v470
        %v484 = vunpack.c.l.b16 %v471
        %v485 = vpack.c.b16 %v482, %v481
        %v486 = vpack.c.b16 %v484, %v483
        %489 = vmatprep.subr.bf16.mxu0 0
        %490 = vmatpush1.bf16.msra.mxu0 %v485
        %491 = vmatprep.subr.bf16.mxu0 0
        %492 = vmatpush1.bf16.msra.mxu0 %v486
        %493 = vmatprep.subr.bf16.mxu0 0
        %494 = vmatpush1.bf16.msra.mxu0 0
        %495 = vmatprep.subr.bf16.mxu0 0
        %496 = vmatpush1.bf16.msra.mxu0 0
        %497 = vmatprep.subr.bf16.mxu0 0
        %498 = vmatpush1.bf16.msra.mxu0 0
        %499 = vmatprep.subr.bf16.mxu0 0
        %500 = vmatpush1.bf16.msra.mxu0 0
        %501 = vmatprep.subr.bf16.mxu0 0
        %502 = vmatpush1.bf16.msra.mxu0 0
        %503 = vmatprep.subr.bf16.mxu0 0
        %504 = vmatpush1.bf16.msra.mxu0 0
        %505 = vmatprep.subr.bf16.mxu0 0
        %506 = vmatpush1.bf16.msra.mxu0 0
        %507 = vmatprep.subr.bf16.mxu0 0
        %508 = vmatpush1.bf16.msra.mxu0 0
        %509 = vmatprep.subr.bf16.mxu0 0
        %510 = vmatpush1.bf16.msra.mxu0 0
        %511 = vmatprep.subr.bf16.mxu0 0
        %512 = vmatpush1.bf16.msra.mxu0 0
        %513 = vmatprep.subr.bf16.mxu0 0
        %514 = vmatpush1.bf16.msra.mxu0 0
        %515 = vmatprep.subr.bf16.mxu0 0
        %516 = vmatpush1.bf16.msra.mxu0 0
        %517 = vmatprep.subr.bf16.mxu0 0
        %518 = vmatpush1.bf16.msra.mxu0 0
        %519 = vmatprep.subr.bf16.mxu0 0
        %520 = vmatpush1.bf16.msra.mxu0 0
        %521 = vmatprep.mubr.bf16.mxu0 0
        %522 = vmatmul.mubr.bf16.gmra.mrb[0].mxu0 %v414
        %v523 = vpop.f32.mrb[0].mxu0
        %v524 = vadd.f32 %v476, %v523
        %v525 = vpop.f32.mrb[0].mxu0
        %v526 = vpop.f32.mrb[0].mxu0
        %v527 = vadd.f32 %v476, %v526
        %v528 = vpop.f32.mrb[0].mxu0
        %529 = vmatprep.mubr.bf16.mxu0 0
        %530 = vmatmul.mubr.bf16.gmra.mrb[0].mxu0 %v417
        %v531 = vpop.f32.mrb[0].mxu0
        %v532 = vadd.f32 %v476, %v531
        %v533 = vpop.f32.mrb[0].mxu0
        %v534 = vpop.f32.mrb[0].mxu0
        %v535 = vadd.f32 %v476, %v534
        %v536 = vpop.f32.mrb[0].mxu0
        %537 = vdwg.mxu0
        %v538 = vld [vmem:[%s1 + $0x68] sm:$0xf]
        %v539 = vld [vmem:[%s1 + $0x6c] sm:$0xf]
        %v540 = vld [vmem:[%s1 + $0x70] sm:$0xf]
        %v541 = vld [vmem:[%s1 + $0x74] sm:$0xf]
        %v542 = vld [vmem:[%s2 + $0x5] sm:$0x1]
        %v543 = vlaneseq
        %v544 = vshrl.u32 %v543, 7
        %v545 = vsub.s32 0, %v544
        %v546 = vrot.slane %v542, %v545
        %v551 = vunpack.c.l.b16 %v538
        %v552 = vunpack.c.l.b16 %v539
        %v553 = vunpack.c.l.b16 %v540
        %v554 = vunpack.c.l.b16 %v541
        %v555 = vpack.c.b16 %v552, %v551
        %v556 = vpack.c.b16 %v554, %v553
        %559 = vmatprep.subr.bf16.mxu0 0
        %560 = vmatpush1.bf16.msra.mxu0 %v555
        %561 = vmatprep.subr.bf16.mxu0 0
        %562 = vmatpush1.bf16.msra.mxu0 %v556
        %563 = vmatprep.subr.bf16.mxu0 0
        %564 = vmatpush1.bf16.msra.mxu0 0
        %565 = vmatprep.subr.bf16.mxu0 0
        %566 = vmatpush1.bf16.msra.mxu0 0
        %567 = vmatprep.subr.bf16.mxu0 0
        %568 = vmatpush1.bf16.msra.mxu0 0
        %569 = vmatprep.subr.bf16.mxu0 0
        %570 = vmatpush1.bf16.msra.mxu0 0
        %571 = vmatprep.subr.bf16.mxu0 0
        %572 = vmatpush1.bf16.msra.mxu0 0
        %573 = vmatprep.subr.bf16.mxu0 0
        %574 = vmatpush1.bf16.msra.mxu0 0
        %575 = vmatprep.subr.bf16.mxu0 0
        %576 = vmatpush1.bf16.msra.mxu0 0
        %577 = vmatprep.subr.bf16.mxu0 0
        %578 = vmatpush1.bf16.msra.mxu0 0
        %579 = vmatprep.subr.bf16.mxu0 0
        %580 = vmatpush1.bf16.msra.mxu0 0
        %581 = vmatprep.subr.bf16.mxu0 0
        %582 = vmatpush1.bf16.msra.mxu0 0
        %583 = vmatprep.subr.bf16.mxu0 0
        %584 = vmatpush1.bf16.msra.mxu0 0
        %585 = vmatprep.subr.bf16.mxu0 0
        %586 = vmatpush1.bf16.msra.mxu0 0
        %587 = vmatprep.subr.bf16.mxu0 0
        %588 = vmatpush1.bf16.msra.mxu0 0
        %589 = vmatprep.subr.bf16.mxu0 0
        %590 = vmatpush1.bf16.msra.mxu0 0
        %591 = vmatprep.mubr.bf16.mxu0 0
        %592 = vmatmul.mubr.bf16.gmra.mrb[0].mxu0 %v414
        %v593 = vpop.f32.mrb[0].mxu0
        %v594 = vadd.f32 %v546, %v593
        %v595 = vpop.f32.mrb[0].mxu0
        %v596 = vpop.f32.mrb[0].mxu0
        %v597 = vadd.f32 %v546, %v596
        %v598 = vpop.f32.mrb[0].mxu0
        %599 = vmatprep.mubr.bf16.mxu0 0
        %600 = vmatmul.mubr.bf16.gmra.mrb[0].mxu0 %v417
        %v601 = vpop.f32.mrb[0].mxu0
        %v602 = vadd.f32 %v546, %v601
        %v603 = vpop.f32.mrb[0].mxu0
        %v604 = vpop.f32.mrb[0].mxu0
        %v605 = vadd.f32 %v546, %v604
        %v606 = vpop.f32.mrb[0].mxu0
        %607 = vdwg.mxu0
        %v608 = vld [vmem:[%s1 + $0x78] sm:$0xf]
        %v609 = vld [vmem:[%s1 + $0x7c] sm:$0xf]
        %v610 = vld [vmem:[%s1 + $0x80] sm:$0xf]
        %v611 = vld [vmem:[%s1 + $0x84] sm:$0xf]
        %v612 = vld [vmem:[%s2 + $0x6] sm:$0x1]
        %v613 = vpack.c.bf16 %v457, %v454
        %v614 = vpack.c.bf16 %v465, %v462
        %v615 = vpack.c.bf16 %v527, %v524
        %v616 = vpack.c.bf16 %v535, %v532
        %vm617 = vcmask 64512
        %v619 = vsel %vm617, %v613, 0
        %v622 = vsel %vm617, %v615, 0
        %624 = vmatprep.subr.bf16.mxu0 0
        %625 = vmatpush1.bf16.xpose.msra.mxu0 %v622
        %626 = vmatprep.subr.bf16.mxu0 0
        %627 = vmatpush1.bf16.xpose.msra.mxu0 0
        %628 = vmatprep.subr.bf16.mxu0 0
        %629 = vmatpush1.bf16.xpose.msra.mxu0 0
        %630 = vmatprep.subr.bf16.mxu0 0
        %631 = vmatpush1.bf16.xpose.msra.mxu0 0
        %632 = vmatprep.subr.bf16.mxu0 0
        %633 = vmatpush1.bf16.xpose.msra.mxu0 0
        %634 = vmatprep.subr.bf16.mxu0 0
        %635 = vmatpush1.bf16.xpose.msra.mxu0 0
        %636 = vmatprep.subr.bf16.mxu0 0
        %637 = vmatpush1.bf16.xpose.msra.mxu0 0
        %638 = vmatprep.subr.bf16.mxu0 0
        %639 = vmatpush1.bf16.xpose.msra.mxu0 0
        %640 = vmatprep.subr.bf16.mxu0 0
        %641 = vmatpush1.bf16.xpose.msra.mxu0 0
        %642 = vmatprep.subr.bf16.mxu0 0
        %643 = vmatpush1.bf16.xpose.msra.mxu0 0
        %644 = vmatprep.subr.bf16.mxu0 0
        %645 = vmatpush1.bf16.xpose.msra.mxu0 0
        %646 = vmatprep.subr.bf16.mxu0 0
        %647 = vmatpush1.bf16.xpose.msra.mxu0 0
        %648 = vmatprep.subr.bf16.mxu0 0
        %649 = vmatpush1.bf16.xpose.msra.mxu0 0
        %650 = vmatprep.subr.bf16.mxu0 0
        %651 = vmatpush1.bf16.xpose.msra.mxu0 0
        %652 = vmatprep.subr.bf16.mxu0 0
        %653 = vmatpush1.bf16.xpose.msra.mxu0 0
        %654 = vmatprep.subr.bf16.mxu0 0
        %655 = vmatpush1.bf16.xpose.msra.mxu0 0
        %656 = vmatprep.mubr.bf16.mxu0 0
        %657 = vmatmul.mubr.bf16.gmra.mrb[0].mxu0 %v619
        %v658 = vpop.f32.mrb[0].mxu0
        %v659 = vadd.f32 0.0, %v658
        %v660 = vpop.f32.mrb[0].mxu0
        %v661 = vpop.f32.mrb[0].mxu0
        %v662 = vadd.f32 0.0, %v661
        %v663 = vpop.f32.mrb[0].mxu0
        %664 = vdwg.mxu0
        %v666 = vsel %vm617, %v614, 0
        %v669 = vsel %vm617, %v616, 0
        %671 = vmatprep.subr.bf16.mxu0 0
        %672 = vmatpush1.bf16.xpose.msra.mxu0 %v669
        %673 = vmatprep.subr.bf16.mxu0 0
        %674 = vmatpush1.bf16.xpose.msra.mxu0 0
        %675 = vmatprep.subr.bf16.mxu0 0
        %676 = vmatpush1.bf16.xpose.msra.mxu0 0
        %677 = vmatprep.subr.bf16.mxu0 0
        %678 = vmatpush1.bf16.xpose.msra.mxu0 0
        %679 = vmatprep.subr.bf16.mxu0 0
        %680 = vmatpush1.bf16.xpose.msra.mxu0 0
        %681 = vmatprep.subr.bf16.mxu0 0
        %682 = vmatpush1.bf16.xpose.msra.mxu0 0
        %683 = vmatprep.subr.bf16.mxu0 0
        %684 = vmatpush1.bf16.xpose.msra.mxu0 0
        %685 = vmatprep.subr.bf16.mxu0 0
        %686 = vmatpush1.bf16.xpose.msra.mxu0 0
        %687 = vmatprep.subr.bf16.mxu0 0
        %688 = vmatpush1.bf16.xpose.msra.mxu0 0
        %689 = vmatprep.subr.bf16.mxu0 0
        %690 = vmatpush1.bf16.xpose.msra.mxu0 0
        %691 = vmatprep.subr.bf16.mxu0 0
        %692 = vmatpush1.bf16.xpose.msra.mxu0 0
        %693 = vmatprep.subr.bf16.mxu0 0
        %694 = vmatpush1.bf16.xpose.msra.mxu0 0
        %695 = vmatprep.subr.bf16.mxu0 0
        %696 = vmatpush1.bf16.xpose.msra.mxu0 0
        %697 = vmatprep.subr.bf16.mxu0 0
        %698 = vmatpush1.bf16.xpose.msra.mxu0 0
        %699 = vmatprep.subr.bf16.mxu0 0
        %700 = vmatpush1.bf16.xpose.msra.mxu0 0
        %701 = vmatprep.subr.bf16.mxu0 0
        %702 = vmatpush1.bf16.xpose.msra.mxu0 0
        %703 = vmatprep.mubr.bf16.mxu0 0
        %704 = vmatmul.mubr.bf16.gmra.mrb[0].mxu0 %v666
        %v705 = vpop.f32.mrb[0].mxu0
        %v706 = vadd.f32 0.0, %v705
        %v707 = vpop.f32.mrb[0].mxu0
        %v708 = vpop.f32.mrb[0].mxu0
        %v709 = vadd.f32 0.0, %v708
        %v710 = vpop.f32.mrb[0].mxu0
        %711 = vdwg.mxu0
        %vm712 = vcmask 130048
        %v713 = vsel %vm712, %v659, -inf
        %714 = vmax.xlane.f32.xlu0 %v713
        %v715 = vpop.xlane.xlu0 %714
        %v716 = vsel %vm712, %v662, -inf
        %717 = vmax.xlane.f32.xlu0 %v716
        %v718 = vpop.xlane.xlu0 %717
        %v719 = vsel %vm712, %v706, -inf
        %720 = vmax.xlane.f32.xlu0 %v719
        %v721 = vpop.xlane.xlu0 %720
        %v722 = vsel %vm712, %v709, -inf
        %723 = vmax.xlane.f32.xlu0 %v722
        %v724 = vpop.xlane.xlu0 %723
        %v725 = vsub.f32 %v659, %v715
        %v726 = vsub.f32 %v662, %v718
        %v727 = vsub.f32 %v706, %v721
        %v728 = vsub.f32 %v709, %v724
        %v729 = vmul.f32 %v725, 1.442695
        %v730 = vpow.pop %v729
        %v731 = vmul.f32 %v726, 1.442695
        %v732 = vpow.pop %v731
        %v733 = vmul.f32 %v727, 1.442695
        %v734 = vpow.pop %v733
        %v735 = vmul.f32 %v728, 1.442695
        %v736 = vpow.pop %v735
        %v737 = vsel %vm712, %v730, 0.0
        %738 = vadd.xlane.f32.xlu0 %v737
        %v739 = vpop.xlane.xlu0 %738
        %v740 = vsel %vm712, %v732, 0.0
        %741 = vadd.xlane.f32.xlu0 %v740
        %v742 = vpop.xlane.xlu0 %741
        %v743 = vsel %vm712, %v734, 0.0
        %744 = vadd.xlane.f32.xlu0 %v743
        %v745 = vpop.xlane.xlu0 %744
        %v746 = vsel %vm712, %v736, 0.0
        %747 = vadd.xlane.f32.xlu0 %v746
        %v748 = vpop.xlane.xlu0 %747
        %v749 = vrcp.pop %v739
        %v750 = vrcp.pop %v742
        %v751 = vrcp.pop %v745
        %v752 = vrcp.pop %v748
        %v753 = vmul.f32 %v730, %v749
        %v754 = vmul.f32 %v732, %v750
        %v755 = vmul.f32 %v734, %v751
        %v756 = vmul.f32 %v736, %v752
        %v757 = vpack.c.bf16 %v754, %v753
        %v758 = vpack.c.bf16 %v756, %v755
        %v759 = vpack.c.bf16 %v597, %v594
        %v760 = vpack.c.bf16 %v605, %v602
        %v762 = vsel %vm712, %v757, 0
        %764 = vmatprep.subr.bf16.mxu0 0
        %765 = vmatpush1.bf16.msra.mxu0 %v759
        %766 = vmatprep.subr.bf16.mxu0 0
        %767 = vmatpush1.bf16.msra.mxu0 0
        %768 = vmatprep.subr.bf16.mxu0 0
        %769 = vmatpush1.bf16.msra.mxu0 0
        %770 = vmatprep.subr.bf16.mxu0 0
        %771 = vmatpush1.bf16.msra.mxu0 0
        %772 = vmatprep.subr.bf16.mxu0 0
        %773 = vmatpush1.bf16.msra.mxu0 0
        %774 = vmatprep.subr.bf16.mxu0 0
        %775 = vmatpush1.bf16.msra.mxu0 0
        %776 = vmatprep.subr.bf16.mxu0 0
        %777 = vmatpush1.bf16.msra.mxu0 0
        %778 = vmatprep.subr.bf16.mxu0 0
        %779 = vmatpush1.bf16.msra.mxu0 0
        %780 = vmatprep.subr.bf16.mxu0 0
        %781 = vmatpush1.bf16.msra.mxu0 0
        %782 = vmatprep.subr.bf16.mxu0 0
        %783 = vmatpush1.bf16.msra.mxu0 0
        %784 = vmatprep.subr.bf16.mxu0 0
        %785 = vmatpush1.bf16.msra.mxu0 0
        %786 = vmatprep.subr.bf16.mxu0 0
        %787 = vmatpush1.bf16.msra.mxu0 0
        %788 = vmatprep.subr.bf16.mxu0 0
        %789 = vmatpush1.bf16.msra.mxu0 0
        %790 = vmatprep.subr.bf16.mxu0 0
        %791 = vmatpush1.bf16.msra.mxu0 0
        %792 = vmatprep.subr.bf16.mxu0 0
        %793 = vmatpush1.bf16.msra.mxu0 0
        %794 = vmatprep.subr.bf16.mxu0 0
        %795 = vmatpush1.bf16.msra.mxu0 0
        %796 = vmatprep.mubr.bf16.mxu0 0
        %797 = vmatmul.mubr.bf16.gmra.mrb[0].mxu0 %v762
        %v798 = vpop.f32.mrb[0].mxu0
        %v799 = vadd.f32 0.0, %v798
        %v800 = vpop.f32.mrb[0].mxu0
        %v801 = vpop.f32.mrb[0].mxu0
        %v802 = vadd.f32 0.0, %v801
        %v803 = vpop.f32.mrb[0].mxu0
        %804 = vdwg.mxu0
        %v806 = vsel %vm712, %v758, 0
        %808 = vmatprep.subr.bf16.mxu0 0
        %809 = vmatpush1.bf16.msra.mxu0 %v760
        %810 = vmatprep.subr.bf16.mxu0 0
        %811 = vmatpush1.bf16.msra.mxu0 0
        %812 = vmatprep.subr.bf16.mxu0 0
        %813 = vmatpush1.bf16.msra.mxu0 0
        %814 = vmatprep.subr.bf16.mxu0 0
        %815 = vmatpush1.bf16.msra.mxu0 0
        %816 = vmatprep.subr.bf16.mxu0 0
        %817 = vmatpush1.bf16.msra.mxu0 0
        %818 = vmatprep.subr.bf16.mxu0 0
        %819 = vmatpush1.bf16.msra.mxu0 0
        %820 = vmatprep.subr.bf16.mxu0 0
        %821 = vmatpush1.bf16.msra.mxu0 0
        %822 = vmatprep.subr.bf16.mxu0 0
        %823 = vmatpush1.bf16.msra.mxu0 0
        %824 = vmatprep.subr.bf16.mxu0 0
        %825 = vmatpush1.bf16.msra.mxu0 0
        %826 = vmatprep.subr.bf16.mxu0 0
        %827 = vmatpush1.bf16.msra.mxu0 0
        %828 = vmatprep.subr.bf16.mxu0 0
        %829 = vmatpush1.bf16.msra.mxu0 0
        %830 = vmatprep.subr.bf16.mxu0 0
        %831 = vmatpush1.bf16.msra.mxu0 0
        %832 = vmatprep.subr.bf16.mxu0 0
        %833 = vmatpush1.bf16.msra.mxu0 0
        %834 = vmatprep.subr.bf16.mxu0 0
        %835 = vmatpush1.bf16.msra.mxu0 0
        %836 = vmatprep.subr.bf16.mxu0 0
        %837 = vmatpush1.bf16.msra.mxu0 0
        %838 = vmatprep.subr.bf16.mxu0 0
        %839 = vmatpush1.bf16.msra.mxu0 0
        %840 = vmatprep.mubr.bf16.mxu0 0
        %841 = vmatmul.mubr.bf16.gmra.mrb[0].mxu0 %v806
        %v842 = vpop.f32.mrb[0].mxu0
        %v843 = vadd.f32 0.0, %v842
        %v844 = vpop.f32.mrb[0].mxu0
        %v845 = vpop.f32.mrb[0].mxu0
        %v846 = vadd.f32 0.0, %v845
        %v847 = vpop.f32.mrb[0].mxu0
        %848 = vdwg.mxu0
        %850 = vrot.lane.b32.xlu0 %v613, 120
        %v851 = vpop.permute.xlu0 %850
        %853 = vrot.lane.b32.xlu0 %v615, 120
        %v854 = vpop.permute.xlu0 %853
        %v856 = vsel %vm617, %v851, 0
        %v859 = vsel %vm617, %v854, 0
        %861 = vmatprep.subr.bf16.mxu0 0
        %862 = vmatpush1.bf16.xpose.msra.mxu0 %v859
        %863 = vmatprep.subr.bf16.mxu0 0
        %864 = vmatpush1.bf16.xpose.msra.mxu0 0
        %865 = vmatprep.subr.bf16.mxu0 0
        %866 = vmatpush1.bf16.xpose.msra.mxu0 0
        %867 = vmatprep.subr.bf16.mxu0 0
        %868 = vmatpush1.bf16.xpose.msra.mxu0 0
        %869 = vmatprep.subr.bf16.mxu0 0
        %870 = vmatpush1.bf16.xpose.msra.mxu0 0
        %871 = vmatprep.subr.bf16.mxu0 0
        %872 = vmatpush1.bf16.xpose.msra.mxu0 0
        %873 = vmatprep.subr.bf16.mxu0 0
        %874 = vmatpush1.bf16.xpose.msra.mxu0 0
        %875 = vmatprep.subr.bf16.mxu0 0
        %876 = vmatpush1.bf16.xpose.msra.mxu0 0
        %877 = vmatprep.subr.bf16.mxu0 0
        %878 = vmatpush1.bf16.xpose.msra.mxu0 0
        %879 = vmatprep.subr.bf16.mxu0 0
        %880 = vmatpush1.bf16.xpose.msra.mxu0 0
        %881 = vmatprep.subr.bf16.mxu0 0
        %882 = vmatpush1.bf16.xpose.msra.mxu0 0
        %883 = vmatprep.subr.bf16.mxu0 0
        %884 = vmatpush1.bf16.xpose.msra.mxu0 0
        %885 = vmatprep.subr.bf16.mxu0 0
        %886 = vmatpush1.bf16.xpose.msra.mxu0 0
        %887 = vmatprep.subr.bf16.mxu0 0
        %888 = vmatpush1.bf16.xpose.msra.mxu0 0
        %889 = vmatprep.subr.bf16.mxu0 0
        %890 = vmatpush1.bf16.xpose.msra.mxu0 0
        %891 = vmatprep.subr.bf16.mxu0 0
        %892 = vmatpush1.bf16.xpose.msra.mxu0 0
        %893 = vmatprep.mubr.bf16.mxu0 0
        %894 = vmatmul.mubr.bf16.gmra.mrb[0].mxu0 %v856
        %v895 = vpop.f32.mrb[0].mxu0
        %v896 = vadd.f32 0.0, %v895
        %v897 = vpop.f32.mrb[0].mxu0
        %v898 = vpop.f32.mrb[0].mxu0
        %v899 = vadd.f32 0.0, %v898
        %v900 = vpop.f32.mrb[0].mxu0
        %901 = vdwg.mxu0
        %903 = vrot.lane.b32.xlu0 %v614, 120
        %v904 = vpop.permute.xlu0 %903
        %906 = vrot.lane.b32.xlu0 %v616, 120
        %v907 = vpop.permute.xlu0 %906
        %v909 = vsel %vm617, %v904, 0
        %v912 = vsel %vm617, %v907, 0
        %914 = vmatprep.subr.bf16.mxu0 0
        %915 = vmatpush1.bf16.xpose.msra.mxu0 %v912
        %916 = vmatprep.subr.bf16.mxu0 0
        %917 = vmatpush1.bf16.xpose.msra.mxu0 0
        %918 = vmatprep.subr.bf16.mxu0 0
        %919 = vmatpush1.bf16.xpose.msra.mxu0 0
        %920 = vmatprep.subr.bf16.mxu0 0
        %921 = vmatpush1.bf16.xpose.msra.mxu0 0
        %922 = vmatprep.subr.bf16.mxu0 0
        %923 = vmatpush1.bf16.xpose.msra.mxu0 0
        %924 = vmatprep.subr.bf16.mxu0 0
        %925 = vmatpush1.bf16.xpose.msra.mxu0 0
        %926 = vmatprep.subr.bf16.mxu0 0
        %927 = vmatpush1.bf16.xpose.msra.mxu0 0
        %928 = vmatprep.subr.bf16.mxu0 0
        %929 = vmatpush1.bf16.xpose.msra.mxu0 0
        %930 = vmatprep.subr.bf16.mxu0 0
        %931 = vmatpush1.bf16.xpose.msra.mxu0 0
        %932 = vmatprep.subr.bf16.mxu0 0
        %933 = vmatpush1.bf16.xpose.msra.mxu0 0
        %934 = vmatprep.subr.bf16.mxu0 0
        %935 = vmatpush1.bf16.xpose.msra.mxu0 0
        %936 = vmatprep.subr.bf16.mxu0 0
        %937 = vmatpush1.bf16.xpose.msra.mxu0 0
        %938 = vmatprep.subr.bf16.mxu0 0
        %939 = vmatpush1.bf16.xpose.msra.mxu0 0
        %940 = vmatprep.subr.bf16.mxu0 0
        %941 = vmatpush1.bf16.xpose.msra.mxu0 0
        %942 = vmatprep.subr.bf16.mxu0 0
        %943 = vmatpush1.bf16.xpose.msra.mxu0 0
        %944 = vmatprep.subr.bf16.mxu0 0
        %945 = vmatpush1.bf16.xpose.msra.mxu0 0
        %946 = vmatprep.mubr.bf16.mxu0 0
        %947 = vmatmul.mubr.bf16.gmra.mrb[0].mxu0 %v909
        %v948 = vpop.f32.mrb[0].mxu0
        %v949 = vadd.f32 0.0, %v948
        %v950 = vpop.f32.mrb[0].mxu0
        %v951 = vpop.f32.mrb[0].mxu0
        %v952 = vadd.f32 0.0, %v951
        %v953 = vpop.f32.mrb[0].mxu0
        %954 = vdwg.mxu0
        %v955 = vsel %vm712, %v896, -inf
        %956 = vmax.xlane.f32.xlu0 %v955
        %v957 = vpop.xlane.xlu0 %956
        %v958 = vsel %vm712, %v899, -inf
        %959 = vmax.xlane.f32.xlu0 %v958
        %v960 = vpop.xlane.xlu0 %959
        %v961 = vsel %vm712, %v949, -inf
        %962 = vmax.xlane.f32.xlu0 %v961
        %v963 = vpop.xlane.xlu0 %962
        %v964 = vsel %vm712, %v952, -inf
        %965 = vmax.xlane.f32.xlu0 %v964
        %v966 = vpop.xlane.xlu0 %965
        %v967 = vsub.f32 %v896, %v957
        %v968 = vsub.f32 %v899, %v960
        %v969 = vsub.f32 %v949, %v963
        %v970 = vsub.f32 %v952, %v966
        %v971 = vmul.f32 %v967, 1.442695
        %v972 = vpow.pop %v971
        %v973 = vmul.f32 %v968, 1.442695
        %v974 = vpow.pop %v973
        %v975 = vmul.f32 %v969, 1.442695
        %v976 = vpow.pop %v975
        %v977 = vmul.f32 %v970, 1.442695
        %v978 = vpow.pop %v977
        %v979 = vsel %vm712, %v972, 0.0
        %980 = vadd.xlane.f32.xlu0 %v979
        %v981 = vpop.xlane.xlu0 %980
        %v982 = vsel %vm712, %v974, 0.0
        %983 = vadd.xlane.f32.xlu0 %v982
        %v984 = vpop.xlane.xlu0 %983
        %v985 = vsel %vm712, %v976, 0.0
        %986 = vadd.xlane.f32.xlu0 %v985
        %v987 = vpop.xlane.xlu0 %986
        %v988 = vsel %vm712, %v978, 0.0
        %989 = vadd.xlane.f32.xlu0 %v988
        %v990 = vpop.xlane.xlu0 %989
        %v991 = vrcp.pop %v981
        %v992 = vrcp.pop %v984
        %v993 = vrcp.pop %v987
        %v994 = vrcp.pop %v990
        %v995 = vmul.f32 %v972, %v991
        %v996 = vmul.f32 %v974, %v992
        %v997 = vmul.f32 %v976, %v993
        %v998 = vmul.f32 %v978, %v994
        %v999 = vpack.c.bf16 %v996, %v995
        %v1000 = vpack.c.bf16 %v998, %v997
        %1002 = vrot.lane.b32.xlu0 %v759, 120
        %v1003 = vpop.permute.xlu0 %1002
        %v1006 = vsel %vm712, %v999, 0
        %1008 = vmatprep.subr.bf16.mxu0 0
        %1009 = vmatpush1.bf16.msra.mxu0 %v1003
        %1010 = vmatprep.subr.bf16.mxu0 0
        %1011 = vmatpush1.bf16.msra.mxu0 0
        %1012 = vmatprep.subr.bf16.mxu0 0
        %1013 = vmatpush1.bf16.msra.mxu0 0
        %1014 = vmatprep.subr.bf16.mxu0 0
        %1015 = vmatpush1.bf16.msra.mxu0 0
        %1016 = vmatprep.subr.bf16.mxu0 0
        %1017 = vmatpush1.bf16.msra.mxu0 0
        %1018 = vmatprep.subr.bf16.mxu0 0
        %1019 = vmatpush1.bf16.msra.mxu0 0
        %1020 = vmatprep.subr.bf16.mxu0 0
        %1021 = vmatpush1.bf16.msra.mxu0 0
        %1022 = vmatprep.subr.bf16.mxu0 0
        %1023 = vmatpush1.bf16.msra.mxu0 0
        %1024 = vmatprep.subr.bf16.mxu0 0
        %1025 = vmatpush1.bf16.msra.mxu0 0
        %1026 = vmatprep.subr.bf16.mxu0 0
        %1027 = vmatpush1.bf16.msra.mxu0 0
        %1028 = vmatprep.subr.bf16.mxu0 0
        %1029 = vmatpush1.bf16.msra.mxu0 0
        %1030 = vmatprep.subr.bf16.mxu0 0
        %1031 = vmatpush1.bf16.msra.mxu0 0
        %1032 = vmatprep.subr.bf16.mxu0 0
        %1033 = vmatpush1.bf16.msra.mxu0 0
        %1034 = vmatprep.subr.bf16.mxu0 0
        %1035 = vmatpush1.bf16.msra.mxu0 0
        %1036 = vmatprep.subr.bf16.mxu0 0
        %1037 = vmatpush1.bf16.msra.mxu0 0
        %1038 = vmatprep.subr.bf16.mxu0 0
        %1039 = vmatpush1.bf16.msra.mxu0 0
        %1040 = vmatprep.mubr.bf16.mxu0 0
        %1041 = vmatmul.mubr.bf16.gmra.mrb[0].mxu0 %v1006
        %v1042 = vpop.f32.mrb[0].mxu0
        %v1043 = vadd.f32 0.0, %v1042
        %v1044 = vpop.f32.mrb[0].mxu0
        %v1045 = vpop.f32.mrb[0].mxu0
        %v1046 = vadd.f32 0.0, %v1045
        %v1047 = vpop.f32.mrb[0].mxu0
        %1048 = vdwg.mxu0
        %1050 = vrot.lane.b32.xlu0 %v760, 120
        %v1051 = vpop.permute.xlu0 %1050
        %v1054 = vsel %vm712, %v1000, 0
        %1056 = vmatprep.subr.bf16.mxu0 0
        %1057 = vmatpush1.bf16.msra.mxu0 %v1051
        %1058 = vmatprep.subr.bf16.mxu0 0
        %1059 = vmatpush1.bf16.msra.mxu0 0
        %1060 = vmatprep.subr.bf16.mxu0 0
        %1061 = vmatpush1.bf16.msra.mxu0 0
        %1062 = vmatprep.subr.bf16.mxu0 0
        %1063 = vmatpush1.bf16.msra.mxu0 0
        %1064 = vmatprep.subr.bf16.mxu0 0
        %1065 = vmatpush1.bf16.msra.mxu0 0
        %1066 = vmatprep.subr.bf16.mxu0 0
        %1067 = vmatpush1.bf16.msra.mxu0 0
        %1068 = vmatprep.subr.bf16.mxu0 0
        %1069 = vmatpush1.bf16.msra.mxu0 0
        %1070 = vmatprep.subr.bf16.mxu0 0
        %1071 = vmatpush1.bf16.msra.mxu0 0
        %1072 = vmatprep.subr.bf16.mxu0 0
        %1073 = vmatpush1.bf16.msra.mxu0 0
        %1074 = vmatprep.subr.bf16.mxu0 0
        %1075 = vmatpush1.bf16.msra.mxu0 0
        %1076 = vmatprep.subr.bf16.mxu0 0
        %1077 = vmatpush1.bf16.msra.mxu0 0
        %1078 = vmatprep.subr.bf16.mxu0 0
        %1079 = vmatpush1.bf16.msra.mxu0 0
        %1080 = vmatprep.subr.bf16.mxu0 0
        %1081 = vmatpush1.bf16.msra.mxu0 0
        %1082 = vmatprep.subr.bf16.mxu0 0
        %1083 = vmatpush1.bf16.msra.mxu0 0
        %1084 = vmatprep.subr.bf16.mxu0 0
        %1085 = vmatpush1.bf16.msra.mxu0 0
        %1086 = vmatprep.subr.bf16.mxu0 0
        %1087 = vmatpush1.bf16.msra.mxu0 0
        %1088 = vmatprep.mubr.bf16.mxu0 0
        %1089 = vmatmul.mubr.bf16.gmra.mrb[0].mxu0 %v1054
        %v1090 = vpop.f32.mrb[0].mxu0
        %v1091 = vadd.f32 0.0, %v1090
        %v1092 = vpop.f32.mrb[0].mxu0
        %v1093 = vpop.f32.mrb[0].mxu0
        %v1094 = vadd.f32 0.0, %v1093
        %v1095 = vpop.f32.mrb[0].mxu0
        %1096 = vdwg.mxu0
        %1097 = vrot.lane.b32.xlu0 %v613, 112
        %v1098 = vpop.permute.xlu0 %1097
        %1099 = vrot.lane.b32.xlu0 %v615, 112
        %v1100 = vpop.permute.xlu0 %1099
        %v1102 = vsel %vm617, %v1098, 0
        %v1105 = vsel %vm617, %v1100, 0
        %1107 = vmatprep.subr.bf16.mxu0 0
        %1108 = vmatpush1.bf16.xpose.msra.mxu0 %v1105
        %1109 = vmatprep.subr.bf16.mxu0 0
        %1110 = vmatpush1.bf16.xpose.msra.mxu0 0
        %1111 = vmatprep.subr.bf16.mxu0 0
        %1112 = vmatpush1.bf16.xpose.msra.mxu0 0
        %1113 = vmatprep.subr.bf16.mxu0 0
        %1114 = vmatpush1.bf16.xpose.msra.mxu0 0
        %1115 = vmatprep.subr.bf16.mxu0 0
        %1116 = vmatpush1.bf16.xpose.msra.mxu0 0
        %1117 = vmatprep.subr.bf16.mxu0 0
        %1118 = vmatpush1.bf16.xpose.msra.mxu0 0
        %1119 = vmatprep.subr.bf16.mxu0 0
        %1120 = vmatpush1.bf16.xpose.msra.mxu0 0
        %1121 = vmatprep.subr.bf16.mxu0 0
        %1122 = vmatpush1.bf16.xpose.msra.mxu0 0
        %1123 = vmatprep.subr.bf16.mxu0 0
        %1124 = vmatpush1.bf16.xpose.msra.mxu0 0
        %1125 = vmatprep.subr.bf16.mxu0 0
        %1126 = vmatpush1.bf16.xpose.msra.mxu0 0
        %1127 = vmatprep.subr.bf16.mxu0 0
        %1128 = vmatpush1.bf16.xpose.msra.mxu0 0
        %1129 = vmatprep.subr.bf16.mxu0 0
        %1130 = vmatpush1.bf16.xpose.msra.mxu0 0
        %1131 = vmatprep.subr.bf16.mxu0 0
        %1132 = vmatpush1.bf16.xpose.msra.mxu0 0
        %1133 = vmatprep.subr.bf16.mxu0 0
        %1134 = vmatpush1.bf16.xpose.msra.mxu0 0
        %1135 = vmatprep.subr.bf16.mxu0 0
        %1136 = vmatpush1.bf16.xpose.msra.mxu0 0
        %1137 = vmatprep.subr.bf16.mxu0 0
        %1138 = vmatpush1.bf16.xpose.msra.mxu0 0
        %1139 = vmatprep.mubr.bf16.mxu0 0
        %1140 = vmatmul.mubr.bf16.gmra.mrb[0].mxu0 %v1102
        %v1141 = vpop.f32.mrb[0].mxu0
        %v1142 = vadd.f32 0.0, %v1141
        %v1143 = vpop.f32.mrb[0].mxu0
        %v1144 = vpop.f32.mrb[0].mxu0
        %v1145 = vadd.f32 0.0, %v1144
        %v1146 = vpop.f32.mrb[0].mxu0
        %1147 = vdwg.mxu0
        %1148 = vrot.lane.b32.xlu0 %v614, 112
        %v1149 = vpop.permute.xlu0 %1148
        %1150 = vrot.lane.b32.xlu0 %v616, 112
        %v1151 = vpop.permute.xlu0 %1150
        %v1153 = vsel %vm617, %v1149, 0
        %v1156 = vsel %vm617, %v1151, 0
        %1158 = vmatprep.subr.bf16.mxu0 0
        %1159 = vmatpush1.bf16.xpose.msra.mxu0 %v1156
        %1160 = vmatprep.subr.bf16.mxu0 0
        %1161 = vmatpush1.bf16.xpose.msra.mxu0 0
        %1162 = vmatprep.subr.bf16.mxu0 0
        %1163 = vmatpush1.bf16.xpose.msra.mxu0 0
        %1164 = vmatprep.subr.bf16.mxu0 0
        %1165 = vmatpush1.bf16.xpose.msra.mxu0 0
        %1166 = vmatprep.subr.bf16.mxu0 0
        %1167 = vmatpush1.bf16.xpose.msra.mxu0 0
        %1168 = vmatprep.subr.bf16.mxu0 0
        %1169 = vmatpush1.bf16.xpose.msra.mxu0 0
        %1170 = vmatprep.subr.bf16.mxu0 0
        %1171 = vmatpush1.bf16.xpose.msra.mxu0 0
        %1172 = vmatprep.subr.bf16.mxu0 0
        %1173 = vmatpush1.bf16.xpose.msra.mxu0 0
        %1174 = vmatprep.subr.bf16.mxu0 0
        %1175 = vmatpush1.bf16.xpose.msra.mxu0 0
        %1176 = vmatprep.subr.bf16.mxu0 0
        %1177 = vmatpush1.bf16.xpose.msra.mxu0 0
        %1178 = vmatprep.subr.bf16.mxu0 0
        %1179 = vmatpush1.bf16.xpose.msra.mxu0 0
        %1180 = vmatprep.subr.bf16.mxu0 0
        %1181 = vmatpush1.bf16.xpose.msra.mxu0 0
        %1182 = vmatprep.subr.bf16.mxu0 0
        %1183 = vmatpush1.bf16.xpose.msra.mxu0 0
        %1184 = vmatprep.subr.bf16.mxu0 0
        %1185 = vmatpush1.bf16.xpose.msra.mxu0 0
        %1186 = vmatprep.subr.bf16.mxu0 0
        %1187 = vmatpush1.bf16.xpose.msra.mxu0 0
        %1188 = vmatprep.subr.bf16.mxu0 0
        %1189 = vmatpush1.bf16.xpose.msra.mxu0 0
        %1190 = vmatprep.mubr.bf16.mxu0 0
        %1191 = vmatmul.mubr.bf16.gmra.mrb[0].mxu0 %v1153
        %v1192 = vpop.f32.mrb[0].mxu0
        %v1193 = vadd.f32 0.0, %v1192
        %v1194 = vpop.f32.mrb[0].mxu0
        %v1195 = vpop.f32.mrb[0].mxu0
        %v1196 = vadd.f32 0.0, %v1195
        %v1197 = vpop.f32.mrb[0].mxu0
        %1198 = vdwg.mxu0
        %v1199 = vsel %vm712, %v1142, -inf
        %1200 = vmax.xlane.f32.xlu0 %v1199
        %v1201 = vpop.xlane.xlu0 %1200
        %v1202 = vsel %vm712, %v1145, -inf
        %1203 = vmax.xlane.f32.xlu0 %v1202
        %v1204 = vpop.xlane.xlu0 %1203
        %v1205 = vsel %vm712, %v1193, -inf
        %1206 = vmax.xlane.f32.xlu0 %v1205
        %v1207 = vpop.xlane.xlu0 %1206
        %v1208 = vsel %vm712, %v1196, -inf
        %1209 = vmax.xlane.f32.xlu0 %v1208
        %v1210 = vpop.xlane.xlu0 %1209
        %v1211 = vsub.f32 %v1142, %v1201
        %v1212 = vsub.f32 %v1145, %v1204
        %v1213 = vsub.f32 %v1193, %v1207
        %v1214 = vsub.f32 %v1196, %v1210
        %v1215 = vmul.f32 %v1211, 1.442695
        %v1216 = vpow.pop %v1215
        %v1217 = vmul.f32 %v1212, 1.442695
        %v1218 = vpow.pop %v1217
        %v1219 = vmul.f32 %v1213, 1.442695
        %v1220 = vpow.pop %v1219
        %v1221 = vmul.f32 %v1214, 1.442695
        %v1222 = vpow.pop %v1221
        %v1223 = vsel %vm712, %v1216, 0.0
        %1224 = vadd.xlane.f32.xlu0 %v1223
        %v1225 = vpop.xlane.xlu0 %1224
        %v1226 = vsel %vm712, %v1218, 0.0
        %1227 = vadd.xlane.f32.xlu0 %v1226
        %v1228 = vpop.xlane.xlu0 %1227
        %v1229 = vsel %vm712, %v1220, 0.0
        %1230 = vadd.xlane.f32.xlu0 %v1229
        %v1231 = vpop.xlane.xlu0 %1230
        %v1232 = vsel %vm712, %v1222, 0.0
        %1233 = vadd.xlane.f32.xlu0 %v1232
        %v1234 = vpop.xlane.xlu0 %1233
        %v1235 = vrcp.pop %v1225
        %v1236 = vrcp.pop %v1228
        %v1237 = vrcp.pop %v1231
        %v1238 = vrcp.pop %v1234
        %v1239 = vmul.f32 %v1216, %v1235
        %v1240 = vmul.f32 %v1218, %v1236
        %v1241 = vmul.f32 %v1220, %v1237
        %v1242 = vmul.f32 %v1222, %v1238
        %v1243 = vpack.c.bf16 %v1240, %v1239
        %v1244 = vpack.c.bf16 %v1242, %v1241
        %1245 = vrot.lane.b32.xlu0 %v759, 112
        %v1246 = vpop.permute.xlu0 %1245
        %v1249 = vsel %vm712, %v1243, 0
        %1251 = vmatprep.subr.bf16.mxu0 0
        %1252 = vmatpush1.bf16.msra.mxu0 %v1246
        %1253 = vmatprep.subr.bf16.mxu0 0
        %1254 = vmatpush1.bf16.msra.mxu0 0
        %1255 = vmatprep.subr.bf16.mxu0 0
        %1256 = vmatpush1.bf16.msra.mxu0 0
        %1257 = vmatprep.subr.bf16.mxu0 0
        %1258 = vmatpush1.bf16.msra.mxu0 0
        %1259 = vmatprep.subr.bf16.mxu0 0
        %1260 = vmatpush1.bf16.msra.mxu0 0
        %1261 = vmatprep.subr.bf16.mxu0 0
        %1262 = vmatpush1.bf16.msra.mxu0 0
        %1263 = vmatprep.subr.bf16.mxu0 0
        %1264 = vmatpush1.bf16.msra.mxu0 0
        %1265 = vmatprep.subr.bf16.mxu0 0
        %1266 = vmatpush1.bf16.msra.mxu0 0
        %1267 = vmatprep.subr.bf16.mxu0 0
        %1268 = vmatpush1.bf16.msra.mxu0 0
        %1269 = vmatprep.subr.bf16.mxu0 0
        %1270 = vmatpush1.bf16.msra.mxu0 0
        %1271 = vmatprep.subr.bf16.mxu0 0
        %1272 = vmatpush1.bf16.msra.mxu0 0
        %1273 = vmatprep.subr.bf16.mxu0 0
        %1274 = vmatpush1.bf16.msra.mxu0 0
        %1275 = vmatprep.subr.bf16.mxu0 0
        %1276 = vmatpush1.bf16.msra.mxu0 0
        %1277 = vmatprep.subr.bf16.mxu0 0
        %1278 = vmatpush1.bf16.msra.mxu0 0
        %1279 = vmatprep.subr.bf16.mxu0 0
        %1280 = vmatpush1.bf16.msra.mxu0 0
        %1281 = vmatprep.subr.bf16.mxu0 0
        %1282 = vmatpush1.bf16.msra.mxu0 0
        %1283 = vmatprep.mubr.bf16.mxu0 0
        %1284 = vmatmul.mubr.bf16.gmra.mrb[0].mxu0 %v1249
        %v1285 = vpop.f32.mrb[0].mxu0
        %v1286 = vadd.f32 0.0, %v1285
        %v1287 = vpop.f32.mrb[0].mxu0
        %v1288 = vpop.f32.mrb[0].mxu0
        %v1289 = vadd.f32 0.0, %v1288
        %v1290 = vpop.f32.mrb[0].mxu0
        %1291 = vdwg.mxu0
        %1292 = vrot.lane.b32.xlu0 %v760, 112
        %v1293 = vpop.permute.xlu0 %1292
        %v1296 = vsel %vm712, %v1244, 0
        %1298 = vmatprep.subr.bf16.mxu0 0
        %1299 = vmatpush1.bf16.msra.mxu0 %v1293
        %1300 = vmatprep.subr.bf16.mxu0 0
        %1301 = vmatpush1.bf16.msra.mxu0 0
        %1302 = vmatprep.subr.bf16.mxu0 0
        %1303 = vmatpush1.bf16.msra.mxu0 0
        %1304 = vmatprep.subr.bf16.mxu0 0
        %1305 = vmatpush1.bf16.msra.mxu0 0
        %1306 = vmatprep.subr.bf16.mxu0 0
        %1307 = vmatpush1.bf16.msra.mxu0 0
        %1308 = vmatprep.subr.bf16.mxu0 0
        %1309 = vmatpush1.bf16.msra.mxu0 0
        %1310 = vmatprep.subr.bf16.mxu0 0
        %1311 = vmatpush1.bf16.msra.mxu0 0
        %1312 = vmatprep.subr.bf16.mxu0 0
        %1313 = vmatpush1.bf16.msra.mxu0 0
        %1314 = vmatprep.subr.bf16.mxu0 0
        %1315 = vmatpush1.bf16.msra.mxu0 0
        %1316 = vmatprep.subr.bf16.mxu0 0
        %1317 = vmatpush1.bf16.msra.mxu0 0
        %1318 = vmatprep.subr.bf16.mxu0 0
        %1319 = vmatpush1.bf16.msra.mxu0 0
        %1320 = vmatprep.subr.bf16.mxu0 0
        %1321 = vmatpush1.bf16.msra.mxu0 0
        %1322 = vmatprep.subr.bf16.mxu0 0
        %1323 = vmatpush1.bf16.msra.mxu0 0
        %1324 = vmatprep.subr.bf16.mxu0 0
        %1325 = vmatpush1.bf16.msra.mxu0 0
        %1326 = vmatprep.subr.bf16.mxu0 0
        %1327 = vmatpush1.bf16.msra.mxu0 0
        %1328 = vmatprep.subr.bf16.mxu0 0
        %1329 = vmatpush1.bf16.msra.mxu0 0
        %1330 = vmatprep.mubr.bf16.mxu0 0
        %1331 = vmatmul.mubr.bf16.gmra.mrb[0].mxu0 %v1296
        %v1332 = vpop.f32.mrb[0].mxu0
        %v1333 = vadd.f32 0.0, %v1332
        %v1334 = vpop.f32.mrb[0].mxu0
        %v1335 = vpop.f32.mrb[0].mxu0
        %v1336 = vadd.f32 0.0, %v1335
        %v1337 = vpop.f32.mrb[0].mxu0
        %1338 = vdwg.mxu0
        %1339 = vrot.lane.b32.xlu0 %v613, 104
        %v1340 = vpop.permute.xlu0 %1339
        %1341 = vrot.lane.b32.xlu0 %v615, 104
        %v1342 = vpop.permute.xlu0 %1341
        %v1344 = vsel %vm617, %v1340, 0
        %v1347 = vsel %vm617, %v1342, 0
        %1349 = vmatprep.subr.bf16.mxu0 0
        %1350 = vmatpush1.bf16.xpose.msra.mxu0 %v1347
        %1351 = vmatprep.subr.bf16.mxu0 0
        %1352 = vmatpush1.bf16.xpose.msra.mxu0 0
        %1353 = vmatprep.subr.bf16.mxu0 0
        %1354 = vmatpush1.bf16.xpose.msra.mxu0 0
        %1355 = vmatprep.subr.bf16.mxu0 0
        %1356 = vmatpush1.bf16.xpose.msra.mxu0 0
        %1357 = vmatprep.subr.bf16.mxu0 0
        %1358 = vmatpush1.bf16.xpose.msra.mxu0 0
        %1359 = vmatprep.subr.bf16.mxu0 0
        %1360 = vmatpush1.bf16.xpose.msra.mxu0 0
        %1361 = vmatprep.subr.bf16.mxu0 0
        %1362 = vmatpush1.bf16.xpose.msra.mxu0 0
        %1363 = vmatprep.subr.bf16.mxu0 0
        %1364 = vmatpush1.bf16.xpose.msra.mxu0 0
        %1365 = vmatprep.subr.bf16.mxu0 0
        %1366 = vmatpush1.bf16.xpose.msra.mxu0 0
        %1367 = vmatprep.subr.bf16.mxu0 0
        %1368 = vmatpush1.bf16.xpose.msra.mxu0 0
        %1369 = vmatprep.subr.bf16.mxu0 0
        %1370 = vmatpush1.bf16.xpose.msra.mxu0 0
        %1371 = vmatprep.subr.bf16.mxu0 0
        %1372 = vmatpush1.bf16.xpose.msra.mxu0 0
        %1373 = vmatprep.subr.bf16.mxu0 0
        %1374 = vmatpush1.bf16.xpose.msra.mxu0 0
        %1375 = vmatprep.subr.bf16.mxu0 0
        %1376 = vmatpush1.bf16.xpose.msra.mxu0 0
        %1377 = vmatprep.subr.bf16.mxu0 0
        %1378 = vmatpush1.bf16.xpose.msra.mxu0 0
        %1379 = vmatprep.subr.bf16.mxu0 0
        %1380 = vmatpush1.bf16.xpose.msra.mxu0 0
        %1381 = vmatprep.mubr.bf16.mxu0 0
        %1382 = vmatmul.mubr.bf16.gmra.mrb[0].mxu0 %v1344
        %v1383 = vpop.f32.mrb[0].mxu0
        %v1384 = vadd.f32 0.0, %v1383
        %v1385 = vpop.f32.mrb[0].mxu0
        %v1386 = vpop.f32.mrb[0].mxu0
        %v1387 = vadd.f32 0.0, %v1386
        %v1388 = vpop.f32.mrb[0].mxu0
        %1389 = vdwg.mxu0
        %1390 = vrot.lane.b32.xlu0 %v614, 104
        %v1391 = vpop.permute.xlu0 %1390
        %1392 = vrot.lane.b32.xlu0 %v616, 104
        %v1393 = vpop.permute.xlu0 %1392
        %v1395 = vsel %vm617, %v1391, 0
        %v1398 = vsel %vm617, %v1393, 0
        %1400 = vmatprep.subr.bf16.mxu0 0
        %1401 = vmatpush1.bf16.xpose.msra.mxu0 %v1398
        %1402 = vmatprep.subr.bf16.mxu0 0
        %1403 = vmatpush1.bf16.xpose.msra.mxu0 0
        %1404 = vmatprep.subr.bf16.mxu0 0
        %1405 = vmatpush1.bf16.xpose.msra.mxu0 0
        %1406 = vmatprep.subr.bf16.mxu0 0
        %1407 = vmatpush1.bf16.xpose.msra.mxu0 0
        %1408 = vmatprep.subr.bf16.mxu0 0
        %1409 = vmatpush1.bf16.xpose.msra.mxu0 0
        %1410 = vmatprep.subr.bf16.mxu0 0
        %1411 = vmatpush1.bf16.xpose.msra.mxu0 0
        %1412 = vmatprep.subr.bf16.mxu0 0
        %1413 = vmatpush1.bf16.xpose.msra.mxu0 0
        %1414 = vmatprep.subr.bf16.mxu0 0
        %1415 = vmatpush1.bf16.xpose.msra.mxu0 0
        %1416 = vmatprep.subr.bf16.mxu0 0
        %1417 = vmatpush1.bf16.xpose.msra.mxu0 0
        %1418 = vmatprep.subr.bf16.mxu0 0
        %1419 = vmatpush1.bf16.xpose.msra.mxu0 0
        %1420 = vmatprep.subr.bf16.mxu0 0
        %1421 = vmatpush1.bf16.xpose.msra.mxu0 0
        %1422 = vmatprep.subr.bf16.mxu0 0
        %1423 = vmatpush1.bf16.xpose.msra.mxu0 0
        %1424 = vmatprep.subr.bf16.mxu0 0
        %1425 = vmatpush1.bf16.xpose.msra.mxu0 0
        %1426 = vmatprep.subr.bf16.mxu0 0
        %1427 = vmatpush1.bf16.xpose.msra.mxu0 0
        %1428 = vmatprep.subr.bf16.mxu0 0
        %1429 = vmatpush1.bf16.xpose.msra.mxu0 0
        %1430 = vmatprep.subr.bf16.mxu0 0
        %1431 = vmatpush1.bf16.xpose.msra.mxu0 0
        %1432 = vmatprep.mubr.bf16.mxu0 0
        %1433 = vmatmul.mubr.bf16.gmra.mrb[0].mxu0 %v1395
        %v1434 = vpop.f32.mrb[0].mxu0
        %v1435 = vadd.f32 0.0, %v1434
        %v1436 = vpop.f32.mrb[0].mxu0
        %v1437 = vpop.f32.mrb[0].mxu0
        %v1438 = vadd.f32 0.0, %v1437
        %v1439 = vpop.f32.mrb[0].mxu0
        %1440 = vdwg.mxu0
        %v1441 = vsel %vm712, %v1384, -inf
        %1442 = vmax.xlane.f32.xlu0 %v1441
        %v1443 = vpop.xlane.xlu0 %1442
        %v1444 = vsel %vm712, %v1387, -inf
        %1445 = vmax.xlane.f32.xlu0 %v1444
        %v1446 = vpop.xlane.xlu0 %1445
        %v1447 = vsel %vm712, %v1435, -inf
        %1448 = vmax.xlane.f32.xlu0 %v1447
        %v1449 = vpop.xlane.xlu0 %1448
        %v1450 = vsel %vm712, %v1438, -inf
        %1451 = vmax.xlane.f32.xlu0 %v1450
        %v1452 = vpop.xlane.xlu0 %1451
        %v1453 = vsub.f32 %v1384, %v1443
        %v1454 = vsub.f32 %v1387, %v1446
        %v1455 = vsub.f32 %v1435, %v1449
        %v1456 = vsub.f32 %v1438, %v1452
        %v1457 = vmul.f32 %v1453, 1.442695
        %v1458 = vpow.pop %v1457
        %v1459 = vmul.f32 %v1454, 1.442695
        %v1460 = vpow.pop %v1459
        %v1461 = vmul.f32 %v1455, 1.442695
        %v1462 = vpow.pop %v1461
        %v1463 = vmul.f32 %v1456, 1.442695
        %v1464 = vpow.pop %v1463
        %v1465 = vsel %vm712, %v1458, 0.0
        %1466 = vadd.xlane.f32.xlu0 %v1465
        %v1467 = vpop.xlane.xlu0 %1466
        %v1468 = vsel %vm712, %v1460, 0.0
        %1469 = vadd.xlane.f32.xlu0 %v1468
        %v1470 = vpop.xlane.xlu0 %1469
        %v1471 = vsel %vm712, %v1462, 0.0
        %1472 = vadd.xlane.f32.xlu0 %v1471
        %v1473 = vpop.xlane.xlu0 %1472
        %v1474 = vsel %vm712, %v1464, 0.0
        %1475 = vadd.xlane.f32.xlu0 %v1474
        %v1476 = vpop.xlane.xlu0 %1475
        %v1477 = vrcp.pop %v1467
        %v1478 = vrcp.pop %v1470
        %v1479 = vrcp.pop %v1473
        %v1480 = vrcp.pop %v1476
        %v1481 = vmul.f32 %v1458, %v1477
        %v1482 = vmul.f32 %v1460, %v1478
        %v1483 = vmul.f32 %v1462, %v1479
        %v1484 = vmul.f32 %v1464, %v1480
        %v1485 = vpack.c.bf16 %v1482, %v1481
        %v1486 = vpack.c.bf16 %v1484, %v1483
        %1487 = vrot.lane.b32.xlu0 %v759, 104
        %v1488 = vpop.permute.xlu0 %1487
        %v1491 = vsel %vm712, %v1485, 0
        %1493 = vmatprep.subr.bf16.mxu0 0
        %1494 = vmatpush1.bf16.msra.mxu0 %v1488
        %1495 = vmatprep.subr.bf16.mxu0 0
        %1496 = vmatpush1.bf16.msra.mxu0 0
        %1497 = vmatprep.subr.bf16.mxu0 0
        %1498 = vmatpush1.bf16.msra.mxu0 0
        %1499 = vmatprep.subr.bf16.mxu0 0
        %1500 = vmatpush1.bf16.msra.mxu0 0
        %1501 = vmatprep.subr.bf16.mxu0 0
        %1502 = vmatpush1.bf16.msra.mxu0 0
        %1503 = vmatprep.subr.bf16.mxu0 0
        %1504 = vmatpush1.bf16.msra.mxu0 0
        %1505 = vmatprep.subr.bf16.mxu0 0
        %1506 = vmatpush1.bf16.msra.mxu0 0
        %1507 = vmatprep.subr.bf16.mxu0 0
        %1508 = vmatpush1.bf16.msra.mxu0 0
        %1509 = vmatprep.subr.bf16.mxu0 0
        %1510 = vmatpush1.bf16.msra.mxu0 0
        %1511 = vmatprep.subr.bf16.mxu0 0
        %1512 = vmatpush1.bf16.msra.mxu0 0
        %1513 = vmatprep.subr.bf16.mxu0 0
        %1514 = vmatpush1.bf16.msra.mxu0 0
        %1515 = vmatprep.subr.bf16.mxu0 0
        %1516 = vmatpush1.bf16.msra.mxu0 0
        %1517 = vmatprep.subr.bf16.mxu0 0
        %1518 = vmatpush1.bf16.msra.mxu0 0
        %1519 = vmatprep.subr.bf16.mxu0 0
        %1520 = vmatpush1.bf16.msra.mxu0 0
        %1521 = vmatprep.subr.bf16.mxu0 0
        %1522 = vmatpush1.bf16.msra.mxu0 0
        %1523 = vmatprep.subr.bf16.mxu0 0
        %1524 = vmatpush1.bf16.msra.mxu0 0
        %1525 = vmatprep.mubr.bf16.mxu0 0
        %1526 = vmatmul.mubr.bf16.gmra.mrb[0].mxu0 %v1491
        %v1527 = vpop.f32.mrb[0].mxu0
        %v1528 = vadd.f32 0.0, %v1527
        %v1529 = vpop.f32.mrb[0].mxu0
        %v1530 = vpop.f32.mrb[0].mxu0
        %v1531 = vadd.f32 0.0, %v1530
        %v1532 = vpop.f32.mrb[0].mxu0
        %1533 = vdwg.mxu0
        %1534 = vrot.lane.b32.xlu0 %v760, 104
        %v1535 = vpop.permute.xlu0 %1534
        %v1538 = vsel %vm712, %v1486, 0
        %1540 = vmatprep.subr.bf16.mxu0 0
        %1541 = vmatpush1.bf16.msra.mxu0 %v1535
        %1542 = vmatprep.subr.bf16.mxu0 0
        %1543 = vmatpush1.bf16.msra.mxu0 0
        %1544 = vmatprep.subr.bf16.mxu0 0
        %1545 = vmatpush1.bf16.msra.mxu0 0
        %1546 = vmatprep.subr.bf16.mxu0 0
        %1547 = vmatpush1.bf16.msra.mxu0 0
        %1548 = vmatprep.subr.bf16.mxu0 0
        %1549 = vmatpush1.bf16.msra.mxu0 0
        %1550 = vmatprep.subr.bf16.mxu0 0
        %1551 = vmatpush1.bf16.msra.mxu0 0
        %1552 = vmatprep.subr.bf16.mxu0 0
        %1553 = vmatpush1.bf16.msra.mxu0 0
        %1554 = vmatprep.subr.bf16.mxu0 0
        %1555 = vmatpush1.bf16.msra.mxu0 0
        %1556 = vmatprep.subr.bf16.mxu0 0
        %1557 = vmatpush1.bf16.msra.mxu0 0
        %1558 = vmatprep.subr.bf16.mxu0 0
        %1559 = vmatpush1.bf16.msra.mxu0 0
        %1560 = vmatprep.subr.bf16.mxu0 0
        %1561 = vmatpush1.bf16.msra.mxu0 0
        %1562 = vmatprep.subr.bf16.mxu0 0
        %1563 = vmatpush1.bf16.msra.mxu0 0
        %1564 = vmatprep.subr.bf16.mxu0 0
        %1565 = vmatpush1.bf16.msra.mxu0 0
        %1566 = vmatprep.subr.bf16.mxu0 0
        %1567 = vmatpush1.bf16.msra.mxu0 0
        %1568 = vmatprep.subr.bf16.mxu0 0
        %1569 = vmatpush1.bf16.msra.mxu0 0
        %1570 = vmatprep.subr.bf16.mxu0 0
        %1571 = vmatpush1.bf16.msra.mxu0 0
        %1572 = vmatprep.mubr.bf16.mxu0 0
        %1573 = vmatmul.mubr.bf16.gmra.mrb[0].mxu0 %v1538
        %v1574 = vpop.f32.mrb[0].mxu0
        %v1575 = vadd.f32 0.0, %v1574
        %v1576 = vpop.f32.mrb[0].mxu0
        %v1577 = vpop.f32.mrb[0].mxu0
        %v1578 = vadd.f32 0.0, %v1577
        %v1579 = vpop.f32.mrb[0].mxu0
        %1580 = vdwg.mxu0
        %1585 = vrot.lane.b32.xlu0 %v1043, 8
        %v1586 = vpop.permute.xlu0 %1585
        %1587 = vrot.lane.b32.xlu0 %v1046, 8
        %v1588 = vpop.permute.xlu0 %1587
        %1589 = vrot.lane.b32.xlu0 %v1091, 8
        %v1590 = vpop.permute.xlu0 %1589
        %1591 = vrot.lane.b32.xlu0 %v1094, 8
        %v1592 = vpop.permute.xlu0 %1591
        %1601 = vrot.lane.b32.xlu0 %v1286, 16
        %v1602 = vpop.permute.xlu0 %1601
        %1603 = vrot.lane.b32.xlu0 %v1289, 16
        %v1604 = vpop.permute.xlu0 %1603
        %1605 = vrot.lane.b32.xlu0 %v1333, 16
        %v1606 = vpop.permute.xlu0 %1605
        %1607 = vrot.lane.b32.xlu0 %v1336, 16
        %v1608 = vpop.permute.xlu0 %1607
        %1617 = vrot.lane.b32.xlu0 %v1528, 24
        %v1618 = vpop.permute.xlu0 %1617
        %1619 = vrot.lane.b32.xlu0 %v1531, 24
        %v1620 = vpop.permute.xlu0 %1619
        %1621 = vrot.lane.b32.xlu0 %v1575, 24
        %v1622 = vpop.permute.xlu0 %1621
        %1623 = vrot.lane.b32.xlu0 %v1578, 24
        %v1624 = vpop.permute.xlu0 %1623
        %v1629 = vsel %vm617, %v799, %v1586
        %v1630 = vsel %vm617, %v802, %v1588
        %v1631 = vsel %vm617, %v843, %v1590
        %v1632 = vsel %vm617, %v846, %v1592
        %v1633 = vsel %vm712, %v1629, %v1602
        %v1634 = vsel %vm712, %v1630, %v1604
        %v1635 = vsel %vm712, %v1631, %v1606
        %v1636 = vsel %vm712, %v1632, %v1608
        %vm1637 = vcmask 195584
        %v1638 = vsel %vm1637, %v1633, %v1618
        %v1639 = vsel %vm1637, %v1634, %v1620
        %v1640 = vsel %vm1637, %v1635, %v1622
        %v1641 = vsel %vm1637, %v1636, %v1624
        %v1642 = vpack.c.bf16 %v1639, %v1638
        %v1643 = vpack.c.bf16 %v1641, %v1640
        %v1644 = vlaneseq
        %v1645 = vshrl.u32 %v1644, 7
        %v1646 = vsub.s32 0, %v1645
        %v1647 = vrot.slane %v612, %v1646
        %v1652 = vunpack.c.l.b16 %v608
        %v1653 = vunpack.c.l.b16 %v609
        %v1654 = vunpack.c.l.b16 %v610
        %v1655 = vunpack.c.l.b16 %v611
        %v1656 = vpack.c.b16 %v1653, %v1652
        %v1657 = vpack.c.b16 %v1655, %v1654
        %v1661 = vsel %vm320, %v1642, 0
        %v1664 = vsel %vm320, %v1643, 0
        %1666 = vmatprep.subr.bf16.mxu0 0
        %1667 = vmatpush1.bf16.msra.mxu0 %v1656
        %1668 = vmatprep.subr.bf16.mxu0 0
        %1669 = vmatpush1.bf16.msra.mxu0 %v1657
        %1670 = vmatprep.subr.bf16.mxu0 0
        %1671 = vmatpush1.bf16.msra.mxu0 0
        %1672 = vmatprep.subr.bf16.mxu0 0
        %1673 = vmatpush1.bf16.msra.mxu0 0
        %1674 = vmatprep.subr.bf16.mxu0 0
        %1675 = vmatpush1.bf16.msra.mxu0 0
        %1676 = vmatprep.subr.bf16.mxu0 0
        %1677 = vmatpush1.bf16.msra.mxu0 0
        %1678 = vmatprep.subr.bf16.mxu0 0
        %1679 = vmatpush1.bf16.msra.mxu0 0
        %1680 = vmatprep.subr.bf16.mxu0 0
        %1681 = vmatpush1.bf16.msra.mxu0 0
        %1682 = vmatprep.subr.bf16.mxu0 0
        %1683 = vmatpush1.bf16.msra.mxu0 0
        %1684 = vmatprep.subr.bf16.mxu0 0
        %1685 = vmatpush1.bf16.msra.mxu0 0
        %1686 = vmatprep.subr.bf16.mxu0 0
        %1687 = vmatpush1.bf16.msra.mxu0 0
        %1688 = vmatprep.subr.bf16.mxu0 0
        %1689 = vmatpush1.bf16.msra.mxu0 0
        %1690 = vmatprep.subr.bf16.mxu0 0
        %1691 = vmatpush1.bf16.msra.mxu0 0
        %1692 = vmatprep.subr.bf16.mxu0 0
        %1693 = vmatpush1.bf16.msra.mxu0 0
        %1694 = vmatprep.subr.bf16.mxu0 0
        %1695 = vmatpush1.bf16.msra.mxu0 0
        %1696 = vmatprep.subr.bf16.mxu0 0
        %1697 = vmatpush1.bf16.msra.mxu0 0
        %1698 = vmatprep.mubr.bf16.mxu0 0
        %1699 = vmatmul.mubr.bf16.gmra.mrb[0].mxu0 %v1661
        %v1700 = vpop.f32.mrb[0].mxu0
        %v1701 = vadd.f32 %v1647, %v1700
        %v1702 = vpop.f32.mrb[0].mxu0
        %v1703 = vpop.f32.mrb[0].mxu0
        %v1704 = vadd.f32 %v1647, %v1703
        %v1705 = vpop.f32.mrb[0].mxu0
        %1706 = vmatprep.mubr.bf16.mxu0 0
        %1707 = vmatmul.mubr.bf16.gmra.mrb[0].mxu0 %v1664
        %v1708 = vpop.f32.mrb[0].mxu0
        %v1709 = vadd.f32 %v1647, %v1708
        %v1710 = vpop.f32.mrb[0].mxu0
        %v1711 = vpop.f32.mrb[0].mxu0
        %v1712 = vadd.f32 %v1647, %v1711
        %v1713 = vpop.f32.mrb[0].mxu0
        %1714 = vdwg.mxu0
        %v1715 = vadd.f32 %v314, %v1701
        %v1716 = vadd.f32 %v315, %v1704
        %v1717 = vadd.f32 %v316, %v1709
        %v1718 = vadd.f32 %v317, %v1712
        %v1719 = vld [vmem:[%s2 + $0x7] sm:$0x1]
        %v1720 = vld [vmem:[%s2 + $0x8] sm:$0x1]
        %v1721 = vsel %vm320, %v1715, 0.0
        %1722 = vadd.xlane.f32.xlu0 %v1721
        %v1723 = vpop.xlane.xlu0 %1722
        %v1724 = vsel %vm320, %v1716, 0.0
        %1725 = vadd.xlane.f32.xlu0 %v1724
        %v1726 = vpop.xlane.xlu0 %1725
        %v1727 = vsel %vm320, %v1717, 0.0
        %1728 = vadd.xlane.f32.xlu0 %v1727
        %v1729 = vpop.xlane.xlu0 %1728
        %v1730 = vsel %vm320, %v1718, 0.0
        %1731 = vadd.xlane.f32.xlu0 %v1730
        %v1732 = vpop.xlane.xlu0 %1731
        %v1733 = vmul.f32 %v1723, %v333
        %v1734 = vmul.f32 %v1726, %v333
        %v1735 = vmul.f32 %v1729, %v333
        %v1736 = vmul.f32 %v1732, %v333
        %v1737 = vsub.f32 %v1715, %v1733
        %v1738 = vsub.f32 %v1716, %v1734
        %v1739 = vsub.f32 %v1717, %v1735
        %v1740 = vsub.f32 %v1718, %v1736
        %v1741 = vmul.f32 %v1737, %v1737
        %v1742 = vmul.f32 %v1738, %v1738
        %v1743 = vmul.f32 %v1739, %v1739
        %v1744 = vmul.f32 %v1740, %v1740
        %v1745 = vsel %vm320, %v1741, 0.0
        %1746 = vadd.xlane.f32.xlu0 %v1745
        %v1747 = vpop.xlane.xlu0 %1746
        %v1748 = vsel %vm320, %v1742, 0.0
        %1749 = vadd.xlane.f32.xlu0 %v1748
        %v1750 = vpop.xlane.xlu0 %1749
        %v1751 = vsel %vm320, %v1743, 0.0
        %1752 = vadd.xlane.f32.xlu0 %v1751
        %v1753 = vpop.xlane.xlu0 %1752
        %v1754 = vsel %vm320, %v1744, 0.0
        %1755 = vadd.xlane.f32.xlu0 %v1754
        %v1756 = vpop.xlane.xlu0 %1755
        %v1757 = vmul.f32 %v1747, %v333
        %v1758 = vmul.f32 %v1750, %v333
        %v1759 = vmul.f32 %v1753, %v333
        %v1760 = vmul.f32 %v1756, %v333
        %v1761 = vadd.f32 %v1757, 1e-06
        %v1762 = vadd.f32 %v1758, 1e-06
        %v1763 = vadd.f32 %v1759, 1e-06
        %v1764 = vadd.f32 %v1760, 1e-06
        %v1765 = vrsqrt.pop %v1761
        %v1766 = vrsqrt.pop %v1762
        %v1767 = vrsqrt.pop %v1763
        %v1768 = vrsqrt.pop %v1764
        %v1769 = vmul.f32 %v1737, %v1765
        %v1770 = vmul.f32 %v1738, %v1766
        %v1771 = vmul.f32 %v1739, %v1767
        %v1772 = vmul.f32 %v1740, %v1768
        %v1773 = vlaneseq
        %v1774 = vshrl.u32 %v1773, 7
        %v1775 = vsub.s32 0, %v1774
        %v1776 = vrot.slane %v1719, %v1775
        %v1777 = vmul.f32 %v1769, %v1776
        %v1778 = vmul.f32 %v1770, %v1776
        %v1779 = vmul.f32 %v1771, %v1776
        %v1780 = vmul.f32 %v1772, %v1776
        %v1781 = vlaneseq
        %v1782 = vshrl.u32 %v1781, 7
        %v1783 = vsub.s32 0, %v1782
        %v1784 = vrot.slane %v1720, %v1783
        %v1785 = vadd.f32 %v1777, %v1784
        %v1786 = vadd.f32 %v1778, %v1784
        %v1787 = vadd.f32 %v1779, %v1784
        %v1788 = vadd.f32 %v1780, %v1784
        %v1789 = vld [vmem:[%s1 + $0x88] sm:$0xf]
        %v1790 = vld [vmem:[%s1 + $0x8c] sm:$0xf]
        %v1791 = vld [vmem:[%s1 + $0x90] sm:$0xf]
        %v1792 = vld [vmem:[%s1 + $0x94] sm:$0xf]
        %v1793 = vpack.c.bf16 %v1786, %v1785
        %v1794 = vpack.c.bf16 %v1788, %v1787
        %v1795 = vld [vmem:[%s2 + $0x9] sm:$0x1]
        %v1796 = vlaneseq
        %v1797 = vshrl.u32 %v1796, 7
        %v1798 = vsub.s32 0, %v1797
        %v1799 = vrot.slane %v1795, %v1798
        %v1804 = vunpack.c.l.b16 %v1789
        %v1805 = vunpack.c.l.b16 %v1790
        %v1806 = vunpack.c.l.b16 %v1791
        %v1807 = vunpack.c.l.b16 %v1792
        %v1808 = vpack.c.b16 %v1805, %v1804
        %v1809 = vpack.c.b16 %v1807, %v1806
        %v1813 = vsel %vm320, %v1793, 0
        %v1816 = vsel %vm320, %v1794, 0
        %1818 = vmatprep.subr.bf16.mxu0 0
        %1819 = vmatpush1.bf16.msra.mxu0 %v1808
        %1820 = vmatprep.subr.bf16.mxu0 0
        %1821 = vmatpush1.bf16.msra.mxu0 %v1809
        %1822 = vmatprep.subr.bf16.mxu0 0
        %1823 = vmatpush1.bf16.msra.mxu0 0
        %1824 = vmatprep.subr.bf16.mxu0 0
        %1825 = vmatpush1.bf16.msra.mxu0 0
        %1826 = vmatprep.subr.bf16.mxu0 0
        %1827 = vmatpush1.bf16.msra.mxu0 0
        %1828 = vmatprep.subr.bf16.mxu0 0
        %1829 = vmatpush1.bf16.msra.mxu0 0
        %1830 = vmatprep.subr.bf16.mxu0 0
        %1831 = vmatpush1.bf16.msra.mxu0 0
        %1832 = vmatprep.subr.bf16.mxu0 0
        %1833 = vmatpush1.bf16.msra.mxu0 0
        %1834 = vmatprep.subr.bf16.mxu0 0
        %1835 = vmatpush1.bf16.msra.mxu0 0
        %1836 = vmatprep.subr.bf16.mxu0 0
        %1837 = vmatpush1.bf16.msra.mxu0 0
        %1838 = vmatprep.subr.bf16.mxu0 0
        %1839 = vmatpush1.bf16.msra.mxu0 0
        %1840 = vmatprep.subr.bf16.mxu0 0
        %1841 = vmatpush1.bf16.msra.mxu0 0
        %1842 = vmatprep.subr.bf16.mxu0 0
        %1843 = vmatpush1.bf16.msra.mxu0 0
        %1844 = vmatprep.subr.bf16.mxu0 0
        %1845 = vmatpush1.bf16.msra.mxu0 0
        %1846 = vmatprep.subr.bf16.mxu0 0
        %1847 = vmatpush1.bf16.msra.mxu0 0
        %1848 = vmatprep.subr.bf16.mxu0 0
        %1849 = vmatpush1.bf16.msra.mxu0 0
        %1850 = vmatprep.mubr.bf16.mxu0 0
        %1851 = vmatmul.mubr.bf16.gmra.mrb[0].mxu0 %v1813
        %v1852 = vpop.f32.mrb[0].mxu0
        %v1853 = vadd.f32 %v1799, %v1852
        %v1854 = vpop.f32.mrb[0].mxu0
        %v1855 = vpop.f32.mrb[0].mxu0
        %v1856 = vadd.f32 %v1799, %v1855
        %v1857 = vpop.f32.mrb[0].mxu0
        %1858 = vmatprep.mubr.bf16.mxu0 0
        %1859 = vmatmul.mubr.bf16.gmra.mrb[0].mxu0 %v1816
        %v1860 = vpop.f32.mrb[0].mxu0
        %v1861 = vadd.f32 %v1799, %v1860
        %v1862 = vpop.f32.mrb[0].mxu0
        %v1863 = vpop.f32.mrb[0].mxu0
        %v1864 = vadd.f32 %v1799, %v1863
        %v1865 = vpop.f32.mrb[0].mxu0
        %1866 = vdwg.mxu0
        %v1867 = vmul.f32 %v1853, 0.5
        %v1868 = vmul.f32 %v1856, 0.5
        %v1869 = vmul.f32 %v1861, 0.5
        %v1870 = vmul.f32 %v1864, 0.5
        %v1871 = vmul.f32 %v1853, 0.044715
        %v1872 = vmul.f32 %v1856, 0.044715
        %v1873 = vmul.f32 %v1861, 0.044715
        %v1874 = vmul.f32 %v1864, 0.044715
        %v1875 = vmul.f32 %v1871, %v1853
        %v1876 = vmul.f32 %v1872, %v1856
        %v1877 = vmul.f32 %v1873, %v1861
        %v1878 = vmul.f32 %v1874, %v1864
        %v1879 = vmul.f32 %v1875, %v1853
        %v1880 = vmul.f32 %v1876, %v1856
        %v1881 = vmul.f32 %v1877, %v1861
        %v1882 = vmul.f32 %v1878, %v1864
        %v1883 = vadd.f32 %v1853, %v1879
        %v1884 = vadd.f32 %v1856, %v1880
        %v1885 = vadd.f32 %v1861, %v1881
        %v1886 = vadd.f32 %v1864, %v1882
        %v1887 = vmul.f32 %v1883, 0.7978846
        %v1888 = vmul.f32 %v1884, 0.7978846
        %v1889 = vmul.f32 %v1885, 0.7978846
        %v1890 = vmul.f32 %v1886, 0.7978846
        %v1891 = vtanh.pop %v1887
        %v1892 = vtanh.pop %v1888
        %v1893 = vtanh.pop %v1889
        %v1894 = vtanh.pop %v1890
        %v1895 = vadd.f32 %v1891, 1.0
        %v1896 = vadd.f32 %v1892, 1.0
        %v1897 = vadd.f32 %v1893, 1.0
        %v1898 = vadd.f32 %v1894, 1.0
        %v1899 = vmul.f32 %v1867, %v1895
        %v1900 = vmul.f32 %v1868, %v1896
        %v1901 = vmul.f32 %v1869, %v1897
        %v1902 = vmul.f32 %v1870, %v1898
        %v1903 = vld [vmem:[%s1 + $0x98] sm:$0xf]
        %v1904 = vld [vmem:[%s1 + $0x9c] sm:$0xf]
        %v1905 = vld [vmem:[%s1 + $0xa0] sm:$0xf]
        %v1906 = vld [vmem:[%s1 + $0xa4] sm:$0xf]
        %v1907 = vld [vmem:[%s1 + $0xa8] sm:$0xf]
        %v1908 = vld [vmem:[%s1 + $0xac] sm:$0xf]
        %v1909 = vld [vmem:[%s1 + $0xb0] sm:$0xf]
        %v1910 = vld [vmem:[%s1 + $0xb4] sm:$0xf]
        %v1911 = vld [vmem:[%s1 + $0xb8] sm:$0xf]
        %v1912 = vld [vmem:[%s1 + $0xbc] sm:$0xf]
        %v1913 = vld [vmem:[%s1 + $0xc0] sm:$0xf]
        %v1914 = vld [vmem:[%s1 + $0xc4] sm:$0xf]
        %v1915 = vld [vmem:[%s1 + $0xc8] sm:$0xf]
        %v1916 = vld [vmem:[%s1 + $0xcc] sm:$0xf]
        %v1917 = vld [vmem:[%s1 + $0xd0] sm:$0xf]
        %v1918 = vld [vmem:[%s1 + $0xd4] sm:$0xf]
        %v1919 = vpack.c.bf16 %v1900, %v1899
        %v1920 = vpack.c.bf16 %v1902, %v1901
        %v1937 = vunpack.c.l.b16 %v1903
        %v1938 = vunpack.c.l.b16 %v1904
        %v1939 = vunpack.c.l.b16 %v1905
        %v1940 = vunpack.c.l.b16 %v1906
        %v1941 = vunpack.c.l.b16 %v1907
        %v1942 = vunpack.c.l.b16 %v1908
        %v1943 = vunpack.c.l.b16 %v1909
        %v1944 = vunpack.c.l.b16 %v1910
        %v1945 = vunpack.c.l.b16 %v1911
        %v1946 = vunpack.c.l.b16 %v1912
        %v1947 = vunpack.c.l.b16 %v1913
        %v1948 = vunpack.c.l.b16 %v1914
        %v1949 = vunpack.c.l.b16 %v1915
        %v1950 = vunpack.c.l.b16 %v1916
        %v1951 = vunpack.c.l.b16 %v1917
        %v1952 = vunpack.c.l.b16 %v1918
        %v1953 = vpack.c.b16 %v1938, %v1937
        %v1954 = vpack.c.b16 %v1940, %v1939
        %v1955 = vpack.c.b16 %v1942, %v1941
        %v1956 = vpack.c.b16 %v1944, %v1943
        %v1957 = vpack.c.b16 %v1946, %v1945
        %v1958 = vpack.c.b16 %v1948, %v1947
        %v1959 = vpack.c.b16 %v1950, %v1949
        %v1960 = vpack.c.b16 %v1952, %v1951
        %1969 = vmatprep.subr.bf16.mxu0 0
        %1970 = vmatpush1.bf16.msra.mxu0 %v1953
        %1971 = vmatprep.subr.bf16.mxu0 0
        %1972 = vmatpush1.bf16.msra.mxu0 %v1954
        %1973 = vmatprep.subr.bf16.mxu0 0
        %1974 = vmatpush1.bf16.msra.mxu0 %v1955
        %1975 = vmatprep.subr.bf16.mxu0 0
        %1976 = vmatpush1.bf16.msra.mxu0 %v1956
        %1977 = vmatprep.subr.bf16.mxu0 0
        %1978 = vmatpush1.bf16.msra.mxu0 %v1957
        %1979 = vmatprep.subr.bf16.mxu0 0
        %1980 = vmatpush1.bf16.msra.mxu0 %v1958
        %1981 = vmatprep.subr.bf16.mxu0 0
        %1982 = vmatpush1.bf16.msra.mxu0 %v1959
        %1983 = vmatprep.subr.bf16.mxu0 0
        %1984 = vmatpush1.bf16.msra.mxu0 %v1960
        %1985 = vmatprep.subr.bf16.mxu0 0
        %1986 = vmatpush1.bf16.msra.mxu0 0
        %1987 = vmatprep.subr.bf16.mxu0 0
        %1988 = vmatpush1.bf16.msra.mxu0 0
        %1989 = vmatprep.subr.bf16.mxu0 0
        %1990 = vmatpush1.bf16.msra.mxu0 0
        %1991 = vmatprep.subr.bf16.mxu0 0
        %1992 = vmatpush1.bf16.msra.mxu0 0
        %1993 = vmatprep.subr.bf16.mxu0 0
        %1994 = vmatpush1.bf16.msra.mxu0 0
        %1995 = vmatprep.subr.bf16.mxu0 0
        %1996 = vmatpush1.bf16.msra.mxu0 0
        %1997 = vmatprep.subr.bf16.mxu0 0
        %1998 = vmatpush1.bf16.msra.mxu0 0
        %1999 = vmatprep.subr.bf16.mxu0 0
        %2000 = vmatpush1.bf16.msra.mxu0 0
        %2001 = vmatprep.mubr.bf16.mxu0 0
        %2002 = vmatmul.mubr.bf16.gmra.mrb[0].mxu0 %v1919
        %v2003 = vpop.f32.mrb[0].mxu0
        %v2004 = vadd.f32 0.0, %v2003
        %v2005 = vpop.f32.mrb[0].mxu0
        %v2006 = vpop.f32.mrb[0].mxu0
        %v2007 = vadd.f32 0.0, %v2006
        %v2008 = vpop.f32.mrb[0].mxu0
        %2009 = vmatprep.mubr.bf16.mxu0 0
        %2010 = vmatmul.mubr.bf16.gmra.mrb[0].mxu0 %v1920
        %v2011 = vpop.f32.mrb[0].mxu0
        %v2012 = vadd.f32 0.0, %v2011
        %v2013 = vpop.f32.mrb[0].mxu0
        %v2014 = vpop.f32.mrb[0].mxu0
        %v2015 = vadd.f32 0.0, %v2014
        %v2016 = vpop.f32.mrb[0].mxu0
        %2017 = vdwg.mxu0
        %v2018 = vadd.f32 %v1715, %v2004
        %v2019 = vadd.f32 %v1716, %v2007
        %v2020 = vadd.f32 %v1717, %v2012
        %v2021 = vadd.f32 %v1718, %v2015
        %v2022 = vld [vmem:[%s2 + $0xa] sm:$0x1]
        %v2023 = vlaneseq
        %v2024 = vshrl.u32 %v2023, 7
        %v2025 = vsub.s32 0, %v2024
        %v2026 = vrot.slane %v2022, %v2025
        %v2027 = vadd.f32 %v2018, %v2026
        %v2028 = vadd.f32 %v2019, %v2026
        %v2029 = vadd.f32 %v2020, %v2026
        %v2030 = vadd.f32 %v2021, %v2026
        %v2031 = vld [vmem:[%s2 + $0xb] sm:$0x1]
        %v2032 = vld [vmem:[%s2 + $0xc] sm:$0x1]
        %v2033 = vsel %vm320, %v2027, 0.0
        %2034 = vadd.xlane.f32.xlu0 %v2033
        %v2035 = vpop.xlane.xlu0 %2034
        %v2036 = vsel %vm320, %v2028, 0.0
        %2037 = vadd.xlane.f32.xlu0 %v2036
        %v2038 = vpop.xlane.xlu0 %2037
        %v2039 = vsel %vm320, %v2029, 0.0
        %2040 = vadd.xlane.f32.xlu0 %v2039
        %v2041 = vpop.xlane.xlu0 %2040
        %v2042 = vsel %vm320, %v2030, 0.0
        %2043 = vadd.xlane.f32.xlu0 %v2042
        %v2044 = vpop.xlane.xlu0 %2043
        %v2045 = vmul.f32 %v2035, %v333
        %v2046 = vmul.f32 %v2038, %v333
        %v2047 = vmul.f32 %v2041, %v333
        %v2048 = vmul.f32 %v2044, %v333
        %v2049 = vsub.f32 %v2027, %v2045
        %v2050 = vsub.f32 %v2028, %v2046
        %v2051 = vsub.f32 %v2029, %v2047
        %v2052 = vsub.f32 %v2030, %v2048
        %v2053 = vmul.f32 %v2049, %v2049
        %v2054 = vmul.f32 %v2050, %v2050
        %v2055 = vmul.f32 %v2051, %v2051
        %v2056 = vmul.f32 %v2052, %v2052
        %v2057 = vsel %vm320, %v2053, 0.0
        %2058 = vadd.xlane.f32.xlu0 %v2057
        %v2059 = vpop.xlane.xlu0 %2058
        %v2060 = vsel %vm320, %v2054, 0.0
        %2061 = vadd.xlane.f32.xlu0 %v2060
        %v2062 = vpop.xlane.xlu0 %2061
        %v2063 = vsel %vm320, %v2055, 0.0
        %2064 = vadd.xlane.f32.xlu0 %v2063
        %v2065 = vpop.xlane.xlu0 %2064
        %v2066 = vsel %vm320, %v2056, 0.0
        %2067 = vadd.xlane.f32.xlu0 %v2066
        %v2068 = vpop.xlane.xlu0 %2067
        %v2069 = vmul.f32 %v2059, %v333
        %v2070 = vmul.f32 %v2062, %v333
        %v2071 = vmul.f32 %v2065, %v333
        %v2072 = vmul.f32 %v2068, %v333
        %v2073 = vadd.f32 %v2069, 1e-06
        %v2074 = vadd.f32 %v2070, 1e-06
        %v2075 = vadd.f32 %v2071, 1e-06
        %v2076 = vadd.f32 %v2072, 1e-06
        %v2077 = vrsqrt.pop %v2073
        %v2078 = vrsqrt.pop %v2074
        %v2079 = vrsqrt.pop %v2075
        %v2080 = vrsqrt.pop %v2076
        %v2081 = vmul.f32 %v2049, %v2077
        %v2082 = vmul.f32 %v2050, %v2078
        %v2083 = vmul.f32 %v2051, %v2079
        %v2084 = vmul.f32 %v2052, %v2080
        %v2085 = vlaneseq
        %v2086 = vshrl.u32 %v2085, 7
        %v2087 = vsub.s32 0, %v2086
        %v2088 = vrot.slane %v2031, %v2087
        %v2089 = vmul.f32 %v2081, %v2088
        %v2090 = vmul.f32 %v2082, %v2088
        %v2091 = vmul.f32 %v2083, %v2088
        %v2092 = vmul.f32 %v2084, %v2088
        %v2093 = vlaneseq
        %v2094 = vshrl.u32 %v2093, 7
        %v2095 = vsub.s32 0, %v2094
        %v2096 = vrot.slane %v2032, %v2095
        %v2097 = vadd.f32 %v2089, %v2096
        %v2098 = vadd.f32 %v2090, %v2096
        %v2099 = vadd.f32 %v2091, %v2096
        %v2100 = vadd.f32 %v2092, %v2096
        %v2101 = vld [vmem:[%s1 + $0xd8] sm:$0xf]
        %v2102 = vld [vmem:[%s1 + $0xdc] sm:$0xf]
        %v2103 = vld [vmem:[%s1 + $0xe0] sm:$0xf]
        %v2104 = vld [vmem:[%s1 + $0xe4] sm:$0xf]
        %v2105 = vpack.c.bf16 %v2098, %v2097
        %v2106 = vpack.c.bf16 %v2100, %v2099
        %v2107 = vld [vmem:[%s2 + $0xd] sm:$0x1]
        %v2108 = vlaneseq
        %v2109 = vshrl.u32 %v2108, 7
        %v2110 = vsub.s32 0, %v2109
        %v2111 = vrot.slane %v2107, %v2110
        %v2116 = vunpack.c.l.b16 %v2101
        %v2117 = vunpack.c.l.b16 %v2102
        %v2118 = vunpack.c.l.b16 %v2103
        %v2119 = vunpack.c.l.b16 %v2104
        %v2120 = vpack.c.b16 %v2117, %v2116
        %v2121 = vpack.c.b16 %v2119, %v2118
        %v2125 = vsel %vm320, %v2105, 0
        %v2128 = vsel %vm320, %v2106, 0
        %2130 = vmatprep.subr.bf16.mxu0 0
        %2131 = vmatpush1.bf16.msra.mxu0 %v2120
        %2132 = vmatprep.subr.bf16.mxu0 0
        %2133 = vmatpush1.bf16.msra.mxu0 %v2121
        %2134 = vmatprep.subr.bf16.mxu0 0
        %2135 = vmatpush1.bf16.msra.mxu0 0
        %2136 = vmatprep.subr.bf16.mxu0 0
        %2137 = vmatpush1.bf16.msra.mxu0 0
        %2138 = vmatprep.subr.bf16.mxu0 0
        %2139 = vmatpush1.bf16.msra.mxu0 0
        %2140 = vmatprep.subr.bf16.mxu0 0
        %2141 = vmatpush1.bf16.msra.mxu0 0
        %2142 = vmatprep.subr.bf16.mxu0 0
        %2143 = vmatpush1.bf16.msra.mxu0 0
        %2144 = vmatprep.subr.bf16.mxu0 0
        %2145 = vmatpush1.bf16.msra.mxu0 0
        %2146 = vmatprep.subr.bf16.mxu0 0
        %2147 = vmatpush1.bf16.msra.mxu0 0
        %2148 = vmatprep.subr.bf16.mxu0 0
        %2149 = vmatpush1.bf16.msra.mxu0 0
        %2150 = vmatprep.subr.bf16.mxu0 0
        %2151 = vmatpush1.bf16.msra.mxu0 0
        %2152 = vmatprep.subr.bf16.mxu0 0
        %2153 = vmatpush1.bf16.msra.mxu0 0
        %2154 = vmatprep.subr.bf16.mxu0 0
        %2155 = vmatpush1.bf16.msra.mxu0 0
        %2156 = vmatprep.subr.bf16.mxu0 0
        %2157 = vmatpush1.bf16.msra.mxu0 0
        %2158 = vmatprep.subr.bf16.mxu0 0
        %2159 = vmatpush1.bf16.msra.mxu0 0
        %2160 = vmatprep.subr.bf16.mxu0 0
        %2161 = vmatpush1.bf16.msra.mxu0 0
        %2162 = vmatprep.mubr.bf16.mxu0 0
        %2163 = vmatmul.mubr.bf16.gmra.mrb[0].mxu0 %v2125
        %v2164 = vpop.f32.mrb[0].mxu0
        %v2165 = vadd.f32 %v2111, %v2164
        %v2166 = vpop.f32.mrb[0].mxu0
        %v2167 = vpop.f32.mrb[0].mxu0
        %v2168 = vadd.f32 %v2111, %v2167
        %v2169 = vpop.f32.mrb[0].mxu0
        %2170 = vmatprep.mubr.bf16.mxu0 0
        %2171 = vmatmul.mubr.bf16.gmra.mrb[0].mxu0 %v2128
        %v2172 = vpop.f32.mrb[0].mxu0
        %v2173 = vadd.f32 %v2111, %v2172
        %v2174 = vpop.f32.mrb[0].mxu0
        %v2175 = vpop.f32.mrb[0].mxu0
        %v2176 = vadd.f32 %v2111, %v2175
        %v2177 = vpop.f32.mrb[0].mxu0
        %2178 = vdwg.mxu0
        %v2179 = vld [vmem:[%s1 + $0xe8] sm:$0xf]
        %v2180 = vld [vmem:[%s1 + $0xec] sm:$0xf]
        %v2181 = vld [vmem:[%s1 + $0xf0] sm:$0xf]
        %v2182 = vld [vmem:[%s1 + $0xf4] sm:$0xf]
        %v2183 = vld [vmem:[%s2 + $0xe] sm:$0x1]
        %v2184 = vlaneseq
        %v2185 = vshrl.u32 %v2184, 7
        %v2186 = vsub.s32 0, %v2185
        %v2187 = vrot.slane %v2183, %v2186
        %v2192 = vunpack.c.l.b16 %v2179
        %v2193 = vunpack.c.l.b16 %v2180
        %v2194 = vunpack.c.l.b16 %v2181
        %v2195 = vunpack.c.l.b16 %v2182
        %v2196 = vpack.c.b16 %v2193, %v2192
        %v2197 = vpack.c.b16 %v2195, %v2194
        %2200 = vmatprep.subr.bf16.mxu0 0
        %2201 = vmatpush1.bf16.msra.mxu0 %v2196
        %2202 = vmatprep.subr.bf16.mxu0 0
        %2203 = vmatpush1.bf16.msra.mxu0 %v2197
        %2204 = vmatprep.subr.bf16.mxu0 0
        %2205 = vmatpush1.bf16.msra.mxu0 0
        %2206 = vmatprep.subr.bf16.mxu0 0
        %2207 = vmatpush1.bf16.msra.mxu0 0
        %2208 = vmatprep.subr.bf16.mxu0 0
        %2209 = vmatpush1.bf16.msra.mxu0 0
        %2210 = vmatprep.subr.bf16.mxu0 0
        %2211 = vmatpush1.bf16.msra.mxu0 0
        %2212 = vmatprep.subr.bf16.mxu0 0
        %2213 = vmatpush1.bf16.msra.mxu0 0
        %2214 = vmatprep.subr.bf16.mxu0 0
        %2215 = vmatpush1.bf16.msra.mxu0 0
        %2216 = vmatprep.subr.bf16.mxu0 0
        %2217 = vmatpush1.bf16.msra.mxu0 0
        %2218 = vmatprep.subr.bf16.mxu0 0
        %2219 = vmatpush1.bf16.msra.mxu0 0
        %2220 = vmatprep.subr.bf16.mxu0 0
        %2221 = vmatpush1.bf16.msra.mxu0 0
        %2222 = vmatprep.subr.bf16.mxu0 0
        %2223 = vmatpush1.bf16.msra.mxu0 0
        %2224 = vmatprep.subr.bf16.mxu0 0
        %2225 = vmatpush1.bf16.msra.mxu0 0
        %2226 = vmatprep.subr.bf16.mxu0 0
        %2227 = vmatpush1.bf16.msra.mxu0 0
        %2228 = vmatprep.subr.bf16.mxu0 0
        %2229 = vmatpush1.bf16.msra.mxu0 0
        %2230 = vmatprep.subr.bf16.mxu0 0
        %2231 = vmatpush1.bf16.msra.mxu0 0
        %2232 = vmatprep.mubr.bf16.mxu0 0
        %2233 = vmatmul.mubr.bf16.gmra.mrb[0].mxu0 %v2125
        %v2234 = vpop.f32.mrb[0].mxu0
        %v2235 = vadd.f32 %v2187, %v2234
        %v2236 = vpop.f32.mrb[0].mxu0
        %v2237 = vpop.f32.mrb[0].mxu0
        %v2238 = vadd.f32 %v2187, %v2237
        %v2239 = vpop.f32.mrb[0].mxu0
        %2240 = vmatprep.mubr.bf16.mxu0 0
        %2241 = vmatmul.mubr.bf16.gmra.mrb[0].mxu0 %v2128
        %v2242 = vpop.f32.mrb[0].mxu0
        %v2243 = vadd.f32 %v2187, %v2242
        %v2244 = vpop.f32.mrb[0].mxu0
        %v2245 = vpop.f32.mrb[0].mxu0
        %v2246 = vadd.f32 %v2187, %v2245
        %v2247 = vpop.f32.mrb[0].mxu0
        %2248 = vdwg.mxu0
        %v2249 = vld [vmem:[%s1 + $0xf8] sm:$0xf]
        %v2250 = vld [vmem:[%s1 + $0xfc] sm:$0xf]
        %v2251 = vld [vmem:[%s1 + $0x100] sm:$0xf]
        %v2252 = vld [vmem:[%s1 + $0x104] sm:$0xf]
        %v2253 = vld [vmem:[%s2 + $0xf] sm:$0x1]
        %v2254 = vlaneseq
        %v2255 = vshrl.u32 %v2254, 7
        %v2256 = vsub.s32 0, %v2255
        %v2257 = vrot.slane %v2253, %v2256
        %v2262 = vunpack.c.l.b16 %v2249
        %v2263 = vunpack.c.l.b16 %v2250
        %v2264 = vunpack.c.l.b16 %v2251
        %v2265 = vunpack.c.l.b16 %v2252
        %v2266 = vpack.c.b16 %v2263, %v2262
        %v2267 = vpack.c.b16 %v2265, %v2264
        %2270 = vmatprep.subr.bf16.mxu0 0
        %2271 = vmatpush1.bf16.msra.mxu0 %v2266
        %2272 = vmatprep.subr.bf16.mxu0 0
        %2273 = vmatpush1.bf16.msra.mxu0 %v2267
        %2274 = vmatprep.subr.bf16.mxu0 0
        %2275 = vmatpush1.bf16.msra.mxu0 0
        %2276 = vmatprep.subr.bf16.mxu0 0
        %2277 = vmatpush1.bf16.msra.mxu0 0
        %2278 = vmatprep.subr.bf16.mxu0 0
        %2279 = vmatpush1.bf16.msra.mxu0 0
        %2280 = vmatprep.subr.bf16.mxu0 0
        %2281 = vmatpush1.bf16.msra.mxu0 0
        %2282 = vmatprep.subr.bf16.mxu0 0
        %2283 = vmatpush1.bf16.msra.mxu0 0
        %2284 = vmatprep.subr.bf16.mxu0 0
        %2285 = vmatpush1.bf16.msra.mxu0 0
        %2286 = vmatprep.subr.bf16.mxu0 0
        %2287 = vmatpush1.bf16.msra.mxu0 0
        %2288 = vmatprep.subr.bf16.mxu0 0
        %2289 = vmatpush1.bf16.msra.mxu0 0
        %2290 = vmatprep.subr.bf16.mxu0 0
        %2291 = vmatpush1.bf16.msra.mxu0 0
        %2292 = vmatprep.subr.bf16.mxu0 0
        %2293 = vmatpush1.bf16.msra.mxu0 0
        %2294 = vmatprep.subr.bf16.mxu0 0
        %2295 = vmatpush1.bf16.msra.mxu0 0
        %2296 = vmatprep.subr.bf16.mxu0 0
        %2297 = vmatpush1.bf16.msra.mxu0 0
        %2298 = vmatprep.subr.bf16.mxu0 0
        %2299 = vmatpush1.bf16.msra.mxu0 0
        %2300 = vmatprep.subr.bf16.mxu0 0
        %2301 = vmatpush1.bf16.msra.mxu0 0
        %2302 = vmatprep.mubr.bf16.mxu0 0
        %2303 = vmatmul.mubr.bf16.gmra.mrb[0].mxu0 %v2125
        %v2304 = vpop.f32.mrb[0].mxu0
        %v2305 = vadd.f32 %v2257, %v2304
        %v2306 = vpop.f32.mrb[0].mxu0
        %v2307 = vpop.f32.mrb[0].mxu0
        %v2308 = vadd.f32 %v2257, %v2307
        %v2309 = vpop.f32.mrb[0].mxu0
        %2310 = vmatprep.mubr.bf16.mxu0 0
        %2311 = vmatmul.mubr.bf16.gmra.mrb[0].mxu0 %v2128
        %v2312 = vpop.f32.mrb[0].mxu0
        %v2313 = vadd.f32 %v2257, %v2312
        %v2314 = vpop.f32.mrb[0].mxu0
        %v2315 = vpop.f32.mrb[0].mxu0
        %v2316 = vadd.f32 %v2257, %v2315
        %v2317 = vpop.f32.mrb[0].mxu0
        %2318 = vdwg.mxu0
        %v2319 = vld [vmem:[%s1 + $0x108] sm:$0xf]
        %v2320 = vld [vmem:[%s1 + $0x10c] sm:$0xf]
        %v2321 = vld [vmem:[%s1 + $0x110] sm:$0xf]
        %v2322 = vld [vmem:[%s1 + $0x114] sm:$0xf]
        %v2323 = vld [vmem:[%s2 + $0x10] sm:$0x1]
        %v2324 = vpack.c.bf16 %v2168, %v2165
        %v2325 = vpack.c.bf16 %v2176, %v2173
        %v2326 = vpack.c.bf16 %v2238, %v2235
        %v2327 = vpack.c.bf16 %v2246, %v2243
        %v2329 = vsel %vm617, %v2324, 0
        %v2332 = vsel %vm617, %v2326, 0
        %2334 = vmatprep.subr.bf16.mxu0 0
        %2335 = vmatpush1.bf16.xpose.msra.mxu0 %v2332
        %2336 = vmatprep.subr.bf16.mxu0 0
        %2337 = vmatpush1.bf16.xpose.msra.mxu0 0
        %2338 = vmatprep.subr.bf16.mxu0 0
        %2339 = vmatpush1.bf16.xpose.msra.mxu0 0
        %2340 = vmatprep.subr.bf16.mxu0 0
        %2341 = vmatpush1.bf16.xpose.msra.mxu0 0
        %2342 = vmatprep.subr.bf16.mxu0 0
        %2343 = vmatpush1.bf16.xpose.msra.mxu0 0
        %2344 = vmatprep.subr.bf16.mxu0 0
        %2345 = vmatpush1.bf16.xpose.msra.mxu0 0
        %2346 = vmatprep.subr.bf16.mxu0 0
        %2347 = vmatpush1.bf16.xpose.msra.mxu0 0
        %2348 = vmatprep.subr.bf16.mxu0 0
        %2349 = vmatpush1.bf16.xpose.msra.mxu0 0
        %2350 = vmatprep.subr.bf16.mxu0 0
        %2351 = vmatpush1.bf16.xpose.msra.mxu0 0
        %2352 = vmatprep.subr.bf16.mxu0 0
        %2353 = vmatpush1.bf16.xpose.msra.mxu0 0
        %2354 = vmatprep.subr.bf16.mxu0 0
        %2355 = vmatpush1.bf16.xpose.msra.mxu0 0
        %2356 = vmatprep.subr.bf16.mxu0 0
        %2357 = vmatpush1.bf16.xpose.msra.mxu0 0
        %2358 = vmatprep.subr.bf16.mxu0 0
        %2359 = vmatpush1.bf16.xpose.msra.mxu0 0
        %2360 = vmatprep.subr.bf16.mxu0 0
        %2361 = vmatpush1.bf16.xpose.msra.mxu0 0
        %2362 = vmatprep.subr.bf16.mxu0 0
        %2363 = vmatpush1.bf16.xpose.msra.mxu0 0
        %2364 = vmatprep.subr.bf16.mxu0 0
        %2365 = vmatpush1.bf16.xpose.msra.mxu0 0
        %2366 = vmatprep.mubr.bf16.mxu0 0
        %2367 = vmatmul.mubr.bf16.gmra.mrb[0].mxu0 %v2329
        %v2368 = vpop.f32.mrb[0].mxu0
        %v2369 = vadd.f32 0.0, %v2368
        %v2370 = vpop.f32.mrb[0].mxu0
        %v2371 = vpop.f32.mrb[0].mxu0
        %v2372 = vadd.f32 0.0, %v2371
        %v2373 = vpop.f32.mrb[0].mxu0
        %2374 = vdwg.mxu0
        %v2376 = vsel %vm617, %v2325, 0
        %v2379 = vsel %vm617, %v2327, 0
        %2381 = vmatprep.subr.bf16.mxu0 0
        %2382 = vmatpush1.bf16.xpose.msra.mxu0 %v2379
        %2383 = vmatprep.subr.bf16.mxu0 0
        %2384 = vmatpush1.bf16.xpose.msra.mxu0 0
        %2385 = vmatprep.subr.bf16.mxu0 0
        %2386 = vmatpush1.bf16.xpose.msra.mxu0 0
        %2387 = vmatprep.subr.bf16.mxu0 0
        %2388 = vmatpush1.bf16.xpose.msra.mxu0 0
        %2389 = vmatprep.subr.bf16.mxu0 0
        %2390 = vmatpush1.bf16.xpose.msra.mxu0 0
        %2391 = vmatprep.subr.bf16.mxu0 0
        %2392 = vmatpush1.bf16.xpose.msra.mxu0 0
        %2393 = vmatprep.subr.bf16.mxu0 0
        %2394 = vmatpush1.bf16.xpose.msra.mxu0 0
        %2395 = vmatprep.subr.bf16.mxu0 0
        %2396 = vmatpush1.bf16.xpose.msra.mxu0 0
        %2397 = vmatprep.subr.bf16.mxu0 0
        %2398 = vmatpush1.bf16.xpose.msra.mxu0 0
        %2399 = vmatprep.subr.bf16.mxu0 0
        %2400 = vmatpush1.bf16.xpose.msra.mxu0 0
        %2401 = vmatprep.subr.bf16.mxu0 0
        %2402 = vmatpush1.bf16.xpose.msra.mxu0 0
        %2403 = vmatprep.subr.bf16.mxu0 0
        %2404 = vmatpush1.bf16.xpose.msra.mxu0 0
        %2405 = vmatprep.subr.bf16.mxu0 0
        %2406 = vmatpush1.bf16.xpose.msra.mxu0 0
        %2407 = vmatprep.subr.bf16.mxu0 0
        %2408 = vmatpush1.bf16.xpose.msra.mxu0 0
        %2409 = vmatprep.subr.bf16.mxu0 0
        %2410 = vmatpush1.bf16.xpose.msra.mxu0 0
        %2411 = vmatprep.subr.bf16.mxu0 0
        %2412 = vmatpush1.bf16.xpose.msra.mxu0 0
        %2413 = vmatprep.mubr.bf16.mxu0 0
        %2414 = vmatmul.mubr.bf16.gmra.mrb[0].mxu0 %v2376
        %v2415 = vpop.f32.mrb[0].mxu0
        %v2416 = vadd.f32 0.0, %v2415
        %v2417 = vpop.f32.mrb[0].mxu0
        %v2418 = vpop.f32.mrb[0].mxu0
        %v2419 = vadd.f32 0.0, %v2418
        %v2420 = vpop.f32.mrb[0].mxu0
        %2421 = vdwg.mxu0
        %v2422 = vsel %vm712, %v2369, -inf
        %2423 = vmax.xlane.f32.xlu0 %v2422
        %v2424 = vpop.xlane.xlu0 %2423
        %v2425 = vsel %vm712, %v2372, -inf
        %2426 = vmax.xlane.f32.xlu0 %v2425
        %v2427 = vpop.xlane.xlu0 %2426
        %v2428 = vsel %vm712, %v2416, -inf
        %2429 = vmax.xlane.f32.xlu0 %v2428
        %v2430 = vpop.xlane.xlu0 %2429
        %v2431 = vsel %vm712, %v2419, -inf
        %2432 = vmax.xlane.f32.xlu0 %v2431
        %v2433 = vpop.xlane.xlu0 %2432
        %v2434 = vsub.f32 %v2369, %v2424
        %v2435 = vsub.f32 %v2372, %v2427
        %v2436 = vsub.f32 %v2416, %v2430
        %v2437 = vsub.f32 %v2419, %v2433
        %v2438 = vmul.f32 %v2434, 1.442695
        %v2439 = vpow.pop %v2438
        %v2440 = vmul.f32 %v2435, 1.442695
        %v2441 = vpow.pop %v2440
        %v2442 = vmul.f32 %v2436, 1.442695
        %v2443 = vpow.pop %v2442
        %v2444 = vmul.f32 %v2437, 1.442695
        %v2445 = vpow.pop %v2444
        %v2446 = vsel %vm712, %v2439, 0.0
        %2447 = vadd.xlane.f32.xlu0 %v2446
        %v2448 = vpop.xlane.xlu0 %2447
        %v2449 = vsel %vm712, %v2441, 0.0
        %2450 = vadd.xlane.f32.xlu0 %v2449
        %v2451 = vpop.xlane.xlu0 %2450
        %v2452 = vsel %vm712, %v2443, 0.0
        %2453 = vadd.xlane.f32.xlu0 %v2452
        %v2454 = vpop.xlane.xlu0 %2453
        %v2455 = vsel %vm712, %v2445, 0.0
        %2456 = vadd.xlane.f32.xlu0 %v2455
        %v2457 = vpop.xlane.xlu0 %2456
        %v2458 = vrcp.pop %v2448
        %v2459 = vrcp.pop %v2451
        %v2460 = vrcp.pop %v2454
        %v2461 = vrcp.pop %v2457
        %v2462 = vmul.f32 %v2439, %v2458
        %v2463 = vmul.f32 %v2441, %v2459
        %v2464 = vmul.f32 %v2443, %v2460
        %v2465 = vmul.f32 %v2445, %v2461
        %v2466 = vpack.c.bf16 %v2463, %v2462
        %v2467 = vpack.c.bf16 %v2465, %v2464
        %v2468 = vpack.c.bf16 %v2308, %v2305
        %v2469 = vpack.c.bf16 %v2316, %v2313
        %v2471 = vsel %vm712, %v2466, 0
        %2473 = vmatprep.subr.bf16.mxu0 0
        %2474 = vmatpush1.bf16.msra.mxu0 %v2468
        %2475 = vmatprep.subr.bf16.mxu0 0
        %2476 = vmatpush1.bf16.msra.mxu0 0
        %2477 = vmatprep.subr.bf16.mxu0 0
        %2478 = vmatpush1.bf16.msra.mxu0 0
        %2479 = vmatprep.subr.bf16.mxu0 0
        %2480 = vmatpush1.bf16.msra.mxu0 0
        %2481 = vmatprep.subr.bf16.mxu0 0
        %2482 = vmatpush1.bf16.msra.mxu0 0
        %2483 = vmatprep.subr.bf16.mxu0 0
        %2484 = vmatpush1.bf16.msra.mxu0 0
        %2485 = vmatprep.subr.bf16.mxu0 0
        %2486 = vmatpush1.bf16.msra.mxu0 0
        %2487 = vmatprep.subr.bf16.mxu0 0
        %2488 = vmatpush1.bf16.msra.mxu0 0
        %2489 = vmatprep.subr.bf16.mxu0 0
        %2490 = vmatpush1.bf16.msra.mxu0 0
        %2491 = vmatprep.subr.bf16.mxu0 0
        %2492 = vmatpush1.bf16.msra.mxu0 0
        %2493 = vmatprep.subr.bf16.mxu0 0
        %2494 = vmatpush1.bf16.msra.mxu0 0
        %2495 = vmatprep.subr.bf16.mxu0 0
        %2496 = vmatpush1.bf16.msra.mxu0 0
        %2497 = vmatprep.subr.bf16.mxu0 0
        %2498 = vmatpush1.bf16.msra.mxu0 0
        %2499 = vmatprep.subr.bf16.mxu0 0
        %2500 = vmatpush1.bf16.msra.mxu0 0
        %2501 = vmatprep.subr.bf16.mxu0 0
        %2502 = vmatpush1.bf16.msra.mxu0 0
        %2503 = vmatprep.subr.bf16.mxu0 0
        %2504 = vmatpush1.bf16.msra.mxu0 0
        %2505 = vmatprep.mubr.bf16.mxu0 0
        %2506 = vmatmul.mubr.bf16.gmra.mrb[0].mxu0 %v2471
        %v2507 = vpop.f32.mrb[0].mxu0
        %v2508 = vadd.f32 0.0, %v2507
        %v2509 = vpop.f32.mrb[0].mxu0
        %v2510 = vpop.f32.mrb[0].mxu0
        %v2511 = vadd.f32 0.0, %v2510
        %v2512 = vpop.f32.mrb[0].mxu0
        %2513 = vdwg.mxu0
        %v2515 = vsel %vm712, %v2467, 0
        %2517 = vmatprep.subr.bf16.mxu0 0
        %2518 = vmatpush1.bf16.msra.mxu0 %v2469
        %2519 = vmatprep.subr.bf16.mxu0 0
        %2520 = vmatpush1.bf16.msra.mxu0 0
        %2521 = vmatprep.subr.bf16.mxu0 0
        %2522 = vmatpush1.bf16.msra.mxu0 0
        %2523 = vmatprep.subr.bf16.mxu0 0
        %2524 = vmatpush1.bf16.msra.mxu0 0
        %2525 = vmatprep.subr.bf16.mxu0 0
        %2526 = vmatpush1.bf16.msra.mxu0 0
        %2527 = vmatprep.subr.bf16.mxu0 0
        %2528 = vmatpush1.bf16.msra.mxu0 0
        %2529 = vmatprep.subr.bf16.mxu0 0
        %2530 = vmatpush1.bf16.msra.mxu0 0
        %2531 = vmatprep.subr.bf16.mxu0 0
        %2532 = vmatpush1.bf16.msra.mxu0 0
        %2533 = vmatprep.subr.bf16.mxu0 0
        %2534 = vmatpush1.bf16.msra.mxu0 0
        %2535 = vmatprep.subr.bf16.mxu0 0
        %2536 = vmatpush1.bf16.msra.mxu0 0
        %2537 = vmatprep.subr.bf16.mxu0 0
        %2538 = vmatpush1.bf16.msra.mxu0 0
        %2539 = vmatprep.subr.bf16.mxu0 0
        %2540 = vmatpush1.bf16.msra.mxu0 0
        %2541 = vmatprep.subr.bf16.mxu0 0
        %2542 = vmatpush1.bf16.msra.mxu0 0
        %2543 = vmatprep.subr.bf16.mxu0 0
        %2544 = vmatpush1.bf16.msra.mxu0 0
        %2545 = vmatprep.subr.bf16.mxu0 0
        %2546 = vmatpush1.bf16.msra.mxu0 0
        %2547 = vmatprep.subr.bf16.mxu0 0
        %2548 = vmatpush1.bf16.msra.mxu0 0
        %2549 = vmatprep.mubr.bf16.mxu0 0
        %2550 = vmatmul.mubr.bf16.gmra.mrb[0].mxu0 %v2515
        %v2551 = vpop.f32.mrb[0].mxu0
        %v2552 = vadd.f32 0.0, %v2551
        %v2553 = vpop.f32.mrb[0].mxu0
        %v2554 = vpop.f32.mrb[0].mxu0
        %v2555 = vadd.f32 0.0, %v2554
        %v2556 = vpop.f32.mrb[0].mxu0
        %2557 = vdwg.mxu0
        %2559 = vrot.lane.b32.xlu0 %v2324, 120
        %v2560 = vpop.permute.xlu0 %2559
        %2562 = vrot.lane.b32.xlu0 %v2326, 120
        %v2563 = vpop.permute.xlu0 %2562
        %v2565 = vsel %vm617, %v2560, 0
        %v2568 = vsel %vm617, %v2563, 0
        %2570 = vmatprep.subr.bf16.mxu0 0
        %2571 = vmatpush1.bf16.xpose.msra.mxu0 %v2568
        %2572 = vmatprep.subr.bf16.mxu0 0
        %2573 = vmatpush1.bf16.xpose.msra.mxu0 0
        %2574 = vmatprep.subr.bf16.mxu0 0
        %2575 = vmatpush1.bf16.xpose.msra.mxu0 0
        %2576 = vmatprep.subr.bf16.mxu0 0
        %2577 = vmatpush1.bf16.xpose.msra.mxu0 0
        %2578 = vmatprep.subr.bf16.mxu0 0
        %2579 = vmatpush1.bf16.xpose.msra.mxu0 0
        %2580 = vmatprep.subr.bf16.mxu0 0
        %2581 = vmatpush1.bf16.xpose.msra.mxu0 0
        %2582 = vmatprep.subr.bf16.mxu0 0
        %2583 = vmatpush1.bf16.xpose.msra.mxu0 0
        %2584 = vmatprep.subr.bf16.mxu0 0
        %2585 = vmatpush1.bf16.xpose.msra.mxu0 0
        %2586 = vmatprep.subr.bf16.mxu0 0
        %2587 = vmatpush1.bf16.xpose.msra.mxu0 0
        %2588 = vmatprep.subr.bf16.mxu0 0
        %2589 = vmatpush1.bf16.xpose.msra.mxu0 0
        %2590 = vmatprep.subr.bf16.mxu0 0
        %2591 = vmatpush1.bf16.xpose.msra.mxu0 0
        %2592 = vmatprep.subr.bf16.mxu0 0
        %2593 = vmatpush1.bf16.xpose.msra.mxu0 0
        %2594 = vmatprep.subr.bf16.mxu0 0
        %2595 = vmatpush1.bf16.xpose.msra.mxu0 0
        %2596 = vmatprep.subr.bf16.mxu0 0
        %2597 = vmatpush1.bf16.xpose.msra.mxu0 0
        %2598 = vmatprep.subr.bf16.mxu0 0
        %2599 = vmatpush1.bf16.xpose.msra.mxu0 0
        %2600 = vmatprep.subr.bf16.mxu0 0
        %2601 = vmatpush1.bf16.xpose.msra.mxu0 0
        %2602 = vmatprep.mubr.bf16.mxu0 0
        %2603 = vmatmul.mubr.bf16.gmra.mrb[0].mxu0 %v2565
        %v2604 = vpop.f32.mrb[0].mxu0
        %v2605 = vadd.f32 0.0, %v2604
        %v2606 = vpop.f32.mrb[0].mxu0
        %v2607 = vpop.f32.mrb[0].mxu0
        %v2608 = vadd.f32 0.0, %v2607
        %v2609 = vpop.f32.mrb[0].mxu0
        %2610 = vdwg.mxu0
        %2612 = vrot.lane.b32.xlu0 %v2325, 120
        %v2613 = vpop.permute.xlu0 %2612
        %2615 = vrot.lane.b32.xlu0 %v2327, 120
        %v2616 = vpop.permute.xlu0 %2615
        %v2618 = vsel %vm617, %v2613, 0
        %v2621 = vsel %vm617, %v2616, 0
        %2623 = vmatprep.subr.bf16.mxu0 0
        %2624 = vmatpush1.bf16.xpose.msra.mxu0 %v2621
        %2625 = vmatprep.subr.bf16.mxu0 0
        %2626 = vmatpush1.bf16.xpose.msra.mxu0 0
        %2627 = vmatprep.subr.bf16.mxu0 0
        %2628 = vmatpush1.bf16.xpose.msra.mxu0 0
        %2629 = vmatprep.subr.bf16.mxu0 0
        %2630 = vmatpush1.bf16.xpose.msra.mxu0 0
        %2631 = vmatprep.subr.bf16.mxu0 0
        %2632 = vmatpush1.bf16.xpose.msra.mxu0 0
        %2633 = vmatprep.subr.bf16.mxu0 0
        %2634 = vmatpush1.bf16.xpose.msra.mxu0 0
        %2635 = vmatprep.subr.bf16.mxu0 0
        %2636 = vmatpush1.bf16.xpose.msra.mxu0 0
        %2637 = vmatprep.subr.bf16.mxu0 0
        %2638 = vmatpush1.bf16.xpose.msra.mxu0 0
        %2639 = vmatprep.subr.bf16.mxu0 0
        %2640 = vmatpush1.bf16.xpose.msra.mxu0 0
        %2641 = vmatprep.subr.bf16.mxu0 0
        %2642 = vmatpush1.bf16.xpose.msra.mxu0 0
        %2643 = vmatprep.subr.bf16.mxu0 0
        %2644 = vmatpush1.bf16.xpose.msra.mxu0 0
        %2645 = vmatprep.subr.bf16.mxu0 0
        %2646 = vmatpush1.bf16.xpose.msra.mxu0 0
        %2647 = vmatprep.subr.bf16.mxu0 0
        %2648 = vmatpush1.bf16.xpose.msra.mxu0 0
        %2649 = vmatprep.subr.bf16.mxu0 0
        %2650 = vmatpush1.bf16.xpose.msra.mxu0 0
        %2651 = vmatprep.subr.bf16.mxu0 0
        %2652 = vmatpush1.bf16.xpose.msra.mxu0 0
        %2653 = vmatprep.subr.bf16.mxu0 0
        %2654 = vmatpush1.bf16.xpose.msra.mxu0 0
        %2655 = vmatprep.mubr.bf16.mxu0 0
        %2656 = vmatmul.mubr.bf16.gmra.mrb[0].mxu0 %v2618
        %v2657 = vpop.f32.mrb[0].mxu0
        %v2658 = vadd.f32 0.0, %v2657
        %v2659 = vpop.f32.mrb[0].mxu0
        %v2660 = vpop.f32.mrb[0].mxu0
        %v2661 = vadd.f32 0.0, %v2660
        %v2662 = vpop.f32.mrb[0].mxu0
        %2663 = vdwg.mxu0
        %v2664 = vsel %vm712, %v2605, -inf
        %2665 = vmax.xlane.f32.xlu0 %v2664
        %v2666 = vpop.xlane.xlu0 %2665
        %v2667 = vsel %vm712, %v2608, -inf
        %2668 = vmax.xlane.f32.xlu0 %v2667
        %v2669 = vpop.xlane.xlu0 %2668
        %v2670 = vsel %vm712, %v2658, -inf
        %2671 = vmax.xlane.f32.xlu0 %v2670
        %v2672 = vpop.xlane.xlu0 %2671
        %v2673 = vsel %vm712, %v2661, -inf
        %2674 = vmax.xlane.f32.xlu0 %v2673
        %v2675 = vpop.xlane.xlu0 %2674
        %v2676 = vsub.f32 %v2605, %v2666
        %v2677 = vsub.f32 %v2608, %v2669
        %v2678 = vsub.f32 %v2658, %v2672
        %v2679 = vsub.f32 %v2661, %v2675
        %v2680 = vmul.f32 %v2676, 1.442695
        %v2681 = vpow.pop %v2680
        %v2682 = vmul.f32 %v2677, 1.442695
        %v2683 = vpow.pop %v2682
        %v2684 = vmul.f32 %v2678, 1.442695
        %v2685 = vpow.pop %v2684
        %v2686 = vmul.f32 %v2679, 1.442695
        %v2687 = vpow.pop %v2686
        %v2688 = vsel %vm712, %v2681, 0.0
        %2689 = vadd.xlane.f32.xlu0 %v2688
        %v2690 = vpop.xlane.xlu0 %2689
        %v2691 = vsel %vm712, %v2683, 0.0
        %2692 = vadd.xlane.f32.xlu0 %v2691
        %v2693 = vpop.xlane.xlu0 %2692
        %v2694 = vsel %vm712, %v2685, 0.0
        %2695 = vadd.xlane.f32.xlu0 %v2694
        %v2696 = vpop.xlane.xlu0 %2695
        %v2697 = vsel %vm712, %v2687, 0.0
        %2698 = vadd.xlane.f32.xlu0 %v2697
        %v2699 = vpop.xlane.xlu0 %2698
        %v2700 = vrcp.pop %v2690
        %v2701 = vrcp.pop %v2693
        %v2702 = vrcp.pop %v2696
        %v2703 = vrcp.pop %v2699
        %v2704 = vmul.f32 %v2681, %v2700
        %v2705 = vmul.f32 %v2683, %v2701
        %v2706 = vmul.f32 %v2685, %v2702
        %v2707 = vmul.f32 %v2687, %v2703
        %v2708 = vpack.c.bf16 %v2705, %v2704
        %v2709 = vpack.c.bf16 %v2707, %v2706
        %2711 = vrot.lane.b32.xlu0 %v2468, 120
        %v2712 = vpop.permute.xlu0 %2711
        %v2715 = vsel %vm712, %v2708, 0
        %2717 = vmatprep.subr.bf16.mxu0 0
        %2718 = vmatpush1.bf16.msra.mxu0 %v2712
        %2719 = vmatprep.subr.bf16.mxu0 0
        %2720 = vmatpush1.bf16.msra.mxu0 0
        %2721 = vmatprep.subr.bf16.mxu0 0
        %2722 = vmatpush1.bf16.msra.mxu0 0
        %2723 = vmatprep.subr.bf16.mxu0 0
        %2724 = vmatpush1.bf16.msra.mxu0 0
        %2725 = vmatprep.subr.bf16.mxu0 0
        %2726 = vmatpush1.bf16.msra.mxu0 0
        %2727 = vmatprep.subr.bf16.mxu0 0
        %2728 = vmatpush1.bf16.msra.mxu0 0
        %2729 = vmatprep.subr.bf16.mxu0 0
        %2730 = vmatpush1.bf16.msra.mxu0 0
        %2731 = vmatprep.subr.bf16.mxu0 0
        %2732 = vmatpush1.bf16.msra.mxu0 0
        %2733 = vmatprep.subr.bf16.mxu0 0
        %2734 = vmatpush1.bf16.msra.mxu0 0
        %2735 = vmatprep.subr.bf16.mxu0 0
        %2736 = vmatpush1.bf16.msra.mxu0 0
        %2737 = vmatprep.subr.bf16.mxu0 0
        %2738 = vmatpush1.bf16.msra.mxu0 0
        %2739 = vmatprep.subr.bf16.mxu0 0
        %2740 = vmatpush1.bf16.msra.mxu0 0
        %2741 = vmatprep.subr.bf16.mxu0 0
        %2742 = vmatpush1.bf16.msra.mxu0 0
        %2743 = vmatprep.subr.bf16.mxu0 0
        %2744 = vmatpush1.bf16.msra.mxu0 0
        %2745 = vmatprep.subr.bf16.mxu0 0
        %2746 = vmatpush1.bf16.msra.mxu0 0
        %2747 = vmatprep.subr.bf16.mxu0 0
        %2748 = vmatpush1.bf16.msra.mxu0 0
        %2749 = vmatprep.mubr.bf16.mxu0 0
        %2750 = vmatmul.mubr.bf16.gmra.mrb[0].mxu0 %v2715
        %v2751 = vpop.f32.mrb[0].mxu0
        %v2752 = vadd.f32 0.0, %v2751
        %v2753 = vpop.f32.mrb[0].mxu0
        %v2754 = vpop.f32.mrb[0].mxu0
        %v2755 = vadd.f32 0.0, %v2754
        %v2756 = vpop.f32.mrb[0].mxu0
        %2757 = vdwg.mxu0
        %2759 = vrot.lane.b32.xlu0 %v2469, 120
        %v2760 = vpop.permute.xlu0 %2759
        %v2763 = vsel %vm712, %v2709, 0
        %2765 = vmatprep.subr.bf16.mxu0 0
        %2766 = vmatpush1.bf16.msra.mxu0 %v2760
        %2767 = vmatprep.subr.bf16.mxu0 0
        %2768 = vmatpush1.bf16.msra.mxu0 0
        %2769 = vmatprep.subr.bf16.mxu0 0
        %2770 = vmatpush1.bf16.msra.mxu0 0
        %2771 = vmatprep.subr.bf16.mxu0 0
        %2772 = vmatpush1.bf16.msra.mxu0 0
        %2773 = vmatprep.subr.bf16.mxu0 0
        %2774 = vmatpush1.bf16.msra.mxu0 0
        %2775 = vmatprep.subr.bf16.mxu0 0
        %2776 = vmatpush1.bf16.msra.mxu0 0
        %2777 = vmatprep.subr.bf16.mxu0 0
        %2778 = vmatpush1.bf16.msra.mxu0 0
        %2779 = vmatprep.subr.bf16.mxu0 0
        %2780 = vmatpush1.bf16.msra.mxu0 0
        %2781 = vmatprep.subr.bf16.mxu0 0
        %2782 = vmatpush1.bf16.msra.mxu0 0
        %2783 = vmatprep.subr.bf16.mxu0 0
        %2784 = vmatpush1.bf16.msra.mxu0 0
        %2785 = vmatprep.subr.bf16.mxu0 0
        %2786 = vmatpush1.bf16.msra.mxu0 0
        %2787 = vmatprep.subr.bf16.mxu0 0
        %2788 = vmatpush1.bf16.msra.mxu0 0
        %2789 = vmatprep.subr.bf16.mxu0 0
        %2790 = vmatpush1.bf16.msra.mxu0 0
        %2791 = vmatprep.subr.bf16.mxu0 0
        %2792 = vmatpush1.bf16.msra.mxu0 0
        %2793 = vmatprep.subr.bf16.mxu0 0
        %2794 = vmatpush1.bf16.msra.mxu0 0
        %2795 = vmatprep.subr.bf16.mxu0 0
        %2796 = vmatpush1.bf16.msra.mxu0 0
        %2797 = vmatprep.mubr.bf16.mxu0 0
        %2798 = vmatmul.mubr.bf16.gmra.mrb[0].mxu0 %v2763
        %v2799 = vpop.f32.mrb[0].mxu0
        %v2800 = vadd.f32 0.0, %v2799
        %v2801 = vpop.f32.mrb[0].mxu0
        %v2802 = vpop.f32.mrb[0].mxu0
        %v2803 = vadd.f32 0.0, %v2802
        %v2804 = vpop.f32.mrb[0].mxu0
        %2805 = vdwg.mxu0
        %2806 = vrot.lane.b32.xlu0 %v2324, 112
        %v2807 = vpop.permute.xlu0 %2806
        %2808 = vrot.lane.b32.xlu0 %v2326, 112
        %v2809 = vpop.permute.xlu0 %2808
        %v2811 = vsel %vm617, %v2807, 0
        %v2814 = vsel %vm617, %v2809, 0
        %2816 = vmatprep.subr.bf16.mxu0 0
        %2817 = vmatpush1.bf16.xpose.msra.mxu0 %v2814
        %2818 = vmatprep.subr.bf16.mxu0 0
        %2819 = vmatpush1.bf16.xpose.msra.mxu0 0
        %2820 = vmatprep.subr.bf16.mxu0 0
        %2821 = vmatpush1.bf16.xpose.msra.mxu0 0
        %2822 = vmatprep.subr.bf16.mxu0 0
        %2823 = vmatpush1.bf16.xpose.msra.mxu0 0
        %2824 = vmatprep.subr.bf16.mxu0 0
        %2825 = vmatpush1.bf16.xpose.msra.mxu0 0
        %2826 = vmatprep.subr.bf16.mxu0 0
        %2827 = vmatpush1.bf16.xpose.msra.mxu0 0
        %2828 = vmatprep.subr.bf16.mxu0 0
        %2829 = vmatpush1.bf16.xpose.msra.mxu0 0
        %2830 = vmatprep.subr.bf16.mxu0 0
        %2831 = vmatpush1.bf16.xpose.msra.mxu0 0
        %2832 = vmatprep.subr.bf16.mxu0 0
        %2833 = vmatpush1.bf16.xpose.msra.mxu0 0
        %2834 = vmatprep.subr.bf16.mxu0 0
        %2835 = vmatpush1.bf16.xpose.msra.mxu0 0
        %2836 = vmatprep.subr.bf16.mxu0 0
        %2837 = vmatpush1.bf16.xpose.msra.mxu0 0
        %2838 = vmatprep.subr.bf16.mxu0 0
        %2839 = vmatpush1.bf16.xpose.msra.mxu0 0
        %2840 = vmatprep.subr.bf16.mxu0 0
        %2841 = vmatpush1.bf16.xpose.msra.mxu0 0
        %2842 = vmatprep.subr.bf16.mxu0 0
        %2843 = vmatpush1.bf16.xpose.msra.mxu0 0
        %2844 = vmatprep.subr.bf16.mxu0 0
        %2845 = vmatpush1.bf16.xpose.msra.mxu0 0
        %2846 = vmatprep.subr.bf16.mxu0 0
        %2847 = vmatpush1.bf16.xpose.msra.mxu0 0
        %2848 = vmatprep.mubr.bf16.mxu0 0
        %2849 = vmatmul.mubr.bf16.gmra.mrb[0].mxu0 %v2811
        %v2850 = vpop.f32.mrb[0].mxu0
        %v2851 = vadd.f32 0.0, %v2850
        %v2852 = vpop.f32.mrb[0].mxu0
        %v2853 = vpop.f32.mrb[0].mxu0
        %v2854 = vadd.f32 0.0, %v2853
        %v2855 = vpop.f32.mrb[0].mxu0
        %2856 = vdwg.mxu0
        %2857 = vrot.lane.b32.xlu0 %v2325, 112
        %v2858 = vpop.permute.xlu0 %2857
        %2859 = vrot.lane.b32.xlu0 %v2327, 112
        %v2860 = vpop.permute.xlu0 %2859
        %v2862 = vsel %vm617, %v2858, 0
        %v2865 = vsel %vm617, %v2860, 0
        %2867 = vmatprep.subr.bf16.mxu0 0
        %2868 = vmatpush1.bf16.xpose.msra.mxu0 %v2865
        %2869 = vmatprep.subr.bf16.mxu0 0
        %2870 = vmatpush1.bf16.xpose.msra.mxu0 0
        %2871 = vmatprep.subr.bf16.mxu0 0
        %2872 = vmatpush1.bf16.xpose.msra.mxu0 0
        %2873 = vmatprep.subr.bf16.mxu0 0
        %2874 = vmatpush1.bf16.xpose.msra.mxu0 0
        %2875 = vmatprep.subr.bf16.mxu0 0
        %2876 = vmatpush1.bf16.xpose.msra.mxu0 0
        %2877 = vmatprep.subr.bf16.mxu0 0
        %2878 = vmatpush1.bf16.xpose.msra.mxu0 0
        %2879 = vmatprep.subr.bf16.mxu0 0
        %2880 = vmatpush1.bf16.xpose.msra.mxu0 0
        %2881 = vmatprep.subr.bf16.mxu0 0
        %2882 = vmatpush1.bf16.xpose.msra.mxu0 0
        %2883 = vmatprep.subr.bf16.mxu0 0
        %2884 = vmatpush1.bf16.xpose.msra.mxu0 0
        %2885 = vmatprep.subr.bf16.mxu0 0
        %2886 = vmatpush1.bf16.xpose.msra.mxu0 0
        %2887 = vmatprep.subr.bf16.mxu0 0
        %2888 = vmatpush1.bf16.xpose.msra.mxu0 0
        %2889 = vmatprep.subr.bf16.mxu0 0
        %2890 = vmatpush1.bf16.xpose.msra.mxu0 0
        %2891 = vmatprep.subr.bf16.mxu0 0
        %2892 = vmatpush1.bf16.xpose.msra.mxu0 0
        %2893 = vmatprep.subr.bf16.mxu0 0
        %2894 = vmatpush1.bf16.xpose.msra.mxu0 0
        %2895 = vmatprep.subr.bf16.mxu0 0
        %2896 = vmatpush1.bf16.xpose.msra.mxu0 0
        %2897 = vmatprep.subr.bf16.mxu0 0
        %2898 = vmatpush1.bf16.xpose.msra.mxu0 0
        %2899 = vmatprep.mubr.bf16.mxu0 0
        %2900 = vmatmul.mubr.bf16.gmra.mrb[0].mxu0 %v2862
        %v2901 = vpop.f32.mrb[0].mxu0
        %v2902 = vadd.f32 0.0, %v2901
        %v2903 = vpop.f32.mrb[0].mxu0
        %v2904 = vpop.f32.mrb[0].mxu0
        %v2905 = vadd.f32 0.0, %v2904
        %v2906 = vpop.f32.mrb[0].mxu0
        %2907 = vdwg.mxu0
        %v2908 = vsel %vm712, %v2851, -inf
        %2909 = vmax.xlane.f32.xlu0 %v2908
        %v2910 = vpop.xlane.xlu0 %2909
        %v2911 = vsel %vm712, %v2854, -inf
        %2912 = vmax.xlane.f32.xlu0 %v2911
        %v2913 = vpop.xlane.xlu0 %2912
        %v2914 = vsel %vm712, %v2902, -inf
        %2915 = vmax.xlane.f32.xlu0 %v2914
        %v2916 = vpop.xlane.xlu0 %2915
        %v2917 = vsel %vm712, %v2905, -inf
        %2918 = vmax.xlane.f32.xlu0 %v2917
        %v2919 = vpop.xlane.xlu0 %2918
        %v2920 = vsub.f32 %v2851, %v2910
        %v2921 = vsub.f32 %v2854, %v2913
        %v2922 = vsub.f32 %v2902, %v2916
        %v2923 = vsub.f32 %v2905, %v2919
        %v2924 = vmul.f32 %v2920, 1.442695
        %v2925 = vpow.pop %v2924
        %v2926 = vmul.f32 %v2921, 1.442695
        %v2927 = vpow.pop %v2926
        %v2928 = vmul.f32 %v2922, 1.442695
        %v2929 = vpow.pop %v2928
        %v2930 = vmul.f32 %v2923, 1.442695
        %v2931 = vpow.pop %v2930
        %v2932 = vsel %vm712, %v2925, 0.0
        %2933 = vadd.xlane.f32.xlu0 %v2932
        %v2934 = vpop.xlane.xlu0 %2933
        %v2935 = vsel %vm712, %v2927, 0.0
        %2936 = vadd.xlane.f32.xlu0 %v2935
        %v2937 = vpop.xlane.xlu0 %2936
        %v2938 = vsel %vm712, %v2929, 0.0
        %2939 = vadd.xlane.f32.xlu0 %v2938
        %v2940 = vpop.xlane.xlu0 %2939
        %v2941 = vsel %vm712, %v2931, 0.0
        %2942 = vadd.xlane.f32.xlu0 %v2941
        %v2943 = vpop.xlane.xlu0 %2942
        %v2944 = vrcp.pop %v2934
        %v2945 = vrcp.pop %v2937
        %v2946 = vrcp.pop %v2940
        %v2947 = vrcp.pop %v2943
        %v2948 = vmul.f32 %v2925, %v2944
        %v2949 = vmul.f32 %v2927, %v2945
        %v2950 = vmul.f32 %v2929, %v2946
        %v2951 = vmul.f32 %v2931, %v2947
        %v2952 = vpack.c.bf16 %v2949, %v2948
        %v2953 = vpack.c.bf16 %v2951, %v2950
        %2954 = vrot.lane.b32.xlu0 %v2468, 112
        %v2955 = vpop.permute.xlu0 %2954
        %v2958 = vsel %vm712, %v2952, 0
        %2960 = vmatprep.subr.bf16.mxu0 0
        %2961 = vmatpush1.bf16.msra.mxu0 %v2955
        %2962 = vmatprep.subr.bf16.mxu0 0
        %2963 = vmatpush1.bf16.msra.mxu0 0
        %2964 = vmatprep.subr.bf16.mxu0 0
        %2965 = vmatpush1.bf16.msra.mxu0 0
        %2966 = vmatprep.subr.bf16.mxu0 0
        %2967 = vmatpush1.bf16.msra.mxu0 0
        %2968 = vmatprep.subr.bf16.mxu0 0
        %2969 = vmatpush1.bf16.msra.mxu0 0
        %2970 = vmatprep.subr.bf16.mxu0 0
        %2971 = vmatpush1.bf16.msra.mxu0 0
        %2972 = vmatprep.subr.bf16.mxu0 0
        %2973 = vmatpush1.bf16.msra.mxu0 0
        %2974 = vmatprep.subr.bf16.mxu0 0
        %2975 = vmatpush1.bf16.msra.mxu0 0
        %2976 = vmatprep.subr.bf16.mxu0 0
        %2977 = vmatpush1.bf16.msra.mxu0 0
        %2978 = vmatprep.subr.bf16.mxu0 0
        %2979 = vmatpush1.bf16.msra.mxu0 0
        %2980 = vmatprep.subr.bf16.mxu0 0
        %2981 = vmatpush1.bf16.msra.mxu0 0
        %2982 = vmatprep.subr.bf16.mxu0 0
        %2983 = vmatpush1.bf16.msra.mxu0 0
        %2984 = vmatprep.subr.bf16.mxu0 0
        %2985 = vmatpush1.bf16.msra.mxu0 0
        %2986 = vmatprep.subr.bf16.mxu0 0
        %2987 = vmatpush1.bf16.msra.mxu0 0
        %2988 = vmatprep.subr.bf16.mxu0 0
        %2989 = vmatpush1.bf16.msra.mxu0 0
        %2990 = vmatprep.subr.bf16.mxu0 0
        %2991 = vmatpush1.bf16.msra.mxu0 0
        %2992 = vmatprep.mubr.bf16.mxu0 0
        %2993 = vmatmul.mubr.bf16.gmra.mrb[0].mxu0 %v2958
        %v2994 = vpop.f32.mrb[0].mxu0
        %v2995 = vadd.f32 0.0, %v2994
        %v2996 = vpop.f32.mrb[0].mxu0
        %v2997 = vpop.f32.mrb[0].mxu0
        %v2998 = vadd.f32 0.0, %v2997
        %v2999 = vpop.f32.mrb[0].mxu0
        %3000 = vdwg.mxu0
        %3001 = vrot.lane.b32.xlu0 %v2469, 112
        %v3002 = vpop.permute.xlu0 %3001
        %v3005 = vsel %vm712, %v2953, 0
        %3007 = vmatprep.subr.bf16.mxu0 0
        %3008 = vmatpush1.bf16.msra.mxu0 %v3002
        %3009 = vmatprep.subr.bf16.mxu0 0
        %3010 = vmatpush1.bf16.msra.mxu0 0
        %3011 = vmatprep.subr.bf16.mxu0 0
        %3012 = vmatpush1.bf16.msra.mxu0 0
        %3013 = vmatprep.subr.bf16.mxu0 0
        %3014 = vmatpush1.bf16.msra.mxu0 0
        %3015 = vmatprep.subr.bf16.mxu0 0
        %3016 = vmatpush1.bf16.msra.mxu0 0
        %3017 = vmatprep.subr.bf16.mxu0 0
        %3018 = vmatpush1.bf16.msra.mxu0 0
        %3019 = vmatprep.subr.bf16.mxu0 0
        %3020 = vmatpush1.bf16.msra.mxu0 0
        %3021 = vmatprep.subr.bf16.mxu0 0
        %3022 = vmatpush1.bf16.msra.mxu0 0
        %3023 = vmatprep.subr.bf16.mxu0 0
        %3024 = vmatpush1.bf16.msra.mxu0 0
        %3025 = vmatprep.subr.bf16.mxu0 0
        %3026 = vmatpush1.bf16.msra.mxu0 0
        %3027 = vmatprep.subr.bf16.mxu0 0
        %3028 = vmatpush1.bf16.msra.mxu0 0
        %3029 = vmatprep.subr.bf16.mxu0 0
        %3030 = vmatpush1.bf16.msra.mxu0 0
        %3031 = vmatprep.subr.bf16.mxu0 0
        %3032 = vmatpush1.bf16.msra.mxu0 0
        %3033 = vmatprep.subr.bf16.mxu0 0
        %3034 = vmatpush1.bf16.msra.mxu0 0
        %3035 = vmatprep.subr.bf16.mxu0 0
        %3036 = vmatpush1.bf16.msra.mxu0 0
        %3037 = vmatprep.subr.bf16.mxu0 0
        %3038 = vmatpush1.bf16.msra.mxu0 0
        %3039 = vmatprep.mubr.bf16.mxu0 0
        %3040 = vmatmul.mubr.bf16.gmra.mrb[0].mxu0 %v3005
        %v3041 = vpop.f32.mrb[0].mxu0
        %v3042 = vadd.f32 0.0, %v3041
        %v3043 = vpop.f32.mrb[0].mxu0
        %v3044 = vpop.f32.mrb[0].mxu0
        %v3045 = vadd.f32 0.0, %v3044
        %v3046 = vpop.f32.mrb[0].mxu0
        %3047 = vdwg.mxu0
        %3048 = vrot.lane.b32.xlu0 %v2324, 104
        %v3049 = vpop.permute.xlu0 %3048
        %3050 = vrot.lane.b32.xlu0 %v2326, 104
        %v3051 = vpop.permute.xlu0 %3050
        %v3053 = vsel %vm617, %v3049, 0
        %v3056 = vsel %vm617, %v3051, 0
        %3058 = vmatprep.subr.bf16.mxu0 0
        %3059 = vmatpush1.bf16.xpose.msra.mxu0 %v3056
        %3060 = vmatprep.subr.bf16.mxu0 0
        %3061 = vmatpush1.bf16.xpose.msra.mxu0 0
        %3062 = vmatprep.subr.bf16.mxu0 0
        %3063 = vmatpush1.bf16.xpose.msra.mxu0 0
        %3064 = vmatprep.subr.bf16.mxu0 0
        %3065 = vmatpush1.bf16.xpose.msra.mxu0 0
        %3066 = vmatprep.subr.bf16.mxu0 0
        %3067 = vmatpush1.bf16.xpose.msra.mxu0 0
        %3068 = vmatprep.subr.bf16.mxu0 0
        %3069 = vmatpush1.bf16.xpose.msra.mxu0 0
        %3070 = vmatprep.subr.bf16.mxu0 0
        %3071 = vmatpush1.bf16.xpose.msra.mxu0 0
        %3072 = vmatprep.subr.bf16.mxu0 0
        %3073 = vmatpush1.bf16.xpose.msra.mxu0 0
        %3074 = vmatprep.subr.bf16.mxu0 0
        %3075 = vmatpush1.bf16.xpose.msra.mxu0 0
        %3076 = vmatprep.subr.bf16.mxu0 0
        %3077 = vmatpush1.bf16.xpose.msra.mxu0 0
        %3078 = vmatprep.subr.bf16.mxu0 0
        %3079 = vmatpush1.bf16.xpose.msra.mxu0 0
        %3080 = vmatprep.subr.bf16.mxu0 0
        %3081 = vmatpush1.bf16.xpose.msra.mxu0 0
        %3082 = vmatprep.subr.bf16.mxu0 0
        %3083 = vmatpush1.bf16.xpose.msra.mxu0 0
        %3084 = vmatprep.subr.bf16.mxu0 0
        %3085 = vmatpush1.bf16.xpose.msra.mxu0 0
        %3086 = vmatprep.subr.bf16.mxu0 0
        %3087 = vmatpush1.bf16.xpose.msra.mxu0 0
        %3088 = vmatprep.subr.bf16.mxu0 0
        %3089 = vmatpush1.bf16.xpose.msra.mxu0 0
        %3090 = vmatprep.mubr.bf16.mxu0 0
        %3091 = vmatmul.mubr.bf16.gmra.mrb[0].mxu0 %v3053
        %v3092 = vpop.f32.mrb[0].mxu0
        %v3093 = vadd.f32 0.0, %v3092
        %v3094 = vpop.f32.mrb[0].mxu0
        %v3095 = vpop.f32.mrb[0].mxu0
        %v3096 = vadd.f32 0.0, %v3095
        %v3097 = vpop.f32.mrb[0].mxu0
        %3098 = vdwg.mxu0
        %3099 = vrot.lane.b32.xlu0 %v2325, 104
        %v3100 = vpop.permute.xlu0 %3099
        %3101 = vrot.lane.b32.xlu0 %v2327, 104
        %v3102 = vpop.permute.xlu0 %3101
        %v3104 = vsel %vm617, %v3100, 0
        %v3107 = vsel %vm617, %v3102, 0
        %3109 = vmatprep.subr.bf16.mxu0 0
        %3110 = vmatpush1.bf16.xpose.msra.mxu0 %v3107
        %3111 = vmatprep.subr.bf16.mxu0 0
        %3112 = vmatpush1.bf16.xpose.msra.mxu0 0
        %3113 = vmatprep.subr.bf16.mxu0 0
        %3114 = vmatpush1.bf16.xpose.msra.mxu0 0
        %3115 = vmatprep.subr.bf16.mxu0 0
        %3116 = vmatpush1.bf16.xpose.msra.mxu0 0
        %3117 = vmatprep.subr.bf16.mxu0 0
        %3118 = vmatpush1.bf16.xpose.msra.mxu0 0
        %3119 = vmatprep.subr.bf16.mxu0 0
        %3120 = vmatpush1.bf16.xpose.msra.mxu0 0
        %3121 = vmatprep.subr.bf16.mxu0 0
        %3122 = vmatpush1.bf16.xpose.msra.mxu0 0
        %3123 = vmatprep.subr.bf16.mxu0 0
        %3124 = vmatpush1.bf16.xpose.msra.mxu0 0
        %3125 = vmatprep.subr.bf16.mxu0 0
        %3126 = vmatpush1.bf16.xpose.msra.mxu0 0
        %3127 = vmatprep.subr.bf16.mxu0 0
        %3128 = vmatpush1.bf16.xpose.msra.mxu0 0
        %3129 = vmatprep.subr.bf16.mxu0 0
        %3130 = vmatpush1.bf16.xpose.msra.mxu0 0
        %3131 = vmatprep.subr.bf16.mxu0 0
        %3132 = vmatpush1.bf16.xpose.msra.mxu0 0
        %3133 = vmatprep.subr.bf16.mxu0 0
        %3134 = vmatpush1.bf16.xpose.msra.mxu0 0
        %3135 = vmatprep.subr.bf16.mxu0 0
        %3136 = vmatpush1.bf16.xpose.msra.mxu0 0
        %3137 = vmatprep.subr.bf16.mxu0 0
        %3138 = vmatpush1.bf16.xpose.msra.mxu0 0
        %3139 = vmatprep.subr.bf16.mxu0 0
        %3140 = vmatpush1.bf16.xpose.msra.mxu0 0
        %3141 = vmatprep.mubr.bf16.mxu0 0
        %3142 = vmatmul.mubr.bf16.gmra.mrb[0].mxu0 %v3104
        %v3143 = vpop.f32.mrb[0].mxu0
        %v3144 = vadd.f32 0.0, %v3143
        %v3145 = vpop.f32.mrb[0].mxu0
        %v3146 = vpop.f32.mrb[0].mxu0
        %v3147 = vadd.f32 0.0, %v3146
        %v3148 = vpop.f32.mrb[0].mxu0
        %3149 = vdwg.mxu0
        %v3150 = vsel %vm712, %v3093, -inf
        %3151 = vmax.xlane.f32.xlu0 %v3150
        %v3152 = vpop.xlane.xlu0 %3151
        %v3153 = vsel %vm712, %v3096, -inf
        %3154 = vmax.xlane.f32.xlu0 %v3153
        %v3155 = vpop.xlane.xlu0 %3154
        %v3156 = vsel %vm712, %v3144, -inf
        %3157 = vmax.xlane.f32.xlu0 %v3156
        %v3158 = vpop.xlane.xlu0 %3157
        %v3159 = vsel %vm712, %v3147, -inf
        %3160 = vmax.xlane.f32.xlu0 %v3159
        %v3161 = vpop.xlane.xlu0 %3160
        %v3162 = vsub.f32 %v3093, %v3152
        %v3163 = vsub.f32 %v3096, %v3155
        %v3164 = vsub.f32 %v3144, %v3158
        %v3165 = vsub.f32 %v3147, %v3161
        %v3166 = vmul.f32 %v3162, 1.442695
        %v3167 = vpow.pop %v3166
        %v3168 = vmul.f32 %v3163, 1.442695
        %v3169 = vpow.pop %v3168
        %v3170 = vmul.f32 %v3164, 1.442695
        %v3171 = vpow.pop %v3170
        %v3172 = vmul.f32 %v3165, 1.442695
        %v3173 = vpow.pop %v3172
        %v3174 = vsel %vm712, %v3167, 0.0
        %3175 = vadd.xlane.f32.xlu0 %v3174
        %v3176 = vpop.xlane.xlu0 %3175
        %v3177 = vsel %vm712, %v3169, 0.0
        %3178 = vadd.xlane.f32.xlu0 %v3177
        %v3179 = vpop.xlane.xlu0 %3178
        %v3180 = vsel %vm712, %v3171, 0.0
        %3181 = vadd.xlane.f32.xlu0 %v3180
        %v3182 = vpop.xlane.xlu0 %3181
        %v3183 = vsel %vm712, %v3173, 0.0
        %3184 = vadd.xlane.f32.xlu0 %v3183
        %v3185 = vpop.xlane.xlu0 %3184
        %v3186 = vrcp.pop %v3176
        %v3187 = vrcp.pop %v3179
        %v3188 = vrcp.pop %v3182
        %v3189 = vrcp.pop %v3185
        %v3190 = vmul.f32 %v3167, %v3186
        %v3191 = vmul.f32 %v3169, %v3187
        %v3192 = vmul.f32 %v3171, %v3188
        %v3193 = vmul.f32 %v3173, %v3189
        %v3194 = vpack.c.bf16 %v3191, %v3190
        %v3195 = vpack.c.bf16 %v3193, %v3192
        %3196 = vrot.lane.b32.xlu0 %v2468, 104
        %v3197 = vpop.permute.xlu0 %3196
        %v3200 = vsel %vm712, %v3194, 0
        %3202 = vmatprep.subr.bf16.mxu0 0
        %3203 = vmatpush1.bf16.msra.mxu0 %v3197
        %3204 = vmatprep.subr.bf16.mxu0 0
        %3205 = vmatpush1.bf16.msra.mxu0 0
        %3206 = vmatprep.subr.bf16.mxu0 0
        %3207 = vmatpush1.bf16.msra.mxu0 0
        %3208 = vmatprep.subr.bf16.mxu0 0
        %3209 = vmatpush1.bf16.msra.mxu0 0
        %3210 = vmatprep.subr.bf16.mxu0 0
        %3211 = vmatpush1.bf16.msra.mxu0 0
        %3212 = vmatprep.subr.bf16.mxu0 0
        %3213 = vmatpush1.bf16.msra.mxu0 0
        %3214 = vmatprep.subr.bf16.mxu0 0
        %3215 = vmatpush1.bf16.msra.mxu0 0
        %3216 = vmatprep.subr.bf16.mxu0 0
        %3217 = vmatpush1.bf16.msra.mxu0 0
        %3218 = vmatprep.subr.bf16.mxu0 0
        %3219 = vmatpush1.bf16.msra.mxu0 0
        %3220 = vmatprep.subr.bf16.mxu0 0
        %3221 = vmatpush1.bf16.msra.mxu0 0
        %3222 = vmatprep.subr.bf16.mxu0 0
        %3223 = vmatpush1.bf16.msra.mxu0 0
        %3224 = vmatprep.subr.bf16.mxu0 0
        %3225 = vmatpush1.bf16.msra.mxu0 0
        %3226 = vmatprep.subr.bf16.mxu0 0
        %3227 = vmatpush1.bf16.msra.mxu0 0
        %3228 = vmatprep.subr.bf16.mxu0 0
        %3229 = vmatpush1.bf16.msra.mxu0 0
        %3230 = vmatprep.subr.bf16.mxu0 0
        %3231 = vmatpush1.bf16.msra.mxu0 0
        %3232 = vmatprep.subr.bf16.mxu0 0
        %3233 = vmatpush1.bf16.msra.mxu0 0
        %3234 = vmatprep.mubr.bf16.mxu0 0
        %3235 = vmatmul.mubr.bf16.gmra.mrb[0].mxu0 %v3200
        %v3236 = vpop.f32.mrb[0].mxu0
        %v3237 = vadd.f32 0.0, %v3236
        %v3238 = vpop.f32.mrb[0].mxu0
        %v3239 = vpop.f32.mrb[0].mxu0
        %v3240 = vadd.f32 0.0, %v3239
        %v3241 = vpop.f32.mrb[0].mxu0
        %3242 = vdwg.mxu0
        %3243 = vrot.lane.b32.xlu0 %v2469, 104
        %v3244 = vpop.permute.xlu0 %3243
        %v3247 = vsel %vm712, %v3195, 0
        %3249 = vmatprep.subr.bf16.mxu0 0
        %3250 = vmatpush1.bf16.msra.mxu0 %v3244
        %3251 = vmatprep.subr.bf16.mxu0 0
        %3252 = vmatpush1.bf16.msra.mxu0 0
        %3253 = vmatprep.subr.bf16.mxu0 0
        %3254 = vmatpush1.bf16.msra.mxu0 0
        %3255 = vmatprep.subr.bf16.mxu0 0
        %3256 = vmatpush1.bf16.msra.mxu0 0
        %3257 = vmatprep.subr.bf16.mxu0 0
        %3258 = vmatpush1.bf16.msra.mxu0 0
        %3259 = vmatprep.subr.bf16.mxu0 0
        %3260 = vmatpush1.bf16.msra.mxu0 0
        %3261 = vmatprep.subr.bf16.mxu0 0
        %3262 = vmatpush1.bf16.msra.mxu0 0
        %3263 = vmatprep.subr.bf16.mxu0 0
        %3264 = vmatpush1.bf16.msra.mxu0 0
        %3265 = vmatprep.subr.bf16.mxu0 0
        %3266 = vmatpush1.bf16.msra.mxu0 0
        %3267 = vmatprep.subr.bf16.mxu0 0
        %3268 = vmatpush1.bf16.msra.mxu0 0
        %3269 = vmatprep.subr.bf16.mxu0 0
        %3270 = vmatpush1.bf16.msra.mxu0 0
        %3271 = vmatprep.subr.bf16.mxu0 0
        %3272 = vmatpush1.bf16.msra.mxu0 0
        %3273 = vmatprep.subr.bf16.mxu0 0
        %3274 = vmatpush1.bf16.msra.mxu0 0
        %3275 = vmatprep.subr.bf16.mxu0 0
        %3276 = vmatpush1.bf16.msra.mxu0 0
        %3277 = vmatprep.subr.bf16.mxu0 0
        %3278 = vmatpush1.bf16.msra.mxu0 0
        %3279 = vmatprep.subr.bf16.mxu0 0
        %3280 = vmatpush1.bf16.msra.mxu0 0
        %3281 = vmatprep.mubr.bf16.mxu0 0
        %3282 = vmatmul.mubr.bf16.gmra.mrb[0].mxu0 %v3247
        %v3283 = vpop.f32.mrb[0].mxu0
        %v3284 = vadd.f32 0.0, %v3283
        %v3285 = vpop.f32.mrb[0].mxu0
        %v3286 = vpop.f32.mrb[0].mxu0
        %v3287 = vadd.f32 0.0, %v3286
        %v3288 = vpop.f32.mrb[0].mxu0
        %3289 = vdwg.mxu0
        %3294 = vrot.lane.b32.xlu0 %v2752, 8
        %v3295 = vpop.permute.xlu0 %3294
        %3296 = vrot.lane.b32.xlu0 %v2755, 8
        %v3297 = vpop.permute.xlu0 %3296
        %3298 = vrot.lane.b32.xlu0 %v2800, 8
        %v3299 = vpop.permute.xlu0 %3298
        %3300 = vrot.lane.b32.xlu0 %v2803, 8
        %v3301 = vpop.permute.xlu0 %3300
        %3310 = vrot.lane.b32.xlu0 %v2995, 16
        %v3311 = vpop.permute.xlu0 %3310
        %3312 = vrot.lane.b32.xlu0 %v2998, 16
        %v3313 = vpop.permute.xlu0 %3312
        %3314 = vrot.lane.b32.xlu0 %v3042, 16
        %v3315 = vpop.permute.xlu0 %3314
        %3316 = vrot.lane.b32.xlu0 %v3045, 16
        %v3317 = vpop.permute.xlu0 %3316
        %3326 = vrot.lane.b32.xlu0 %v3237, 24
        %v3327 = vpop.permute.xlu0 %3326
        %3328 = vrot.lane.b32.xlu0 %v3240, 24
        %v3329 = vpop.permute.xlu0 %3328
        %3330 = vrot.lane.b32.xlu0 %v3284, 24
        %v3331 = vpop.permute.xlu0 %3330
        %3332 = vrot.lane.b32.xlu0 %v3287, 24
        %v3333 = vpop.permute.xlu0 %3332
        %v3338 = vsel %vm617, %v2508, %v3295
        %v3339 = vsel %vm617, %v2511, %v3297
        %v3340 = vsel %vm617, %v2552, %v3299
        %v3341 = vsel %vm617, %v2555, %v3301
        %v3342 = vsel %vm712, %v3338, %v3311
        %v3343 = vsel %vm712, %v3339, %v3313
        %v3344 = vsel %vm712, %v3340, %v3315
        %v3345 = vsel %vm712, %v3341, %v3317
        %v3346 = vsel %vm1637, %v3342, %v3327
        %v3347 = vsel %vm1637, %v3343, %v3329
        %v3348 = vsel %vm1637, %v3344, %v3331
        %v3349 = vsel %vm1637, %v3345, %v3333
        %v3350 = vpack.c.bf16 %v3347, %v3346
        %v3351 = vpack.c.bf16 %v3349, %v3348
        %v3352 = vlaneseq
        %v3353 = vshrl.u32 %v3352, 7
        %v3354 = vsub.s32 0, %v3353
        %v3355 = vrot.slane %v2323, %v3354
        %v3360 = vunpack.c.l.b16 %v2319
        %v3361 = vunpack.c.l.b16 %v2320
        %v3362 = vunpack.c.l.b16 %v2321
        %v3363 = vunpack.c.l.b16 %v2322
        %v3364 = vpack.c.b16 %v3361, %v3360
        %v3365 = vpack.c.b16 %v3363, %v3362
        %v3369 = vsel %vm320, %v3350, 0
        %v3372 = vsel %vm320, %v3351, 0
        %3374 = vmatprep.subr.bf16.mxu0 0
        %3375 = vmatpush1.bf16.msra.mxu0 %v3364
        %3376 = vmatprep.subr.bf16.mxu0 0
        %3377 = vmatpush1.bf16.msra.mxu0 %v3365
        %3378 = vmatprep.subr.bf16.mxu0 0
        %3379 = vmatpush1.bf16.msra.mxu0 0
        %3380 = vmatprep.subr.bf16.mxu0 0
        %3381 = vmatpush1.bf16.msra.mxu0 0
        %3382 = vmatprep.subr.bf16.mxu0 0
        %3383 = vmatpush1.bf16.msra.mxu0 0
        %3384 = vmatprep.subr.bf16.mxu0 0
        %3385 = vmatpush1.bf16.msra.mxu0 0
        %3386 = vmatprep.subr.bf16.mxu0 0
        %3387 = vmatpush1.bf16.msra.mxu0 0
        %3388 = vmatprep.subr.bf16.mxu0 0
        %3389 = vmatpush1.bf16.msra.mxu0 0
        %3390 = vmatprep.subr.bf16.mxu0 0
        %3391 = vmatpush1.bf16.msra.mxu0 0
        %3392 = vmatprep.subr.bf16.mxu0 0
        %3393 = vmatpush1.bf16.msra.mxu0 0
        %3394 = vmatprep.subr.bf16.mxu0 0
        %3395 = vmatpush1.bf16.msra.mxu0 0
        %3396 = vmatprep.subr.bf16.mxu0 0
        %3397 = vmatpush1.bf16.msra.mxu0 0
        %3398 = vmatprep.subr.bf16.mxu0 0
        %3399 = vmatpush1.bf16.msra.mxu0 0
        %3400 = vmatprep.subr.bf16.mxu0 0
        %3401 = vmatpush1.bf16.msra.mxu0 0
        %3402 = vmatprep.subr.bf16.mxu0 0
        %3403 = vmatpush1.bf16.msra.mxu0 0
        %3404 = vmatprep.subr.bf16.mxu0 0
        %3405 = vmatpush1.bf16.msra.mxu0 0
        %3406 = vmatprep.mubr.bf16.mxu0 0
        %3407 = vmatmul.mubr.bf16.gmra.mrb[0].mxu0 %v3369
        %v3408 = vpop.f32.mrb[0].mxu0
        %v3409 = vadd.f32 %v3355, %v3408
        %v3410 = vpop.f32.mrb[0].mxu0
        %v3411 = vpop.f32.mrb[0].mxu0
        %v3412 = vadd.f32 %v3355, %v3411
        %v3413 = vpop.f32.mrb[0].mxu0
        %3414 = vmatprep.mubr.bf16.mxu0 0
        %3415 = vmatmul.mubr.bf16.gmra.mrb[0].mxu0 %v3372
        %v3416 = vpop.f32.mrb[0].mxu0
        %v3417 = vadd.f32 %v3355, %v3416
        %v3418 = vpop.f32.mrb[0].mxu0
        %v3419 = vpop.f32.mrb[0].mxu0
        %v3420 = vadd.f32 %v3355, %v3419
        %v3421 = vpop.f32.mrb[0].mxu0
        %3422 = vdwg.mxu0
        %v3423 = vadd.f32 %v2027, %v3409
        %v3424 = vadd.f32 %v2028, %v3412
        %v3425 = vadd.f32 %v2029, %v3417
        %v3426 = vadd.f32 %v2030, %v3420
        %v3427 = vld [vmem:[%s2 + $0x11] sm:$0x1]
        %v3428 = vld [vmem:[%s2 + $0x12] sm:$0x1]
        %v3429 = vsel %vm320, %v3423, 0.0
        %3430 = vadd.xlane.f32.xlu0 %v3429
        %v3431 = vpop.xlane.xlu0 %3430
        %v3432 = vsel %vm320, %v3424, 0.0
        %3433 = vadd.xlane.f32.xlu0 %v3432
        %v3434 = vpop.xlane.xlu0 %3433
        %v3435 = vsel %vm320, %v3425, 0.0
        %3436 = vadd.xlane.f32.xlu0 %v3435
        %v3437 = vpop.xlane.xlu0 %3436
        %v3438 = vsel %vm320, %v3426, 0.0
        %3439 = vadd.xlane.f32.xlu0 %v3438
        %v3440 = vpop.xlane.xlu0 %3439
        %v3441 = vmul.f32 %v3431, %v333
        %v3442 = vmul.f32 %v3434, %v333
        %v3443 = vmul.f32 %v3437, %v333
        %v3444 = vmul.f32 %v3440, %v333
        %v3445 = vsub.f32 %v3423, %v3441
        %v3446 = vsub.f32 %v3424, %v3442
        %v3447 = vsub.f32 %v3425, %v3443
        %v3448 = vsub.f32 %v3426, %v3444
        %v3449 = vmul.f32 %v3445, %v3445
        %v3450 = vmul.f32 %v3446, %v3446
        %v3451 = vmul.f32 %v3447, %v3447
        %v3452 = vmul.f32 %v3448, %v3448
        %v3453 = vsel %vm320, %v3449, 0.0
        %3454 = vadd.xlane.f32.xlu0 %v3453
        %v3455 = vpop.xlane.xlu0 %3454
        %v3456 = vsel %vm320, %v3450, 0.0
        %3457 = vadd.xlane.f32.xlu0 %v3456
        %v3458 = vpop.xlane.xlu0 %3457
        %v3459 = vsel %vm320, %v3451, 0.0
        %3460 = vadd.xlane.f32.xlu0 %v3459
        %v3461 = vpop.xlane.xlu0 %3460
        %v3462 = vsel %vm320, %v3452, 0.0
        %3463 = vadd.xlane.f32.xlu0 %v3462
        %v3464 = vpop.xlane.xlu0 %3463
        %v3465 = vmul.f32 %v3455, %v333
        %v3466 = vmul.f32 %v3458, %v333
        %v3467 = vmul.f32 %v3461, %v333
        %v3468 = vmul.f32 %v3464, %v333
        %v3469 = vadd.f32 %v3465, 1e-06
        %v3470 = vadd.f32 %v3466, 1e-06
        %v3471 = vadd.f32 %v3467, 1e-06
        %v3472 = vadd.f32 %v3468, 1e-06
        %v3473 = vrsqrt.pop %v3469
        %v3474 = vrsqrt.pop %v3470
        %v3475 = vrsqrt.pop %v3471
        %v3476 = vrsqrt.pop %v3472
        %v3477 = vmul.f32 %v3445, %v3473
        %v3478 = vmul.f32 %v3446, %v3474
        %v3479 = vmul.f32 %v3447, %v3475
        %v3480 = vmul.f32 %v3448, %v3476
        %v3481 = vlaneseq
        %v3482 = vshrl.u32 %v3481, 7
        %v3483 = vsub.s32 0, %v3482
        %v3484 = vrot.slane %v3427, %v3483
        %v3485 = vmul.f32 %v3477, %v3484
        %v3486 = vmul.f32 %v3478, %v3484
        %v3487 = vmul.f32 %v3479, %v3484
        %v3488 = vmul.f32 %v3480, %v3484
        %v3489 = vlaneseq
        %v3490 = vshrl.u32 %v3489, 7
        %v3491 = vsub.s32 0, %v3490
        %v3492 = vrot.slane %v3428, %v3491
        %v3493 = vadd.f32 %v3485, %v3492
        %v3494 = vadd.f32 %v3486, %v3492
        %v3495 = vadd.f32 %v3487, %v3492
        %v3496 = vadd.f32 %v3488, %v3492
        %v3497 = vld [vmem:[%s1 + $0x118] sm:$0xf]
        %v3498 = vld [vmem:[%s1 + $0x11c] sm:$0xf]
        %v3499 = vld [vmem:[%s1 + $0x120] sm:$0xf]
        %v3500 = vld [vmem:[%s1 + $0x124] sm:$0xf]
        %v3501 = vpack.c.bf16 %v3494, %v3493
        %v3502 = vpack.c.bf16 %v3496, %v3495
        %v3503 = vld [vmem:[%s2 + $0x13] sm:$0x1]
        %v3504 = vlaneseq
        %v3505 = vshrl.u32 %v3504, 7
        %v3506 = vsub.s32 0, %v3505
        %v3507 = vrot.slane %v3503, %v3506
        %v3512 = vunpack.c.l.b16 %v3497
        %v3513 = vunpack.c.l.b16 %v3498
        %v3514 = vunpack.c.l.b16 %v3499
        %v3515 = vunpack.c.l.b16 %v3500
        %v3516 = vpack.c.b16 %v3513, %v3512
        %v3517 = vpack.c.b16 %v3515, %v3514
        %v3521 = vsel %vm320, %v3501, 0
        %v3524 = vsel %vm320, %v3502, 0
        %3526 = vmatprep.subr.bf16.mxu0 0
        %3527 = vmatpush1.bf16.msra.mxu0 %v3516
        %3528 = vmatprep.subr.bf16.mxu0 0
        %3529 = vmatpush1.bf16.msra.mxu0 %v3517
        %3530 = vmatprep.subr.bf16.mxu0 0
        %3531 = vmatpush1.bf16.msra.mxu0 0
        %3532 = vmatprep.subr.bf16.mxu0 0
        %3533 = vmatpush1.bf16.msra.mxu0 0
        %3534 = vmatprep.subr.bf16.mxu0 0
        %3535 = vmatpush1.bf16.msra.mxu0 0
        %3536 = vmatprep.subr.bf16.mxu0 0
        %3537 = vmatpush1.bf16.msra.mxu0 0
        %3538 = vmatprep.subr.bf16.mxu0 0
        %3539 = vmatpush1.bf16.msra.mxu0 0
        %3540 = vmatprep.subr.bf16.mxu0 0
        %3541 = vmatpush1.bf16.msra.mxu0 0
        %3542 = vmatprep.subr.bf16.mxu0 0
        %3543 = vmatpush1.bf16.msra.mxu0 0
        %3544 = vmatprep.subr.bf16.mxu0 0
        %3545 = vmatpush1.bf16.msra.mxu0 0
        %3546 = vmatprep.subr.bf16.mxu0 0
        %3547 = vmatpush1.bf16.msra.mxu0 0
        %3548 = vmatprep.subr.bf16.mxu0 0
        %3549 = vmatpush1.bf16.msra.mxu0 0
        %3550 = vmatprep.subr.bf16.mxu0 0
        %3551 = vmatpush1.bf16.msra.mxu0 0
        %3552 = vmatprep.subr.bf16.mxu0 0
        %3553 = vmatpush1.bf16.msra.mxu0 0
        %3554 = vmatprep.subr.bf16.mxu0 0
        %3555 = vmatpush1.bf16.msra.mxu0 0
        %3556 = vmatprep.subr.bf16.mxu0 0
        %3557 = vmatpush1.bf16.msra.mxu0 0
        %3558 = vmatprep.mubr.bf16.mxu0 0
        %3559 = vmatmul.mubr.bf16.gmra.mrb[0].mxu0 %v3521
        %v3560 = vpop.f32.mrb[0].mxu0
        %v3561 = vadd.f32 %v3507, %v3560
        %v3562 = vpop.f32.mrb[0].mxu0
        %v3563 = vpop.f32.mrb[0].mxu0
        %v3564 = vadd.f32 %v3507, %v3563
        %v3565 = vpop.f32.mrb[0].mxu0
        %3566 = vmatprep.mubr.bf16.mxu0 0
        %3567 = vmatmul.mubr.bf16.gmra.mrb[0].mxu0 %v3524
        %v3568 = vpop.f32.mrb[0].mxu0
        %v3569 = vadd.f32 %v3507, %v3568
        %v3570 = vpop.f32.mrb[0].mxu0
        %v3571 = vpop.f32.mrb[0].mxu0
        %v3572 = vadd.f32 %v3507, %v3571
        %v3573 = vpop.f32.mrb[0].mxu0
        %3574 = vdwg.mxu0
        %v3575 = vmul.f32 %v3561, 0.5
        %v3576 = vmul.f32 %v3564, 0.5
        %v3577 = vmul.f32 %v3569, 0.5
        %v3578 = vmul.f32 %v3572, 0.5
        %v3579 = vmul.f32 %v3561, 0.044715
        %v3580 = vmul.f32 %v3564, 0.044715
        %v3581 = vmul.f32 %v3569, 0.044715
        %v3582 = vmul.f32 %v3572, 0.044715
        %v3583 = vmul.f32 %v3579, %v3561
        %v3584 = vmul.f32 %v3580, %v3564
        %v3585 = vmul.f32 %v3581, %v3569
        %v3586 = vmul.f32 %v3582, %v3572
        %v3587 = vmul.f32 %v3583, %v3561
        %v3588 = vmul.f32 %v3584, %v3564
        %v3589 = vmul.f32 %v3585, %v3569
        %v3590 = vmul.f32 %v3586, %v3572
        %v3591 = vadd.f32 %v3561, %v3587
        %v3592 = vadd.f32 %v3564, %v3588
        %v3593 = vadd.f32 %v3569, %v3589
        %v3594 = vadd.f32 %v3572, %v3590
        %v3595 = vmul.f32 %v3591, 0.7978846
        %v3596 = vmul.f32 %v3592, 0.7978846
        %v3597 = vmul.f32 %v3593, 0.7978846
        %v3598 = vmul.f32 %v3594, 0.7978846
        %v3599 = vtanh.pop %v3595
        %v3600 = vtanh.pop %v3596
        %v3601 = vtanh.pop %v3597
        %v3602 = vtanh.pop %v3598
        %v3603 = vadd.f32 %v3599, 1.0
        %v3604 = vadd.f32 %v3600, 1.0
        %v3605 = vadd.f32 %v3601, 1.0
        %v3606 = vadd.f32 %v3602, 1.0
        %v3607 = vmul.f32 %v3575, %v3603
        %v3608 = vmul.f32 %v3576, %v3604
        %v3609 = vmul.f32 %v3577, %v3605
        %v3610 = vmul.f32 %v3578, %v3606
        %v3611 = vld [vmem:[%s1 + $0x128] sm:$0xf]
        %v3612 = vld [vmem:[%s1 + $0x12c] sm:$0xf]
        %v3613 = vld [vmem:[%s1 + $0x130] sm:$0xf]
        %v3614 = vld [vmem:[%s1 + $0x134] sm:$0xf]
        %v3615 = vld [vmem:[%s1 + $0x138] sm:$0xf]
        %v3616 = vld [vmem:[%s1 + $0x13c] sm:$0xf]
        %v3617 = vld [vmem:[%s1 + $0x140] sm:$0xf]
        %v3618 = vld [vmem:[%s1 + $0x144] sm:$0xf]
        %v3619 = vld [vmem:[%s1 + $0x148] sm:$0xf]
        %v3620 = vld [vmem:[%s1 + $0x14c] sm:$0xf]
        %v3621 = vld [vmem:[%s1 + $0x150] sm:$0xf]
        %v3622 = vld [vmem:[%s1 + $0x154] sm:$0xf]
        %v3623 = vld [vmem:[%s1 + $0x158] sm:$0xf]
        %v3624 = vld [vmem:[%s1 + $0x15c] sm:$0xf]
        %v3625 = vld [vmem:[%s1 + $0x160] sm:$0xf]
        %v3626 = vld [vmem:[%s1 + $0x164] sm:$0xf]
        %v3627 = vpack.c.bf16 %v3608, %v3607
        %v3628 = vpack.c.bf16 %v3610, %v3609
        %v3645 = vunpack.c.l.b16 %v3611
        %v3646 = vunpack.c.l.b16 %v3612
        %v3647 = vunpack.c.l.b16 %v3613
        %v3648 = vunpack.c.l.b16 %v3614
        %v3649 = vunpack.c.l.b16 %v3615
        %v3650 = vunpack.c.l.b16 %v3616
        %v3651 = vunpack.c.l.b16 %v3617
        %v3652 = vunpack.c.l.b16 %v3618
        %v3653 = vunpack.c.l.b16 %v3619
        %v3654 = vunpack.c.l.b16 %v3620
        %v3655 = vunpack.c.l.b16 %v3621
        %v3656 = vunpack.c.l.b16 %v3622
        %v3657 = vunpack.c.l.b16 %v3623
        %v3658 = vunpack.c.l.b16 %v3624
        %v3659 = vunpack.c.l.b16 %v3625
        %v3660 = vunpack.c.l.b16 %v3626
        %v3661 = vpack.c.b16 %v3646, %v3645
        %v3662 = vpack.c.b16 %v3648, %v3647
        %v3663 = vpack.c.b16 %v3650, %v3649
        %v3664 = vpack.c.b16 %v3652, %v3651
        %v3665 = vpack.c.b16 %v3654, %v3653
        %v3666 = vpack.c.b16 %v3656, %v3655
        %v3667 = vpack.c.b16 %v3658, %v3657
        %v3668 = vpack.c.b16 %v3660, %v3659
        %3677 = vmatprep.subr.bf16.mxu0 0
        %3678 = vmatpush1.bf16.msra.mxu0 %v3661
        %3679 = vmatprep.subr.bf16.mxu0 0
        %3680 = vmatpush1.bf16.msra.mxu0 %v3662
        %3681 = vmatprep.subr.bf16.mxu0 0
        %3682 = vmatpush1.bf16.msra.mxu0 %v3663
        %3683 = vmatprep.subr.bf16.mxu0 0
        %3684 = vmatpush1.bf16.msra.mxu0 %v3664
        %3685 = vmatprep.subr.bf16.mxu0 0
        %3686 = vmatpush1.bf16.msra.mxu0 %v3665
        %3687 = vmatprep.subr.bf16.mxu0 0
        %3688 = vmatpush1.bf16.msra.mxu0 %v3666
        %3689 = vmatprep.subr.bf16.mxu0 0
        %3690 = vmatpush1.bf16.msra.mxu0 %v3667
        %3691 = vmatprep.subr.bf16.mxu0 0
        %3692 = vmatpush1.bf16.msra.mxu0 %v3668
        %3693 = vmatprep.subr.bf16.mxu0 0
        %3694 = vmatpush1.bf16.msra.mxu0 0
        %3695 = vmatprep.subr.bf16.mxu0 0
        %3696 = vmatpush1.bf16.msra.mxu0 0
        %3697 = vmatprep.subr.bf16.mxu0 0
        %3698 = vmatpush1.bf16.msra.mxu0 0
        %3699 = vmatprep.subr.bf16.mxu0 0
        %3700 = vmatpush1.bf16.msra.mxu0 0
        %3701 = vmatprep.subr.bf16.mxu0 0
        %3702 = vmatpush1.bf16.msra.mxu0 0
        %3703 = vmatprep.subr.bf16.mxu0 0
        %3704 = vmatpush1.bf16.msra.mxu0 0
        %3705 = vmatprep.subr.bf16.mxu0 0
        %3706 = vmatpush1.bf16.msra.mxu0 0
        %3707 = vmatprep.subr.bf16.mxu0 0
        %3708 = vmatpush1.bf16.msra.mxu0 0
        %3709 = vmatprep.mubr.bf16.mxu0 0
        %3710 = vmatmul.mubr.bf16.gmra.mrb[0].mxu0 %v3627
        %v3711 = vpop.f32.mrb[0].mxu0
        %v3712 = vadd.f32 0.0, %v3711
        %v3713 = vpop.f32.mrb[0].mxu0
        %v3714 = vpop.f32.mrb[0].mxu0
        %v3715 = vadd.f32 0.0, %v3714
        %v3716 = vpop.f32.mrb[0].mxu0
        %3717 = vmatprep.mubr.bf16.mxu0 0
        %3718 = vmatmul.mubr.bf16.gmra.mrb[0].mxu0 %v3628
        %v3719 = vpop.f32.mrb[0].mxu0
        %v3720 = vadd.f32 0.0, %v3719
        %v3721 = vpop.f32.mrb[0].mxu0
        %v3722 = vpop.f32.mrb[0].mxu0
        %v3723 = vadd.f32 0.0, %v3722
        %v3724 = vpop.f32.mrb[0].mxu0
        %3725 = vdwg.mxu0
        %v3726 = vadd.f32 %v3423, %v3712
        %v3727 = vadd.f32 %v3424, %v3715
        %v3728 = vadd.f32 %v3425, %v3720
        %v3729 = vadd.f32 %v3426, %v3723
        %v3730 = vld [vmem:[%s2 + $0x14] sm:$0x1]
        %v3731 = vlaneseq
        %v3732 = vshrl.u32 %v3731, 7
        %v3733 = vsub.s32 0, %v3732
        %v3734 = vrot.slane %v3730, %v3733
        %v3735 = vadd.f32 %v3726, %v3734
        %v3736 = vadd.f32 %v3727, %v3734
        %v3737 = vadd.f32 %v3728, %v3734
        %v3738 = vadd.f32 %v3729, %v3734
        %v3739 = vld [vmem:[%s2 + $0x15] sm:$0x1]
        %v3740 = vld [vmem:[%s2 + $0x16] sm:$0x1]
        %v3741 = vsel %vm320, %v3735, 0.0
        %3742 = vadd.xlane.f32.xlu0 %v3741
        %v3743 = vpop.xlane.xlu0 %3742
        %v3744 = vsel %vm320, %v3736, 0.0
        %3745 = vadd.xlane.f32.xlu0 %v3744
        %v3746 = vpop.xlane.xlu0 %3745
        %v3747 = vsel %vm320, %v3737, 0.0
        %3748 = vadd.xlane.f32.xlu0 %v3747
        %v3749 = vpop.xlane.xlu0 %3748
        %v3750 = vsel %vm320, %v3738, 0.0
        %3751 = vadd.xlane.f32.xlu0 %v3750
        %v3752 = vpop.xlane.xlu0 %3751
        %v3753 = vmul.f32 %v3743, %v333
        %v3754 = vmul.f32 %v3746, %v333
        %v3755 = vmul.f32 %v3749, %v333
        %v3756 = vmul.f32 %v3752, %v333
        %v3757 = vsub.f32 %v3735, %v3753
        %v3758 = vsub.f32 %v3736, %v3754
        %v3759 = vsub.f32 %v3737, %v3755
        %v3760 = vsub.f32 %v3738, %v3756
        %v3761 = vmul.f32 %v3757, %v3757
        %v3762 = vmul.f32 %v3758, %v3758
        %v3763 = vmul.f32 %v3759, %v3759
        %v3764 = vmul.f32 %v3760, %v3760
        %v3765 = vsel %vm320, %v3761, 0.0
        %3766 = vadd.xlane.f32.xlu0 %v3765
        %v3767 = vpop.xlane.xlu0 %3766
        %v3768 = vsel %vm320, %v3762, 0.0
        %3769 = vadd.xlane.f32.xlu0 %v3768
        %v3770 = vpop.xlane.xlu0 %3769
        %v3771 = vsel %vm320, %v3763, 0.0
        %3772 = vadd.xlane.f32.xlu0 %v3771
        %v3773 = vpop.xlane.xlu0 %3772
        %v3774 = vsel %vm320, %v3764, 0.0
        %3775 = vadd.xlane.f32.xlu0 %v3774
        %v3776 = vpop.xlane.xlu0 %3775
        %v3777 = vmul.f32 %v3767, %v333
        %v3778 = vmul.f32 %v3770, %v333
        %v3779 = vmul.f32 %v3773, %v333
        %v3780 = vmul.f32 %v3776, %v333
        %v3781 = vadd.f32 %v3777, 1e-06
        %v3782 = vadd.f32 %v3778, 1e-06
        %v3783 = vadd.f32 %v3779, 1e-06
        %v3784 = vadd.f32 %v3780, 1e-06
        %v3785 = vrsqrt.pop %v3781
        %v3786 = vrsqrt.pop %v3782
        %v3787 = vrsqrt.pop %v3783
        %v3788 = vrsqrt.pop %v3784
        %v3789 = vmul.f32 %v3757, %v3785
        %v3790 = vmul.f32 %v3758, %v3786
        %v3791 = vmul.f32 %v3759, %v3787
        %v3792 = vmul.f32 %v3760, %v3788
        %v3793 = vlaneseq
        %v3794 = vshrl.u32 %v3793, 7
        %v3795 = vsub.s32 0, %v3794
        %v3796 = vrot.slane %v3739, %v3795
        %v3797 = vmul.f32 %v3789, %v3796
        %v3798 = vmul.f32 %v3790, %v3796
        %v3799 = vmul.f32 %v3791, %v3796
        %v3800 = vmul.f32 %v3792, %v3796
        %v3801 = vlaneseq
        %v3802 = vshrl.u32 %v3801, 7
        %v3803 = vsub.s32 0, %v3802
        %v3804 = vrot.slane %v3740, %v3803
        %v3805 = vadd.f32 %v3797, %v3804
        %v3806 = vadd.f32 %v3798, %v3804
        %v3807 = vadd.f32 %v3799, %v3804
        %v3808 = vadd.f32 %v3800, %v3804
        %v3809 = vld [vmem:[%s1 + $0x2c8] sm:$0xf]
        %v3810 = vunpack.c.l.bf16 %v3809
        %v3811 = vld [vmem:[%s2 + $0x17] sm:$0x1]
        %v3812 = vlaneseq
        %v3813 = vshrl.u32 %v3812, 7
        %v3814 = vsub.s32 0, %v3813
        %v3815 = vrot.slane %v3811, %v3814
        %v3816 = vld [vmem:[%s2 + $0x18] sm:$0x1]
        %v3817 = vld [vmem:[%s2 + $0x19] sm:$0x1]
        %v3818 = vsel %vm320, %v3815, 0.0
        %3819 = vadd.xlane.f32.xlu0 %v3818
        %v3820 = vpop.xlane.xlu0 %3819
        %v3821 = vmul.f32 %v3820, %v333
        %v3822 = vsub.f32 %v3815, %v3821
        %v3823 = vmul.f32 %v3822, %v3822
        %v3824 = vsel %vm320, %v3823, 0.0
        %3825 = vadd.xlane.f32.xlu0 %v3824
        %v3826 = vpop.xlane.xlu0 %3825
        %v3827 = vmul.f32 %v3826, %v333
        %v3828 = vadd.f32 %v3827, 1e-05
        %v3829 = vrsqrt.pop %v3828
        %v3830 = vmul.f32 %v3822, %v3829
        %v3831 = vlaneseq
        %v3832 = vshrl.u32 %v3831, 7
        %v3833 = vsub.s32 0, %v3832
        %v3834 = vrot.slane %v3816, %v3833
        %v3835 = vmul.f32 %v3830, %v3834
        %v3836 = vlaneseq
        %v3837 = vshrl.u32 %v3836, 7
        %v3838 = vsub.s32 0, %v3837
        %v3839 = vrot.slane %v3817, %v3838
        %v3840 = vadd.f32 %v3835, %v3839
        %v3841 = vld [vmem:[%s1 + $0x168] sm:$0xf]
        %v3842 = vld [vmem:[%s1 + $0x16c] sm:$0xf]
        %v3843 = vld [vmem:[%s1 + $0x170] sm:$0xf]
        %v3844 = vld [vmem:[%s1 + $0x174] sm:$0xf]
        %v3845 = vpack.c.bf16 %v3840, %v3840
        %v3846 = vld [vmem:[%s2 + $0x1a] sm:$0x1]
        %v3847 = vlaneseq
        %v3848 = vshrl.u32 %v3847, 7
        %v3849 = vsub.s32 0, %v3848
        %v3850 = vrot.slane %v3846, %v3849
        %v3855 = vunpack.c.l.b16 %v3841
        %v3856 = vunpack.c.l.b16 %v3842
        %v3857 = vunpack.c.l.b16 %v3843
        %v3858 = vunpack.c.l.b16 %v3844
        %v3859 = vpack.c.b16 %v3856, %v3855
        %v3860 = vpack.c.b16 %v3858, %v3857
        %v3864 = vsel %vm320, %v3845, 0
        %3866 = vmatprep.subr.bf16.mxu0 0
        %3867 = vmatpush1.bf16.msra.mxu0 %v3859
        %3868 = vmatprep.subr.bf16.mxu0 0
        %3869 = vmatpush1.bf16.msra.mxu0 %v3860
        %3870 = vmatprep.subr.bf16.mxu0 0
        %3871 = vmatpush1.bf16.msra.mxu0 0
        %3872 = vmatprep.subr.bf16.mxu0 0
        %3873 = vmatpush1.bf16.msra.mxu0 0
        %3874 = vmatprep.subr.bf16.mxu0 0
        %3875 = vmatpush1.bf16.msra.mxu0 0
        %3876 = vmatprep.subr.bf16.mxu0 0
        %3877 = vmatpush1.bf16.msra.mxu0 0
        %3878 = vmatprep.subr.bf16.mxu0 0
        %3879 = vmatpush1.bf16.msra.mxu0 0
        %3880 = vmatprep.subr.bf16.mxu0 0
        %3881 = vmatpush1.bf16.msra.mxu0 0
        %3882 = vmatprep.subr.bf16.mxu0 0
        %3883 = vmatpush1.bf16.msra.mxu0 0
        %3884 = vmatprep.subr.bf16.mxu0 0
        %3885 = vmatpush1.bf16.msra.mxu0 0
        %3886 = vmatprep.subr.bf16.mxu0 0
        %3887 = vmatpush1.bf16.msra.mxu0 0
        %3888 = vmatprep.subr.bf16.mxu0 0
        %3889 = vmatpush1.bf16.msra.mxu0 0
        %3890 = vmatprep.subr.bf16.mxu0 0
        %3891 = vmatpush1.bf16.msra.mxu0 0
        %3892 = vmatprep.subr.bf16.mxu0 0
        %3893 = vmatpush1.bf16.msra.mxu0 0
        %3894 = vmatprep.subr.bf16.mxu0 0
        %3895 = vmatpush1.bf16.msra.mxu0 0
        %3896 = vmatprep.subr.bf16.mxu0 0
        %3897 = vmatpush1.bf16.msra.mxu0 0
        %3898 = vmatprep.mubr.bf16.mxu0 0
        %3899 = vmatmul.mubr.bf16.gmra.mrb[0].mxu0 %v3864
        %v3900 = vpop.f32.mrb[0].mxu0
        %v3901 = vadd.f32 %v3850, %v3900
        %v3902 = vpop.f32.mrb[0].mxu0
        %v3903 = vpop.f32.mrb[0].mxu0
        %v3904 = vpop.f32.mrb[0].mxu0
        %3905 = vdwg.mxu0
        %v3906 = vld [vmem:[%s1 + $0x178] sm:$0xf]
        %v3907 = vld [vmem:[%s1 + $0x17c] sm:$0xf]
        %v3908 = vld [vmem:[%s1 + $0x180] sm:$0xf]
        %v3909 = vld [vmem:[%s1 + $0x184] sm:$0xf]
        %v3910 = vpack.c.bf16 %v3901, %v3901
        %v3911 = vld [vmem:[%s2 + $0x1b] sm:$0x1]
        %v3912 = vlaneseq
        %v3913 = vshrl.u32 %v3912, 7
        %v3914 = vsub.s32 0, %v3913
        %v3915 = vrot.slane %v3911, %v3914
        %v3920 = vunpack.c.l.b16 %v3906
        %v3921 = vunpack.c.l.b16 %v3907
        %v3922 = vunpack.c.l.b16 %v3908
        %v3923 = vunpack.c.l.b16 %v3909
        %v3924 = vpack.c.b16 %v3921, %v3920
        %v3925 = vpack.c.b16 %v3923, %v3922
        %v3929 = vsel %vm320, %v3910, 0
        %3931 = vmatprep.subr.bf16.mxu0 0
        %3932 = vmatpush1.bf16.msra.mxu0 %v3924
        %3933 = vmatprep.subr.bf16.mxu0 0
        %3934 = vmatpush1.bf16.msra.mxu0 %v3925
        %3935 = vmatprep.subr.bf16.mxu0 0
        %3936 = vmatpush1.bf16.msra.mxu0 0
        %3937 = vmatprep.subr.bf16.mxu0 0
        %3938 = vmatpush1.bf16.msra.mxu0 0
        %3939 = vmatprep.subr.bf16.mxu0 0
        %3940 = vmatpush1.bf16.msra.mxu0 0
        %3941 = vmatprep.subr.bf16.mxu0 0
        %3942 = vmatpush1.bf16.msra.mxu0 0
        %3943 = vmatprep.subr.bf16.mxu0 0
        %3944 = vmatpush1.bf16.msra.mxu0 0
        %3945 = vmatprep.subr.bf16.mxu0 0
        %3946 = vmatpush1.bf16.msra.mxu0 0
        %3947 = vmatprep.subr.bf16.mxu0 0
        %3948 = vmatpush1.bf16.msra.mxu0 0
        %3949 = vmatprep.subr.bf16.mxu0 0
        %3950 = vmatpush1.bf16.msra.mxu0 0
        %3951 = vmatprep.subr.bf16.mxu0 0
        %3952 = vmatpush1.bf16.msra.mxu0 0
        %3953 = vmatprep.subr.bf16.mxu0 0
        %3954 = vmatpush1.bf16.msra.mxu0 0
        %3955 = vmatprep.subr.bf16.mxu0 0
        %3956 = vmatpush1.bf16.msra.mxu0 0
        %3957 = vmatprep.subr.bf16.mxu0 0
        %3958 = vmatpush1.bf16.msra.mxu0 0
        %3959 = vmatprep.subr.bf16.mxu0 0
        %3960 = vmatpush1.bf16.msra.mxu0 0
        %3961 = vmatprep.subr.bf16.mxu0 0
        %3962 = vmatpush1.bf16.msra.mxu0 0
        %3963 = vmatprep.mubr.bf16.mxu0 0
        %3964 = vmatmul.mubr.bf16.gmra.mrb[0].mxu0 %v3929
        %v3965 = vpop.f32.mrb[0].mxu0
        %v3966 = vadd.f32 %v3915, %v3965
        %v3967 = vpop.f32.mrb[0].mxu0
        %v3968 = vpop.f32.mrb[0].mxu0
        %v3969 = vpop.f32.mrb[0].mxu0
        %3970 = vdwg.mxu0
        %v3971 = vld [vmem:[%s1 + $0x198] sm:$0xf]
        %v3972 = vld [vmem:[%s1 + $0x19c] sm:$0xf]
        %v3973 = vld [vmem:[%s1 + $0x1a0] sm:$0xf]
        %v3974 = vld [vmem:[%s1 + $0x1a4] sm:$0xf]
        %v3975 = vpack.c.bf16 %v3806, %v3805
        %v3976 = vpack.c.bf16 %v3808, %v3807
        %v3977 = vld [vmem:[%s2 + $0x1f] sm:$0x1]
        %v3978 = vlaneseq
        %v3979 = vshrl.u32 %v3978, 7
        %v3980 = vsub.s32 0, %v3979
        %v3981 = vrot.slane %v3977, %v3980
        %v3986 = vunpack.c.l.b16 %v3971
        %v3987 = vunpack.c.l.b16 %v3972
        %v3988 = vunpack.c.l.b16 %v3973
        %v3989 = vunpack.c.l.b16 %v3974
        %v3990 = vpack.c.b16 %v3987, %v3986
        %v3991 = vpack.c.b16 %v3989, %v3988
        %v3995 = vsel %vm320, %v3975, 0
        %v3998 = vsel %vm320, %v3976, 0
        %4000 = vmatprep.subr.bf16.mxu0 0
        %4001 = vmatpush1.bf16.msra.mxu0 %v3990
        %4002 = vmatprep.subr.bf16.mxu0 0
        %4003 = vmatpush1.bf16.msra.mxu0 %v3991
        %4004 = vmatprep.subr.bf16.mxu0 0
        %4005 = vmatpush1.bf16.msra.mxu0 0
        %4006 = vmatprep.subr.bf16.mxu0 0
        %4007 = vmatpush1.bf16.msra.mxu0 0
        %4008 = vmatprep.subr.bf16.mxu0 0
        %4009 = vmatpush1.bf16.msra.mxu0 0
        %4010 = vmatprep.subr.bf16.mxu0 0
        %4011 = vmatpush1.bf16.msra.mxu0 0
        %4012 = vmatprep.subr.bf16.mxu0 0
        %4013 = vmatpush1.bf16.msra.mxu0 0
        %4014 = vmatprep.subr.bf16.mxu0 0
        %4015 = vmatpush1.bf16.msra.mxu0 0
        %4016 = vmatprep.subr.bf16.mxu0 0
        %4017 = vmatpush1.bf16.msra.mxu0 0
        %4018 = vmatprep.subr.bf16.mxu0 0
        %4019 = vmatpush1.bf16.msra.mxu0 0
        %4020 = vmatprep.subr.bf16.mxu0 0
        %4021 = vmatpush1.bf16.msra.mxu0 0
        %4022 = vmatprep.subr.bf16.mxu0 0
        %4023 = vmatpush1.bf16.msra.mxu0 0
        %4024 = vmatprep.subr.bf16.mxu0 0
        %4025 = vmatpush1.bf16.msra.mxu0 0
        %4026 = vmatprep.subr.bf16.mxu0 0
        %4027 = vmatpush1.bf16.msra.mxu0 0
        %4028 = vmatprep.subr.bf16.mxu0 0
        %4029 = vmatpush1.bf16.msra.mxu0 0
        %4030 = vmatprep.subr.bf16.mxu0 0
        %4031 = vmatpush1.bf16.msra.mxu0 0
        %4032 = vmatprep.mubr.bf16.mxu0 0
        %4033 = vmatmul.mubr.bf16.gmra.mrb[0].mxu0 %v3995
        %v4034 = vpop.f32.mrb[0].mxu0
        %v4035 = vadd.f32 %v3981, %v4034
        %v4036 = vpop.f32.mrb[0].mxu0
        %v4037 = vpop.f32.mrb[0].mxu0
        %v4038 = vadd.f32 %v3981, %v4037
        %v4039 = vpop.f32.mrb[0].mxu0
        %4040 = vmatprep.mubr.bf16.mxu0 0
        %4041 = vmatmul.mubr.bf16.gmra.mrb[0].mxu0 %v3998
        %v4042 = vpop.f32.mrb[0].mxu0
        %v4043 = vadd.f32 %v3981, %v4042
        %v4044 = vpop.f32.mrb[0].mxu0
        %v4045 = vpop.f32.mrb[0].mxu0
        %v4046 = vadd.f32 %v3981, %v4045
        %v4047 = vpop.f32.mrb[0].mxu0
        %4048 = vdwg.mxu0
        %v4049 = vld [vmem:[%s1 + $0x1a8] sm:$0xf]
        %v4050 = vld [vmem:[%s1 + $0x1ac] sm:$0xf]
        %v4051 = vld [vmem:[%s1 + $0x1b0] sm:$0xf]
        %v4052 = vld [vmem:[%s1 + $0x1b4] sm:$0xf]
        %v4053 = vld [vmem:[%s2 + $0x20] sm:$0x1]
        %v4054 = vlaneseq
        %v4055 = vshrl.u32 %v4054, 7
        %v4056 = vsub.s32 0, %v4055
        %v4057 = vrot.slane %v4053, %v4056
        %v4062 = vunpack.c.l.b16 %v4049
        %v4063 = vunpack.c.l.b16 %v4050
        %v4064 = vunpack.c.l.b16 %v4051
        %v4065 = vunpack.c.l.b16 %v4052
        %v4066 = vpack.c.b16 %v4063, %v4062
        %v4067 = vpack.c.b16 %v4065, %v4064
        %4070 = vmatprep.subr.bf16.mxu0 0
        %4071 = vmatpush1.bf16.msra.mxu0 %v4066
        %4072 = vmatprep.subr.bf16.mxu0 0
        %4073 = vmatpush1.bf16.msra.mxu0 %v4067
        %4074 = vmatprep.subr.bf16.mxu0 0
        %4075 = vmatpush1.bf16.msra.mxu0 0
        %4076 = vmatprep.subr.bf16.mxu0 0
        %4077 = vmatpush1.bf16.msra.mxu0 0
        %4078 = vmatprep.subr.bf16.mxu0 0
        %4079 = vmatpush1.bf16.msra.mxu0 0
        %4080 = vmatprep.subr.bf16.mxu0 0
        %4081 = vmatpush1.bf16.msra.mxu0 0
        %4082 = vmatprep.subr.bf16.mxu0 0
        %4083 = vmatpush1.bf16.msra.mxu0 0
        %4084 = vmatprep.subr.bf16.mxu0 0
        %4085 = vmatpush1.bf16.msra.mxu0 0
        %4086 = vmatprep.subr.bf16.mxu0 0
        %4087 = vmatpush1.bf16.msra.mxu0 0
        %4088 = vmatprep.subr.bf16.mxu0 0
        %4089 = vmatpush1.bf16.msra.mxu0 0
        %4090 = vmatprep.subr.bf16.mxu0 0
        %4091 = vmatpush1.bf16.msra.mxu0 0
        %4092 = vmatprep.subr.bf16.mxu0 0
        %4093 = vmatpush1.bf16.msra.mxu0 0
        %4094 = vmatprep.subr.bf16.mxu0 0
        %4095 = vmatpush1.bf16.msra.mxu0 0
        %4096 = vmatprep.subr.bf16.mxu0 0
        %4097 = vmatpush1.bf16.msra.mxu0 0
        %4098 = vmatprep.subr.bf16.mxu0 0
        %4099 = vmatpush1.bf16.msra.mxu0 0
        %4100 = vmatprep.subr.bf16.mxu0 0
        %4101 = vmatpush1.bf16.msra.mxu0 0
        %4102 = vmatprep.mubr.bf16.mxu0 0
        %4103 = vmatmul.mubr.bf16.gmra.mrb[0].mxu0 %v3995
        %v4104 = vpop.f32.mrb[0].mxu0
        %v4105 = vadd.f32 %v4057, %v4104
        %v4106 = vpop.f32.mrb[0].mxu0
        %v4107 = vpop.f32.mrb[0].mxu0
        %v4108 = vadd.f32 %v4057, %v4107
        %v4109 = vpop.f32.mrb[0].mxu0
        %4110 = vmatprep.mubr.bf16.mxu0 0
        %4111 = vmatmul.mubr.bf16.gmra.mrb[0].mxu0 %v3998
        %v4112 = vpop.f32.mrb[0].mxu0
        %v4113 = vadd.f32 %v4057, %v4112
        %v4114 = vpop.f32.mrb[0].mxu0
        %v4115 = vpop.f32.mrb[0].mxu0
        %v4116 = vadd.f32 %v4057, %v4115
        %v4117 = vpop.f32.mrb[0].mxu0
        %4118 = vdwg.mxu0
        %v4121 = vunpack.c.l.s4 1966171168
        %v4122 = vunpack.c.0.s8 %v4121
        %v4123 = vlaneseq
        %v4124 = vshrl.u32 %v4123, 7
        %v4125 = vsub.s32 %v4122, %v4124
        %v4126 = vrot.slane %v3966, %v4125
        %v4127 = vcombine.high %v4126, %v4126
        %v4129 = vunpack.c.l.s4 1966171168
        %v4130 = vunpack.c.0.s8 %v4129
        %v4131 = vlaneseq
        %v4132 = vshrl.u32 %v4131, 7
        %v4133 = vsub.s32 %v4130, %v4132
        %v4134 = vrot.slane %v4126, %v4133
        %v4136 = vunpack.c.l.s4 1966171168
        %v4137 = vunpack.c.0.s8 %v4136
        %v4138 = vlaneseq
        %v4139 = vshrl.u32 %v4138, 7
        %v4140 = vsub.s32 %v4137, %v4139
        %v4141 = vrot.slane %v4127, %v4140
        %v4142 = vlaneseq
        %v4143 = vshrl.u32 %v4142, 7
        %v4144 = vsub.s32 0, %v4143
        %v4145 = vrot.slane %v4134, %v4144
        %v4146 = vlaneseq
        %v4147 = vshrl.u32 %v4146, 7
        %v4148 = vsub.s32 0, %v4147
        %v4149 = vrot.slane %v4141, %v4148
        %v4152 = vadd.f32 %v3810, %v4145
        %v4153 = vadd.f32 %v3810, %v4149
        %v4154 = vld [vmem:[%s2 + $0x1c] sm:$0x1]
        %v4155 = vld [vmem:[%s2 + $0x1d] sm:$0x1]
        %v4156 = vsel %vm320, %v4152, 0.0
        %4157 = vadd.xlane.f32.xlu0 %v4156
        %v4158 = vpop.xlane.xlu0 %4157
        %v4159 = vsel %vm320, %v4153, 0.0
        %4160 = vadd.xlane.f32.xlu0 %v4159
        %v4161 = vpop.xlane.xlu0 %4160
        %v4162 = vmul.f32 %v4158, %v333
        %v4163 = vmul.f32 %v4161, %v333
        %v4164 = vsub.f32 %v4152, %v4162
        %v4165 = vsub.f32 %v4153, %v4163
        %v4166 = vmul.f32 %v4164, %v4164
        %v4167 = vmul.f32 %v4165, %v4165
        %v4168 = vsel %vm320, %v4166, 0.0
        %4169 = vadd.xlane.f32.xlu0 %v4168
        %v4170 = vpop.xlane.xlu0 %4169
        %v4171 = vsel %vm320, %v4167, 0.0
        %4172 = vadd.xlane.f32.xlu0 %v4171
        %v4173 = vpop.xlane.xlu0 %4172
        %v4174 = vmul.f32 %v4170, %v333
        %v4175 = vmul.f32 %v4173, %v333
        %v4176 = vadd.f32 %v4174, 1e-05
        %v4177 = vadd.f32 %v4175, 1e-05
        %v4178 = vrsqrt.pop %v4176
        %v4179 = vrsqrt.pop %v4177
        %v4180 = vmul.f32 %v4164, %v4178
        %v4181 = vmul.f32 %v4165, %v4179
        %v4182 = vlaneseq
        %v4183 = vshrl.u32 %v4182, 7
        %v4184 = vsub.s32 0, %v4183
        %v4185 = vrot.slane %v4154, %v4184
        %v4186 = vmul.f32 %v4180, %v4185
        %v4187 = vmul.f32 %v4181, %v4185
        %v4188 = vlaneseq
        %v4189 = vshrl.u32 %v4188, 7
        %v4190 = vsub.s32 0, %v4189
        %v4191 = vrot.slane %v4155, %v4190
        %v4192 = vadd.f32 %v4186, %v4191
        %v4193 = vadd.f32 %v4187, %v4191
        %v4194 = vld [vmem:[%s1 + $0x188] sm:$0xf]
        %v4195 = vld [vmem:[%s1 + $0x18c] sm:$0xf]
        %v4196 = vld [vmem:[%s1 + $0x190] sm:$0xf]
        %v4197 = vld [vmem:[%s1 + $0x194] sm:$0xf]
        %v4198 = vpack.c.bf16 %v4193, %v4192
        %v4199 = vld [vmem:[%s2 + $0x1e] sm:$0x1]
        %v4200 = vlaneseq
        %v4201 = vshrl.u32 %v4200, 7
        %v4202 = vsub.s32 0, %v4201
        %v4203 = vrot.slane %v4199, %v4202
        %v4208 = vunpack.c.l.b16 %v4194
        %v4209 = vunpack.c.l.b16 %v4195
        %v4210 = vunpack.c.l.b16 %v4196
        %v4211 = vunpack.c.l.b16 %v4197
        %v4212 = vpack.c.b16 %v4209, %v4208
        %v4213 = vpack.c.b16 %v4211, %v4210
        %v4217 = vsel %vm320, %v4198, 0
        %4219 = vmatprep.subr.bf16.mxu0 0
        %4220 = vmatpush1.bf16.msra.mxu0 %v4212
        %4221 = vmatprep.subr.bf16.mxu0 0
        %4222 = vmatpush1.bf16.msra.mxu0 %v4213
        %4223 = vmatprep.subr.bf16.mxu0 0
        %4224 = vmatpush1.bf16.msra.mxu0 0
        %4225 = vmatprep.subr.bf16.mxu0 0
        %4226 = vmatpush1.bf16.msra.mxu0 0
        %4227 = vmatprep.subr.bf16.mxu0 0
        %4228 = vmatpush1.bf16.msra.mxu0 0
        %4229 = vmatprep.subr.bf16.mxu0 0
        %4230 = vmatpush1.bf16.msra.mxu0 0
        %4231 = vmatprep.subr.bf16.mxu0 0
        %4232 = vmatpush1.bf16.msra.mxu0 0
        %4233 = vmatprep.subr.bf16.mxu0 0
        %4234 = vmatpush1.bf16.msra.mxu0 0
        %4235 = vmatprep.subr.bf16.mxu0 0
        %4236 = vmatpush1.bf16.msra.mxu0 0
        %4237 = vmatprep.subr.bf16.mxu0 0
        %4238 = vmatpush1.bf16.msra.mxu0 0
        %4239 = vmatprep.subr.bf16.mxu0 0
        %4240 = vmatpush1.bf16.msra.mxu0 0
        %4241 = vmatprep.subr.bf16.mxu0 0
        %4242 = vmatpush1.bf16.msra.mxu0 0
        %4243 = vmatprep.subr.bf16.mxu0 0
        %4244 = vmatpush1.bf16.msra.mxu0 0
        %4245 = vmatprep.subr.bf16.mxu0 0
        %4246 = vmatpush1.bf16.msra.mxu0 0
        %4247 = vmatprep.subr.bf16.mxu0 0
        %4248 = vmatpush1.bf16.msra.mxu0 0
        %4249 = vmatprep.subr.bf16.mxu0 0
        %4250 = vmatpush1.bf16.msra.mxu0 0
        %4251 = vmatprep.mubr.bf16.mxu0 0
        %4252 = vmatmul.mubr.bf16.gmra.mrb[0].mxu0 %v4217
        %v4253 = vpop.f32.mrb[0].mxu0
        %v4254 = vadd.f32 %v4203, %v4253
        %v4255 = vpop.f32.mrb[0].mxu0
        %v4256 = vpop.f32.mrb[0].mxu0
        %v4257 = vadd.f32 %v4203, %v4256
        %v4258 = vpop.f32.mrb[0].mxu0
        %4259 = vdwg.mxu0
        %v4260 = vld [vmem:[%s1 + $0x1b8] sm:$0xf]
        %v4261 = vld [vmem:[%s1 + $0x1bc] sm:$0xf]
        %v4262 = vld [vmem:[%s1 + $0x1c0] sm:$0xf]
        %v4263 = vld [vmem:[%s1 + $0x1c4] sm:$0xf]
        %v4264 = vld [vmem:[%s2 + $0x21] sm:$0x1]
        %v4265 = vpack.c.bf16 %v4254, %v4254
        %v4266 = vpack.c.bf16 %v4257, %v4257
        %v4267 = vpack.c.bf16 %v4038, %v4035
        %v4268 = vpack.c.bf16 %v4046, %v4043
        %v4270 = vsel %vm617, %v4265, 0
        %v4273 = vsel %vm617, %v4267, 0
        %4275 = vmatprep.subr.bf16.mxu0 0
        %4276 = vmatpush1.bf16.xpose.msra.mxu0 %v4273
        %4277 = vmatprep.subr.bf16.mxu0 0
        %4278 = vmatpush1.bf16.xpose.msra.mxu0 0
        %4279 = vmatprep.subr.bf16.mxu0 0
        %4280 = vmatpush1.bf16.xpose.msra.mxu0 0
        %4281 = vmatprep.subr.bf16.mxu0 0
        %4282 = vmatpush1.bf16.xpose.msra.mxu0 0
        %4283 = vmatprep.subr.bf16.mxu0 0
        %4284 = vmatpush1.bf16.xpose.msra.mxu0 0
        %4285 = vmatprep.subr.bf16.mxu0 0
        %4286 = vmatpush1.bf16.xpose.msra.mxu0 0
        %4287 = vmatprep.subr.bf16.mxu0 0
        %4288 = vmatpush1.bf16.xpose.msra.mxu0 0
        %4289 = vmatprep.subr.bf16.mxu0 0
        %4290 = vmatpush1.bf16.xpose.msra.mxu0 0
        %4291 = vmatprep.subr.bf16.mxu0 0
        %4292 = vmatpush1.bf16.xpose.msra.mxu0 0
        %4293 = vmatprep.subr.bf16.mxu0 0
        %4294 = vmatpush1.bf16.xpose.msra.mxu0 0
        %4295 = vmatprep.subr.bf16.mxu0 0
        %4296 = vmatpush1.bf16.xpose.msra.mxu0 0
        %4297 = vmatprep.subr.bf16.mxu0 0
        %4298 = vmatpush1.bf16.xpose.msra.mxu0 0
        %4299 = vmatprep.subr.bf16.mxu0 0
        %4300 = vmatpush1.bf16.xpose.msra.mxu0 0
        %4301 = vmatprep.subr.bf16.mxu0 0
        %4302 = vmatpush1.bf16.xpose.msra.mxu0 0
        %4303 = vmatprep.subr.bf16.mxu0 0
        %4304 = vmatpush1.bf16.xpose.msra.mxu0 0
        %4305 = vmatprep.subr.bf16.mxu0 0
        %4306 = vmatpush1.bf16.xpose.msra.mxu0 0
        %4307 = vmatprep.mubr.bf16.mxu0 0
        %4308 = vmatmul.mubr.bf16.gmra.mrb[0].mxu0 %v4270
        %v4309 = vpop.f32.mrb[0].mxu0
        %v4310 = vadd.f32 0.0, %v4309
        %v4311 = vpop.f32.mrb[0].mxu0
        %v4312 = vpop.f32.mrb[0].mxu0
        %v4313 = vpop.f32.mrb[0].mxu0
        %4314 = vdwg.mxu0
        %v4316 = vsel %vm617, %v4266, 0
        %v4319 = vsel %vm617, %v4268, 0
        %4321 = vmatprep.subr.bf16.mxu0 0
        %4322 = vmatpush1.bf16.xpose.msra.mxu0 %v4319
        %4323 = vmatprep.subr.bf16.mxu0 0
        %4324 = vmatpush1.bf16.xpose.msra.mxu0 0
        %4325 = vmatprep.subr.bf16.mxu0 0
        %4326 = vmatpush1.bf16.xpose.msra.mxu0 0
        %4327 = vmatprep.subr.bf16.mxu0 0
        %4328 = vmatpush1.bf16.xpose.msra.mxu0 0
        %4329 = vmatprep.subr.bf16.mxu0 0
        %4330 = vmatpush1.bf16.xpose.msra.mxu0 0
        %4331 = vmatprep.subr.bf16.mxu0 0
        %4332 = vmatpush1.bf16.xpose.msra.mxu0 0
        %4333 = vmatprep.subr.bf16.mxu0 0
        %4334 = vmatpush1.bf16.xpose.msra.mxu0 0
        %4335 = vmatprep.subr.bf16.mxu0 0
        %4336 = vmatpush1.bf16.xpose.msra.mxu0 0
        %4337 = vmatprep.subr.bf16.mxu0 0
        %4338 = vmatpush1.bf16.xpose.msra.mxu0 0
        %4339 = vmatprep.subr.bf16.mxu0 0
        %4340 = vmatpush1.bf16.xpose.msra.mxu0 0
        %4341 = vmatprep.subr.bf16.mxu0 0
        %4342 = vmatpush1.bf16.xpose.msra.mxu0 0
        %4343 = vmatprep.subr.bf16.mxu0 0
        %4344 = vmatpush1.bf16.xpose.msra.mxu0 0
        %4345 = vmatprep.subr.bf16.mxu0 0
        %4346 = vmatpush1.bf16.xpose.msra.mxu0 0
        %4347 = vmatprep.subr.bf16.mxu0 0
        %4348 = vmatpush1.bf16.xpose.msra.mxu0 0
        %4349 = vmatprep.subr.bf16.mxu0 0
        %4350 = vmatpush1.bf16.xpose.msra.mxu0 0
        %4351 = vmatprep.subr.bf16.mxu0 0
        %4352 = vmatpush1.bf16.xpose.msra.mxu0 0
        %4353 = vmatprep.mubr.bf16.mxu0 0
        %4354 = vmatmul.mubr.bf16.gmra.mrb[0].mxu0 %v4316
        %v4355 = vpop.f32.mrb[0].mxu0
        %v4356 = vadd.f32 0.0, %v4355
        %v4357 = vpop.f32.mrb[0].mxu0
        %v4358 = vpop.f32.mrb[0].mxu0
        %v4359 = vpop.f32.mrb[0].mxu0
        %4360 = vdwg.mxu0
        %v4361 = vsel %vm712, %v4310, -inf
        %4362 = vmax.xlane.f32.xlu0 %v4361
        %v4363 = vpop.xlane.xlu0 %4362
        %v4364 = vsel %vm712, %v4356, -inf
        %4365 = vmax.xlane.f32.xlu0 %v4364
        %v4366 = vpop.xlane.xlu0 %4365
        %v4367 = vsub.f32 %v4310, %v4363
        %v4368 = vsub.f32 %v4356, %v4366
        %v4369 = vmul.f32 %v4367, 1.442695
        %v4370 = vpow.pop %v4369
        %v4371 = vmul.f32 %v4368, 1.442695
        %v4372 = vpow.pop %v4371
        %v4373 = vsel %vm712, %v4370, 0.0
        %4374 = vadd.xlane.f32.xlu0 %v4373
        %v4375 = vpop.xlane.xlu0 %4374
        %v4376 = vsel %vm712, %v4372, 0.0
        %4377 = vadd.xlane.f32.xlu0 %v4376
        %v4378 = vpop.xlane.xlu0 %4377
        %v4379 = vrcp.pop %v4375
        %v4380 = vrcp.pop %v4378
        %v4381 = vmul.f32 %v4370, %v4379
        %v4382 = vmul.f32 %v4372, %v4380
        %v4383 = vpack.c.bf16 %v4381, %v4381
        %v4384 = vpack.c.bf16 %v4382, %v4382
        %v4385 = vpack.c.bf16 %v4108, %v4105
        %v4386 = vpack.c.bf16 %v4116, %v4113
        %v4388 = vsel %vm712, %v4383, 0
        %4390 = vmatprep.subr.bf16.mxu0 0
        %4391 = vmatpush1.bf16.msra.mxu0 %v4385
        %4392 = vmatprep.subr.bf16.mxu0 0
        %4393 = vmatpush1.bf16.msra.mxu0 0
        %4394 = vmatprep.subr.bf16.mxu0 0
        %4395 = vmatpush1.bf16.msra.mxu0 0
        %4396 = vmatprep.subr.bf16.mxu0 0
        %4397 = vmatpush1.bf16.msra.mxu0 0
        %4398 = vmatprep.subr.bf16.mxu0 0
        %4399 = vmatpush1.bf16.msra.mxu0 0
        %4400 = vmatprep.subr.bf16.mxu0 0
        %4401 = vmatpush1.bf16.msra.mxu0 0
        %4402 = vmatprep.subr.bf16.mxu0 0
        %4403 = vmatpush1.bf16.msra.mxu0 0
        %4404 = vmatprep.subr.bf16.mxu0 0
        %4405 = vmatpush1.bf16.msra.mxu0 0
        %4406 = vmatprep.subr.bf16.mxu0 0
        %4407 = vmatpush1.bf16.msra.mxu0 0
        %4408 = vmatprep.subr.bf16.mxu0 0
        %4409 = vmatpush1.bf16.msra.mxu0 0
        %4410 = vmatprep.subr.bf16.mxu0 0
        %4411 = vmatpush1.bf16.msra.mxu0 0
        %4412 = vmatprep.subr.bf16.mxu0 0
        %4413 = vmatpush1.bf16.msra.mxu0 0
        %4414 = vmatprep.subr.bf16.mxu0 0
        %4415 = vmatpush1.bf16.msra.mxu0 0
        %4416 = vmatprep.subr.bf16.mxu0 0
        %4417 = vmatpush1.bf16.msra.mxu0 0
        %4418 = vmatprep.subr.bf16.mxu0 0
        %4419 = vmatpush1.bf16.msra.mxu0 0
        %4420 = vmatprep.subr.bf16.mxu0 0
        %4421 = vmatpush1.bf16.msra.mxu0 0
        %4422 = vmatprep.mubr.bf16.mxu0 0
        %4423 = vmatmul.mubr.bf16.gmra.mrb[0].mxu0 %v4388
        %v4424 = vpop.f32.mrb[0].mxu0
        %v4425 = vadd.f32 0.0, %v4424
        %v4426 = vpop.f32.mrb[0].mxu0
        %v4427 = vpop.f32.mrb[0].mxu0
        %v4428 = vpop.f32.mrb[0].mxu0
        %4429 = vdwg.mxu0
        %v4431 = vsel %vm712, %v4384, 0
        %4433 = vmatprep.subr.bf16.mxu0 0
        %4434 = vmatpush1.bf16.msra.mxu0 %v4386
        %4435 = vmatprep.subr.bf16.mxu0 0
        %4436 = vmatpush1.bf16.msra.mxu0 0
        %4437 = vmatprep.subr.bf16.mxu0 0
        %4438 = vmatpush1.bf16.msra.mxu0 0
        %4439 = vmatprep.subr.bf16.mxu0 0
        %4440 = vmatpush1.bf16.msra.mxu0 0
        %4441 = vmatprep.subr.bf16.mxu0 0
        %4442 = vmatpush1.bf16.msra.mxu0 0
        %4443 = vmatprep.subr.bf16.mxu0 0
        %4444 = vmatpush1.bf16.msra.mxu0 0
        %4445 = vmatprep.subr.bf16.mxu0 0
        %4446 = vmatpush1.bf16.msra.mxu0 0
        %4447 = vmatprep.subr.bf16.mxu0 0
        %4448 = vmatpush1.bf16.msra.mxu0 0
        %4449 = vmatprep.subr.bf16.mxu0 0
        %4450 = vmatpush1.bf16.msra.mxu0 0
        %4451 = vmatprep.subr.bf16.mxu0 0
        %4452 = vmatpush1.bf16.msra.mxu0 0
        %4453 = vmatprep.subr.bf16.mxu0 0
        %4454 = vmatpush1.bf16.msra.mxu0 0
        %4455 = vmatprep.subr.bf16.mxu0 0
        %4456 = vmatpush1.bf16.msra.mxu0 0
        %4457 = vmatprep.subr.bf16.mxu0 0
        %4458 = vmatpush1.bf16.msra.mxu0 0
        %4459 = vmatprep.subr.bf16.mxu0 0
        %4460 = vmatpush1.bf16.msra.mxu0 0
        %4461 = vmatprep.subr.bf16.mxu0 0
        %4462 = vmatpush1.bf16.msra.mxu0 0
        %4463 = vmatprep.subr.bf16.mxu0 0
        %4464 = vmatpush1.bf16.msra.mxu0 0
        %4465 = vmatprep.mubr.bf16.mxu0 0
        %4466 = vmatmul.mubr.bf16.gmra.mrb[0].mxu0 %v4431
        %v4467 = vpop.f32.mrb[0].mxu0
        %v4468 = vadd.f32 0.0, %v4467
        %v4469 = vpop.f32.mrb[0].mxu0
        %v4470 = vpop.f32.mrb[0].mxu0
        %v4471 = vpop.f32.mrb[0].mxu0
        %4472 = vdwg.mxu0
        %4474 = vrot.lane.b32.xlu0 %v4265, 120
        %v4475 = vpop.permute.xlu0 %4474
        %4477 = vrot.lane.b32.xlu0 %v4267, 120
        %v4478 = vpop.permute.xlu0 %4477
        %v4480 = vsel %vm617, %v4475, 0
        %v4483 = vsel %vm617, %v4478, 0
        %4485 = vmatprep.subr.bf16.mxu0 0
        %4486 = vmatpush1.bf16.xpose.msra.mxu0 %v4483
        %4487 = vmatprep.subr.bf16.mxu0 0
        %4488 = vmatpush1.bf16.xpose.msra.mxu0 0
        %4489 = vmatprep.subr.bf16.mxu0 0
        %4490 = vmatpush1.bf16.xpose.msra.mxu0 0
        %4491 = vmatprep.subr.bf16.mxu0 0
        %4492 = vmatpush1.bf16.xpose.msra.mxu0 0
        %4493 = vmatprep.subr.bf16.mxu0 0
        %4494 = vmatpush1.bf16.xpose.msra.mxu0 0
        %4495 = vmatprep.subr.bf16.mxu0 0
        %4496 = vmatpush1.bf16.xpose.msra.mxu0 0
        %4497 = vmatprep.subr.bf16.mxu0 0
        %4498 = vmatpush1.bf16.xpose.msra.mxu0 0
        %4499 = vmatprep.subr.bf16.mxu0 0
        %4500 = vmatpush1.bf16.xpose.msra.mxu0 0
        %4501 = vmatprep.subr.bf16.mxu0 0
        %4502 = vmatpush1.bf16.xpose.msra.mxu0 0
        %4503 = vmatprep.subr.bf16.mxu0 0
        %4504 = vmatpush1.bf16.xpose.msra.mxu0 0
        %4505 = vmatprep.subr.bf16.mxu0 0
        %4506 = vmatpush1.bf16.xpose.msra.mxu0 0
        %4507 = vmatprep.subr.bf16.mxu0 0
        %4508 = vmatpush1.bf16.xpose.msra.mxu0 0
        %4509 = vmatprep.subr.bf16.mxu0 0
        %4510 = vmatpush1.bf16.xpose.msra.mxu0 0
        %4511 = vmatprep.subr.bf16.mxu0 0
        %4512 = vmatpush1.bf16.xpose.msra.mxu0 0
        %4513 = vmatprep.subr.bf16.mxu0 0
        %4514 = vmatpush1.bf16.xpose.msra.mxu0 0
        %4515 = vmatprep.subr.bf16.mxu0 0
        %4516 = vmatpush1.bf16.xpose.msra.mxu0 0
        %4517 = vmatprep.mubr.bf16.mxu0 0
        %4518 = vmatmul.mubr.bf16.gmra.mrb[0].mxu0 %v4480
        %v4519 = vpop.f32.mrb[0].mxu0
        %v4520 = vadd.f32 0.0, %v4519
        %v4521 = vpop.f32.mrb[0].mxu0
        %v4522 = vpop.f32.mrb[0].mxu0
        %v4523 = vpop.f32.mrb[0].mxu0
        %4524 = vdwg.mxu0
        %4526 = vrot.lane.b32.xlu0 %v4266, 120
        %v4527 = vpop.permute.xlu0 %4526
        %4529 = vrot.lane.b32.xlu0 %v4268, 120
        %v4530 = vpop.permute.xlu0 %4529
        %v4532 = vsel %vm617, %v4527, 0
        %v4535 = vsel %vm617, %v4530, 0
        %4537 = vmatprep.subr.bf16.mxu0 0
        %4538 = vmatpush1.bf16.xpose.msra.mxu0 %v4535
        %4539 = vmatprep.subr.bf16.mxu0 0
        %4540 = vmatpush1.bf16.xpose.msra.mxu0 0
        %4541 = vmatprep.subr.bf16.mxu0 0
        %4542 = vmatpush1.bf16.xpose.msra.mxu0 0
        %4543 = vmatprep.subr.bf16.mxu0 0
        %4544 = vmatpush1.bf16.xpose.msra.mxu0 0
        %4545 = vmatprep.subr.bf16.mxu0 0
        %4546 = vmatpush1.bf16.xpose.msra.mxu0 0
        %4547 = vmatprep.subr.bf16.mxu0 0
        %4548 = vmatpush1.bf16.xpose.msra.mxu0 0
        %4549 = vmatprep.subr.bf16.mxu0 0
        %4550 = vmatpush1.bf16.xpose.msra.mxu0 0
        %4551 = vmatprep.subr.bf16.mxu0 0
        %4552 = vmatpush1.bf16.xpose.msra.mxu0 0
        %4553 = vmatprep.subr.bf16.mxu0 0
        %4554 = vmatpush1.bf16.xpose.msra.mxu0 0
        %4555 = vmatprep.subr.bf16.mxu0 0
        %4556 = vmatpush1.bf16.xpose.msra.mxu0 0
        %4557 = vmatprep.subr.bf16.mxu0 0
        %4558 = vmatpush1.bf16.xpose.msra.mxu0 0
        %4559 = vmatprep.subr.bf16.mxu0 0
        %4560 = vmatpush1.bf16.xpose.msra.mxu0 0
        %4561 = vmatprep.subr.bf16.mxu0 0
        %4562 = vmatpush1.bf16.xpose.msra.mxu0 0
        %4563 = vmatprep.subr.bf16.mxu0 0
        %4564 = vmatpush1.bf16.xpose.msra.mxu0 0
        %4565 = vmatprep.subr.bf16.mxu0 0
        %4566 = vmatpush1.bf16.xpose.msra.mxu0 0
        %4567 = vmatprep.subr.bf16.mxu0 0
        %4568 = vmatpush1.bf16.xpose.msra.mxu0 0
        %4569 = vmatprep.mubr.bf16.mxu0 0
        %4570 = vmatmul.mubr.bf16.gmra.mrb[0].mxu0 %v4532
        %v4571 = vpop.f32.mrb[0].mxu0
        %v4572 = vadd.f32 0.0, %v4571
        %v4573 = vpop.f32.mrb[0].mxu0
        %v4574 = vpop.f32.mrb[0].mxu0
        %v4575 = vpop.f32.mrb[0].mxu0
        %4576 = vdwg.mxu0
        %v4577 = vsel %vm712, %v4520, -inf
        %4578 = vmax.xlane.f32.xlu0 %v4577
        %v4579 = vpop.xlane.xlu0 %4578
        %v4580 = vsel %vm712, %v4572, -inf
        %4581 = vmax.xlane.f32.xlu0 %v4580
        %v4582 = vpop.xlane.xlu0 %4581
        %v4583 = vsub.f32 %v4520, %v4579
        %v4584 = vsub.f32 %v4572, %v4582
        %v4585 = vmul.f32 %v4583, 1.442695
        %v4586 = vpow.pop %v4585
        %v4587 = vmul.f32 %v4584, 1.442695
        %v4588 = vpow.pop %v4587
        %v4589 = vsel %vm712, %v4586, 0.0
        %4590 = vadd.xlane.f32.xlu0 %v4589
        %v4591 = vpop.xlane.xlu0 %4590
        %v4592 = vsel %vm712, %v4588, 0.0
        %4593 = vadd.xlane.f32.xlu0 %v4592
        %v4594 = vpop.xlane.xlu0 %4593
        %v4595 = vrcp.pop %v4591
        %v4596 = vrcp.pop %v4594
        %v4597 = vmul.f32 %v4586, %v4595
        %v4598 = vmul.f32 %v4588, %v4596
        %v4599 = vpack.c.bf16 %v4597, %v4597
        %v4600 = vpack.c.bf16 %v4598, %v4598
        %4602 = vrot.lane.b32.xlu0 %v4385, 120
        %v4603 = vpop.permute.xlu0 %4602
        %v4606 = vsel %vm712, %v4599, 0
        %4608 = vmatprep.subr.bf16.mxu0 0
        %4609 = vmatpush1.bf16.msra.mxu0 %v4603
        %4610 = vmatprep.subr.bf16.mxu0 0
        %4611 = vmatpush1.bf16.msra.mxu0 0
        %4612 = vmatprep.subr.bf16.mxu0 0
        %4613 = vmatpush1.bf16.msra.mxu0 0
        %4614 = vmatprep.subr.bf16.mxu0 0
        %4615 = vmatpush1.bf16.msra.mxu0 0
        %4616 = vmatprep.subr.bf16.mxu0 0
        %4617 = vmatpush1.bf16.msra.mxu0 0
        %4618 = vmatprep.subr.bf16.mxu0 0
        %4619 = vmatpush1.bf16.msra.mxu0 0
        %4620 = vmatprep.subr.bf16.mxu0 0
        %4621 = vmatpush1.bf16.msra.mxu0 0
        %4622 = vmatprep.subr.bf16.mxu0 0
        %4623 = vmatpush1.bf16.msra.mxu0 0
        %4624 = vmatprep.subr.bf16.mxu0 0
        %4625 = vmatpush1.bf16.msra.mxu0 0
        %4626 = vmatprep.subr.bf16.mxu0 0
        %4627 = vmatpush1.bf16.msra.mxu0 0
        %4628 = vmatprep.subr.bf16.mxu0 0
        %4629 = vmatpush1.bf16.msra.mxu0 0
        %4630 = vmatprep.subr.bf16.mxu0 0
        %4631 = vmatpush1.bf16.msra.mxu0 0
        %4632 = vmatprep.subr.bf16.mxu0 0
        %4633 = vmatpush1.bf16.msra.mxu0 0
        %4634 = vmatprep.subr.bf16.mxu0 0
        %4635 = vmatpush1.bf16.msra.mxu0 0
        %4636 = vmatprep.subr.bf16.mxu0 0
        %4637 = vmatpush1.bf16.msra.mxu0 0
        %4638 = vmatprep.subr.bf16.mxu0 0
        %4639 = vmatpush1.bf16.msra.mxu0 0
        %4640 = vmatprep.mubr.bf16.mxu0 0
        %4641 = vmatmul.mubr.bf16.gmra.mrb[0].mxu0 %v4606
        %v4642 = vpop.f32.mrb[0].mxu0
        %v4643 = vadd.f32 0.0, %v4642
        %v4644 = vpop.f32.mrb[0].mxu0
        %v4645 = vpop.f32.mrb[0].mxu0
        %v4646 = vpop.f32.mrb[0].mxu0
        %4647 = vdwg.mxu0
        %4649 = vrot.lane.b32.xlu0 %v4386, 120
        %v4650 = vpop.permute.xlu0 %4649
        %v4653 = vsel %vm712, %v4600, 0
        %4655 = vmatprep.subr.bf16.mxu0 0
        %4656 = vmatpush1.bf16.msra.mxu0 %v4650
        %4657 = vmatprep.subr.bf16.mxu0 0
        %4658 = vmatpush1.bf16.msra.mxu0 0
        %4659 = vmatprep.subr.bf16.mxu0 0
        %4660 = vmatpush1.bf16.msra.mxu0 0
        %4661 = vmatprep.subr.bf16.mxu0 0
        %4662 = vmatpush1.bf16.msra.mxu0 0
        %4663 = vmatprep.subr.bf16.mxu0 0
        %4664 = vmatpush1.bf16.msra.mxu0 0
        %4665 = vmatprep.subr.bf16.mxu0 0
        %4666 = vmatpush1.bf16.msra.mxu0 0
        %4667 = vmatprep.subr.bf16.mxu0 0
        %4668 = vmatpush1.bf16.msra.mxu0 0
        %4669 = vmatprep.subr.bf16.mxu0 0
        %4670 = vmatpush1.bf16.msra.mxu0 0
        %4671 = vmatprep.subr.bf16.mxu0 0
        %4672 = vmatpush1.bf16.msra.mxu0 0
        %4673 = vmatprep.subr.bf16.mxu0 0
        %4674 = vmatpush1.bf16.msra.mxu0 0
        %4675 = vmatprep.subr.bf16.mxu0 0
        %4676 = vmatpush1.bf16.msra.mxu0 0
        %4677 = vmatprep.subr.bf16.mxu0 0
        %4678 = vmatpush1.bf16.msra.mxu0 0
        %4679 = vmatprep.subr.bf16.mxu0 0
        %4680 = vmatpush1.bf16.msra.mxu0 0
        %4681 = vmatprep.subr.bf16.mxu0 0
        %4682 = vmatpush1.bf16.msra.mxu0 0
        %4683 = vmatprep.subr.bf16.mxu0 0
        %4684 = vmatpush1.bf16.msra.mxu0 0
        %4685 = vmatprep.subr.bf16.mxu0 0
        %4686 = vmatpush1.bf16.msra.mxu0 0
        %4687 = vmatprep.mubr.bf16.mxu0 0
        %4688 = vmatmul.mubr.bf16.gmra.mrb[0].mxu0 %v4653
        %v4689 = vpop.f32.mrb[0].mxu0
        %v4690 = vadd.f32 0.0, %v4689
        %v4691 = vpop.f32.mrb[0].mxu0
        %v4692 = vpop.f32.mrb[0].mxu0
        %v4693 = vpop.f32.mrb[0].mxu0
        %4694 = vdwg.mxu0
        %4695 = vrot.lane.b32.xlu0 %v4265, 112
        %v4696 = vpop.permute.xlu0 %4695
        %4697 = vrot.lane.b32.xlu0 %v4267, 112
        %v4698 = vpop.permute.xlu0 %4697
        %v4700 = vsel %vm617, %v4696, 0
        %v4703 = vsel %vm617, %v4698, 0
        %4705 = vmatprep.subr.bf16.mxu0 0
        %4706 = vmatpush1.bf16.xpose.msra.mxu0 %v4703
        %4707 = vmatprep.subr.bf16.mxu0 0
        %4708 = vmatpush1.bf16.xpose.msra.mxu0 0
        %4709 = vmatprep.subr.bf16.mxu0 0
        %4710 = vmatpush1.bf16.xpose.msra.mxu0 0
        %4711 = vmatprep.subr.bf16.mxu0 0
        %4712 = vmatpush1.bf16.xpose.msra.mxu0 0
        %4713 = vmatprep.subr.bf16.mxu0 0
        %4714 = vmatpush1.bf16.xpose.msra.mxu0 0
        %4715 = vmatprep.subr.bf16.mxu0 0
        %4716 = vmatpush1.bf16.xpose.msra.mxu0 0
        %4717 = vmatprep.subr.bf16.mxu0 0
        %4718 = vmatpush1.bf16.xpose.msra.mxu0 0
        %4719 = vmatprep.subr.bf16.mxu0 0
        %4720 = vmatpush1.bf16.xpose.msra.mxu0 0
        %4721 = vmatprep.subr.bf16.mxu0 0
        %4722 = vmatpush1.bf16.xpose.msra.mxu0 0
        %4723 = vmatprep.subr.bf16.mxu0 0
        %4724 = vmatpush1.bf16.xpose.msra.mxu0 0
        %4725 = vmatprep.subr.bf16.mxu0 0
        %4726 = vmatpush1.bf16.xpose.msra.mxu0 0
        %4727 = vmatprep.subr.bf16.mxu0 0
        %4728 = vmatpush1.bf16.xpose.msra.mxu0 0
        %4729 = vmatprep.subr.bf16.mxu0 0
        %4730 = vmatpush1.bf16.xpose.msra.mxu0 0
        %4731 = vmatprep.subr.bf16.mxu0 0
        %4732 = vmatpush1.bf16.xpose.msra.mxu0 0
        %4733 = vmatprep.subr.bf16.mxu0 0
        %4734 = vmatpush1.bf16.xpose.msra.mxu0 0
        %4735 = vmatprep.subr.bf16.mxu0 0
        %4736 = vmatpush1.bf16.xpose.msra.mxu0 0
        %4737 = vmatprep.mubr.bf16.mxu0 0
        %4738 = vmatmul.mubr.bf16.gmra.mrb[0].mxu0 %v4700
        %v4739 = vpop.f32.mrb[0].mxu0
        %v4740 = vadd.f32 0.0, %v4739
        %v4741 = vpop.f32.mrb[0].mxu0
        %v4742 = vpop.f32.mrb[0].mxu0
        %v4743 = vpop.f32.mrb[0].mxu0
        %4744 = vdwg.mxu0
        %4745 = vrot.lane.b32.xlu0 %v4266, 112
        %v4746 = vpop.permute.xlu0 %4745
        %4747 = vrot.lane.b32.xlu0 %v4268, 112
        %v4748 = vpop.permute.xlu0 %4747
        %v4750 = vsel %vm617, %v4746, 0
        %v4753 = vsel %vm617, %v4748, 0
        %4755 = vmatprep.subr.bf16.mxu0 0
        %4756 = vmatpush1.bf16.xpose.msra.mxu0 %v4753
        %4757 = vmatprep.subr.bf16.mxu0 0
        %4758 = vmatpush1.bf16.xpose.msra.mxu0 0
        %4759 = vmatprep.subr.bf16.mxu0 0
        %4760 = vmatpush1.bf16.xpose.msra.mxu0 0
        %4761 = vmatprep.subr.bf16.mxu0 0
        %4762 = vmatpush1.bf16.xpose.msra.mxu0 0
        %4763 = vmatprep.subr.bf16.mxu0 0
        %4764 = vmatpush1.bf16.xpose.msra.mxu0 0
        %4765 = vmatprep.subr.bf16.mxu0 0
        %4766 = vmatpush1.bf16.xpose.msra.mxu0 0
        %4767 = vmatprep.subr.bf16.mxu0 0
        %4768 = vmatpush1.bf16.xpose.msra.mxu0 0
        %4769 = vmatprep.subr.bf16.mxu0 0
        %4770 = vmatpush1.bf16.xpose.msra.mxu0 0
        %4771 = vmatprep.subr.bf16.mxu0 0
        %4772 = vmatpush1.bf16.xpose.msra.mxu0 0
        %4773 = vmatprep.subr.bf16.mxu0 0
        %4774 = vmatpush1.bf16.xpose.msra.mxu0 0
        %4775 = vmatprep.subr.bf16.mxu0 0
        %4776 = vmatpush1.bf16.xpose.msra.mxu0 0
        %4777 = vmatprep.subr.bf16.mxu0 0
        %4778 = vmatpush1.bf16.xpose.msra.mxu0 0
        %4779 = vmatprep.subr.bf16.mxu0 0
        %4780 = vmatpush1.bf16.xpose.msra.mxu0 0
        %4781 = vmatprep.subr.bf16.mxu0 0
        %4782 = vmatpush1.bf16.xpose.msra.mxu0 0
        %4783 = vmatprep.subr.bf16.mxu0 0
        %4784 = vmatpush1.bf16.xpose.msra.mxu0 0
        %4785 = vmatprep.subr.bf16.mxu0 0
        %4786 = vmatpush1.bf16.xpose.msra.mxu0 0
        %4787 = vmatprep.mubr.bf16.mxu0 0
        %4788 = vmatmul.mubr.bf16.gmra.mrb[0].mxu0 %v4750
        %v4789 = vpop.f32.mrb[0].mxu0
        %v4790 = vadd.f32 0.0, %v4789
        %v4791 = vpop.f32.mrb[0].mxu0
        %v4792 = vpop.f32.mrb[0].mxu0
        %v4793 = vpop.f32.mrb[0].mxu0
        %4794 = vdwg.mxu0
        %v4795 = vsel %vm712, %v4740, -inf
        %4796 = vmax.xlane.f32.xlu0 %v4795
        %v4797 = vpop.xlane.xlu0 %4796
        %v4798 = vsel %vm712, %v4790, -inf
        %4799 = vmax.xlane.f32.xlu0 %v4798
        %v4800 = vpop.xlane.xlu0 %4799
        %v4801 = vsub.f32 %v4740, %v4797
        %v4802 = vsub.f32 %v4790, %v4800
        %v4803 = vmul.f32 %v4801, 1.442695
        %v4804 = vpow.pop %v4803
        %v4805 = vmul.f32 %v4802, 1.442695
        %v4806 = vpow.pop %v4805
        %v4807 = vsel %vm712, %v4804, 0.0
        %4808 = vadd.xlane.f32.xlu0 %v4807
        %v4809 = vpop.xlane.xlu0 %4808
        %v4810 = vsel %vm712, %v4806, 0.0
        %4811 = vadd.xlane.f32.xlu0 %v4810
        %v4812 = vpop.xlane.xlu0 %4811
        %v4813 = vrcp.pop %v4809
        %v4814 = vrcp.pop %v4812
        %v4815 = vmul.f32 %v4804, %v4813
        %v4816 = vmul.f32 %v4806, %v4814
        %v4817 = vpack.c.bf16 %v4815, %v4815
        %v4818 = vpack.c.bf16 %v4816, %v4816
        %4819 = vrot.lane.b32.xlu0 %v4385, 112
        %v4820 = vpop.permute.xlu0 %4819
        %v4823 = vsel %vm712, %v4817, 0
        %4825 = vmatprep.subr.bf16.mxu0 0
        %4826 = vmatpush1.bf16.msra.mxu0 %v4820
        %4827 = vmatprep.subr.bf16.mxu0 0
        %4828 = vmatpush1.bf16.msra.mxu0 0
        %4829 = vmatprep.subr.bf16.mxu0 0
        %4830 = vmatpush1.bf16.msra.mxu0 0
        %4831 = vmatprep.subr.bf16.mxu0 0
        %4832 = vmatpush1.bf16.msra.mxu0 0
        %4833 = vmatprep.subr.bf16.mxu0 0
        %4834 = vmatpush1.bf16.msra.mxu0 0
        %4835 = vmatprep.subr.bf16.mxu0 0
        %4836 = vmatpush1.bf16.msra.mxu0 0
        %4837 = vmatprep.subr.bf16.mxu0 0
        %4838 = vmatpush1.bf16.msra.mxu0 0
        %4839 = vmatprep.subr.bf16.mxu0 0
        %4840 = vmatpush1.bf16.msra.mxu0 0
        %4841 = vmatprep.subr.bf16.mxu0 0
        %4842 = vmatpush1.bf16.msra.mxu0 0
        %4843 = vmatprep.subr.bf16.mxu0 0
        %4844 = vmatpush1.bf16.msra.mxu0 0
        %4845 = vmatprep.subr.bf16.mxu0 0
        %4846 = vmatpush1.bf16.msra.mxu0 0
        %4847 = vmatprep.subr.bf16.mxu0 0
        %4848 = vmatpush1.bf16.msra.mxu0 0
        %4849 = vmatprep.subr.bf16.mxu0 0
        %4850 = vmatpush1.bf16.msra.mxu0 0
        %4851 = vmatprep.subr.bf16.mxu0 0
        %4852 = vmatpush1.bf16.msra.mxu0 0
        %4853 = vmatprep.subr.bf16.mxu0 0
        %4854 = vmatpush1.bf16.msra.mxu0 0
        %4855 = vmatprep.subr.bf16.mxu0 0
        %4856 = vmatpush1.bf16.msra.mxu0 0
        %4857 = vmatprep.mubr.bf16.mxu0 0
        %4858 = vmatmul.mubr.bf16.gmra.mrb[0].mxu0 %v4823
        %v4859 = vpop.f32.mrb[0].mxu0
        %v4860 = vadd.f32 0.0, %v4859
        %v4861 = vpop.f32.mrb[0].mxu0
        %v4862 = vpop.f32.mrb[0].mxu0
        %v4863 = vpop.f32.mrb[0].mxu0
        %4864 = vdwg.mxu0
        %4865 = vrot.lane.b32.xlu0 %v4386, 112
        %v4866 = vpop.permute.xlu0 %4865
        %v4869 = vsel %vm712, %v4818, 0
        %4871 = vmatprep.subr.bf16.mxu0 0
        %4872 = vmatpush1.bf16.msra.mxu0 %v4866
        %4873 = vmatprep.subr.bf16.mxu0 0
        %4874 = vmatpush1.bf16.msra.mxu0 0
        %4875 = vmatprep.subr.bf16.mxu0 0
        %4876 = vmatpush1.bf16.msra.mxu0 0
        %4877 = vmatprep.subr.bf16.mxu0 0
        %4878 = vmatpush1.bf16.msra.mxu0 0
        %4879 = vmatprep.subr.bf16.mxu0 0
        %4880 = vmatpush1.bf16.msra.mxu0 0
        %4881 = vmatprep.subr.bf16.mxu0 0
        %4882 = vmatpush1.bf16.msra.mxu0 0
        %4883 = vmatprep.subr.bf16.mxu0 0
        %4884 = vmatpush1.bf16.msra.mxu0 0
        %4885 = vmatprep.subr.bf16.mxu0 0
        %4886 = vmatpush1.bf16.msra.mxu0 0
        %4887 = vmatprep.subr.bf16.mxu0 0
        %4888 = vmatpush1.bf16.msra.mxu0 0
        %4889 = vmatprep.subr.bf16.mxu0 0
        %4890 = vmatpush1.bf16.msra.mxu0 0
        %4891 = vmatprep.subr.bf16.mxu0 0
        %4892 = vmatpush1.bf16.msra.mxu0 0
        %4893 = vmatprep.subr.bf16.mxu0 0
        %4894 = vmatpush1.bf16.msra.mxu0 0
        %4895 = vmatprep.subr.bf16.mxu0 0
        %4896 = vmatpush1.bf16.msra.mxu0 0
        %4897 = vmatprep.subr.bf16.mxu0 0
        %4898 = vmatpush1.bf16.msra.mxu0 0
        %4899 = vmatprep.subr.bf16.mxu0 0
        %4900 = vmatpush1.bf16.msra.mxu0 0
        %4901 = vmatprep.subr.bf16.mxu0 0
        %4902 = vmatpush1.bf16.msra.mxu0 0
        %4903 = vmatprep.mubr.bf16.mxu0 0
        %4904 = vmatmul.mubr.bf16.gmra.mrb[0].mxu0 %v4869
        %v4905 = vpop.f32.mrb[0].mxu0
        %v4906 = vadd.f32 0.0, %v4905
        %v4907 = vpop.f32.mrb[0].mxu0
        %v4908 = vpop.f32.mrb[0].mxu0
        %v4909 = vpop.f32.mrb[0].mxu0
        %4910 = vdwg.mxu0
        %4911 = vrot.lane.b32.xlu0 %v4265, 104
        %v4912 = vpop.permute.xlu0 %4911
        %4913 = vrot.lane.b32.xlu0 %v4267, 104
        %v4914 = vpop.permute.xlu0 %4913
        %v4916 = vsel %vm617, %v4912, 0
        %v4919 = vsel %vm617, %v4914, 0
        %4921 = vmatprep.subr.bf16.mxu0 0
        %4922 = vmatpush1.bf16.xpose.msra.mxu0 %v4919
        %4923 = vmatprep.subr.bf16.mxu0 0
        %4924 = vmatpush1.bf16.xpose.msra.mxu0 0
        %4925 = vmatprep.subr.bf16.mxu0 0
        %4926 = vmatpush1.bf16.xpose.msra.mxu0 0
        %4927 = vmatprep.subr.bf16.mxu0 0
        %4928 = vmatpush1.bf16.xpose.msra.mxu0 0
        %4929 = vmatprep.subr.bf16.mxu0 0
        %4930 = vmatpush1.bf16.xpose.msra.mxu0 0
        %4931 = vmatprep.subr.bf16.mxu0 0
        %4932 = vmatpush1.bf16.xpose.msra.mxu0 0
        %4933 = vmatprep.subr.bf16.mxu0 0
        %4934 = vmatpush1.bf16.xpose.msra.mxu0 0
        %4935 = vmatprep.subr.bf16.mxu0 0
        %4936 = vmatpush1.bf16.xpose.msra.mxu0 0
        %4937 = vmatprep.subr.bf16.mxu0 0
        %4938 = vmatpush1.bf16.xpose.msra.mxu0 0
        %4939 = vmatprep.subr.bf16.mxu0 0
        %4940 = vmatpush1.bf16.xpose.msra.mxu0 0
        %4941 = vmatprep.subr.bf16.mxu0 0
        %4942 = vmatpush1.bf16.xpose.msra.mxu0 0
        %4943 = vmatprep.subr.bf16.mxu0 0
        %4944 = vmatpush1.bf16.xpose.msra.mxu0 0
        %4945 = vmatprep.subr.bf16.mxu0 0
        %4946 = vmatpush1.bf16.xpose.msra.mxu0 0
        %4947 = vmatprep.subr.bf16.mxu0 0
        %4948 = vmatpush1.bf16.xpose.msra.mxu0 0
        %4949 = vmatprep.subr.bf16.mxu0 0
        %4950 = vmatpush1.bf16.xpose.msra.mxu0 0
        %4951 = vmatprep.subr.bf16.mxu0 0
        %4952 = vmatpush1.bf16.xpose.msra.mxu0 0
        %4953 = vmatprep.mubr.bf16.mxu0 0
        %4954 = vmatmul.mubr.bf16.gmra.mrb[0].mxu0 %v4916
        %v4955 = vpop.f32.mrb[0].mxu0
        %v4956 = vadd.f32 0.0, %v4955
        %v4957 = vpop.f32.mrb[0].mxu0
        %v4958 = vpop.f32.mrb[0].mxu0
        %v4959 = vpop.f32.mrb[0].mxu0
        %4960 = vdwg.mxu0
        %4961 = vrot.lane.b32.xlu0 %v4266, 104
        %v4962 = vpop.permute.xlu0 %4961
        %4963 = vrot.lane.b32.xlu0 %v4268, 104
        %v4964 = vpop.permute.xlu0 %4963
        %v4966 = vsel %vm617, %v4962, 0
        %v4969 = vsel %vm617, %v4964, 0
        %4971 = vmatprep.subr.bf16.mxu0 0
        %4972 = vmatpush1.bf16.xpose.msra.mxu0 %v4969
        %4973 = vmatprep.subr.bf16.mxu0 0
        %4974 = vmatpush1.bf16.xpose.msra.mxu0 0
        %4975 = vmatprep.subr.bf16.mxu0 0
        %4976 = vmatpush1.bf16.xpose.msra.mxu0 0
        %4977 = vmatprep.subr.bf16.mxu0 0
        %4978 = vmatpush1.bf16.xpose.msra.mxu0 0
        %4979 = vmatprep.subr.bf16.mxu0 0
        %4980 = vmatpush1.bf16.xpose.msra.mxu0 0
        %4981 = vmatprep.subr.bf16.mxu0 0
        %4982 = vmatpush1.bf16.xpose.msra.mxu0 0
        %4983 = vmatprep.subr.bf16.mxu0 0
        %4984 = vmatpush1.bf16.xpose.msra.mxu0 0
        %4985 = vmatprep.subr.bf16.mxu0 0
        %4986 = vmatpush1.bf16.xpose.msra.mxu0 0
        %4987 = vmatprep.subr.bf16.mxu0 0
        %4988 = vmatpush1.bf16.xpose.msra.mxu0 0
        %4989 = vmatprep.subr.bf16.mxu0 0
        %4990 = vmatpush1.bf16.xpose.msra.mxu0 0
        %4991 = vmatprep.subr.bf16.mxu0 0
        %4992 = vmatpush1.bf16.xpose.msra.mxu0 0
        %4993 = vmatprep.subr.bf16.mxu0 0
        %4994 = vmatpush1.bf16.xpose.msra.mxu0 0
        %4995 = vmatprep.subr.bf16.mxu0 0
        %4996 = vmatpush1.bf16.xpose.msra.mxu0 0
        %4997 = vmatprep.subr.bf16.mxu0 0
        %4998 = vmatpush1.bf16.xpose.msra.mxu0 0
        %4999 = vmatprep.subr.bf16.mxu0 0
        %5000 = vmatpush1.bf16.xpose.msra.mxu0 0
        %5001 = vmatprep.subr.bf16.mxu0 0
        %5002 = vmatpush1.bf16.xpose.msra.mxu0 0
        %5003 = vmatprep.mubr.bf16.mxu0 0
        %5004 = vmatmul.mubr.bf16.gmra.mrb[0].mxu0 %v4966
        %v5005 = vpop.f32.mrb[0].mxu0
        %v5006 = vadd.f32 0.0, %v5005
        %v5007 = vpop.f32.mrb[0].mxu0
        %v5008 = vpop.f32.mrb[0].mxu0
        %v5009 = vpop.f32.mrb[0].mxu0
        %5010 = vdwg.mxu0
        %v5011 = vsel %vm712, %v4956, -inf
        %5012 = vmax.xlane.f32.xlu0 %v5011
        %v5013 = vpop.xlane.xlu0 %5012
        %v5014 = vsel %vm712, %v5006, -inf
        %5015 = vmax.xlane.f32.xlu0 %v5014
        %v5016 = vpop.xlane.xlu0 %5015
        %v5017 = vsub.f32 %v4956, %v5013
        %v5018 = vsub.f32 %v5006, %v5016
        %v5019 = vmul.f32 %v5017, 1.442695
        %v5020 = vpow.pop %v5019
        %v5021 = vmul.f32 %v5018, 1.442695
        %v5022 = vpow.pop %v5021
        %v5023 = vsel %vm712, %v5020, 0.0
        %5024 = vadd.xlane.f32.xlu0 %v5023
        %v5025 = vpop.xlane.xlu0 %5024
        %v5026 = vsel %vm712, %v5022, 0.0
        %5027 = vadd.xlane.f32.xlu0 %v5026
        %v5028 = vpop.xlane.xlu0 %5027
        %v5029 = vrcp.pop %v5025
        %v5030 = vrcp.pop %v5028
        %v5031 = vmul.f32 %v5020, %v5029
        %v5032 = vmul.f32 %v5022, %v5030
        %v5033 = vpack.c.bf16 %v5031, %v5031
        %v5034 = vpack.c.bf16 %v5032, %v5032
        %5035 = vrot.lane.b32.xlu0 %v4385, 104
        %v5036 = vpop.permute.xlu0 %5035
        %v5039 = vsel %vm712, %v5033, 0
        %5041 = vmatprep.subr.bf16.mxu0 0
        %5042 = vmatpush1.bf16.msra.mxu0 %v5036
        %5043 = vmatprep.subr.bf16.mxu0 0
        %5044 = vmatpush1.bf16.msra.mxu0 0
        %5045 = vmatprep.subr.bf16.mxu0 0
        %5046 = vmatpush1.bf16.msra.mxu0 0
        %5047 = vmatprep.subr.bf16.mxu0 0
        %5048 = vmatpush1.bf16.msra.mxu0 0
        %5049 = vmatprep.subr.bf16.mxu0 0
        %5050 = vmatpush1.bf16.msra.mxu0 0
        %5051 = vmatprep.subr.bf16.mxu0 0
        %5052 = vmatpush1.bf16.msra.mxu0 0
        %5053 = vmatprep.subr.bf16.mxu0 0
        %5054 = vmatpush1.bf16.msra.mxu0 0
        %5055 = vmatprep.subr.bf16.mxu0 0
        %5056 = vmatpush1.bf16.msra.mxu0 0
        %5057 = vmatprep.subr.bf16.mxu0 0
        %5058 = vmatpush1.bf16.msra.mxu0 0
        %5059 = vmatprep.subr.bf16.mxu0 0
        %5060 = vmatpush1.bf16.msra.mxu0 0
        %5061 = vmatprep.subr.bf16.mxu0 0
        %5062 = vmatpush1.bf16.msra.mxu0 0
        %5063 = vmatprep.subr.bf16.mxu0 0
        %5064 = vmatpush1.bf16.msra.mxu0 0
        %5065 = vmatprep.subr.bf16.mxu0 0
        %5066 = vmatpush1.bf16.msra.mxu0 0
        %5067 = vmatprep.subr.bf16.mxu0 0
        %5068 = vmatpush1.bf16.msra.mxu0 0
        %5069 = vmatprep.subr.bf16.mxu0 0
        %5070 = vmatpush1.bf16.msra.mxu0 0
        %5071 = vmatprep.subr.bf16.mxu0 0
        %5072 = vmatpush1.bf16.msra.mxu0 0
        %5073 = vmatprep.mubr.bf16.mxu0 0
        %5074 = vmatmul.mubr.bf16.gmra.mrb[0].mxu0 %v5039
        %v5075 = vpop.f32.mrb[0].mxu0
        %v5076 = vadd.f32 0.0, %v5075
        %v5077 = vpop.f32.mrb[0].mxu0
        %v5078 = vpop.f32.mrb[0].mxu0
        %v5079 = vpop.f32.mrb[0].mxu0
        %5080 = vdwg.mxu0
        %5081 = vrot.lane.b32.xlu0 %v4386, 104
        %v5082 = vpop.permute.xlu0 %5081
        %v5085 = vsel %vm712, %v5034, 0
        %5087 = vmatprep.subr.bf16.mxu0 0
        %5088 = vmatpush1.bf16.msra.mxu0 %v5082
        %5089 = vmatprep.subr.bf16.mxu0 0
        %5090 = vmatpush1.bf16.msra.mxu0 0
        %5091 = vmatprep.subr.bf16.mxu0 0
        %5092 = vmatpush1.bf16.msra.mxu0 0
        %5093 = vmatprep.subr.bf16.mxu0 0
        %5094 = vmatpush1.bf16.msra.mxu0 0
        %5095 = vmatprep.subr.bf16.mxu0 0
        %5096 = vmatpush1.bf16.msra.mxu0 0
        %5097 = vmatprep.subr.bf16.mxu0 0
        %5098 = vmatpush1.bf16.msra.mxu0 0
        %5099 = vmatprep.subr.bf16.mxu0 0
        %5100 = vmatpush1.bf16.msra.mxu0 0
        %5101 = vmatprep.subr.bf16.mxu0 0
        %5102 = vmatpush1.bf16.msra.mxu0 0
        %5103 = vmatprep.subr.bf16.mxu0 0
        %5104 = vmatpush1.bf16.msra.mxu0 0
        %5105 = vmatprep.subr.bf16.mxu0 0
        %5106 = vmatpush1.bf16.msra.mxu0 0
        %5107 = vmatprep.subr.bf16.mxu0 0
        %5108 = vmatpush1.bf16.msra.mxu0 0
        %5109 = vmatprep.subr.bf16.mxu0 0
        %5110 = vmatpush1.bf16.msra.mxu0 0
        %5111 = vmatprep.subr.bf16.mxu0 0
        %5112 = vmatpush1.bf16.msra.mxu0 0
        %5113 = vmatprep.subr.bf16.mxu0 0
        %5114 = vmatpush1.bf16.msra.mxu0 0
        %5115 = vmatprep.subr.bf16.mxu0 0
        %5116 = vmatpush1.bf16.msra.mxu0 0
        %5117 = vmatprep.subr.bf16.mxu0 0
        %5118 = vmatpush1.bf16.msra.mxu0 0
        %5119 = vmatprep.mubr.bf16.mxu0 0
        %5120 = vmatmul.mubr.bf16.gmra.mrb[0].mxu0 %v5085
        %v5121 = vpop.f32.mrb[0].mxu0
        %v5122 = vadd.f32 0.0, %v5121
        %v5123 = vpop.f32.mrb[0].mxu0
        %v5124 = vpop.f32.mrb[0].mxu0
        %v5125 = vpop.f32.mrb[0].mxu0
        %5126 = vdwg.mxu0
        %5129 = vrot.lane.b32.xlu0 %v4643, 8
        %v5130 = vpop.permute.xlu0 %5129
        %5131 = vrot.lane.b32.xlu0 %v4690, 8
        %v5132 = vpop.permute.xlu0 %5131
        %5137 = vrot.lane.b32.xlu0 %v4860, 16
        %v5138 = vpop.permute.xlu0 %5137
        %5139 = vrot.lane.b32.xlu0 %v4906, 16
        %v5140 = vpop.permute.xlu0 %5139
        %5145 = vrot.lane.b32.xlu0 %v5076, 24
        %v5146 = vpop.permute.xlu0 %5145
        %5147 = vrot.lane.b32.xlu0 %v5122, 24
        %v5148 = vpop.permute.xlu0 %5147
        %v5151 = vsel %vm617, %v4425, %v5130
        %v5152 = vsel %vm617, %v4468, %v5132
        %v5153 = vsel %vm712, %v5151, %v5138
        %v5154 = vsel %vm712, %v5152, %v5140
        %v5155 = vsel %vm1637, %v5153, %v5146
        %v5156 = vsel %vm1637, %v5154, %v5148
        %v5157 = vpack.c.bf16 %v5156, %v5155
        %v5158 = vlaneseq
        %v5159 = vshrl.u32 %v5158, 7
        %v5160 = vsub.s32 0, %v5159
        %v5161 = vrot.slane %v4264, %v5160
        %v5166 = vunpack.c.l.b16 %v4260
        %v5167 = vunpack.c.l.b16 %v4261
        %v5168 = vunpack.c.l.b16 %v4262
        %v5169 = vunpack.c.l.b16 %v4263
        %v5170 = vpack.c.b16 %v5167, %v5166
        %v5171 = vpack.c.b16 %v5169, %v5168
        %v5175 = vsel %vm320, %v5157, 0
        %5177 = vmatprep.subr.bf16.mxu0 0
        %5178 = vmatpush1.bf16.msra.mxu0 %v5170
        %5179 = vmatprep.subr.bf16.mxu0 0
        %5180 = vmatpush1.bf16.msra.mxu0 %v5171
        %5181 = vmatprep.subr.bf16.mxu0 0
        %5182 = vmatpush1.bf16.msra.mxu0 0
        %5183 = vmatprep.subr.bf16.mxu0 0
        %5184 = vmatpush1.bf16.msra.mxu0 0
        %5185 = vmatprep.subr.bf16.mxu0 0
        %5186 = vmatpush1.bf16.msra.mxu0 0
        %5187 = vmatprep.subr.bf16.mxu0 0
        %5188 = vmatpush1.bf16.msra.mxu0 0
        %5189 = vmatprep.subr.bf16.mxu0 0
        %5190 = vmatpush1.bf16.msra.mxu0 0
        %5191 = vmatprep.subr.bf16.mxu0 0
        %5192 = vmatpush1.bf16.msra.mxu0 0
        %5193 = vmatprep.subr.bf16.mxu0 0
        %5194 = vmatpush1.bf16.msra.mxu0 0
        %5195 = vmatprep.subr.bf16.mxu0 0
        %5196 = vmatpush1.bf16.msra.mxu0 0
        %5197 = vmatprep.subr.bf16.mxu0 0
        %5198 = vmatpush1.bf16.msra.mxu0 0
        %5199 = vmatprep.subr.bf16.mxu0 0
        %5200 = vmatpush1.bf16.msra.mxu0 0
        %5201 = vmatprep.subr.bf16.mxu0 0
        %5202 = vmatpush1.bf16.msra.mxu0 0
        %5203 = vmatprep.subr.bf16.mxu0 0
        %5204 = vmatpush1.bf16.msra.mxu0 0
        %5205 = vmatprep.subr.bf16.mxu0 0
        %5206 = vmatpush1.bf16.msra.mxu0 0
        %5207 = vmatprep.subr.bf16.mxu0 0
        %5208 = vmatpush1.bf16.msra.mxu0 0
        %5209 = vmatprep.mubr.bf16.mxu0 0
        %5210 = vmatmul.mubr.bf16.gmra.mrb[0].mxu0 %v5175
        %v5211 = vpop.f32.mrb[0].mxu0
        %v5212 = vadd.f32 %v5161, %v5211
        %v5213 = vpop.f32.mrb[0].mxu0
        %v5214 = vpop.f32.mrb[0].mxu0
        %v5215 = vadd.f32 %v5161, %v5214
        %v5216 = vpop.f32.mrb[0].mxu0
        %5217 = vdwg.mxu0
        %v5218 = vadd.f32 %v4152, %v5212
        %v5219 = vadd.f32 %v4153, %v5215
        %v5220 = vld [vmem:[%s2 + $0x22] sm:$0x1]
        %v5221 = vld [vmem:[%s2 + $0x23] sm:$0x1]
        %v5222 = vsel %vm320, %v5218, 0.0
        %5223 = vadd.xlane.f32.xlu0 %v5222
        %v5224 = vpop.xlane.xlu0 %5223
        %v5225 = vsel %vm320, %v5219, 0.0
        %5226 = vadd.xlane.f32.xlu0 %v5225
        %v5227 = vpop.xlane.xlu0 %5226
        %v5228 = vmul.f32 %v5224, %v333
        %v5229 = vmul.f32 %v5227, %v333
        %v5230 = vsub.f32 %v5218, %v5228
        %v5231 = vsub.f32 %v5219, %v5229
        %v5232 = vmul.f32 %v5230, %v5230
        %v5233 = vmul.f32 %v5231, %v5231
        %v5234 = vsel %vm320, %v5232, 0.0
        %5235 = vadd.xlane.f32.xlu0 %v5234
        %v5236 = vpop.xlane.xlu0 %5235
        %v5237 = vsel %vm320, %v5233, 0.0
        %5238 = vadd.xlane.f32.xlu0 %v5237
        %v5239 = vpop.xlane.xlu0 %5238
        %v5240 = vmul.f32 %v5236, %v333
        %v5241 = vmul.f32 %v5239, %v333
        %v5242 = vadd.f32 %v5240, 1e-05
        %v5243 = vadd.f32 %v5241, 1e-05
        %v5244 = vrsqrt.pop %v5242
        %v5245 = vrsqrt.pop %v5243
        %v5246 = vmul.f32 %v5230, %v5244
        %v5247 = vmul.f32 %v5231, %v5245
        %v5248 = vlaneseq
        %v5249 = vshrl.u32 %v5248, 7
        %v5250 = vsub.s32 0, %v5249
        %v5251 = vrot.slane %v5220, %v5250
        %v5252 = vmul.f32 %v5246, %v5251
        %v5253 = vmul.f32 %v5247, %v5251
        %v5254 = vlaneseq
        %v5255 = vshrl.u32 %v5254, 7
        %v5256 = vsub.s32 0, %v5255
        %v5257 = vrot.slane %v5221, %v5256
        %v5258 = vadd.f32 %v5252, %v5257
        %v5259 = vadd.f32 %v5253, %v5257
        %v5260 = vld [vmem:[%s1 + $0x1c8] sm:$0xf]
        %v5261 = vld [vmem:[%s1 + $0x1cc] sm:$0xf]
        %v5262 = vld [vmem:[%s1 + $0x1d0] sm:$0xf]
        %v5263 = vld [vmem:[%s1 + $0x1d4] sm:$0xf]
        %v5264 = vpack.c.bf16 %v5259, %v5258
        %v5265 = vld [vmem:[%s2 + $0x24] sm:$0x1]
        %v5266 = vlaneseq
        %v5267 = vshrl.u32 %v5266, 7
        %v5268 = vsub.s32 0, %v5267
        %v5269 = vrot.slane %v5265, %v5268
        %v5274 = vunpack.c.l.b16 %v5260
        %v5275 = vunpack.c.l.b16 %v5261
        %v5276 = vunpack.c.l.b16 %v5262
        %v5277 = vunpack.c.l.b16 %v5263
        %v5278 = vpack.c.b16 %v5275, %v5274
        %v5279 = vpack.c.b16 %v5277, %v5276
        %v5283 = vsel %vm320, %v5264, 0
        %5285 = vmatprep.subr.bf16.mxu0 0
        %5286 = vmatpush1.bf16.msra.mxu0 %v5278
        %5287 = vmatprep.subr.bf16.mxu0 0
        %5288 = vmatpush1.bf16.msra.mxu0 %v5279
        %5289 = vmatprep.subr.bf16.mxu0 0
        %5290 = vmatpush1.bf16.msra.mxu0 0
        %5291 = vmatprep.subr.bf16.mxu0 0
        %5292 = vmatpush1.bf16.msra.mxu0 0
        %5293 = vmatprep.subr.bf16.mxu0 0
        %5294 = vmatpush1.bf16.msra.mxu0 0
        %5295 = vmatprep.subr.bf16.mxu0 0
        %5296 = vmatpush1.bf16.msra.mxu0 0
        %5297 = vmatprep.subr.bf16.mxu0 0
        %5298 = vmatpush1.bf16.msra.mxu0 0
        %5299 = vmatprep.subr.bf16.mxu0 0
        %5300 = vmatpush1.bf16.msra.mxu0 0
        %5301 = vmatprep.subr.bf16.mxu0 0
        %5302 = vmatpush1.bf16.msra.mxu0 0
        %5303 = vmatprep.subr.bf16.mxu0 0
        %5304 = vmatpush1.bf16.msra.mxu0 0
        %5305 = vmatprep.subr.bf16.mxu0 0
        %5306 = vmatpush1.bf16.msra.mxu0 0
        %5307 = vmatprep.subr.bf16.mxu0 0
        %5308 = vmatpush1.bf16.msra.mxu0 0
        %5309 = vmatprep.subr.bf16.mxu0 0
        %5310 = vmatpush1.bf16.msra.mxu0 0
        %5311 = vmatprep.subr.bf16.mxu0 0
        %5312 = vmatpush1.bf16.msra.mxu0 0
        %5313 = vmatprep.subr.bf16.mxu0 0
        %5314 = vmatpush1.bf16.msra.mxu0 0
        %5315 = vmatprep.subr.bf16.mxu0 0
        %5316 = vmatpush1.bf16.msra.mxu0 0
        %5317 = vmatprep.mubr.bf16.mxu0 0
        %5318 = vmatmul.mubr.bf16.gmra.mrb[0].mxu0 %v5283
        %v5319 = vpop.f32.mrb[0].mxu0
        %v5320 = vadd.f32 %v5269, %v5319
        %v5321 = vpop.f32.mrb[0].mxu0
        %v5322 = vpop.f32.mrb[0].mxu0
        %v5323 = vadd.f32 %v5269, %v5322
        %v5324 = vpop.f32.mrb[0].mxu0
        %5325 = vdwg.mxu0
        %v5326 = vmul.f32 %v5320, 0.5
        %v5327 = vmul.f32 %v5323, 0.5
        %v5328 = vmul.f32 %v5320, 0.044715
        %v5329 = vmul.f32 %v5323, 0.044715
        %v5330 = vmul.f32 %v5328, %v5320
        %v5331 = vmul.f32 %v5329, %v5323
        %v5332 = vmul.f32 %v5330, %v5320
        %v5333 = vmul.f32 %v5331, %v5323
        %v5334 = vadd.f32 %v5320, %v5332
        %v5335 = vadd.f32 %v5323, %v5333
        %v5336 = vmul.f32 %v5334, 0.7978846
        %v5337 = vmul.f32 %v5335, 0.7978846
        %v5338 = vtanh.pop %v5336
        %v5339 = vtanh.pop %v5337
        %v5340 = vadd.f32 %v5338, 1.0
        %v5341 = vadd.f32 %v5339, 1.0
        %v5342 = vmul.f32 %v5326, %v5340
        %v5343 = vmul.f32 %v5327, %v5341
        %v5344 = vld [vmem:[%s1 + $0x1d8] sm:$0xf]
        %v5345 = vld [vmem:[%s1 + $0x1dc] sm:$0xf]
        %v5346 = vld [vmem:[%s1 + $0x1e0] sm:$0xf]
        %v5347 = vld [vmem:[%s1 + $0x1e4] sm:$0xf]
        %v5348 = vld [vmem:[%s1 + $0x1e8] sm:$0xf]
        %v5349 = vld [vmem:[%s1 + $0x1ec] sm:$0xf]
        %v5350 = vld [vmem:[%s1 + $0x1f0] sm:$0xf]
        %v5351 = vld [vmem:[%s1 + $0x1f4] sm:$0xf]
        %v5352 = vld [vmem:[%s1 + $0x1f8] sm:$0xf]
        %v5353 = vld [vmem:[%s1 + $0x1fc] sm:$0xf]
        %v5354 = vld [vmem:[%s1 + $0x200] sm:$0xf]
        %v5355 = vld [vmem:[%s1 + $0x204] sm:$0xf]
        %v5356 = vld [vmem:[%s1 + $0x208] sm:$0xf]
        %v5357 = vld [vmem:[%s1 + $0x20c] sm:$0xf]
        %v5358 = vld [vmem:[%s1 + $0x210] sm:$0xf]
        %v5359 = vld [vmem:[%s1 + $0x214] sm:$0xf]
        %v5360 = vpack.c.bf16 %v5343, %v5342
        %v5361 = vld [vmem:[%s2 + $0x25] sm:$0x1]
        %v5362 = vlaneseq
        %v5363 = vshrl.u32 %v5362, 7
        %v5364 = vsub.s32 0, %v5363
        %v5365 = vrot.slane %v5361, %v5364
        %v5382 = vunpack.c.l.b16 %v5344
        %v5383 = vunpack.c.l.b16 %v5345
        %v5384 = vunpack.c.l.b16 %v5346
        %v5385 = vunpack.c.l.b16 %v5347
        %v5386 = vunpack.c.l.b16 %v5348
        %v5387 = vunpack.c.l.b16 %v5349
        %v5388 = vunpack.c.l.b16 %v5350
        %v5389 = vunpack.c.l.b16 %v5351
        %v5390 = vunpack.c.l.b16 %v5352
        %v5391 = vunpack.c.l.b16 %v5353
        %v5392 = vunpack.c.l.b16 %v5354
        %v5393 = vunpack.c.l.b16 %v5355
        %v5394 = vunpack.c.l.b16 %v5356
        %v5395 = vunpack.c.l.b16 %v5357
        %v5396 = vunpack.c.l.b16 %v5358
        %v5397 = vunpack.c.l.b16 %v5359
        %v5398 = vpack.c.b16 %v5383, %v5382
        %v5399 = vpack.c.b16 %v5385, %v5384
        %v5400 = vpack.c.b16 %v5387, %v5386
        %v5401 = vpack.c.b16 %v5389, %v5388
        %v5402 = vpack.c.b16 %v5391, %v5390
        %v5403 = vpack.c.b16 %v5393, %v5392
        %v5404 = vpack.c.b16 %v5395, %v5394
        %v5405 = vpack.c.b16 %v5397, %v5396
        %5414 = vmatprep.subr.bf16.mxu0 0
        %5415 = vmatpush1.bf16.msra.mxu0 %v5398
        %5416 = vmatprep.subr.bf16.mxu0 0
        %5417 = vmatpush1.bf16.msra.mxu0 %v5399
        %5418 = vmatprep.subr.bf16.mxu0 0
        %5419 = vmatpush1.bf16.msra.mxu0 %v5400
        %5420 = vmatprep.subr.bf16.mxu0 0
        %5421 = vmatpush1.bf16.msra.mxu0 %v5401
        %5422 = vmatprep.subr.bf16.mxu0 0
        %5423 = vmatpush1.bf16.msra.mxu0 %v5402
        %5424 = vmatprep.subr.bf16.mxu0 0
        %5425 = vmatpush1.bf16.msra.mxu0 %v5403
        %5426 = vmatprep.subr.bf16.mxu0 0
        %5427 = vmatpush1.bf16.msra.mxu0 %v5404
        %5428 = vmatprep.subr.bf16.mxu0 0
        %5429 = vmatpush1.bf16.msra.mxu0 %v5405
        %5430 = vmatprep.subr.bf16.mxu0 0
        %5431 = vmatpush1.bf16.msra.mxu0 0
        %5432 = vmatprep.subr.bf16.mxu0 0
        %5433 = vmatpush1.bf16.msra.mxu0 0
        %5434 = vmatprep.subr.bf16.mxu0 0
        %5435 = vmatpush1.bf16.msra.mxu0 0
        %5436 = vmatprep.subr.bf16.mxu0 0
        %5437 = vmatpush1.bf16.msra.mxu0 0
        %5438 = vmatprep.subr.bf16.mxu0 0
        %5439 = vmatpush1.bf16.msra.mxu0 0
        %5440 = vmatprep.subr.bf16.mxu0 0
        %5441 = vmatpush1.bf16.msra.mxu0 0
        %5442 = vmatprep.subr.bf16.mxu0 0
        %5443 = vmatpush1.bf16.msra.mxu0 0
        %5444 = vmatprep.subr.bf16.mxu0 0
        %5445 = vmatpush1.bf16.msra.mxu0 0
        %5446 = vmatprep.mubr.bf16.mxu0 0
        %5447 = vmatmul.mubr.bf16.gmra.mrb[0].mxu0 %v5360
        %v5448 = vpop.f32.mrb[0].mxu0
        %v5449 = vadd.f32 %v5365, %v5448
        %v5450 = vpop.f32.mrb[0].mxu0
        %v5451 = vpop.f32.mrb[0].mxu0
        %v5452 = vadd.f32 %v5365, %v5451
        %v5453 = vpop.f32.mrb[0].mxu0
        %5454 = vdwg.mxu0
        %v5455 = vadd.f32 %v5218, %v5449
        %v5456 = vadd.f32 %v5219, %v5452
        %v5457 = vadd.f32 %v3815, %v3966
        %v5458 = vld [vmem:[%s2 + $0x1c] sm:$0x1]
        %v5459 = vld [vmem:[%s2 + $0x1d] sm:$0x1]
        %vm5460 = vcmask 254976
        %v5461 = vsel %vm5460, %v5457, 0.0
        %5462 = vadd.xlane.f32.xlu0 %v5461
        %v5463 = vpop.xlane.xlu0 %5462
        %v5464 = vmul.f32 %v5463, %v333
        %v5465 = vsub.f32 %v5457, %v5464
        %v5466 = vmul.f32 %v5465, %v5465
        %v5467 = vsel %vm5460, %v5466, 0.0
        %5468 = vadd.xlane.f32.xlu0 %v5467
        %v5469 = vpop.xlane.xlu0 %5468
        %v5470 = vmul.f32 %v5469, %v333
        %v5471 = vadd.f32 %v5470, 1e-05
        %v5472 = vrsqrt.pop %v5471
        %v5473 = vmul.f32 %v5465, %v5472
        %v5474 = vlaneseq
        %v5475 = vshrl.u32 %v5474, 7
        %v5476 = vsub.s32 0, %v5475
        %v5477 = vrot.slane %v5458, %v5476
        %v5478 = vmul.f32 %v5473, %v5477
        %v5479 = vlaneseq
        %v5480 = vshrl.u32 %v5479, 7
        %v5481 = vsub.s32 0, %v5480
        %v5482 = vrot.slane %v5459, %v5481
        %v5483 = vadd.f32 %v5478, %v5482
        %v5484 = vld [vmem:[%s1 + $0x188] sm:$0xf]
        %v5485 = vld [vmem:[%s1 + $0x18c] sm:$0xf]
        %v5486 = vld [vmem:[%s1 + $0x190] sm:$0xf]
        %v5487 = vld [vmem:[%s1 + $0x194] sm:$0xf]
        %v5488 = vpack.c.bf16 %v5483, %v5483
        %v5489 = vld [vmem:[%s2 + $0x1e] sm:$0x1]
        %v5490 = vlaneseq
        %v5491 = vshrl.u32 %v5490, 7
        %v5492 = vsub.s32 0, %v5491
        %v5493 = vrot.slane %v5489, %v5492
        %v5498 = vunpack.c.l.b16 %v5484
        %v5499 = vunpack.c.l.b16 %v5485
        %v5500 = vunpack.c.l.b16 %v5486
        %v5501 = vunpack.c.l.b16 %v5487
        %v5502 = vpack.c.b16 %v5499, %v5498
        %v5503 = vpack.c.b16 %v5501, %v5500
        %v5507 = vsel %vm320, %v5488, 0
        %5509 = vmatprep.subr.bf16.mxu0 0
        %5510 = vmatpush1.bf16.msra.mxu0 %v5502
        %5511 = vmatprep.subr.bf16.mxu0 0
        %5512 = vmatpush1.bf16.msra.mxu0 %v5503
        %5513 = vmatprep.subr.bf16.mxu0 0
        %5514 = vmatpush1.bf16.msra.mxu0 0
        %5515 = vmatprep.subr.bf16.mxu0 0
        %5516 = vmatpush1.bf16.msra.mxu0 0
        %5517 = vmatprep.subr.bf16.mxu0 0
        %5518 = vmatpush1.bf16.msra.mxu0 0
        %5519 = vmatprep.subr.bf16.mxu0 0
        %5520 = vmatpush1.bf16.msra.mxu0 0
        %5521 = vmatprep.subr.bf16.mxu0 0
        %5522 = vmatpush1.bf16.msra.mxu0 0
        %5523 = vmatprep.subr.bf16.mxu0 0
        %5524 = vmatpush1.bf16.msra.mxu0 0
        %5525 = vmatprep.subr.bf16.mxu0 0
        %5526 = vmatpush1.bf16.msra.mxu0 0
        %5527 = vmatprep.subr.bf16.mxu0 0
        %5528 = vmatpush1.bf16.msra.mxu0 0
        %5529 = vmatprep.subr.bf16.mxu0 0
        %5530 = vmatpush1.bf16.msra.mxu0 0
        %5531 = vmatprep.subr.bf16.mxu0 0
        %5532 = vmatpush1.bf16.msra.mxu0 0
        %5533 = vmatprep.subr.bf16.mxu0 0
        %5534 = vmatpush1.bf16.msra.mxu0 0
        %5535 = vmatprep.subr.bf16.mxu0 0
        %5536 = vmatpush1.bf16.msra.mxu0 0
        %5537 = vmatprep.subr.bf16.mxu0 0
        %5538 = vmatpush1.bf16.msra.mxu0 0
        %5539 = vmatprep.subr.bf16.mxu0 0
        %5540 = vmatpush1.bf16.msra.mxu0 0
        %5541 = vmatprep.mubr.bf16.mxu0 0
        %5542 = vmatmul.mubr.bf16.gmra.mrb[0].mxu0 %v5507
        %v5543 = vpop.f32.mrb[0].mxu0
        %v5544 = vadd.f32 %v5493, %v5543
        %v5545 = vpop.f32.mrb[0].mxu0
        %v5546 = vpop.f32.mrb[0].mxu0
        %v5547 = vpop.f32.mrb[0].mxu0
        %5548 = vdwg.mxu0
        %v5549 = vld [vmem:[%s1 + $0x1b8] sm:$0xf]
        %v5550 = vld [vmem:[%s1 + $0x1bc] sm:$0xf]
        %v5551 = vld [vmem:[%s1 + $0x1c0] sm:$0xf]
        %v5552 = vld [vmem:[%s1 + $0x1c4] sm:$0xf]
        %v5553 = vld [vmem:[%s2 + $0x21] sm:$0x1]
        %v5556 = vunpack.c.l.s4 1966171168
        %v5557 = vunpack.c.0.s8 %v5556
        %v5558 = vlaneseq
        %v5559 = vshrl.u32 %v5558, 7
        %v5560 = vsub.s32 %v5557, %v5559
        %v5561 = vrot.slane %v5544, %v5560
        %v5562 = vcombine.high %v5561, %v5561
        %v5564 = vunpack.c.l.s4 1966171168
        %v5565 = vunpack.c.0.s8 %v5564
        %v5566 = vlaneseq
        %v5567 = vshrl.u32 %v5566, 7
        %v5568 = vsub.s32 %v5565, %v5567
        %v5569 = vrot.slane %v5561, %v5568
        %v5571 = vunpack.c.l.s4 1966171168
        %v5572 = vunpack.c.0.s8 %v5571
        %v5573 = vlaneseq
        %v5574 = vshrl.u32 %v5573, 7
        %v5575 = vsub.s32 %v5572, %v5574
        %v5576 = vrot.slane %v5562, %v5575
        %v5577 = vlaneseq
        %v5578 = vshrl.u32 %v5577, 7
        %v5579 = vsub.s32 0, %v5578
        %v5580 = vrot.slane %v5569, %v5579
        %v5581 = vlaneseq
        %v5582 = vshrl.u32 %v5581, 7
        %v5583 = vsub.s32 0, %v5582
        %v5584 = vrot.slane %v5576, %v5583
        %v5587 = vmul.f32 %v5580, %v4035
        %v5588 = vmul.f32 %v5580, %v4038
        %v5589 = vmul.f32 %v5584, %v4043
        %v5590 = vmul.f32 %v5584, %v4046
        %v5591 = vsel %vm617, %v5587, 0.0
        %5592 = vadd.xlane.f32.xlu0 %v5591
        %v5593 = vpop.xlane.xlu0 %5592
        %v5594 = vsel %vm617, %v5588, 0.0
        %5595 = vadd.xlane.f32.xlu0 %v5594
        %v5596 = vpop.xlane.xlu0 %5595
        %v5597 = vsel %vm617, %v5589, 0.0
        %5598 = vadd.xlane.f32.xlu0 %v5597
        %v5599 = vpop.xlane.xlu0 %5598
        %v5600 = vsel %vm617, %v5590, 0.0
        %5601 = vadd.xlane.f32.xlu0 %v5600
        %v5602 = vpop.xlane.xlu0 %5601
        %v5607 = vlaneseq
        %v5608 = vand.u32 %v5607, 127
        %v5609 = vlaneseq
        %v5610 = vshrl.u32 %v5609, 7
        %v5611 = vsub.s32 %v5608, %v5610
        %v5612 = vrot.slane %v5593, %v5611
        %v5613 = vadd.s32 %v5608, 4294967288
        %v5614 = vlaneseq
        %v5615 = vshrl.u32 %v5614, 7
        %v5616 = vsub.s32 %v5613, %v5615
        %v5617 = vrot.slane %v5596, %v5616
        %vm5618 = vcmask 130112
        %v5619 = vsel %vm5618, %v5617, %v5612
        %v5620 = vlaneseq
        %v5621 = vshrl.u32 %v5620, 7
        %v5622 = vsub.s32 %v5608, %v5621
        %v5623 = vrot.slane %v5599, %v5622
        %v5624 = vlaneseq
        %v5625 = vshrl.u32 %v5624, 7
        %v5626 = vsub.s32 %v5613, %v5625
        %v5627 = vrot.slane %v5602, %v5626
        %v5628 = vsel %vm5618, %v5627, %v5623
        %vm5629 = vcmask 1041409
        %v5630 = vsel %vm5629, %v5628, %v5619
        %vm5632 = vcmask 123904
        %v5633 = vsel %vm5632, %v5630, -inf
        %5634 = vmax.xlane.f32.xlu0 %v5633
        %v5635 = vpop.xlane.xlu0 %5634
        %v5637 = vlaneseq
        %v5638 = vshrl.u32 %v5637, 7
        %v5639 = vsub.s32 0, %v5638
        %v5640 = vrot.slane %v5635, %v5639
        %v5641 = vlaneseq
        %v5642 = vshrl.u32 %v5641, 7
        %v5643 = vsub.s32 1, %v5642
        %v5644 = vrot.slane %v5635, %v5643
        %v5647 = vsub.f32 %v5593, %v5640
        %v5648 = vsub.f32 %v5596, %v5640
        %v5649 = vsub.f32 %v5599, %v5644
        %v5650 = vsub.f32 %v5602, %v5644
        %v5651 = vmul.f32 %v5647, 1.442695
        %v5652 = vpow.pop %v5651
        %v5653 = vmul.f32 %v5648, 1.442695
        %v5654 = vpow.pop %v5653
        %v5655 = vmul.f32 %v5649, 1.442695
        %v5656 = vpow.pop %v5655
        %v5657 = vmul.f32 %v5650, 1.442695
        %v5658 = vpow.pop %v5657
        %5663 = vset.pattern.permute.xlu0 0
        %5664 = vperm.xlu0 %5663, %v5652
        %v5665 = vpop.permute.xlu0 %5664
        %5666 = vset.pattern.permute.xlu0 0
        %5667 = vperm.xlu0 %5666, %v5654
        %v5668 = vpop.permute.xlu0 %5667
        %5669 = vset.pattern.permute.xlu0 0
        %5670 = vperm.xlu0 %5669, %v5656
        %v5671 = vpop.permute.xlu0 %5670
        %5672 = vset.pattern.permute.xlu0 0
        %5673 = vperm.xlu0 %5672, %v5658
        %v5674 = vpop.permute.xlu0 %5673
        %v5675 = vlaneseq
        %v5676 = vshrl.u32 %v5675, 7
        %v5677 = vsub.s32 %v5608, %v5676
        %v5678 = vrot.slane %v5665, %v5677
        %v5679 = vlaneseq
        %v5680 = vshrl.u32 %v5679, 7
        %v5681 = vsub.s32 %v5613, %v5680
        %v5682 = vrot.slane %v5668, %v5681
        %v5683 = vsel %vm5618, %v5682, %v5678
        %v5684 = vlaneseq
        %v5685 = vshrl.u32 %v5684, 7
        %v5686 = vsub.s32 %v5608, %v5685
        %v5687 = vrot.slane %v5671, %v5686
        %v5688 = vlaneseq
        %v5689 = vshrl.u32 %v5688, 7
        %v5690 = vsub.s32 %v5613, %v5689
        %v5691 = vrot.slane %v5674, %v5690
        %v5692 = vsel %vm5618, %v5691, %v5687
        %v5693 = vsel %vm5629, %v5692, %v5683
        %v5695 = vsel %vm5632, %v5693, 0.0
        %5696 = vadd.xlane.f32.xlu0 %v5695
        %v5697 = vpop.xlane.xlu0 %5696
        %v5698 = vrcp.pop %v5697
        %v5700 = vlaneseq
        %v5701 = vshrl.u32 %v5700, 7
        %v5702 = vsub.s32 0, %v5701
        %v5703 = vrot.slane %v5698, %v5702
        %v5704 = vlaneseq
        %v5705 = vshrl.u32 %v5704, 7
        %v5706 = vsub.s32 1, %v5705
        %v5707 = vrot.slane %v5698, %v5706
        %v5710 = vmul.f32 %v5652, %v5703
        %v5711 = vmul.f32 %v5654, %v5703
        %v5712 = vmul.f32 %v5656, %v5707
        %v5713 = vmul.f32 %v5658, %v5707
        %5715 = vset.pattern.permute.xlu0 0
        %5716 = vperm.xlu0 %5715, %v5710
        %v5717 = vpop.permute.xlu0 %5716
        %5720 = vset.pattern.permute.xlu0 0
        %5721 = vperm.xlu0 %5720, %v5711
        %v5722 = vpop.permute.xlu0 %5721
        %5725 = vset.pattern.permute.xlu0 0
        %5726 = vperm.xlu0 %5725, %v5712
        %v5727 = vpop.permute.xlu0 %5726
        %5730 = vset.pattern.permute.xlu0 0
        %5731 = vperm.xlu0 %5730, %v5713
        %v5732 = vpop.permute.xlu0 %5731
        %v5734 = vmul.f32 %v5717, %v4105
        %v5735 = vmul.f32 %v5722, %v4108
        %v5736 = vmul.f32 %v5727, %v4113
        %v5737 = vmul.f32 %v5732, %v4116
        %v5738 = vsel %vm617, %v5734, 0.0
        %v5739 = vsel %vm617, %v5735, 0.0
        %v5740 = vadd.f32 %v5738, %v5739
        %v5741 = vrot.slane %v5740, 4
        %v5742 = vadd.f32 %v5740, %v5741
        %v5743 = vrot.slane %v5742, 2
        %v5744 = vadd.f32 %v5742, %v5743
        %v5745 = vrot.slane %v5744, 1
        %v5746 = vadd.f32 %v5744, %v5745
        %v5747 = vsel %vm617, %v5736, 0.0
        %v5748 = vsel %vm617, %v5737, 0.0
        %v5749 = vadd.f32 %v5747, %v5748
        %v5750 = vrot.slane %v5749, 4
        %v5751 = vadd.f32 %v5749, %v5750
        %v5752 = vrot.slane %v5751, 2
        %v5753 = vadd.f32 %v5751, %v5752
        %v5754 = vrot.slane %v5753, 1
        %v5755 = vadd.f32 %v5753, %v5754
        %5760 = vrot.lane.b32.xlu0 %v5587, 120
        %v5761 = vpop.permute.xlu0 %5760
        %5762 = vrot.lane.b32.xlu0 %v5588, 120
        %v5763 = vpop.permute.xlu0 %5762
        %5764 = vrot.lane.b32.xlu0 %v5589, 120
        %v5765 = vpop.permute.xlu0 %5764
        %5766 = vrot.lane.b32.xlu0 %v5590, 120
        %v5767 = vpop.permute.xlu0 %5766
        %v5772 = vsel %vm617, %v5761, 0.0
        %5773 = vadd.xlane.f32.xlu0 %v5772
        %v5774 = vpop.xlane.xlu0 %5773
        %v5775 = vsel %vm617, %v5763, 0.0
        %5776 = vadd.xlane.f32.xlu0 %v5775
        %v5777 = vpop.xlane.xlu0 %5776
        %v5778 = vsel %vm617, %v5765, 0.0
        %5779 = vadd.xlane.f32.xlu0 %v5778
        %v5780 = vpop.xlane.xlu0 %5779
        %v5781 = vsel %vm617, %v5767, 0.0
        %5782 = vadd.xlane.f32.xlu0 %v5781
        %v5783 = vpop.xlane.xlu0 %5782
        %v5788 = vlaneseq
        %v5789 = vshrl.u32 %v5788, 7
        %v5790 = vsub.s32 %v5608, %v5789
        %v5791 = vrot.slane %v5774, %v5790
        %v5792 = vlaneseq
        %v5793 = vshrl.u32 %v5792, 7
        %v5794 = vsub.s32 %v5613, %v5793
        %v5795 = vrot.slane %v5777, %v5794
        %v5796 = vsel %vm5618, %v5795, %v5791
        %v5797 = vlaneseq
        %v5798 = vshrl.u32 %v5797, 7
        %v5799 = vsub.s32 %v5608, %v5798
        %v5800 = vrot.slane %v5780, %v5799
        %v5801 = vlaneseq
        %v5802 = vshrl.u32 %v5801, 7
        %v5803 = vsub.s32 %v5613, %v5802
        %v5804 = vrot.slane %v5783, %v5803
        %v5805 = vsel %vm5618, %v5804, %v5800
        %v5806 = vsel %vm5629, %v5805, %v5796
        %v5808 = vsel %vm5632, %v5806, -inf
        %5809 = vmax.xlane.f32.xlu0 %v5808
        %v5810 = vpop.xlane.xlu0 %5809
        %v5812 = vlaneseq
        %v5813 = vshrl.u32 %v5812, 7
        %v5814 = vsub.s32 0, %v5813
        %v5815 = vrot.slane %v5810, %v5814
        %v5816 = vlaneseq
        %v5817 = vshrl.u32 %v5816, 7
        %v5818 = vsub.s32 1, %v5817
        %v5819 = vrot.slane %v5810, %v5818
        %v5822 = vsub.f32 %v5774, %v5815
        %v5823 = vsub.f32 %v5777, %v5815
        %v5824 = vsub.f32 %v5780, %v5819
        %v5825 = vsub.f32 %v5783, %v5819
        %v5826 = vmul.f32 %v5822, 1.442695
        %v5827 = vpow.pop %v5826
        %v5828 = vmul.f32 %v5823, 1.442695
        %v5829 = vpow.pop %v5828
        %v5830 = vmul.f32 %v5824, 1.442695
        %v5831 = vpow.pop %v5830
        %v5832 = vmul.f32 %v5825, 1.442695
        %v5833 = vpow.pop %v5832
        %5838 = vset.pattern.permute.xlu0 0
        %5839 = vperm.xlu0 %5838, %v5827
        %v5840 = vpop.permute.xlu0 %5839
        %5841 = vset.pattern.permute.xlu0 0
        %5842 = vperm.xlu0 %5841, %v5829
        %v5843 = vpop.permute.xlu0 %5842
        %5844 = vset.pattern.permute.xlu0 0
        %5845 = vperm.xlu0 %5844, %v5831
        %v5846 = vpop.permute.xlu0 %5845
        %5847 = vset.pattern.permute.xlu0 0
        %5848 = vperm.xlu0 %5847, %v5833
        %v5849 = vpop.permute.xlu0 %5848
        %v5850 = vlaneseq
        %v5851 = vshrl.u32 %v5850, 7
        %v5852 = vsub.s32 %v5608, %v5851
        %v5853 = vrot.slane %v5840, %v5852
        %v5854 = vlaneseq
        %v5855 = vshrl.u32 %v5854, 7
        %v5856 = vsub.s32 %v5613, %v5855
        %v5857 = vrot.slane %v5843, %v5856
        %v5858 = vsel %vm5618, %v5857, %v5853
        %v5859 = vlaneseq
        %v5860 = vshrl.u32 %v5859, 7
        %v5861 = vsub.s32 %v5608, %v5860
        %v5862 = vrot.slane %v5846, %v5861
        %v5863 = vlaneseq
        %v5864 = vshrl.u32 %v5863, 7
        %v5865 = vsub.s32 %v5613, %v5864
        %v5866 = vrot.slane %v5849, %v5865
        %v5867 = vsel %vm5618, %v5866, %v5862
        %v5868 = vsel %vm5629, %v5867, %v5858
        %v5870 = vsel %vm5632, %v5868, 0.0
        %5871 = vadd.xlane.f32.xlu0 %v5870
        %v5872 = vpop.xlane.xlu0 %5871
        %v5873 = vrcp.pop %v5872
        %v5875 = vlaneseq
        %v5876 = vshrl.u32 %v5875, 7
        %v5877 = vsub.s32 0, %v5876
        %v5878 = vrot.slane %v5873, %v5877
        %v5879 = vlaneseq
        %v5880 = vshrl.u32 %v5879, 7
        %v5881 = vsub.s32 1, %v5880
        %v5882 = vrot.slane %v5873, %v5881
        %v5885 = vmul.f32 %v5827, %v5878
        %v5886 = vmul.f32 %v5829, %v5878
        %v5887 = vmul.f32 %v5831, %v5882
        %v5888 = vmul.f32 %v5833, %v5882
        %5890 = vset.pattern.permute.xlu0 0
        %5891 = vperm.xlu0 %5890, %v5885
        %v5892 = vpop.permute.xlu0 %5891
        %5895 = vset.pattern.permute.xlu0 0
        %5896 = vperm.xlu0 %5895, %v5886
        %v5897 = vpop.permute.xlu0 %5896
        %5900 = vset.pattern.permute.xlu0 0
        %5901 = vperm.xlu0 %5900, %v5887
        %v5902 = vpop.permute.xlu0 %5901
        %5905 = vset.pattern.permute.xlu0 0
        %5906 = vperm.xlu0 %5905, %v5888
        %v5907 = vpop.permute.xlu0 %5906
        %v5909 = vmul.f32 %v5892, %v4105
        %v5910 = vmul.f32 %v5897, %v4108
        %v5911 = vmul.f32 %v5902, %v4113
        %v5912 = vmul.f32 %v5907, %v4116
        %v5913 = vsel %vm5618, %v5909, 0.0
        %v5914 = vsel %vm5618, %v5910, 0.0
        %v5915 = vadd.f32 %v5913, %v5914
        %v5916 = vrot.slane %v5915, 4
        %v5917 = vadd.f32 %v5915, %v5916
        %v5918 = vrot.slane %v5917, 2
        %v5919 = vadd.f32 %v5917, %v5918
        %v5920 = vrot.slane %v5919, 1
        %v5921 = vadd.f32 %v5919, %v5920
        %v5922 = vsel %vm5618, %v5911, 0.0
        %v5923 = vsel %vm5618, %v5912, 0.0
        %v5924 = vadd.f32 %v5922, %v5923
        %v5925 = vrot.slane %v5924, 4
        %v5926 = vadd.f32 %v5924, %v5925
        %v5927 = vrot.slane %v5926, 2
        %v5928 = vadd.f32 %v5926, %v5927
        %v5929 = vrot.slane %v5928, 1
        %v5930 = vadd.f32 %v5928, %v5929
        %5931 = vrot.lane.b32.xlu0 %v5587, 112
        %v5932 = vpop.permute.xlu0 %5931
        %5933 = vrot.lane.b32.xlu0 %v5588, 112
        %v5934 = vpop.permute.xlu0 %5933
        %5935 = vrot.lane.b32.xlu0 %v5589, 112
        %v5936 = vpop.permute.xlu0 %5935
        %5937 = vrot.lane.b32.xlu0 %v5590, 112
        %v5938 = vpop.permute.xlu0 %5937
        %v5943 = vsel %vm617, %v5932, 0.0
        %5944 = vadd.xlane.f32.xlu0 %v5943
        %v5945 = vpop.xlane.xlu0 %5944
        %v5946 = vsel %vm617, %v5934, 0.0
        %5947 = vadd.xlane.f32.xlu0 %v5946
        %v5948 = vpop.xlane.xlu0 %5947
        %v5949 = vsel %vm617, %v5936, 0.0
        %5950 = vadd.xlane.f32.xlu0 %v5949
        %v5951 = vpop.xlane.xlu0 %5950
        %v5952 = vsel %vm617, %v5938, 0.0
        %5953 = vadd.xlane.f32.xlu0 %v5952
        %v5954 = vpop.xlane.xlu0 %5953
        %v5959 = vlaneseq
        %v5960 = vshrl.u32 %v5959, 7
        %v5961 = vsub.s32 %v5608, %v5960
        %v5962 = vrot.slane %v5945, %v5961
        %v5963 = vlaneseq
        %v5964 = vshrl.u32 %v5963, 7
        %v5965 = vsub.s32 %v5613, %v5964
        %v5966 = vrot.slane %v5948, %v5965
        %v5967 = vsel %vm5618, %v5966, %v5962
        %v5968 = vlaneseq
        %v5969 = vshrl.u32 %v5968, 7
        %v5970 = vsub.s32 %v5608, %v5969
        %v5971 = vrot.slane %v5951, %v5970
        %v5972 = vlaneseq
        %v5973 = vshrl.u32 %v5972, 7
        %v5974 = vsub.s32 %v5613, %v5973
        %v5975 = vrot.slane %v5954, %v5974
        %v5976 = vsel %vm5618, %v5975, %v5971
        %v5977 = vsel %vm5629, %v5976, %v5967
        %v5979 = vsel %vm5632, %v5977, -inf
        %5980 = vmax.xlane.f32.xlu0 %v5979
        %v5981 = vpop.xlane.xlu0 %5980
        %v5983 = vlaneseq
        %v5984 = vshrl.u32 %v5983, 7
        %v5985 = vsub.s32 0, %v5984
        %v5986 = vrot.slane %v5981, %v5985
        %v5987 = vlaneseq
        %v5988 = vshrl.u32 %v5987, 7
        %v5989 = vsub.s32 1, %v5988
        %v5990 = vrot.slane %v5981, %v5989
        %v5993 = vsub.f32 %v5945, %v5986
        %v5994 = vsub.f32 %v5948, %v5986
        %v5995 = vsub.f32 %v5951, %v5990
        %v5996 = vsub.f32 %v5954, %v5990
        %v5997 = vmul.f32 %v5993, 1.442695
        %v5998 = vpow.pop %v5997
        %v5999 = vmul.f32 %v5994, 1.442695
        %v6000 = vpow.pop %v5999
        %v6001 = vmul.f32 %v5995, 1.442695
        %v6002 = vpow.pop %v6001
        %v6003 = vmul.f32 %v5996, 1.442695
        %v6004 = vpow.pop %v6003
        %6009 = vset.pattern.permute.xlu0 0
        %6010 = vperm.xlu0 %6009, %v5998
        %v6011 = vpop.permute.xlu0 %6010
        %6012 = vset.pattern.permute.xlu0 0
        %6013 = vperm.xlu0 %6012, %v6000
        %v6014 = vpop.permute.xlu0 %6013
        %6015 = vset.pattern.permute.xlu0 0
        %6016 = vperm.xlu0 %6015, %v6002
        %v6017 = vpop.permute.xlu0 %6016
        %6018 = vset.pattern.permute.xlu0 0
        %6019 = vperm.xlu0 %6018, %v6004
        %v6020 = vpop.permute.xlu0 %6019
        %v6021 = vlaneseq
        %v6022 = vshrl.u32 %v6021, 7
        %v6023 = vsub.s32 %v5608, %v6022
        %v6024 = vrot.slane %v6011, %v6023
        %v6025 = vlaneseq
        %v6026 = vshrl.u32 %v6025, 7
        %v6027 = vsub.s32 %v5613, %v6026
        %v6028 = vrot.slane %v6014, %v6027
        %v6029 = vsel %vm5618, %v6028, %v6024
        %v6030 = vlaneseq
        %v6031 = vshrl.u32 %v6030, 7
        %v6032 = vsub.s32 %v5608, %v6031
        %v6033 = vrot.slane %v6017, %v6032
        %v6034 = vlaneseq
        %v6035 = vshrl.u32 %v6034, 7
        %v6036 = vsub.s32 %v5613, %v6035
        %v6037 = vrot.slane %v6020, %v6036
        %v6038 = vsel %vm5618, %v6037, %v6033
        %v6039 = vsel %vm5629, %v6038, %v6029
        %v6041 = vsel %vm5632, %v6039, 0.0
        %6042 = vadd.xlane.f32.xlu0 %v6041
        %v6043 = vpop.xlane.xlu0 %6042
        %v6044 = vrcp.pop %v6043
        %v6046 = vlaneseq
        %v6047 = vshrl.u32 %v6046, 7
        %v6048 = vsub.s32 0, %v6047
        %v6049 = vrot.slane %v6044, %v6048
        %v6050 = vlaneseq
        %v6051 = vshrl.u32 %v6050, 7
        %v6052 = vsub.s32 1, %v6051
        %v6053 = vrot.slane %v6044, %v6052
        %v6056 = vmul.f32 %v5998, %v6049
        %v6057 = vmul.f32 %v6000, %v6049
        %v6058 = vmul.f32 %v6002, %v6053
        %v6059 = vmul.f32 %v6004, %v6053
        %6061 = vset.pattern.permute.xlu0 0
        %6062 = vperm.xlu0 %6061, %v6056
        %v6063 = vpop.permute.xlu0 %6062
        %6066 = vset.pattern.permute.xlu0 0
        %6067 = vperm.xlu0 %6066, %v6057
        %v6068 = vpop.permute.xlu0 %6067
        %6071 = vset.pattern.permute.xlu0 0
        %6072 = vperm.xlu0 %6071, %v6058
        %v6073 = vpop.permute.xlu0 %6072
        %6076 = vset.pattern.permute.xlu0 0
        %6077 = vperm.xlu0 %6076, %v6059
        %v6078 = vpop.permute.xlu0 %6077
        %v6080 = vmul.f32 %v6063, %v4105
        %v6081 = vmul.f32 %v6068, %v4108
        %v6082 = vmul.f32 %v6073, %v4113
        %v6083 = vmul.f32 %v6078, %v4116
        %vm6084 = vcmask 195712
        %v6085 = vsel %vm6084, %v6080, 0.0
        %v6086 = vsel %vm6084, %v6081, 0.0
        %v6087 = vadd.f32 %v6085, %v6086
        %v6088 = vrot.slane %v6087, 4
        %v6089 = vadd.f32 %v6087, %v6088
        %v6090 = vrot.slane %v6089, 2
        %v6091 = vadd.f32 %v6089, %v6090
        %v6092 = vrot.slane %v6091, 1
        %v6093 = vadd.f32 %v6091, %v6092
        %v6094 = vsel %vm6084, %v6082, 0.0
        %v6095 = vsel %vm6084, %v6083, 0.0
        %v6096 = vadd.f32 %v6094, %v6095
        %v6097 = vrot.slane %v6096, 4
        %v6098 = vadd.f32 %v6096, %v6097
        %v6099 = vrot.slane %v6098, 2
        %v6100 = vadd.f32 %v6098, %v6099
        %v6101 = vrot.slane %v6100, 1
        %v6102 = vadd.f32 %v6100, %v6101
        %6103 = vrot.lane.b32.xlu0 %v5587, 104
        %v6104 = vpop.permute.xlu0 %6103
        %6105 = vrot.lane.b32.xlu0 %v5588, 104
        %v6106 = vpop.permute.xlu0 %6105
        %6107 = vrot.lane.b32.xlu0 %v5589, 104
        %v6108 = vpop.permute.xlu0 %6107
        %6109 = vrot.lane.b32.xlu0 %v5590, 104
        %v6110 = vpop.permute.xlu0 %6109
        %v6115 = vsel %vm617, %v6104, 0.0
        %6116 = vadd.xlane.f32.xlu0 %v6115
        %v6117 = vpop.xlane.xlu0 %6116
        %v6118 = vsel %vm617, %v6106, 0.0
        %6119 = vadd.xlane.f32.xlu0 %v6118
        %v6120 = vpop.xlane.xlu0 %6119
        %v6121 = vsel %vm617, %v6108, 0.0
        %6122 = vadd.xlane.f32.xlu0 %v6121
        %v6123 = vpop.xlane.xlu0 %6122
        %v6124 = vsel %vm617, %v6110, 0.0
        %6125 = vadd.xlane.f32.xlu0 %v6124
        %v6126 = vpop.xlane.xlu0 %6125
        %v6131 = vlaneseq
        %v6132 = vshrl.u32 %v6131, 7
        %v6133 = vsub.s32 %v5608, %v6132
        %v6134 = vrot.slane %v6117, %v6133
        %v6135 = vlaneseq
        %v6136 = vshrl.u32 %v6135, 7
        %v6137 = vsub.s32 %v5613, %v6136
        %v6138 = vrot.slane %v6120, %v6137
        %v6139 = vsel %vm5618, %v6138, %v6134
        %v6140 = vlaneseq
        %v6141 = vshrl.u32 %v6140, 7
        %v6142 = vsub.s32 %v5608, %v6141
        %v6143 = vrot.slane %v6123, %v6142
        %v6144 = vlaneseq
        %v6145 = vshrl.u32 %v6144, 7
        %v6146 = vsub.s32 %v5613, %v6145
        %v6147 = vrot.slane %v6126, %v6146
        %v6148 = vsel %vm5618, %v6147, %v6143
        %v6149 = vsel %vm5629, %v6148, %v6139
        %v6151 = vsel %vm5632, %v6149, -inf
        %6152 = vmax.xlane.f32.xlu0 %v6151
        %v6153 = vpop.xlane.xlu0 %6152
        %v6155 = vlaneseq
        %v6156 = vshrl.u32 %v6155, 7
        %v6157 = vsub.s32 0, %v6156
        %v6158 = vrot.slane %v6153, %v6157
        %v6159 = vlaneseq
        %v6160 = vshrl.u32 %v6159, 7
        %v6161 = vsub.s32 1, %v6160
        %v6162 = vrot.slane %v6153, %v6161
        %v6165 = vsub.f32 %v6117, %v6158
        %v6166 = vsub.f32 %v6120, %v6158
        %v6167 = vsub.f32 %v6123, %v6162
        %v6168 = vsub.f32 %v6126, %v6162
        %v6169 = vmul.f32 %v6165, 1.442695
        %v6170 = vpow.pop %v6169
        %v6171 = vmul.f32 %v6166, 1.442695
        %v6172 = vpow.pop %v6171
        %v6173 = vmul.f32 %v6167, 1.442695
        %v6174 = vpow.pop %v6173
        %v6175 = vmul.f32 %v6168, 1.442695
        %v6176 = vpow.pop %v6175
        %6181 = vset.pattern.permute.xlu0 0
        %6182 = vperm.xlu0 %6181, %v6170
        %v6183 = vpop.permute.xlu0 %6182
        %6184 = vset.pattern.permute.xlu0 0
        %6185 = vperm.xlu0 %6184, %v6172
        %v6186 = vpop.permute.xlu0 %6185
        %6187 = vset.pattern.permute.xlu0 0
        %6188 = vperm.xlu0 %6187, %v6174
        %v6189 = vpop.permute.xlu0 %6188
        %6190 = vset.pattern.permute.xlu0 0
        %6191 = vperm.xlu0 %6190, %v6176
        %v6192 = vpop.permute.xlu0 %6191
        %v6193 = vlaneseq
        %v6194 = vshrl.u32 %v6193, 7
        %v6195 = vsub.s32 %v5608, %v6194
        %v6196 = vrot.slane %v6183, %v6195
        %v6197 = vlaneseq
        %v6198 = vshrl.u32 %v6197, 7
        %v6199 = vsub.s32 %v5613, %v6198
        %v6200 = vrot.slane %v6186, %v6199
        %v6201 = vsel %vm5618, %v6200, %v6196
        %v6202 = vlaneseq
        %v6203 = vshrl.u32 %v6202, 7
        %v6204 = vsub.s32 %v5608, %v6203
        %v6205 = vrot.slane %v6189, %v6204
        %v6206 = vlaneseq
        %v6207 = vshrl.u32 %v6206, 7
        %v6208 = vsub.s32 %v5613, %v6207
        %v6209 = vrot.slane %v6192, %v6208
        %v6210 = vsel %vm5618, %v6209, %v6205
        %v6211 = vsel %vm5629, %v6210, %v6201
        %v6213 = vsel %vm5632, %v6211, 0.0
        %6214 = vadd.xlane.f32.xlu0 %v6213
        %v6215 = vpop.xlane.xlu0 %6214
        %v6216 = vrcp.pop %v6215
        %v6218 = vlaneseq
        %v6219 = vshrl.u32 %v6218, 7
        %v6220 = vsub.s32 0, %v6219
        %v6221 = vrot.slane %v6216, %v6220
        %v6222 = vlaneseq
        %v6223 = vshrl.u32 %v6222, 7
        %v6224 = vsub.s32 1, %v6223
        %v6225 = vrot.slane %v6216, %v6224
        %v6228 = vmul.f32 %v6170, %v6221
        %v6229 = vmul.f32 %v6172, %v6221
        %v6230 = vmul.f32 %v6174, %v6225
        %v6231 = vmul.f32 %v6176, %v6225
        %6233 = vset.pattern.permute.xlu0 0
        %6234 = vperm.xlu0 %6233, %v6228
        %v6235 = vpop.permute.xlu0 %6234
        %6238 = vset.pattern.permute.xlu0 0
        %6239 = vperm.xlu0 %6238, %v6229
        %v6240 = vpop.permute.xlu0 %6239
        %6243 = vset.pattern.permute.xlu0 0
        %6244 = vperm.xlu0 %6243, %v6230
        %v6245 = vpop.permute.xlu0 %6244
        %6248 = vset.pattern.permute.xlu0 0
        %6249 = vperm.xlu0 %6248, %v6231
        %v6250 = vpop.permute.xlu0 %6249
        %v6252 = vmul.f32 %v6235, %v4105
        %v6253 = vmul.f32 %v6240, %v4108
        %v6254 = vmul.f32 %v6245, %v4113
        %v6255 = vmul.f32 %v6250, %v4116
        %vm6256 = vcmask 261312
        %v6257 = vsel %vm6256, %v6252, 0.0
        %v6258 = vsel %vm6256, %v6253, 0.0
        %v6259 = vadd.f32 %v6257, %v6258
        %v6260 = vrot.slane %v6259, 4
        %v6261 = vadd.f32 %v6259, %v6260
        %v6262 = vrot.slane %v6261, 2
        %v6263 = vadd.f32 %v6261, %v6262
        %v6264 = vrot.slane %v6263, 1
        %v6265 = vadd.f32 %v6263, %v6264
        %v6266 = vsel %vm6256, %v6254, 0.0
        %v6267 = vsel %vm6256, %v6255, 0.0
        %v6268 = vadd.f32 %v6266, %v6267
        %v6269 = vrot.slane %v6268, 4
        %v6270 = vadd.f32 %v6268, %v6269
        %v6271 = vrot.slane %v6270, 2
        %v6272 = vadd.f32 %v6270, %v6271
        %v6273 = vrot.slane %v6272, 1
        %v6274 = vadd.f32 %v6272, %v6273
        %v6277 = vsel %vm5629, %v5755, %v5746
        %v6281 = vsel %vm5629, %v5930, %v5921
        %v6285 = vsel %vm5629, %v6102, %v6093
        %v6289 = vsel %vm5629, %v6274, %v6265
        %v6291 = vsel %vm617, %v6277, %v6281
        %v6292 = vsel %vm712, %v6291, %v6285
        %v6293 = vsel %vm1637, %v6292, %v6289
        %v6294 = vpack.c.bf16 %v6293, %v6293
        %v6295 = vlaneseq
        %v6296 = vshrl.u32 %v6295, 7
        %v6297 = vsub.s32 0, %v6296
        %v6298 = vrot.slane %v5553, %v6297
        %v6303 = vunpack.c.l.b16 %v5549
        %v6304 = vunpack.c.l.b16 %v5550
        %v6305 = vunpack.c.l.b16 %v5551
        %v6306 = vunpack.c.l.b16 %v5552
        %v6307 = vpack.c.b16 %v6304, %v6303
        %v6308 = vpack.c.b16 %v6306, %v6305
        %v6312 = vsel %vm320, %v6294, 0
        %6314 = vmatprep.subr.bf16.mxu0 0
        %6315 = vmatpush1.bf16.msra.mxu0 %v6307
        %6316 = vmatprep.subr.bf16.mxu0 0
        %6317 = vmatpush1.bf16.msra.mxu0 %v6308
        %6318 = vmatprep.subr.bf16.mxu0 0
        %6319 = vmatpush1.bf16.msra.mxu0 0
        %6320 = vmatprep.subr.bf16.mxu0 0
        %6321 = vmatpush1.bf16.msra.mxu0 0
        %6322 = vmatprep.subr.bf16.mxu0 0
        %6323 = vmatpush1.bf16.msra.mxu0 0
        %6324 = vmatprep.subr.bf16.mxu0 0
        %6325 = vmatpush1.bf16.msra.mxu0 0
        %6326 = vmatprep.subr.bf16.mxu0 0
        %6327 = vmatpush1.bf16.msra.mxu0 0
        %6328 = vmatprep.subr.bf16.mxu0 0
        %6329 = vmatpush1.bf16.msra.mxu0 0
        %6330 = vmatprep.subr.bf16.mxu0 0
        %6331 = vmatpush1.bf16.msra.mxu0 0
        %6332 = vmatprep.subr.bf16.mxu0 0
        %6333 = vmatpush1.bf16.msra.mxu0 0
        %6334 = vmatprep.subr.bf16.mxu0 0
        %6335 = vmatpush1.bf16.msra.mxu0 0
        %6336 = vmatprep.subr.bf16.mxu0 0
        %6337 = vmatpush1.bf16.msra.mxu0 0
        %6338 = vmatprep.subr.bf16.mxu0 0
        %6339 = vmatpush1.bf16.msra.mxu0 0
        %6340 = vmatprep.subr.bf16.mxu0 0
        %6341 = vmatpush1.bf16.msra.mxu0 0
        %6342 = vmatprep.subr.bf16.mxu0 0
        %6343 = vmatpush1.bf16.msra.mxu0 0
        %6344 = vmatprep.subr.bf16.mxu0 0
        %6345 = vmatpush1.bf16.msra.mxu0 0
        %6346 = vmatprep.mubr.bf16.mxu0 0
        %6347 = vmatmul.mubr.bf16.gmra.mrb[0].mxu0 %v6312
        %v6348 = vpop.f32.mrb[0].mxu0
        %v6349 = vadd.f32 %v6298, %v6348
        %v6350 = vpop.f32.mrb[0].mxu0
        %v6351 = vpop.f32.mrb[0].mxu0
        %v6352 = vpop.f32.mrb[0].mxu0
        %6353 = vdwg.mxu0
        %v6354 = vadd.f32 %v5457, %v6349
        %v6355 = vsel %vm5460, %v6354, 0.0
        %6356 = vadd.xlane.f32.xlu0 %v6355
        %v6357 = vpop.xlane.xlu0 %6356
        %v6358 = vmul.f32 %v6357, %v333
        %v6359 = vsub.f32 %v6354, %v6358
        %v6360 = vmul.f32 %v6359, %v6359
        %v6361 = vsel %vm5460, %v6360, 0.0
        %6362 = vadd.xlane.f32.xlu0 %v6361
        %v6363 = vpop.xlane.xlu0 %6362
        %v6364 = vmul.f32 %v6363, %v333
        %v6365 = vadd.f32 %v6364, 1e-05
        %v6366 = vrsqrt.pop %v6365
        %v6367 = vmul.f32 %v6359, %v6366
        %v6368 = vmul.f32 %v6367, %v5251
        %v6369 = vadd.f32 %v6368, %v5257
        %v6370 = vpack.c.bf16 %v6369, %v6369
        %v6372 = vsel %vm320, %v6370, 0
        %6374 = vmatprep.subr.bf16.mxu0 0
        %6375 = vmatpush1.bf16.msra.mxu0 %v5278
        %6376 = vmatprep.subr.bf16.mxu0 0
        %6377 = vmatpush1.bf16.msra.mxu0 %v5279
        %6378 = vmatprep.subr.bf16.mxu0 0
        %6379 = vmatpush1.bf16.msra.mxu0 0
        %6380 = vmatprep.subr.bf16.mxu0 0
        %6381 = vmatpush1.bf16.msra.mxu0 0
        %6382 = vmatprep.subr.bf16.mxu0 0
        %6383 = vmatpush1.bf16.msra.mxu0 0
        %6384 = vmatprep.subr.bf16.mxu0 0
        %6385 = vmatpush1.bf16.msra.mxu0 0
        %6386 = vmatprep.subr.bf16.mxu0 0
        %6387 = vmatpush1.bf16.msra.mxu0 0
        %6388 = vmatprep.subr.bf16.mxu0 0
        %6389 = vmatpush1.bf16.msra.mxu0 0
        %6390 = vmatprep.subr.bf16.mxu0 0
        %6391 = vmatpush1.bf16.msra.mxu0 0
        %6392 = vmatprep.subr.bf16.mxu0 0
        %6393 = vmatpush1.bf16.msra.mxu0 0
        %6394 = vmatprep.subr.bf16.mxu0 0
        %6395 = vmatpush1.bf16.msra.mxu0 0
        %6396 = vmatprep.subr.bf16.mxu0 0
        %6397 = vmatpush1.bf16.msra.mxu0 0
        %6398 = vmatprep.subr.bf16.mxu0 0
        %6399 = vmatpush1.bf16.msra.mxu0 0
        %6400 = vmatprep.subr.bf16.mxu0 0
        %6401 = vmatpush1.bf16.msra.mxu0 0
        %6402 = vmatprep.subr.bf16.mxu0 0
        %6403 = vmatpush1.bf16.msra.mxu0 0
        %6404 = vmatprep.subr.bf16.mxu0 0
        %6405 = vmatpush1.bf16.msra.mxu0 0
        %6406 = vmatprep.mubr.bf16.mxu0 0
        %6407 = vmatmul.mubr.bf16.gmra.mrb[0].mxu0 %v6372
        %v6408 = vpop.f32.mrb[0].mxu0
        %v6409 = vadd.f32 %v5269, %v6408
        %v6410 = vpop.f32.mrb[0].mxu0
        %v6411 = vpop.f32.mrb[0].mxu0
        %v6412 = vpop.f32.mrb[0].mxu0
        %6413 = vdwg.mxu0
        %v6414 = vmul.f32 %v6409, 0.5
        %v6415 = vmul.f32 %v6409, 0.044715
        %v6416 = vmul.f32 %v6415, %v6409
        %v6417 = vmul.f32 %v6416, %v6409
        %v6418 = vadd.f32 %v6409, %v6417
        %v6419 = vmul.f32 %v6418, 0.7978846
        %v6420 = vtanh.pop %v6419
        %v6421 = vadd.f32 %v6420, 1.0
        %v6422 = vmul.f32 %v6414, %v6421
        %v6423 = vpack.c.bf16 %v6422, %v6422
        %6424 = vmatprep.subr.bf16.mxu0 0
        %6425 = vmatpush1.bf16.msra.mxu0 %v5398
        %6426 = vmatprep.subr.bf16.mxu0 0
        %6427 = vmatpush1.bf16.msra.mxu0 %v5399
        %6428 = vmatprep.subr.bf16.mxu0 0
        %6429 = vmatpush1.bf16.msra.mxu0 %v5400
        %6430 = vmatprep.subr.bf16.mxu0 0
        %6431 = vmatpush1.bf16.msra.mxu0 %v5401
        %6432 = vmatprep.subr.bf16.mxu0 0
        %6433 = vmatpush1.bf16.msra.mxu0 %v5402
        %6434 = vmatprep.subr.bf16.mxu0 0
        %6435 = vmatpush1.bf16.msra.mxu0 %v5403
        %6436 = vmatprep.subr.bf16.mxu0 0
        %6437 = vmatpush1.bf16.msra.mxu0 %v5404
        %6438 = vmatprep.subr.bf16.mxu0 0
        %6439 = vmatpush1.bf16.msra.mxu0 %v5405
        %6440 = vmatprep.subr.bf16.mxu0 0
        %6441 = vmatpush1.bf16.msra.mxu0 0
        %6442 = vmatprep.subr.bf16.mxu0 0
        %6443 = vmatpush1.bf16.msra.mxu0 0
        %6444 = vmatprep.subr.bf16.mxu0 0
        %6445 = vmatpush1.bf16.msra.mxu0 0
        %6446 = vmatprep.subr.bf16.mxu0 0
        %6447 = vmatpush1.bf16.msra.mxu0 0
        %6448 = vmatprep.subr.bf16.mxu0 0
        %6449 = vmatpush1.bf16.msra.mxu0 0
        %6450 = vmatprep.subr.bf16.mxu0 0
        %6451 = vmatpush1.bf16.msra.mxu0 0
        %6452 = vmatprep.subr.bf16.mxu0 0
        %6453 = vmatpush1.bf16.msra.mxu0 0
        %6454 = vmatprep.subr.bf16.mxu0 0
        %6455 = vmatpush1.bf16.msra.mxu0 0
        %6456 = vmatprep.mubr.bf16.mxu0 0
        %6457 = vmatmul.mubr.bf16.gmra.mrb[0].mxu0 %v6423
        %v6458 = vpop.f32.mrb[0].mxu0
        %v6459 = vadd.f32 0.0, %v6458
        %v6460 = vpop.f32.mrb[0].mxu0
        %v6461 = vpop.f32.mrb[0].mxu0
        %v6462 = vpop.f32.mrb[0].mxu0
        %6463 = vdwg.mxu0
        %v6464 = vadd.f32 %v6354, %v6459
        %v6465 = vadd.f32 %v6464, %v5365
        %v6466 = vld [vmem:[%s2 + $0x26] sm:$0x1]
        %v6467 = vld [vmem:[%s2 + $0x27] sm:$0x1]
        %v6468 = vsel %vm5460, %v6465, 0.0
        %6469 = vadd.xlane.f32.xlu0 %v6468
        %v6470 = vpop.xlane.xlu0 %6469
        %v6471 = vmul.f32 %v6470, %v333
        %v6472 = vsub.f32 %v6465, %v6471
        %v6473 = vmul.f32 %v6472, %v6472
        %v6474 = vsel %vm5460, %v6473, 0.0
        %6475 = vadd.xlane.f32.xlu0 %v6474
        %v6476 = vpop.xlane.xlu0 %6475
        %v6477 = vmul.f32 %v6476, %v333
        %v6478 = vadd.f32 %v6477, 1e-05
        %v6479 = vrsqrt.pop %v6478
        %v6480 = vmul.f32 %v6472, %v6479
        %v6481 = vlaneseq
        %v6482 = vshrl.u32 %v6481, 7
        %v6483 = vsub.s32 0, %v6482
        %v6484 = vrot.slane %v6466, %v6483
        %v6485 = vmul.f32 %v6480, %v6484
        %v6486 = vlaneseq
        %v6487 = vshrl.u32 %v6486, 7
        %v6488 = vsub.s32 0, %v6487
        %v6489 = vrot.slane %v6467, %v6488
        %v6490 = vadd.f32 %v6485, %v6489
        %v6491 = vld [vmem:[%s1 + $0x218] sm:$0xf]
        %v6492 = vld [vmem:[%s1 + $0x21c] sm:$0xf]
        %v6493 = vld [vmem:[%s1 + $0x220] sm:$0xf]
        %v6494 = vld [vmem:[%s1 + $0x224] sm:$0xf]
        %v6495 = vpack.c.bf16 %v6490, %v6490
        %v6496 = vld [vmem:[%s2 + $0x28] sm:$0x1]
        %v6497 = vlaneseq
        %v6498 = vshrl.u32 %v6497, 7
        %v6499 = vsub.s32 0, %v6498
        %v6500 = vrot.slane %v6496, %v6499
        %v6505 = vunpack.c.l.b16 %v6491
        %v6506 = vunpack.c.l.b16 %v6492
        %v6507 = vunpack.c.l.b16 %v6493
        %v6508 = vunpack.c.l.b16 %v6494
        %v6509 = vpack.c.b16 %v6506, %v6505
        %v6510 = vpack.c.b16 %v6508, %v6507
        %v6514 = vsel %vm320, %v6495, 0
        %6516 = vmatprep.subr.bf16.mxu0 0
        %6517 = vmatpush1.bf16.msra.mxu0 %v6509
        %6518 = vmatprep.subr.bf16.mxu0 0
        %6519 = vmatpush1.bf16.msra.mxu0 %v6510
        %6520 = vmatprep.subr.bf16.mxu0 0
        %6521 = vmatpush1.bf16.msra.mxu0 0
        %6522 = vmatprep.subr.bf16.mxu0 0
        %6523 = vmatpush1.bf16.msra.mxu0 0
        %6524 = vmatprep.subr.bf16.mxu0 0
        %6525 = vmatpush1.bf16.msra.mxu0 0
        %6526 = vmatprep.subr.bf16.mxu0 0
        %6527 = vmatpush1.bf16.msra.mxu0 0
        %6528 = vmatprep.subr.bf16.mxu0 0
        %6529 = vmatpush1.bf16.msra.mxu0 0
        %6530 = vmatprep.subr.bf16.mxu0 0
        %6531 = vmatpush1.bf16.msra.mxu0 0
        %6532 = vmatprep.subr.bf16.mxu0 0
        %6533 = vmatpush1.bf16.msra.mxu0 0
        %6534 = vmatprep.subr.bf16.mxu0 0
        %6535 = vmatpush1.bf16.msra.mxu0 0
        %6536 = vmatprep.subr.bf16.mxu0 0
        %6537 = vmatpush1.bf16.msra.mxu0 0
        %6538 = vmatprep.subr.bf16.mxu0 0
        %6539 = vmatpush1.bf16.msra.mxu0 0
        %6540 = vmatprep.subr.bf16.mxu0 0
        %6541 = vmatpush1.bf16.msra.mxu0 0
        %6542 = vmatprep.subr.bf16.mxu0 0
        %6543 = vmatpush1.bf16.msra.mxu0 0
        %6544 = vmatprep.subr.bf16.mxu0 0
        %6545 = vmatpush1.bf16.msra.mxu0 0
        %6546 = vmatprep.subr.bf16.mxu0 0
        %6547 = vmatpush1.bf16.msra.mxu0 0
        %6548 = vmatprep.mubr.bf16.mxu0 0
        %6549 = vmatmul.mubr.bf16.gmra.mrb[0].mxu0 %v6514
        %v6550 = vpop.f32.mrb[0].mxu0
        %v6551 = vadd.f32 %v6500, %v6550
        %v6552 = vpop.f32.mrb[0].mxu0
        %v6553 = vpop.f32.mrb[0].mxu0
        %v6554 = vpop.f32.mrb[0].mxu0
        %6555 = vdwg.mxu0
        %v6556 = vld [vmem:[%s1 + $0x228] sm:$0xf]
        %v6557 = vld [vmem:[%s1 + $0x22c] sm:$0xf]
        %v6558 = vld [vmem:[%s1 + $0x230] sm:$0xf]
        %v6559 = vld [vmem:[%s1 + $0x234] sm:$0xf]
        %v6560 = vpack.c.bf16 %v6551, %v6551
        %v6561 = vld [vmem:[%s2 + $0x29] sm:$0x1]
        %v6562 = vlaneseq
        %v6563 = vshrl.u32 %v6562, 7
        %v6564 = vsub.s32 0, %v6563
        %v6565 = vrot.slane %v6561, %v6564
        %v6570 = vunpack.c.l.b16 %v6556
        %v6571 = vunpack.c.l.b16 %v6557
        %v6572 = vunpack.c.l.b16 %v6558
        %v6573 = vunpack.c.l.b16 %v6559
        %v6574 = vpack.c.b16 %v6571, %v6570
        %v6575 = vpack.c.b16 %v6573, %v6572
        %v6579 = vsel %vm320, %v6560, 0
        %6581 = vmatprep.subr.bf16.mxu0 0
        %6582 = vmatpush1.bf16.msra.mxu0 %v6574
        %6583 = vmatprep.subr.bf16.mxu0 0
        %6584 = vmatpush1.bf16.msra.mxu0 %v6575
        %6585 = vmatprep.subr.bf16.mxu0 0
        %6586 = vmatpush1.bf16.msra.mxu0 0
        %6587 = vmatprep.subr.bf16.mxu0 0
        %6588 = vmatpush1.bf16.msra.mxu0 0
        %6589 = vmatprep.subr.bf16.mxu0 0
        %6590 = vmatpush1.bf16.msra.mxu0 0
        %6591 = vmatprep.subr.bf16.mxu0 0
        %6592 = vmatpush1.bf16.msra.mxu0 0
        %6593 = vmatprep.subr.bf16.mxu0 0
        %6594 = vmatpush1.bf16.msra.mxu0 0
        %6595 = vmatprep.subr.bf16.mxu0 0
        %6596 = vmatpush1.bf16.msra.mxu0 0
        %6597 = vmatprep.subr.bf16.mxu0 0
        %6598 = vmatpush1.bf16.msra.mxu0 0
        %6599 = vmatprep.subr.bf16.mxu0 0
        %6600 = vmatpush1.bf16.msra.mxu0 0
        %6601 = vmatprep.subr.bf16.mxu0 0
        %6602 = vmatpush1.bf16.msra.mxu0 0
        %6603 = vmatprep.subr.bf16.mxu0 0
        %6604 = vmatpush1.bf16.msra.mxu0 0
        %6605 = vmatprep.subr.bf16.mxu0 0
        %6606 = vmatpush1.bf16.msra.mxu0 0
        %6607 = vmatprep.subr.bf16.mxu0 0
        %6608 = vmatpush1.bf16.msra.mxu0 0
        %6609 = vmatprep.subr.bf16.mxu0 0
        %6610 = vmatpush1.bf16.msra.mxu0 0
        %6611 = vmatprep.subr.bf16.mxu0 0
        %6612 = vmatpush1.bf16.msra.mxu0 0
        %6613 = vmatprep.mubr.bf16.mxu0 0
        %6614 = vmatmul.mubr.bf16.gmra.mrb[0].mxu0 %v6579
        %v6615 = vpop.f32.mrb[0].mxu0
        %v6616 = vadd.f32 %v6565, %v6615
        %v6617 = vpop.f32.mrb[0].mxu0
        %v6618 = vpop.f32.mrb[0].mxu0
        %v6619 = vpop.f32.mrb[0].mxu0
        %6620 = vdwg.mxu0
        %v6621 = vld [vmem:[%s1 + $0x248] sm:$0xf]
        %v6622 = vld [vmem:[%s1 + $0x24c] sm:$0xf]
        %v6623 = vld [vmem:[%s1 + $0x250] sm:$0xf]
        %v6624 = vld [vmem:[%s1 + $0x254] sm:$0xf]
        %v6625 = vld [vmem:[%s2 + $0x2d] sm:$0x1]
        %v6626 = vlaneseq
        %v6627 = vshrl.u32 %v6626, 7
        %v6628 = vsub.s32 0, %v6627
        %v6629 = vrot.slane %v6625, %v6628
        %v6634 = vunpack.c.l.b16 %v6621
        %v6635 = vunpack.c.l.b16 %v6622
        %v6636 = vunpack.c.l.b16 %v6623
        %v6637 = vunpack.c.l.b16 %v6624
        %v6638 = vpack.c.b16 %v6635, %v6634
        %v6639 = vpack.c.b16 %v6637, %v6636
        %6642 = vmatprep.subr.bf16.mxu0 0
        %6643 = vmatpush1.bf16.msra.mxu0 %v6638
        %6644 = vmatprep.subr.bf16.mxu0 0
        %6645 = vmatpush1.bf16.msra.mxu0 %v6639
        %6646 = vmatprep.subr.bf16.mxu0 0
        %6647 = vmatpush1.bf16.msra.mxu0 0
        %6648 = vmatprep.subr.bf16.mxu0 0
        %6649 = vmatpush1.bf16.msra.mxu0 0
        %6650 = vmatprep.subr.bf16.mxu0 0
        %6651 = vmatpush1.bf16.msra.mxu0 0
        %6652 = vmatprep.subr.bf16.mxu0 0
        %6653 = vmatpush1.bf16.msra.mxu0 0
        %6654 = vmatprep.subr.bf16.mxu0 0
        %6655 = vmatpush1.bf16.msra.mxu0 0
        %6656 = vmatprep.subr.bf16.mxu0 0
        %6657 = vmatpush1.bf16.msra.mxu0 0
        %6658 = vmatprep.subr.bf16.mxu0 0
        %6659 = vmatpush1.bf16.msra.mxu0 0
        %6660 = vmatprep.subr.bf16.mxu0 0
        %6661 = vmatpush1.bf16.msra.mxu0 0
        %6662 = vmatprep.subr.bf16.mxu0 0
        %6663 = vmatpush1.bf16.msra.mxu0 0
        %6664 = vmatprep.subr.bf16.mxu0 0
        %6665 = vmatpush1.bf16.msra.mxu0 0
        %6666 = vmatprep.subr.bf16.mxu0 0
        %6667 = vmatpush1.bf16.msra.mxu0 0
        %6668 = vmatprep.subr.bf16.mxu0 0
        %6669 = vmatpush1.bf16.msra.mxu0 0
        %6670 = vmatprep.subr.bf16.mxu0 0
        %6671 = vmatpush1.bf16.msra.mxu0 0
        %6672 = vmatprep.subr.bf16.mxu0 0
        %6673 = vmatpush1.bf16.msra.mxu0 0
        %6674 = vmatprep.mubr.bf16.mxu0 0
        %6675 = vmatmul.mubr.bf16.gmra.mrb[0].mxu0 %v3995
        %v6676 = vpop.f32.mrb[0].mxu0
        %v6677 = vadd.f32 %v6629, %v6676
        %v6678 = vpop.f32.mrb[0].mxu0
        %v6679 = vpop.f32.mrb[0].mxu0
        %v6680 = vadd.f32 %v6629, %v6679
        %v6681 = vpop.f32.mrb[0].mxu0
        %6682 = vmatprep.mubr.bf16.mxu0 0
        %6683 = vmatmul.mubr.bf16.gmra.mrb[0].mxu0 %v3998
        %v6684 = vpop.f32.mrb[0].mxu0
        %v6685 = vadd.f32 %v6629, %v6684
        %v6686 = vpop.f32.mrb[0].mxu0
        %v6687 = vpop.f32.mrb[0].mxu0
        %v6688 = vadd.f32 %v6629, %v6687
        %v6689 = vpop.f32.mrb[0].mxu0
        %6690 = vdwg.mxu0
        %v6691 = vld [vmem:[%s1 + $0x258] sm:$0xf]
        %v6692 = vld [vmem:[%s1 + $0x25c] sm:$0xf]
        %v6693 = vld [vmem:[%s1 + $0x260] sm:$0xf]
        %v6694 = vld [vmem:[%s1 + $0x264] sm:$0xf]
        %v6695 = vld [vmem:[%s2 + $0x2e] sm:$0x1]
        %v6696 = vlaneseq
        %v6697 = vshrl.u32 %v6696, 7
        %v6698 = vsub.s32 0, %v6697
        %v6699 = vrot.slane %v6695, %v6698
        %v6704 = vunpack.c.l.b16 %v6691
        %v6705 = vunpack.c.l.b16 %v6692
        %v6706 = vunpack.c.l.b16 %v6693
        %v6707 = vunpack.c.l.b16 %v6694
        %v6708 = vpack.c.b16 %v6705, %v6704
        %v6709 = vpack.c.b16 %v6707, %v6706
        %6712 = vmatprep.subr.bf16.mxu0 0
        %6713 = vmatpush1.bf16.msra.mxu0 %v6708
        %6714 = vmatprep.subr.bf16.mxu0 0
        %6715 = vmatpush1.bf16.msra.mxu0 %v6709
        %6716 = vmatprep.subr.bf16.mxu0 0
        %6717 = vmatpush1.bf16.msra.mxu0 0
        %6718 = vmatprep.subr.bf16.mxu0 0
        %6719 = vmatpush1.bf16.msra.mxu0 0
        %6720 = vmatprep.subr.bf16.mxu0 0
        %6721 = vmatpush1.bf16.msra.mxu0 0
        %6722 = vmatprep.subr.bf16.mxu0 0
        %6723 = vmatpush1.bf16.msra.mxu0 0
        %6724 = vmatprep.subr.bf16.mxu0 0
        %6725 = vmatpush1.bf16.msra.mxu0 0
        %6726 = vmatprep.subr.bf16.mxu0 0
        %6727 = vmatpush1.bf16.msra.mxu0 0
        %6728 = vmatprep.subr.bf16.mxu0 0
        %6729 = vmatpush1.bf16.msra.mxu0 0
        %6730 = vmatprep.subr.bf16.mxu0 0
        %6731 = vmatpush1.bf16.msra.mxu0 0
        %6732 = vmatprep.subr.bf16.mxu0 0
        %6733 = vmatpush1.bf16.msra.mxu0 0
        %6734 = vmatprep.subr.bf16.mxu0 0
        %6735 = vmatpush1.bf16.msra.mxu0 0
        %6736 = vmatprep.subr.bf16.mxu0 0
        %6737 = vmatpush1.bf16.msra.mxu0 0
        %6738 = vmatprep.subr.bf16.mxu0 0
        %6739 = vmatpush1.bf16.msra.mxu0 0
        %6740 = vmatprep.subr.bf16.mxu0 0
        %6741 = vmatpush1.bf16.msra.mxu0 0
        %6742 = vmatprep.subr.bf16.mxu0 0
        %6743 = vmatpush1.bf16.msra.mxu0 0
        %6744 = vmatprep.mubr.bf16.mxu0 0
        %6745 = vmatmul.mubr.bf16.gmra.mrb[0].mxu0 %v3995
        %v6746 = vpop.f32.mrb[0].mxu0
        %v6747 = vadd.f32 %v6699, %v6746
        %v6748 = vpop.f32.mrb[0].mxu0
        %v6749 = vpop.f32.mrb[0].mxu0
        %v6750 = vadd.f32 %v6699, %v6749
        %v6751 = vpop.f32.mrb[0].mxu0
        %6752 = vmatprep.mubr.bf16.mxu0 0
        %6753 = vmatmul.mubr.bf16.gmra.mrb[0].mxu0 %v3998
        %v6754 = vpop.f32.mrb[0].mxu0
        %v6755 = vadd.f32 %v6699, %v6754
        %v6756 = vpop.f32.mrb[0].mxu0
        %v6757 = vpop.f32.mrb[0].mxu0
        %v6758 = vadd.f32 %v6699, %v6757
        %v6759 = vpop.f32.mrb[0].mxu0
        %6760 = vdwg.mxu0
        %v6763 = vunpack.c.l.s4 1966171168
        %v6764 = vunpack.c.0.s8 %v6763
        %v6765 = vlaneseq
        %v6766 = vshrl.u32 %v6765, 7
        %v6767 = vsub.s32 %v6764, %v6766
        %v6768 = vrot.slane %v6616, %v6767
        %v6769 = vcombine.high %v6768, %v6768
        %v6771 = vunpack.c.l.s4 1966171168
        %v6772 = vunpack.c.0.s8 %v6771
        %v6773 = vlaneseq
        %v6774 = vshrl.u32 %v6773, 7
        %v6775 = vsub.s32 %v6772, %v6774
        %v6776 = vrot.slane %v6768, %v6775
        %v6778 = vunpack.c.l.s4 1966171168
        %v6779 = vunpack.c.0.s8 %v6778
        %v6780 = vlaneseq
        %v6781 = vshrl.u32 %v6780, 7
        %v6782 = vsub.s32 %v6779, %v6781
        %v6783 = vrot.slane %v6769, %v6782
        %v6784 = vlaneseq
        %v6785 = vshrl.u32 %v6784, 7
        %v6786 = vsub.s32 0, %v6785
        %v6787 = vrot.slane %v6776, %v6786
        %v6788 = vlaneseq
        %v6789 = vshrl.u32 %v6788, 7
        %v6790 = vsub.s32 0, %v6789
        %v6791 = vrot.slane %v6783, %v6790
        %v6794 = vadd.f32 %v5455, %v6787
        %v6795 = vadd.f32 %v5456, %v6791
        %v6796 = vld [vmem:[%s2 + $0x2a] sm:$0x1]
        %v6797 = vld [vmem:[%s2 + $0x2b] sm:$0x1]
        %v6798 = vsel %vm320, %v6794, 0.0
        %6799 = vadd.xlane.f32.xlu0 %v6798
        %v6800 = vpop.xlane.xlu0 %6799
        %v6801 = vsel %vm320, %v6795, 0.0
        %6802 = vadd.xlane.f32.xlu0 %v6801
        %v6803 = vpop.xlane.xlu0 %6802
        %v6804 = vmul.f32 %v6800, %v333
        %v6805 = vmul.f32 %v6803, %v333
        %v6806 = vsub.f32 %v6794, %v6804
        %v6807 = vsub.f32 %v6795, %v6805
        %v6808 = vmul.f32 %v6806, %v6806
        %v6809 = vmul.f32 %v6807, %v6807
        %v6810 = vsel %vm320, %v6808, 0.0
        %6811 = vadd.xlane.f32.xlu0 %v6810
        %v6812 = vpop.xlane.xlu0 %6811
        %v6813 = vsel %vm320, %v6809, 0.0
        %6814 = vadd.xlane.f32.xlu0 %v6813
        %v6815 = vpop.xlane.xlu0 %6814
        %v6816 = vmul.f32 %v6812, %v333
        %v6817 = vmul.f32 %v6815, %v333
        %v6818 = vadd.f32 %v6816, 1e-05
        %v6819 = vadd.f32 %v6817, 1e-05
        %v6820 = vrsqrt.pop %v6818
        %v6821 = vrsqrt.pop %v6819
        %v6822 = vmul.f32 %v6806, %v6820
        %v6823 = vmul.f32 %v6807, %v6821
        %v6824 = vlaneseq
        %v6825 = vshrl.u32 %v6824, 7
        %v6826 = vsub.s32 0, %v6825
        %v6827 = vrot.slane %v6796, %v6826
        %v6828 = vmul.f32 %v6822, %v6827
        %v6829 = vmul.f32 %v6823, %v6827
        %v6830 = vlaneseq
        %v6831 = vshrl.u32 %v6830, 7
        %v6832 = vsub.s32 0, %v6831
        %v6833 = vrot.slane %v6797, %v6832
        %v6834 = vadd.f32 %v6828, %v6833
        %v6835 = vadd.f32 %v6829, %v6833
        %v6836 = vld [vmem:[%s1 + $0x238] sm:$0xf]
        %v6837 = vld [vmem:[%s1 + $0x23c] sm:$0xf]
        %v6838 = vld [vmem:[%s1 + $0x240] sm:$0xf]
        %v6839 = vld [vmem:[%s1 + $0x244] sm:$0xf]
        %v6840 = vpack.c.bf16 %v6835, %v6834
        %v6841 = vld [vmem:[%s2 + $0x2c] sm:$0x1]
        %v6842 = vlaneseq
        %v6843 = vshrl.u32 %v6842, 7
        %v6844 = vsub.s32 0, %v6843
        %v6845 = vrot.slane %v6841, %v6844
        %v6850 = vunpack.c.l.b16 %v6836
        %v6851 = vunpack.c.l.b16 %v6837
        %v6852 = vunpack.c.l.b16 %v6838
        %v6853 = vunpack.c.l.b16 %v6839
        %v6854 = vpack.c.b16 %v6851, %v6850
        %v6855 = vpack.c.b16 %v6853, %v6852
        %v6859 = vsel %vm320, %v6840, 0
        %6861 = vmatprep.subr.bf16.mxu0 0
        %6862 = vmatpush1.bf16.msra.mxu0 %v6854
        %6863 = vmatprep.subr.bf16.mxu0 0
        %6864 = vmatpush1.bf16.msra.mxu0 %v6855
        %6865 = vmatprep.subr.bf16.mxu0 0
        %6866 = vmatpush1.bf16.msra.mxu0 0
        %6867 = vmatprep.subr.bf16.mxu0 0
        %6868 = vmatpush1.bf16.msra.mxu0 0
        %6869 = vmatprep.subr.bf16.mxu0 0
        %6870 = vmatpush1.bf16.msra.mxu0 0
        %6871 = vmatprep.subr.bf16.mxu0 0
        %6872 = vmatpush1.bf16.msra.mxu0 0
        %6873 = vmatprep.subr.bf16.mxu0 0
        %6874 = vmatpush1.bf16.msra.mxu0 0
        %6875 = vmatprep.subr.bf16.mxu0 0
        %6876 = vmatpush1.bf16.msra.mxu0 0
        %6877 = vmatprep.subr.bf16.mxu0 0
        %6878 = vmatpush1.bf16.msra.mxu0 0
        %6879 = vmatprep.subr.bf16.mxu0 0
        %6880 = vmatpush1.bf16.msra.mxu0 0
        %6881 = vmatprep.subr.bf16.mxu0 0
        %6882 = vmatpush1.bf16.msra.mxu0 0
        %6883 = vmatprep.subr.bf16.mxu0 0
        %6884 = vmatpush1.bf16.msra.mxu0 0
        %6885 = vmatprep.subr.bf16.mxu0 0
        %6886 = vmatpush1.bf16.msra.mxu0 0
        %6887 = vmatprep.subr.bf16.mxu0 0
        %6888 = vmatpush1.bf16.msra.mxu0 0
        %6889 = vmatprep.subr.bf16.mxu0 0
        %6890 = vmatpush1.bf16.msra.mxu0 0
        %6891 = vmatprep.subr.bf16.mxu0 0
        %6892 = vmatpush1.bf16.msra.mxu0 0
        %6893 = vmatprep.mubr.bf16.mxu0 0
        %6894 = vmatmul.mubr.bf16.gmra.mrb[0].mxu0 %v6859
        %v6895 = vpop.f32.mrb[0].mxu0
        %v6896 = vadd.f32 %v6845, %v6895
        %v6897 = vpop.f32.mrb[0].mxu0
        %v6898 = vpop.f32.mrb[0].mxu0
        %v6899 = vadd.f32 %v6845, %v6898
        %v6900 = vpop.f32.mrb[0].mxu0
        %6901 = vdwg.mxu0
        %v6902 = vld [vmem:[%s1 + $0x268] sm:$0xf]
        %v6903 = vld [vmem:[%s1 + $0x26c] sm:$0xf]
        %v6904 = vld [vmem:[%s1 + $0x270] sm:$0xf]
        %v6905 = vld [vmem:[%s1 + $0x274] sm:$0xf]
        %v6906 = vld [vmem:[%s2 + $0x2f] sm:$0x1]
        %v6907 = vpack.c.bf16 %v6896, %v6896
        %v6908 = vpack.c.bf16 %v6899, %v6899
        %v6909 = vpack.c.bf16 %v6680, %v6677
        %v6910 = vpack.c.bf16 %v6688, %v6685
        %v6912 = vsel %vm617, %v6907, 0
        %v6915 = vsel %vm617, %v6909, 0
        %6917 = vmatprep.subr.bf16.mxu0 0
        %6918 = vmatpush1.bf16.xpose.msra.mxu0 %v6915
        %6919 = vmatprep.subr.bf16.mxu0 0
        %6920 = vmatpush1.bf16.xpose.msra.mxu0 0
        %6921 = vmatprep.subr.bf16.mxu0 0
        %6922 = vmatpush1.bf16.xpose.msra.mxu0 0
        %6923 = vmatprep.subr.bf16.mxu0 0
        %6924 = vmatpush1.bf16.xpose.msra.mxu0 0
        %6925 = vmatprep.subr.bf16.mxu0 0
        %6926 = vmatpush1.bf16.xpose.msra.mxu0 0
        %6927 = vmatprep.subr.bf16.mxu0 0
        %6928 = vmatpush1.bf16.xpose.msra.mxu0 0
        %6929 = vmatprep.subr.bf16.mxu0 0
        %6930 = vmatpush1.bf16.xpose.msra.mxu0 0
        %6931 = vmatprep.subr.bf16.mxu0 0
        %6932 = vmatpush1.bf16.xpose.msra.mxu0 0
        %6933 = vmatprep.subr.bf16.mxu0 0
        %6934 = vmatpush1.bf16.xpose.msra.mxu0 0
        %6935 = vmatprep.subr.bf16.mxu0 0
        %6936 = vmatpush1.bf16.xpose.msra.mxu0 0
        %6937 = vmatprep.subr.bf16.mxu0 0
        %6938 = vmatpush1.bf16.xpose.msra.mxu0 0
        %6939 = vmatprep.subr.bf16.mxu0 0
        %6940 = vmatpush1.bf16.xpose.msra.mxu0 0
        %6941 = vmatprep.subr.bf16.mxu0 0
        %6942 = vmatpush1.bf16.xpose.msra.mxu0 0
        %6943 = vmatprep.subr.bf16.mxu0 0
        %6944 = vmatpush1.bf16.xpose.msra.mxu0 0
        %6945 = vmatprep.subr.bf16.mxu0 0
        %6946 = vmatpush1.bf16.xpose.msra.mxu0 0
        %6947 = vmatprep.subr.bf16.mxu0 0
        %6948 = vmatpush1.bf16.xpose.msra.mxu0 0
        %6949 = vmatprep.mubr.bf16.mxu0 0
        %6950 = vmatmul.mubr.bf16.gmra.mrb[0].mxu0 %v6912
        %v6951 = vpop.f32.mrb[0].mxu0
        %v6952 = vadd.f32 0.0, %v6951
        %v6953 = vpop.f32.mrb[0].mxu0
        %v6954 = vpop.f32.mrb[0].mxu0
        %v6955 = vpop.f32.mrb[0].mxu0
        %6956 = vdwg.mxu0
        %v6958 = vsel %vm617, %v6908, 0
        %v6961 = vsel %vm617, %v6910, 0
        %6963 = vmatprep.subr.bf16.mxu0 0
        %6964 = vmatpush1.bf16.xpose.msra.mxu0 %v6961
        %6965 = vmatprep.subr.bf16.mxu0 0
        %6966 = vmatpush1.bf16.xpose.msra.mxu0 0
        %6967 = vmatprep.subr.bf16.mxu0 0
        %6968 = vmatpush1.bf16.xpose.msra.mxu0 0
        %6969 = vmatprep.subr.bf16.mxu0 0
        %6970 = vmatpush1.bf16.xpose.msra.mxu0 0
        %6971 = vmatprep.subr.bf16.mxu0 0
        %6972 = vmatpush1.bf16.xpose.msra.mxu0 0
        %6973 = vmatprep.subr.bf16.mxu0 0
        %6974 = vmatpush1.bf16.xpose.msra.mxu0 0
        %6975 = vmatprep.subr.bf16.mxu0 0
        %6976 = vmatpush1.bf16.xpose.msra.mxu0 0
        %6977 = vmatprep.subr.bf16.mxu0 0
        %6978 = vmatpush1.bf16.xpose.msra.mxu0 0
        %6979 = vmatprep.subr.bf16.mxu0 0
        %6980 = vmatpush1.bf16.xpose.msra.mxu0 0
        %6981 = vmatprep.subr.bf16.mxu0 0
        %6982 = vmatpush1.bf16.xpose.msra.mxu0 0
        %6983 = vmatprep.subr.bf16.mxu0 0
        %6984 = vmatpush1.bf16.xpose.msra.mxu0 0
        %6985 = vmatprep.subr.bf16.mxu0 0
        %6986 = vmatpush1.bf16.xpose.msra.mxu0 0
        %6987 = vmatprep.subr.bf16.mxu0 0
        %6988 = vmatpush1.bf16.xpose.msra.mxu0 0
        %6989 = vmatprep.subr.bf16.mxu0 0
        %6990 = vmatpush1.bf16.xpose.msra.mxu0 0
        %6991 = vmatprep.subr.bf16.mxu0 0
        %6992 = vmatpush1.bf16.xpose.msra.mxu0 0
        %6993 = vmatprep.subr.bf16.mxu0 0
        %6994 = vmatpush1.bf16.xpose.msra.mxu0 0
        %6995 = vmatprep.mubr.bf16.mxu0 0
        %6996 = vmatmul.mubr.bf16.gmra.mrb[0].mxu0 %v6958
        %v6997 = vpop.f32.mrb[0].mxu0
        %v6998 = vadd.f32 0.0, %v6997
        %v6999 = vpop.f32.mrb[0].mxu0
        %v7000 = vpop.f32.mrb[0].mxu0
        %v7001 = vpop.f32.mrb[0].mxu0
        %7002 = vdwg.mxu0
        %v7003 = vsel %vm712, %v6952, -inf
        %7004 = vmax.xlane.f32.xlu0 %v7003
        %v7005 = vpop.xlane.xlu0 %7004
        %v7006 = vsel %vm712, %v6998, -inf
        %7007 = vmax.xlane.f32.xlu0 %v7006
        %v7008 = vpop.xlane.xlu0 %7007
        %v7009 = vsub.f32 %v6952, %v7005
        %v7010 = vsub.f32 %v6998, %v7008
        %v7011 = vmul.f32 %v7009, 1.442695
        %v7012 = vpow.pop %v7011
        %v7013 = vmul.f32 %v7010, 1.442695
        %v7014 = vpow.pop %v7013
        %v7015 = vsel %vm712, %v7012, 0.0
        %7016 = vadd.xlane.f32.xlu0 %v7015
        %v7017 = vpop.xlane.xlu0 %7016
        %v7018 = vsel %vm712, %v7014, 0.0
        %7019 = vadd.xlane.f32.xlu0 %v7018
        %v7020 = vpop.xlane.xlu0 %7019
        %v7021 = vrcp.pop %v7017
        %v7022 = vrcp.pop %v7020
        %v7023 = vmul.f32 %v7012, %v7021
        %v7024 = vmul.f32 %v7014, %v7022
        %v7025 = vpack.c.bf16 %v7023, %v7023
        %v7026 = vpack.c.bf16 %v7024, %v7024
        %v7027 = vpack.c.bf16 %v6750, %v6747
        %v7028 = vpack.c.bf16 %v6758, %v6755
        %v7030 = vsel %vm712, %v7025, 0
        %7032 = vmatprep.subr.bf16.mxu0 0
        %7033 = vmatpush1.bf16.msra.mxu0 %v7027
        %7034 = vmatprep.subr.bf16.mxu0 0
        %7035 = vmatpush1.bf16.msra.mxu0 0
        %7036 = vmatprep.subr.bf16.mxu0 0
        %7037 = vmatpush1.bf16.msra.mxu0 0
        %7038 = vmatprep.subr.bf16.mxu0 0
        %7039 = vmatpush1.bf16.msra.mxu0 0
        %7040 = vmatprep.subr.bf16.mxu0 0
        %7041 = vmatpush1.bf16.msra.mxu0 0
        %7042 = vmatprep.subr.bf16.mxu0 0
        %7043 = vmatpush1.bf16.msra.mxu0 0
        %7044 = vmatprep.subr.bf16.mxu0 0
        %7045 = vmatpush1.bf16.msra.mxu0 0
        %7046 = vmatprep.subr.bf16.mxu0 0
        %7047 = vmatpush1.bf16.msra.mxu0 0
        %7048 = vmatprep.subr.bf16.mxu0 0
        %7049 = vmatpush1.bf16.msra.mxu0 0
        %7050 = vmatprep.subr.bf16.mxu0 0
        %7051 = vmatpush1.bf16.msra.mxu0 0
        %7052 = vmatprep.subr.bf16.mxu0 0
        %7053 = vmatpush1.bf16.msra.mxu0 0
        %7054 = vmatprep.subr.bf16.mxu0 0
        %7055 = vmatpush1.bf16.msra.mxu0 0
        %7056 = vmatprep.subr.bf16.mxu0 0
        %7057 = vmatpush1.bf16.msra.mxu0 0
        %7058 = vmatprep.subr.bf16.mxu0 0
        %7059 = vmatpush1.bf16.msra.mxu0 0
        %7060 = vmatprep.subr.bf16.mxu0 0
        %7061 = vmatpush1.bf16.msra.mxu0 0
        %7062 = vmatprep.subr.bf16.mxu0 0
        %7063 = vmatpush1.bf16.msra.mxu0 0
        %7064 = vmatprep.mubr.bf16.mxu0 0
        %7065 = vmatmul.mubr.bf16.gmra.mrb[0].mxu0 %v7030
        %v7066 = vpop.f32.mrb[0].mxu0
        %v7067 = vadd.f32 0.0, %v7066
        %v7068 = vpop.f32.mrb[0].mxu0
        %v7069 = vpop.f32.mrb[0].mxu0
        %v7070 = vpop.f32.mrb[0].mxu0
        %7071 = vdwg.mxu0
        %v7073 = vsel %vm712, %v7026, 0
        %7075 = vmatprep.subr.bf16.mxu0 0
        %7076 = vmatpush1.bf16.msra.mxu0 %v7028
        %7077 = vmatprep.subr.bf16.mxu0 0
        %7078 = vmatpush1.bf16.msra.mxu0 0
        %7079 = vmatprep.subr.bf16.mxu0 0
        %7080 = vmatpush1.bf16.msra.mxu0 0
        %7081 = vmatprep.subr.bf16.mxu0 0
        %7082 = vmatpush1.bf16.msra.mxu0 0
        %7083 = vmatprep.subr.bf16.mxu0 0
        %7084 = vmatpush1.bf16.msra.mxu0 0
        %7085 = vmatprep.subr.bf16.mxu0 0
        %7086 = vmatpush1.bf16.msra.mxu0 0
        %7087 = vmatprep.subr.bf16.mxu0 0
        %7088 = vmatpush1.bf16.msra.mxu0 0
        %7089 = vmatprep.subr.bf16.mxu0 0
        %7090 = vmatpush1.bf16.msra.mxu0 0
        %7091 = vmatprep.subr.bf16.mxu0 0
        %7092 = vmatpush1.bf16.msra.mxu0 0
        %7093 = vmatprep.subr.bf16.mxu0 0
        %7094 = vmatpush1.bf16.msra.mxu0 0
        %7095 = vmatprep.subr.bf16.mxu0 0
        %7096 = vmatpush1.bf16.msra.mxu0 0
        %7097 = vmatprep.subr.bf16.mxu0 0
        %7098 = vmatpush1.bf16.msra.mxu0 0
        %7099 = vmatprep.subr.bf16.mxu0 0
        %7100 = vmatpush1.bf16.msra.mxu0 0
        %7101 = vmatprep.subr.bf16.mxu0 0
        %7102 = vmatpush1.bf16.msra.mxu0 0
        %7103 = vmatprep.subr.bf16.mxu0 0
        %7104 = vmatpush1.bf16.msra.mxu0 0
        %7105 = vmatprep.subr.bf16.mxu0 0
        %7106 = vmatpush1.bf16.msra.mxu0 0
        %7107 = vmatprep.mubr.bf16.mxu0 0
        %7108 = vmatmul.mubr.bf16.gmra.mrb[0].mxu0 %v7073
        %v7109 = vpop.f32.mrb[0].mxu0
        %v7110 = vadd.f32 0.0, %v7109
        %v7111 = vpop.f32.mrb[0].mxu0
        %v7112 = vpop.f32.mrb[0].mxu0
        %v7113 = vpop.f32.mrb[0].mxu0
        %7114 = vdwg.mxu0
        %7116 = vrot.lane.b32.xlu0 %v6907, 120
        %v7117 = vpop.permute.xlu0 %7116
        %7119 = vrot.lane.b32.xlu0 %v6909, 120
        %v7120 = vpop.permute.xlu0 %7119
        %v7122 = vsel %vm617, %v7117, 0
        %v7125 = vsel %vm617, %v7120, 0
        %7127 = vmatprep.subr.bf16.mxu0 0
        %7128 = vmatpush1.bf16.xpose.msra.mxu0 %v7125
        %7129 = vmatprep.subr.bf16.mxu0 0
        %7130 = vmatpush1.bf16.xpose.msra.mxu0 0
        %7131 = vmatprep.subr.bf16.mxu0 0
        %7132 = vmatpush1.bf16.xpose.msra.mxu0 0
        %7133 = vmatprep.subr.bf16.mxu0 0
        %7134 = vmatpush1.bf16.xpose.msra.mxu0 0
        %7135 = vmatprep.subr.bf16.mxu0 0
        %7136 = vmatpush1.bf16.xpose.msra.mxu0 0
        %7137 = vmatprep.subr.bf16.mxu0 0
        %7138 = vmatpush1.bf16.xpose.msra.mxu0 0
        %7139 = vmatprep.subr.bf16.mxu0 0
        %7140 = vmatpush1.bf16.xpose.msra.mxu0 0
        %7141 = vmatprep.subr.bf16.mxu0 0
        %7142 = vmatpush1.bf16.xpose.msra.mxu0 0
        %7143 = vmatprep.subr.bf16.mxu0 0
        %7144 = vmatpush1.bf16.xpose.msra.mxu0 0
        %7145 = vmatprep.subr.bf16.mxu0 0
        %7146 = vmatpush1.bf16.xpose.msra.mxu0 0
        %7147 = vmatprep.subr.bf16.mxu0 0
        %7148 = vmatpush1.bf16.xpose.msra.mxu0 0
        %7149 = vmatprep.subr.bf16.mxu0 0
        %7150 = vmatpush1.bf16.xpose.msra.mxu0 0
        %7151 = vmatprep.subr.bf16.mxu0 0
        %7152 = vmatpush1.bf16.xpose.msra.mxu0 0
        %7153 = vmatprep.subr.bf16.mxu0 0
        %7154 = vmatpush1.bf16.xpose.msra.mxu0 0
        %7155 = vmatprep.subr.bf16.mxu0 0
        %7156 = vmatpush1.bf16.xpose.msra.mxu0 0
        %7157 = vmatprep.subr.bf16.mxu0 0
        %7158 = vmatpush1.bf16.xpose.msra.mxu0 0
        %7159 = vmatprep.mubr.bf16.mxu0 0
        %7160 = vmatmul.mubr.bf16.gmra.mrb[0].mxu0 %v7122
        %v7161 = vpop.f32.mrb[0].mxu0
        %v7162 = vadd.f32 0.0, %v7161
        %v7163 = vpop.f32.mrb[0].mxu0
        %v7164 = vpop.f32.mrb[0].mxu0
        %v7165 = vpop.f32.mrb[0].mxu0
        %7166 = vdwg.mxu0
        %7168 = vrot.lane.b32.xlu0 %v6908, 120
        %v7169 = vpop.permute.xlu0 %7168
        %7171 = vrot.lane.b32.xlu0 %v6910, 120
        %v7172 = vpop.permute.xlu0 %7171
        %v7174 = vsel %vm617, %v7169, 0
        %v7177 = vsel %vm617, %v7172, 0
        %7179 = vmatprep.subr.bf16.mxu0 0
        %7180 = vmatpush1.bf16.xpose.msra.mxu0 %v7177
        %7181 = vmatprep.subr.bf16.mxu0 0
        %7182 = vmatpush1.bf16.xpose.msra.mxu0 0
        %7183 = vmatprep.subr.bf16.mxu0 0
        %7184 = vmatpush1.bf16.xpose.msra.mxu0 0
        %7185 = vmatprep.subr.bf16.mxu0 0
        %7186 = vmatpush1.bf16.xpose.msra.mxu0 0
        %7187 = vmatprep.subr.bf16.mxu0 0
        %7188 = vmatpush1.bf16.xpose.msra.mxu0 0
        %7189 = vmatprep.subr.bf16.mxu0 0
        %7190 = vmatpush1.bf16.xpose.msra.mxu0 0
        %7191 = vmatprep.subr.bf16.mxu0 0
        %7192 = vmatpush1.bf16.xpose.msra.mxu0 0
        %7193 = vmatprep.subr.bf16.mxu0 0
        %7194 = vmatpush1.bf16.xpose.msra.mxu0 0
        %7195 = vmatprep.subr.bf16.mxu0 0
        %7196 = vmatpush1.bf16.xpose.msra.mxu0 0
        %7197 = vmatprep.subr.bf16.mxu0 0
        %7198 = vmatpush1.bf16.xpose.msra.mxu0 0
        %7199 = vmatprep.subr.bf16.mxu0 0
        %7200 = vmatpush1.bf16.xpose.msra.mxu0 0
        %7201 = vmatprep.subr.bf16.mxu0 0
        %7202 = vmatpush1.bf16.xpose.msra.mxu0 0
        %7203 = vmatprep.subr.bf16.mxu0 0
        %7204 = vmatpush1.bf16.xpose.msra.mxu0 0
        %7205 = vmatprep.subr.bf16.mxu0 0
        %7206 = vmatpush1.bf16.xpose.msra.mxu0 0
        %7207 = vmatprep.subr.bf16.mxu0 0
        %7208 = vmatpush1.bf16.xpose.msra.mxu0 0
        %7209 = vmatprep.subr.bf16.mxu0 0
        %7210 = vmatpush1.bf16.xpose.msra.mxu0 0
        %7211 = vmatprep.mubr.bf16.mxu0 0
        %7212 = vmatmul.mubr.bf16.gmra.mrb[0].mxu0 %v7174
        %v7213 = vpop.f32.mrb[0].mxu0
        %v7214 = vadd.f32 0.0, %v7213
        %v7215 = vpop.f32.mrb[0].mxu0
        %v7216 = vpop.f32.mrb[0].mxu0
        %v7217 = vpop.f32.mrb[0].mxu0
        %7218 = vdwg.mxu0
        %v7219 = vsel %vm712, %v7162, -inf
        %7220 = vmax.xlane.f32.xlu0 %v7219
        %v7221 = vpop.xlane.xlu0 %7220
        %v7222 = vsel %vm712, %v7214, -inf
        %7223 = vmax.xlane.f32.xlu0 %v7222
        %v7224 = vpop.xlane.xlu0 %7223
        %v7225 = vsub.f32 %v7162, %v7221
        %v7226 = vsub.f32 %v7214, %v7224
        %v7227 = vmul.f32 %v7225, 1.442695
        %v7228 = vpow.pop %v7227
        %v7229 = vmul.f32 %v7226, 1.442695
        %v7230 = vpow.pop %v7229
        %v7231 = vsel %vm712, %v7228, 0.0
        %7232 = vadd.xlane.f32.xlu0 %v7231
        %v7233 = vpop.xlane.xlu0 %7232
        %v7234 = vsel %vm712, %v7230, 0.0
        %7235 = vadd.xlane.f32.xlu0 %v7234
        %v7236 = vpop.xlane.xlu0 %7235
        %v7237 = vrcp.pop %v7233
        %v7238 = vrcp.pop %v7236
        %v7239 = vmul.f32 %v7228, %v7237
        %v7240 = vmul.f32 %v7230, %v7238
        %v7241 = vpack.c.bf16 %v7239, %v7239
        %v7242 = vpack.c.bf16 %v7240, %v7240
        %7244 = vrot.lane.b32.xlu0 %v7027, 120
        %v7245 = vpop.permute.xlu0 %7244
        %v7248 = vsel %vm712, %v7241, 0
        %7250 = vmatprep.subr.bf16.mxu0 0
        %7251 = vmatpush1.bf16.msra.mxu0 %v7245
        %7252 = vmatprep.subr.bf16.mxu0 0
        %7253 = vmatpush1.bf16.msra.mxu0 0
        %7254 = vmatprep.subr.bf16.mxu0 0
        %7255 = vmatpush1.bf16.msra.mxu0 0
        %7256 = vmatprep.subr.bf16.mxu0 0
        %7257 = vmatpush1.bf16.msra.mxu0 0
        %7258 = vmatprep.subr.bf16.mxu0 0
        %7259 = vmatpush1.bf16.msra.mxu0 0
        %7260 = vmatprep.subr.bf16.mxu0 0
        %7261 = vmatpush1.bf16.msra.mxu0 0
        %7262 = vmatprep.subr.bf16.mxu0 0
        %7263 = vmatpush1.bf16.msra.mxu0 0
        %7264 = vmatprep.subr.bf16.mxu0 0
        %7265 = vmatpush1.bf16.msra.mxu0 0
        %7266 = vmatprep.subr.bf16.mxu0 0
        %7267 = vmatpush1.bf16.msra.mxu0 0
        %7268 = vmatprep.subr.bf16.mxu0 0
        %7269 = vmatpush1.bf16.msra.mxu0 0
        %7270 = vmatprep.subr.bf16.mxu0 0
        %7271 = vmatpush1.bf16.msra.mxu0 0
        %7272 = vmatprep.subr.bf16.mxu0 0
        %7273 = vmatpush1.bf16.msra.mxu0 0
        %7274 = vmatprep.subr.bf16.mxu0 0
        %7275 = vmatpush1.bf16.msra.mxu0 0
        %7276 = vmatprep.subr.bf16.mxu0 0
        %7277 = vmatpush1.bf16.msra.mxu0 0
        %7278 = vmatprep.subr.bf16.mxu0 0
        %7279 = vmatpush1.bf16.msra.mxu0 0
        %7280 = vmatprep.subr.bf16.mxu0 0
        %7281 = vmatpush1.bf16.msra.mxu0 0
        %7282 = vmatprep.mubr.bf16.mxu0 0
        %7283 = vmatmul.mubr.bf16.gmra.mrb[0].mxu0 %v7248
        %v7284 = vpop.f32.mrb[0].mxu0
        %v7285 = vadd.f32 0.0, %v7284
        %v7286 = vpop.f32.mrb[0].mxu0
        %v7287 = vpop.f32.mrb[0].mxu0
        %v7288 = vpop.f32.mrb[0].mxu0
        %7289 = vdwg.mxu0
        %7291 = vrot.lane.b32.xlu0 %v7028, 120
        %v7292 = vpop.permute.xlu0 %7291
        %v7295 = vsel %vm712, %v7242, 0
        %7297 = vmatprep.subr.bf16.mxu0 0
        %7298 = vmatpush1.bf16.msra.mxu0 %v7292
        %7299 = vmatprep.subr.bf16.mxu0 0
        %7300 = vmatpush1.bf16.msra.mxu0 0
        %7301 = vmatprep.subr.bf16.mxu0 0
        %7302 = vmatpush1.bf16.msra.mxu0 0
        %7303 = vmatprep.subr.bf16.mxu0 0
        %7304 = vmatpush1.bf16.msra.mxu0 0
        %7305 = vmatprep.subr.bf16.mxu0 0
        %7306 = vmatpush1.bf16.msra.mxu0 0
        %7307 = vmatprep.subr.bf16.mxu0 0
        %7308 = vmatpush1.bf16.msra.mxu0 0
        %7309 = vmatprep.subr.bf16.mxu0 0
        %7310 = vmatpush1.bf16.msra.mxu0 0
        %7311 = vmatprep.subr.bf16.mxu0 0
        %7312 = vmatpush1.bf16.msra.mxu0 0
        %7313 = vmatprep.subr.bf16.mxu0 0
        %7314 = vmatpush1.bf16.msra.mxu0 0
        %7315 = vmatprep.subr.bf16.mxu0 0
        %7316 = vmatpush1.bf16.msra.mxu0 0
        %7317 = vmatprep.subr.bf16.mxu0 0
        %7318 = vmatpush1.bf16.msra.mxu0 0
        %7319 = vmatprep.subr.bf16.mxu0 0
        %7320 = vmatpush1.bf16.msra.mxu0 0
        %7321 = vmatprep.subr.bf16.mxu0 0
        %7322 = vmatpush1.bf16.msra.mxu0 0
        %7323 = vmatprep.subr.bf16.mxu0 0
        %7324 = vmatpush1.bf16.msra.mxu0 0
        %7325 = vmatprep.subr.bf16.mxu0 0
        %7326 = vmatpush1.bf16.msra.mxu0 0
        %7327 = vmatprep.subr.bf16.mxu0 0
        %7328 = vmatpush1.bf16.msra.mxu0 0
        %7329 = vmatprep.mubr.bf16.mxu0 0
        %7330 = vmatmul.mubr.bf16.gmra.mrb[0].mxu0 %v7295
        %v7331 = vpop.f32.mrb[0].mxu0
        %v7332 = vadd.f32 0.0, %v7331
        %v7333 = vpop.f32.mrb[0].mxu0
        %v7334 = vpop.f32.mrb[0].mxu0
        %v7335 = vpop.f32.mrb[0].mxu0
        %7336 = vdwg.mxu0
        %7337 = vrot.lane.b32.xlu0 %v6907, 112
        %v7338 = vpop.permute.xlu0 %7337
        %7339 = vrot.lane.b32.xlu0 %v6909, 112
        %v7340 = vpop.permute.xlu0 %7339
        %v7342 = vsel %vm617, %v7338, 0
        %v7345 = vsel %vm617, %v7340, 0
        %7347 = vmatprep.subr.bf16.mxu0 0
        %7348 = vmatpush1.bf16.xpose.msra.mxu0 %v7345
        %7349 = vmatprep.subr.bf16.mxu0 0
        %7350 = vmatpush1.bf16.xpose.msra.mxu0 0
        %7351 = vmatprep.subr.bf16.mxu0 0
        %7352 = vmatpush1.bf16.xpose.msra.mxu0 0
        %7353 = vmatprep.subr.bf16.mxu0 0
        %7354 = vmatpush1.bf16.xpose.msra.mxu0 0
        %7355 = vmatprep.subr.bf16.mxu0 0
        %7356 = vmatpush1.bf16.xpose.msra.mxu0 0
        %7357 = vmatprep.subr.bf16.mxu0 0
        %7358 = vmatpush1.bf16.xpose.msra.mxu0 0
        %7359 = vmatprep.subr.bf16.mxu0 0
        %7360 = vmatpush1.bf16.xpose.msra.mxu0 0
        %7361 = vmatprep.subr.bf16.mxu0 0
        %7362 = vmatpush1.bf16.xpose.msra.mxu0 0
        %7363 = vmatprep.subr.bf16.mxu0 0
        %7364 = vmatpush1.bf16.xpose.msra.mxu0 0
        %7365 = vmatprep.subr.bf16.mxu0 0
        %7366 = vmatpush1.bf16.xpose.msra.mxu0 0
        %7367 = vmatprep.subr.bf16.mxu0 0
        %7368 = vmatpush1.bf16.xpose.msra.mxu0 0
        %7369 = vmatprep.subr.bf16.mxu0 0
        %7370 = vmatpush1.bf16.xpose.msra.mxu0 0
        %7371 = vmatprep.subr.bf16.mxu0 0
        %7372 = vmatpush1.bf16.xpose.msra.mxu0 0
        %7373 = vmatprep.subr.bf16.mxu0 0
        %7374 = vmatpush1.bf16.xpose.msra.mxu0 0
        %7375 = vmatprep.subr.bf16.mxu0 0
        %7376 = vmatpush1.bf16.xpose.msra.mxu0 0
        %7377 = vmatprep.subr.bf16.mxu0 0
        %7378 = vmatpush1.bf16.xpose.msra.mxu0 0
        %7379 = vmatprep.mubr.bf16.mxu0 0
        %7380 = vmatmul.mubr.bf16.gmra.mrb[0].mxu0 %v7342
        %v7381 = vpop.f32.mrb[0].mxu0
        %v7382 = vadd.f32 0.0, %v7381
        %v7383 = vpop.f32.mrb[0].mxu0
        %v7384 = vpop.f32.mrb[0].mxu0
        %v7385 = vpop.f32.mrb[0].mxu0
        %7386 = vdwg.mxu0
        %7387 = vrot.lane.b32.xlu0 %v6908, 112
        %v7388 = vpop.permute.xlu0 %7387
        %7389 = vrot.lane.b32.xlu0 %v6910, 112
        %v7390 = vpop.permute.xlu0 %7389
        %v7392 = vsel %vm617, %v7388, 0
        %v7395 = vsel %vm617, %v7390, 0
        %7397 = vmatprep.subr.bf16.mxu0 0
        %7398 = vmatpush1.bf16.xpose.msra.mxu0 %v7395
        %7399 = vmatprep.subr.bf16.mxu0 0
        %7400 = vmatpush1.bf16.xpose.msra.mxu0 0
        %7401 = vmatprep.subr.bf16.mxu0 0
        %7402 = vmatpush1.bf16.xpose.msra.mxu0 0
        %7403 = vmatprep.subr.bf16.mxu0 0
        %7404 = vmatpush1.bf16.xpose.msra.mxu0 0
        %7405 = vmatprep.subr.bf16.mxu0 0
        %7406 = vmatpush1.bf16.xpose.msra.mxu0 0
        %7407 = vmatprep.subr.bf16.mxu0 0
        %7408 = vmatpush1.bf16.xpose.msra.mxu0 0
        %7409 = vmatprep.subr.bf16.mxu0 0
        %7410 = vmatpush1.bf16.xpose.msra.mxu0 0
        %7411 = vmatprep.subr.bf16.mxu0 0
        %7412 = vmatpush1.bf16.xpose.msra.mxu0 0
        %7413 = vmatprep.subr.bf16.mxu0 0
        %7414 = vmatpush1.bf16.xpose.msra.mxu0 0
        %7415 = vmatprep.subr.bf16.mxu0 0
        %7416 = vmatpush1.bf16.xpose.msra.mxu0 0
        %7417 = vmatprep.subr.bf16.mxu0 0
        %7418 = vmatpush1.bf16.xpose.msra.mxu0 0
        %7419 = vmatprep.subr.bf16.mxu0 0
        %7420 = vmatpush1.bf16.xpose.msra.mxu0 0
        %7421 = vmatprep.subr.bf16.mxu0 0
        %7422 = vmatpush1.bf16.xpose.msra.mxu0 0
        %7423 = vmatprep.subr.bf16.mxu0 0
        %7424 = vmatpush1.bf16.xpose.msra.mxu0 0
        %7425 = vmatprep.subr.bf16.mxu0 0
        %7426 = vmatpush1.bf16.xpose.msra.mxu0 0
        %7427 = vmatprep.subr.bf16.mxu0 0
        %7428 = vmatpush1.bf16.xpose.msra.mxu0 0
        %7429 = vmatprep.mubr.bf16.mxu0 0
        %7430 = vmatmul.mubr.bf16.gmra.mrb[0].mxu0 %v7392
        %v7431 = vpop.f32.mrb[0].mxu0
        %v7432 = vadd.f32 0.0, %v7431
        %v7433 = vpop.f32.mrb[0].mxu0
        %v7434 = vpop.f32.mrb[0].mxu0
        %v7435 = vpop.f32.mrb[0].mxu0
        %7436 = vdwg.mxu0
        %v7437 = vsel %vm712, %v7382, -inf
        %7438 = vmax.xlane.f32.xlu0 %v7437
        %v7439 = vpop.xlane.xlu0 %7438
        %v7440 = vsel %vm712, %v7432, -inf
        %7441 = vmax.xlane.f32.xlu0 %v7440
        %v7442 = vpop.xlane.xlu0 %7441
        %v7443 = vsub.f32 %v7382, %v7439
        %v7444 = vsub.f32 %v7432, %v7442
        %v7445 = vmul.f32 %v7443, 1.442695
        %v7446 = vpow.pop %v7445
        %v7447 = vmul.f32 %v7444, 1.442695
        %v7448 = vpow.pop %v7447
        %v7449 = vsel %vm712, %v7446, 0.0
        %7450 = vadd.xlane.f32.xlu0 %v7449
        %v7451 = vpop.xlane.xlu0 %7450
        %v7452 = vsel %vm712, %v7448, 0.0
        %7453 = vadd.xlane.f32.xlu0 %v7452
        %v7454 = vpop.xlane.xlu0 %7453
        %v7455 = vrcp.pop %v7451
        %v7456 = vrcp.pop %v7454
        %v7457 = vmul.f32 %v7446, %v7455
        %v7458 = vmul.f32 %v7448, %v7456
        %v7459 = vpack.c.bf16 %v7457, %v7457
        %v7460 = vpack.c.bf16 %v7458, %v7458
        %7461 = vrot.lane.b32.xlu0 %v7027, 112
        %v7462 = vpop.permute.xlu0 %7461
        %v7465 = vsel %vm712, %v7459, 0
        %7467 = vmatprep.subr.bf16.mxu0 0
        %7468 = vmatpush1.bf16.msra.mxu0 %v7462
        %7469 = vmatprep.subr.bf16.mxu0 0
        %7470 = vmatpush1.bf16.msra.mxu0 0
        %7471 = vmatprep.subr.bf16.mxu0 0
        %7472 = vmatpush1.bf16.msra.mxu0 0
        %7473 = vmatprep.subr.bf16.mxu0 0
        %7474 = vmatpush1.bf16.msra.mxu0 0
        %7475 = vmatprep.subr.bf16.mxu0 0
        %7476 = vmatpush1.bf16.msra.mxu0 0
        %7477 = vmatprep.subr.bf16.mxu0 0
        %7478 = vmatpush1.bf16.msra.mxu0 0
        %7479 = vmatprep.subr.bf16.mxu0 0
        %7480 = vmatpush1.bf16.msra.mxu0 0
        %7481 = vmatprep.subr.bf16.mxu0 0
        %7482 = vmatpush1.bf16.msra.mxu0 0
        %7483 = vmatprep.subr.bf16.mxu0 0
        %7484 = vmatpush1.bf16.msra.mxu0 0
        %7485 = vmatprep.subr.bf16.mxu0 0
        %7486 = vmatpush1.bf16.msra.mxu0 0
        %7487 = vmatprep.subr.bf16.mxu0 0
        %7488 = vmatpush1.bf16.msra.mxu0 0
        %7489 = vmatprep.subr.bf16.mxu0 0
        %7490 = vmatpush1.bf16.msra.mxu0 0
        %7491 = vmatprep.subr.bf16.mxu0 0
        %7492 = vmatpush1.bf16.msra.mxu0 0
        %7493 = vmatprep.subr.bf16.mxu0 0
        %7494 = vmatpush1.bf16.msra.mxu0 0
        %7495 = vmatprep.subr.bf16.mxu0 0
        %7496 = vmatpush1.bf16.msra.mxu0 0
        %7497 = vmatprep.subr.bf16.mxu0 0
        %7498 = vmatpush1.bf16.msra.mxu0 0
        %7499 = vmatprep.mubr.bf16.mxu0 0
        %7500 = vmatmul.mubr.bf16.gmra.mrb[0].mxu0 %v7465
        %v7501 = vpop.f32.mrb[0].mxu0
        %v7502 = vadd.f32 0.0, %v7501
        %v7503 = vpop.f32.mrb[0].mxu0
        %v7504 = vpop.f32.mrb[0].mxu0
        %v7505 = vpop.f32.mrb[0].mxu0
        %7506 = vdwg.mxu0
        %7507 = vrot.lane.b32.xlu0 %v7028, 112
        %v7508 = vpop.permute.xlu0 %7507
        %v7511 = vsel %vm712, %v7460, 0
        %7513 = vmatprep.subr.bf16.mxu0 0
        %7514 = vmatpush1.bf16.msra.mxu0 %v7508
        %7515 = vmatprep.subr.bf16.mxu0 0
        %7516 = vmatpush1.bf16.msra.mxu0 0
        %7517 = vmatprep.subr.bf16.mxu0 0
        %7518 = vmatpush1.bf16.msra.mxu0 0
        %7519 = vmatprep.subr.bf16.mxu0 0
        %7520 = vmatpush1.bf16.msra.mxu0 0
        %7521 = vmatprep.subr.bf16.mxu0 0
        %7522 = vmatpush1.bf16.msra.mxu0 0
        %7523 = vmatprep.subr.bf16.mxu0 0
        %7524 = vmatpush1.bf16.msra.mxu0 0
        %7525 = vmatprep.subr.bf16.mxu0 0
        %7526 = vmatpush1.bf16.msra.mxu0 0
        %7527 = vmatprep.subr.bf16.mxu0 0
        %7528 = vmatpush1.bf16.msra.mxu0 0
        %7529 = vmatprep.subr.bf16.mxu0 0
        %7530 = vmatpush1.bf16.msra.mxu0 0
        %7531 = vmatprep.subr.bf16.mxu0 0
        %7532 = vmatpush1.bf16.msra.mxu0 0
        %7533 = vmatprep.subr.bf16.mxu0 0
        %7534 = vmatpush1.bf16.msra.mxu0 0
        %7535 = vmatprep.subr.bf16.mxu0 0
        %7536 = vmatpush1.bf16.msra.mxu0 0
        %7537 = vmatprep.subr.bf16.mxu0 0
        %7538 = vmatpush1.bf16.msra.mxu0 0
        %7539 = vmatprep.subr.bf16.mxu0 0
        %7540 = vmatpush1.bf16.msra.mxu0 0
        %7541 = vmatprep.subr.bf16.mxu0 0
        %7542 = vmatpush1.bf16.msra.mxu0 0
        %7543 = vmatprep.subr.bf16.mxu0 0
        %7544 = vmatpush1.bf16.msra.mxu0 0
        %7545 = vmatprep.mubr.bf16.mxu0 0
        %7546 = vmatmul.mubr.bf16.gmra.mrb[0].mxu0 %v7511
        %v7547 = vpop.f32.mrb[0].mxu0
        %v7548 = vadd.f32 0.0, %v7547
        %v7549 = vpop.f32.mrb[0].mxu0
        %v7550 = vpop.f32.mrb[0].mxu0
        %v7551 = vpop.f32.mrb[0].mxu0
        %7552 = vdwg.mxu0
        %7553 = vrot.lane.b32.xlu0 %v6907, 104
        %v7554 = vpop.permute.xlu0 %7553
        %7555 = vrot.lane.b32.xlu0 %v6909, 104
        %v7556 = vpop.permute.xlu0 %7555
        %v7558 = vsel %vm617, %v7554, 0
        %v7561 = vsel %vm617, %v7556, 0
        %7563 = vmatprep.subr.bf16.mxu0 0
        %7564 = vmatpush1.bf16.xpose.msra.mxu0 %v7561
        %7565 = vmatprep.subr.bf16.mxu0 0
        %7566 = vmatpush1.bf16.xpose.msra.mxu0 0
        %7567 = vmatprep.subr.bf16.mxu0 0
        %7568 = vmatpush1.bf16.xpose.msra.mxu0 0
        %7569 = vmatprep.subr.bf16.mxu0 0
        %7570 = vmatpush1.bf16.xpose.msra.mxu0 0
        %7571 = vmatprep.subr.bf16.mxu0 0
        %7572 = vmatpush1.bf16.xpose.msra.mxu0 0
        %7573 = vmatprep.subr.bf16.mxu0 0
        %7574 = vmatpush1.bf16.xpose.msra.mxu0 0
        %7575 = vmatprep.subr.bf16.mxu0 0
        %7576 = vmatpush1.bf16.xpose.msra.mxu0 0
        %7577 = vmatprep.subr.bf16.mxu0 0
        %7578 = vmatpush1.bf16.xpose.msra.mxu0 0
        %7579 = vmatprep.subr.bf16.mxu0 0
        %7580 = vmatpush1.bf16.xpose.msra.mxu0 0
        %7581 = vmatprep.subr.bf16.mxu0 0
        %7582 = vmatpush1.bf16.xpose.msra.mxu0 0
        %7583 = vmatprep.subr.bf16.mxu0 0
        %7584 = vmatpush1.bf16.xpose.msra.mxu0 0
        %7585 = vmatprep.subr.bf16.mxu0 0
        %7586 = vmatpush1.bf16.xpose.msra.mxu0 0
        %7587 = vmatprep.subr.bf16.mxu0 0
        %7588 = vmatpush1.bf16.xpose.msra.mxu0 0
        %7589 = vmatprep.subr.bf16.mxu0 0
        %7590 = vmatpush1.bf16.xpose.msra.mxu0 0
        %7591 = vmatprep.subr.bf16.mxu0 0
        %7592 = vmatpush1.bf16.xpose.msra.mxu0 0
        %7593 = vmatprep.subr.bf16.mxu0 0
        %7594 = vmatpush1.bf16.xpose.msra.mxu0 0
        %7595 = vmatprep.mubr.bf16.mxu0 0
        %7596 = vmatmul.mubr.bf16.gmra.mrb[0].mxu0 %v7558
        %v7597 = vpop.f32.mrb[0].mxu0
        %v7598 = vadd.f32 0.0, %v7597
        %v7599 = vpop.f32.mrb[0].mxu0
        %v7600 = vpop.f32.mrb[0].mxu0
        %v7601 = vpop.f32.mrb[0].mxu0
        %7602 = vdwg.mxu0
        %7603 = vrot.lane.b32.xlu0 %v6908, 104
        %v7604 = vpop.permute.xlu0 %7603
        %7605 = vrot.lane.b32.xlu0 %v6910, 104
        %v7606 = vpop.permute.xlu0 %7605
        %v7608 = vsel %vm617, %v7604, 0
        %v7611 = vsel %vm617, %v7606, 0
        %7613 = vmatprep.subr.bf16.mxu0 0
        %7614 = vmatpush1.bf16.xpose.msra.mxu0 %v7611
        %7615 = vmatprep.subr.bf16.mxu0 0
        %7616 = vmatpush1.bf16.xpose.msra.mxu0 0
        %7617 = vmatprep.subr.bf16.mxu0 0
        %7618 = vmatpush1.bf16.xpose.msra.mxu0 0
        %7619 = vmatprep.subr.bf16.mxu0 0
        %7620 = vmatpush1.bf16.xpose.msra.mxu0 0
        %7621 = vmatprep.subr.bf16.mxu0 0
        %7622 = vmatpush1.bf16.xpose.msra.mxu0 0
        %7623 = vmatprep.subr.bf16.mxu0 0
        %7624 = vmatpush1.bf16.xpose.msra.mxu0 0
        %7625 = vmatprep.subr.bf16.mxu0 0
        %7626 = vmatpush1.bf16.xpose.msra.mxu0 0
        %7627 = vmatprep.subr.bf16.mxu0 0
        %7628 = vmatpush1.bf16.xpose.msra.mxu0 0
        %7629 = vmatprep.subr.bf16.mxu0 0
        %7630 = vmatpush1.bf16.xpose.msra.mxu0 0
        %7631 = vmatprep.subr.bf16.mxu0 0
        %7632 = vmatpush1.bf16.xpose.msra.mxu0 0
        %7633 = vmatprep.subr.bf16.mxu0 0
        %7634 = vmatpush1.bf16.xpose.msra.mxu0 0
        %7635 = vmatprep.subr.bf16.mxu0 0
        %7636 = vmatpush1.bf16.xpose.msra.mxu0 0
        %7637 = vmatprep.subr.bf16.mxu0 0
        %7638 = vmatpush1.bf16.xpose.msra.mxu0 0
        %7639 = vmatprep.subr.bf16.mxu0 0
        %7640 = vmatpush1.bf16.xpose.msra.mxu0 0
        %7641 = vmatprep.subr.bf16.mxu0 0
        %7642 = vmatpush1.bf16.xpose.msra.mxu0 0
        %7643 = vmatprep.subr.bf16.mxu0 0
        %7644 = vmatpush1.bf16.xpose.msra.mxu0 0
        %7645 = vmatprep.mubr.bf16.mxu0 0
        %7646 = vmatmul.mubr.bf16.gmra.mrb[0].mxu0 %v7608
        %v7647 = vpop.f32.mrb[0].mxu0
        %v7648 = vadd.f32 0.0, %v7647
        %v7649 = vpop.f32.mrb[0].mxu0
        %v7650 = vpop.f32.mrb[0].mxu0
        %v7651 = vpop.f32.mrb[0].mxu0
        %7652 = vdwg.mxu0
        %v7653 = vsel %vm712, %v7598, -inf
        %7654 = vmax.xlane.f32.xlu0 %v7653
        %v7655 = vpop.xlane.xlu0 %7654
        %v7656 = vsel %vm712, %v7648, -inf
        %7657 = vmax.xlane.f32.xlu0 %v7656
        %v7658 = vpop.xlane.xlu0 %7657
        %v7659 = vsub.f32 %v7598, %v7655
        %v7660 = vsub.f32 %v7648, %v7658
        %v7661 = vmul.f32 %v7659, 1.442695
        %v7662 = vpow.pop %v7661
        %v7663 = vmul.f32 %v7660, 1.442695
        %v7664 = vpow.pop %v7663
        %v7665 = vsel %vm712, %v7662, 0.0
        %7666 = vadd.xlane.f32.xlu0 %v7665
        %v7667 = vpop.xlane.xlu0 %7666
        %v7668 = vsel %vm712, %v7664, 0.0
        %7669 = vadd.xlane.f32.xlu0 %v7668
        %v7670 = vpop.xlane.xlu0 %7669
        %v7671 = vrcp.pop %v7667
        %v7672 = vrcp.pop %v7670
        %v7673 = vmul.f32 %v7662, %v7671
        %v7674 = vmul.f32 %v7664, %v7672
        %v7675 = vpack.c.bf16 %v7673, %v7673
        %v7676 = vpack.c.bf16 %v7674, %v7674
        %7677 = vrot.lane.b32.xlu0 %v7027, 104
        %v7678 = vpop.permute.xlu0 %7677
        %v7681 = vsel %vm712, %v7675, 0
        %7683 = vmatprep.subr.bf16.mxu0 0
        %7684 = vmatpush1.bf16.msra.mxu0 %v7678
        %7685 = vmatprep.subr.bf16.mxu0 0
        %7686 = vmatpush1.bf16.msra.mxu0 0
        %7687 = vmatprep.subr.bf16.mxu0 0
        %7688 = vmatpush1.bf16.msra.mxu0 0
        %7689 = vmatprep.subr.bf16.mxu0 0
        %7690 = vmatpush1.bf16.msra.mxu0 0
        %7691 = vmatprep.subr.bf16.mxu0 0
        %7692 = vmatpush1.bf16.msra.mxu0 0
        %7693 = vmatprep.subr.bf16.mxu0 0
        %7694 = vmatpush1.bf16.msra.mxu0 0
        %7695 = vmatprep.subr.bf16.mxu0 0
        %7696 = vmatpush1.bf16.msra.mxu0 0
        %7697 = vmatprep.subr.bf16.mxu0 0
        %7698 = vmatpush1.bf16.msra.mxu0 0
        %7699 = vmatprep.subr.bf16.mxu0 0
        %7700 = vmatpush1.bf16.msra.mxu0 0
        %7701 = vmatprep.subr.bf16.mxu0 0
        %7702 = vmatpush1.bf16.msra.mxu0 0
        %7703 = vmatprep.subr.bf16.mxu0 0
        %7704 = vmatpush1.bf16.msra.mxu0 0
        %7705 = vmatprep.subr.bf16.mxu0 0
        %7706 = vmatpush1.bf16.msra.mxu0 0
        %7707 = vmatprep.subr.bf16.mxu0 0
        %7708 = vmatpush1.bf16.msra.mxu0 0
        %7709 = vmatprep.subr.bf16.mxu0 0
        %7710 = vmatpush1.bf16.msra.mxu0 0
        %7711 = vmatprep.subr.bf16.mxu0 0
        %7712 = vmatpush1.bf16.msra.mxu0 0
        %7713 = vmatprep.subr.bf16.mxu0 0
        %7714 = vmatpush1.bf16.msra.mxu0 0
        %7715 = vmatprep.mubr.bf16.mxu0 0
        %7716 = vmatmul.mubr.bf16.gmra.mrb[0].mxu0 %v7681
        %v7717 = vpop.f32.mrb[0].mxu0
        %v7718 = vadd.f32 0.0, %v7717
        %v7719 = vpop.f32.mrb[0].mxu0
        %v7720 = vpop.f32.mrb[0].mxu0
        %v7721 = vpop.f32.mrb[0].mxu0
        %7722 = vdwg.mxu0
        %7723 = vrot.lane.b32.xlu0 %v7028, 104
        %v7724 = vpop.permute.xlu0 %7723
        %v7727 = vsel %vm712, %v7676, 0
        %7729 = vmatprep.subr.bf16.mxu0 0
        %7730 = vmatpush1.bf16.msra.mxu0 %v7724
        %7731 = vmatprep.subr.bf16.mxu0 0
        %7732 = vmatpush1.bf16.msra.mxu0 0
        %7733 = vmatprep.subr.bf16.mxu0 0
        %7734 = vmatpush1.bf16.msra.mxu0 0
        %7735 = vmatprep.subr.bf16.mxu0 0
        %7736 = vmatpush1.bf16.msra.mxu0 0
        %7737 = vmatprep.subr.bf16.mxu0 0
        %7738 = vmatpush1.bf16.msra.mxu0 0
        %7739 = vmatprep.subr.bf16.mxu0 0
        %7740 = vmatpush1.bf16.msra.mxu0 0
        %7741 = vmatprep.subr.bf16.mxu0 0
        %7742 = vmatpush1.bf16.msra.mxu0 0
        %7743 = vmatprep.subr.bf16.mxu0 0
        %7744 = vmatpush1.bf16.msra.mxu0 0
        %7745 = vmatprep.subr.bf16.mxu0 0
        %7746 = vmatpush1.bf16.msra.mxu0 0
        %7747 = vmatprep.subr.bf16.mxu0 0
        %7748 = vmatpush1.bf16.msra.mxu0 0
        %7749 = vmatprep.subr.bf16.mxu0 0
        %7750 = vmatpush1.bf16.msra.mxu0 0
        %7751 = vmatprep.subr.bf16.mxu0 0
        %7752 = vmatpush1.bf16.msra.mxu0 0
        %7753 = vmatprep.subr.bf16.mxu0 0
        %7754 = vmatpush1.bf16.msra.mxu0 0
        %7755 = vmatprep.subr.bf16.mxu0 0
        %7756 = vmatpush1.bf16.msra.mxu0 0
        %7757 = vmatprep.subr.bf16.mxu0 0
        %7758 = vmatpush1.bf16.msra.mxu0 0
        %7759 = vmatprep.subr.bf16.mxu0 0
        %7760 = vmatpush1.bf16.msra.mxu0 0
        %7761 = vmatprep.mubr.bf16.mxu0 0
        %7762 = vmatmul.mubr.bf16.gmra.mrb[0].mxu0 %v7727
        %v7763 = vpop.f32.mrb[0].mxu0
        %v7764 = vadd.f32 0.0, %v7763
        %v7765 = vpop.f32.mrb[0].mxu0
        %v7766 = vpop.f32.mrb[0].mxu0
        %v7767 = vpop.f32.mrb[0].mxu0
        %7768 = vdwg.mxu0
        %7771 = vrot.lane.b32.xlu0 %v7285, 8
        %v7772 = vpop.permute.xlu0 %7771
        %7773 = vrot.lane.b32.xlu0 %v7332, 8
        %v7774 = vpop.permute.xlu0 %7773
        %7779 = vrot.lane.b32.xlu0 %v7502, 16
        %v7780 = vpop.permute.xlu0 %7779
        %7781 = vrot.lane.b32.xlu0 %v7548, 16
        %v7782 = vpop.permute.xlu0 %7781
        %7787 = vrot.lane.b32.xlu0 %v7718, 24
        %v7788 = vpop.permute.xlu0 %7787
        %7789 = vrot.lane.b32.xlu0 %v7764, 24
        %v7790 = vpop.permute.xlu0 %7789
        %v7793 = vsel %vm617, %v7067, %v7772
        %v7794 = vsel %vm617, %v7110, %v7774
        %v7795 = vsel %vm712, %v7793, %v7780
        %v7796 = vsel %vm712, %v7794, %v7782
        %v7797 = vsel %vm1637, %v7795, %v7788
        %v7798 = vsel %vm1637, %v7796, %v7790
        %v7799 = vpack.c.bf16 %v7798, %v7797
        %v7800 = vlaneseq
        %v7801 = vshrl.u32 %v7800, 7
        %v7802 = vsub.s32 0, %v7801
        %v7803 = vrot.slane %v6906, %v7802
        %v7808 = vunpack.c.l.b16 %v6902
        %v7809 = vunpack.c.l.b16 %v6903
        %v7810 = vunpack.c.l.b16 %v6904
        %v7811 = vunpack.c.l.b16 %v6905
        %v7812 = vpack.c.b16 %v7809, %v7808
        %v7813 = vpack.c.b16 %v7811, %v7810
        %v7817 = vsel %vm320, %v7799, 0
        %7819 = vmatprep.subr.bf16.mxu0 0
        %7820 = vmatpush1.bf16.msra.mxu0 %v7812
        %7821 = vmatprep.subr.bf16.mxu0 0
        %7822 = vmatpush1.bf16.msra.mxu0 %v7813
        %7823 = vmatprep.subr.bf16.mxu0 0
        %7824 = vmatpush1.bf16.msra.mxu0 0
        %7825 = vmatprep.subr.bf16.mxu0 0
        %7826 = vmatpush1.bf16.msra.mxu0 0
        %7827 = vmatprep.subr.bf16.mxu0 0
        %7828 = vmatpush1.bf16.msra.mxu0 0
        %7829 = vmatprep.subr.bf16.mxu0 0
        %7830 = vmatpush1.bf16.msra.mxu0 0
        %7831 = vmatprep.subr.bf16.mxu0 0
        %7832 = vmatpush1.bf16.msra.mxu0 0
        %7833 = vmatprep.subr.bf16.mxu0 0
        %7834 = vmatpush1.bf16.msra.mxu0 0
        %7835 = vmatprep.subr.bf16.mxu0 0
        %7836 = vmatpush1.bf16.msra.mxu0 0
        %7837 = vmatprep.subr.bf16.mxu0 0
        %7838 = vmatpush1.bf16.msra.mxu0 0
        %7839 = vmatprep.subr.bf16.mxu0 0
        %7840 = vmatpush1.bf16.msra.mxu0 0
        %7841 = vmatprep.subr.bf16.mxu0 0
        %7842 = vmatpush1.bf16.msra.mxu0 0
        %7843 = vmatprep.subr.bf16.mxu0 0
        %7844 = vmatpush1.bf16.msra.mxu0 0
        %7845 = vmatprep.subr.bf16.mxu0 0
        %7846 = vmatpush1.bf16.msra.mxu0 0
        %7847 = vmatprep.subr.bf16.mxu0 0
        %7848 = vmatpush1.bf16.msra.mxu0 0
        %7849 = vmatprep.subr.bf16.mxu0 0
        %7850 = vmatpush1.bf16.msra.mxu0 0
        %7851 = vmatprep.mubr.bf16.mxu0 0
        %7852 = vmatmul.mubr.bf16.gmra.mrb[0].mxu0 %v7817
        %v7853 = vpop.f32.mrb[0].mxu0
        %v7854 = vadd.f32 %v7803, %v7853
        %v7855 = vpop.f32.mrb[0].mxu0
        %v7856 = vpop.f32.mrb[0].mxu0
        %v7857 = vadd.f32 %v7803, %v7856
        %v7858 = vpop.f32.mrb[0].mxu0
        %7859 = vdwg.mxu0
        %v7860 = vadd.f32 %v6794, %v7854
        %v7861 = vadd.f32 %v6795, %v7857
        %v7862 = vld [vmem:[%s2 + $0x30] sm:$0x1]
        %v7863 = vld [vmem:[%s2 + $0x31] sm:$0x1]
        %v7864 = vsel %vm320, %v7860, 0.0
        %7865 = vadd.xlane.f32.xlu0 %v7864
        %v7866 = vpop.xlane.xlu0 %7865
        %v7867 = vsel %vm320, %v7861, 0.0
        %7868 = vadd.xlane.f32.xlu0 %v7867
        %v7869 = vpop.xlane.xlu0 %7868
        %v7870 = vmul.f32 %v7866, %v333
        %v7871 = vmul.f32 %v7869, %v333
        %v7872 = vsub.f32 %v7860, %v7870
        %v7873 = vsub.f32 %v7861, %v7871
        %v7874 = vmul.f32 %v7872, %v7872
        %v7875 = vmul.f32 %v7873, %v7873
        %v7876 = vsel %vm320, %v7874, 0.0
        %7877 = vadd.xlane.f32.xlu0 %v7876
        %v7878 = vpop.xlane.xlu0 %7877
        %v7879 = vsel %vm320, %v7875, 0.0
        %7880 = vadd.xlane.f32.xlu0 %v7879
        %v7881 = vpop.xlane.xlu0 %7880
        %v7882 = vmul.f32 %v7878, %v333
        %v7883 = vmul.f32 %v7881, %v333
        %v7884 = vadd.f32 %v7882, 1e-05
        %v7885 = vadd.f32 %v7883, 1e-05
        %v7886 = vrsqrt.pop %v7884
        %v7887 = vrsqrt.pop %v7885
        %v7888 = vmul.f32 %v7872, %v7886
        %v7889 = vmul.f32 %v7873, %v7887
        %v7890 = vlaneseq
        %v7891 = vshrl.u32 %v7890, 7
        %v7892 = vsub.s32 0, %v7891
        %v7893 = vrot.slane %v7862, %v7892
        %v7894 = vmul.f32 %v7888, %v7893
        %v7895 = vmul.f32 %v7889, %v7893
        %v7896 = vlaneseq
        %v7897 = vshrl.u32 %v7896, 7
        %v7898 = vsub.s32 0, %v7897
        %v7899 = vrot.slane %v7863, %v7898
        %v7900 = vadd.f32 %v7894, %v7899
        %v7901 = vadd.f32 %v7895, %v7899
        %v7902 = vld [vmem:[%s1 + $0x278] sm:$0xf]
        %v7903 = vld [vmem:[%s1 + $0x27c] sm:$0xf]
        %v7904 = vld [vmem:[%s1 + $0x280] sm:$0xf]
        %v7905 = vld [vmem:[%s1 + $0x284] sm:$0xf]
        %v7906 = vpack.c.bf16 %v7901, %v7900
        %v7907 = vld [vmem:[%s2 + $0x32] sm:$0x1]
        %v7908 = vlaneseq
        %v7909 = vshrl.u32 %v7908, 7
        %v7910 = vsub.s32 0, %v7909
        %v7911 = vrot.slane %v7907, %v7910
        %v7916 = vunpack.c.l.b16 %v7902
        %v7917 = vunpack.c.l.b16 %v7903
        %v7918 = vunpack.c.l.b16 %v7904
        %v7919 = vunpack.c.l.b16 %v7905
        %v7920 = vpack.c.b16 %v7917, %v7916
        %v7921 = vpack.c.b16 %v7919, %v7918
        %v7925 = vsel %vm320, %v7906, 0
        %7927 = vmatprep.subr.bf16.mxu0 0
        %7928 = vmatpush1.bf16.msra.mxu0 %v7920
        %7929 = vmatprep.subr.bf16.mxu0 0
        %7930 = vmatpush1.bf16.msra.mxu0 %v7921
        %7931 = vmatprep.subr.bf16.mxu0 0
        %7932 = vmatpush1.bf16.msra.mxu0 0
        %7933 = vmatprep.subr.bf16.mxu0 0
        %7934 = vmatpush1.bf16.msra.mxu0 0
        %7935 = vmatprep.subr.bf16.mxu0 0
        %7936 = vmatpush1.bf16.msra.mxu0 0
        %7937 = vmatprep.subr.bf16.mxu0 0
        %7938 = vmatpush1.bf16.msra.mxu0 0
        %7939 = vmatprep.subr.bf16.mxu0 0
        %7940 = vmatpush1.bf16.msra.mxu0 0
        %7941 = vmatprep.subr.bf16.mxu0 0
        %7942 = vmatpush1.bf16.msra.mxu0 0
        %7943 = vmatprep.subr.bf16.mxu0 0
        %7944 = vmatpush1.bf16.msra.mxu0 0
        %7945 = vmatprep.subr.bf16.mxu0 0
        %7946 = vmatpush1.bf16.msra.mxu0 0
        %7947 = vmatprep.subr.bf16.mxu0 0
        %7948 = vmatpush1.bf16.msra.mxu0 0
        %7949 = vmatprep.subr.bf16.mxu0 0
        %7950 = vmatpush1.bf16.msra.mxu0 0
        %7951 = vmatprep.subr.bf16.mxu0 0
        %7952 = vmatpush1.bf16.msra.mxu0 0
        %7953 = vmatprep.subr.bf16.mxu0 0
        %7954 = vmatpush1.bf16.msra.mxu0 0
        %7955 = vmatprep.subr.bf16.mxu0 0
        %7956 = vmatpush1.bf16.msra.mxu0 0
        %7957 = vmatprep.subr.bf16.mxu0 0
        %7958 = vmatpush1.bf16.msra.mxu0 0
        %7959 = vmatprep.mubr.bf16.mxu0 0
        %7960 = vmatmul.mubr.bf16.gmra.mrb[0].mxu0 %v7925
        %v7961 = vpop.f32.mrb[0].mxu0
        %v7962 = vadd.f32 %v7911, %v7961
        %v7963 = vpop.f32.mrb[0].mxu0
        %v7964 = vpop.f32.mrb[0].mxu0
        %v7965 = vadd.f32 %v7911, %v7964
        %v7966 = vpop.f32.mrb[0].mxu0
        %7967 = vdwg.mxu0
        %v7968 = vmul.f32 %v7962, 0.5
        %v7969 = vmul.f32 %v7965, 0.5
        %v7970 = vmul.f32 %v7962, 0.044715
        %v7971 = vmul.f32 %v7965, 0.044715
        %v7972 = vmul.f32 %v7970, %v7962
        %v7973 = vmul.f32 %v7971, %v7965
        %v7974 = vmul.f32 %v7972, %v7962
        %v7975 = vmul.f32 %v7973, %v7965
        %v7976 = vadd.f32 %v7962, %v7974
        %v7977 = vadd.f32 %v7965, %v7975
        %v7978 = vmul.f32 %v7976, 0.7978846
        %v7979 = vmul.f32 %v7977, 0.7978846
        %v7980 = vtanh.pop %v7978
        %v7981 = vtanh.pop %v7979
        %v7982 = vadd.f32 %v7980, 1.0
        %v7983 = vadd.f32 %v7981, 1.0
        %v7984 = vmul.f32 %v7968, %v7982
        %v7985 = vmul.f32 %v7969, %v7983
        %v7986 = vld [vmem:[%s1 + $0x288] sm:$0xf]
        %v7987 = vld [vmem:[%s1 + $0x28c] sm:$0xf]
        %v7988 = vld [vmem:[%s1 + $0x290] sm:$0xf]
        %v7989 = vld [vmem:[%s1 + $0x294] sm:$0xf]
        %v7990 = vld [vmem:[%s1 + $0x298] sm:$0xf]
        %v7991 = vld [vmem:[%s1 + $0x29c] sm:$0xf]
        %v7992 = vld [vmem:[%s1 + $0x2a0] sm:$0xf]
        %v7993 = vld [vmem:[%s1 + $0x2a4] sm:$0xf]
        %v7994 = vld [vmem:[%s1 + $0x2a8] sm:$0xf]
        %v7995 = vld [vmem:[%s1 + $0x2ac] sm:$0xf]
        %v7996 = vld [vmem:[%s1 + $0x2b0] sm:$0xf]
        %v7997 = vld [vmem:[%s1 + $0x2b4] sm:$0xf]
        %v7998 = vld [vmem:[%s1 + $0x2b8] sm:$0xf]
        %v7999 = vld [vmem:[%s1 + $0x2bc] sm:$0xf]
        %v8000 = vld [vmem:[%s1 + $0x2c0] sm:$0xf]
        %v8001 = vld [vmem:[%s1 + $0x2c4] sm:$0xf]
        %v8002 = vpack.c.bf16 %v7985, %v7984
        %v8003 = vld [vmem:[%s2 + $0x33] sm:$0x1]
        %v8004 = vlaneseq
        %v8005 = vshrl.u32 %v8004, 7
        %v8006 = vsub.s32 0, %v8005
        %v8007 = vrot.slane %v8003, %v8006
        %v8024 = vunpack.c.l.b16 %v7986
        %v8025 = vunpack.c.l.b16 %v7987
        %v8026 = vunpack.c.l.b16 %v7988
        %v8027 = vunpack.c.l.b16 %v7989
        %v8028 = vunpack.c.l.b16 %v7990
        %v8029 = vunpack.c.l.b16 %v7991
        %v8030 = vunpack.c.l.b16 %v7992
        %v8031 = vunpack.c.l.b16 %v7993
        %v8032 = vunpack.c.l.b16 %v7994
        %v8033 = vunpack.c.l.b16 %v7995
        %v8034 = vunpack.c.l.b16 %v7996
        %v8035 = vunpack.c.l.b16 %v7997
        %v8036 = vunpack.c.l.b16 %v7998
        %v8037 = vunpack.c.l.b16 %v7999
        %v8038 = vunpack.c.l.b16 %v8000
        %v8039 = vunpack.c.l.b16 %v8001
        %v8040 = vpack.c.b16 %v8025, %v8024
        %v8041 = vpack.c.b16 %v8027, %v8026
        %v8042 = vpack.c.b16 %v8029, %v8028
        %v8043 = vpack.c.b16 %v8031, %v8030
        %v8044 = vpack.c.b16 %v8033, %v8032
        %v8045 = vpack.c.b16 %v8035, %v8034
        %v8046 = vpack.c.b16 %v8037, %v8036
        %v8047 = vpack.c.b16 %v8039, %v8038
        %8056 = vmatprep.subr.bf16.mxu0 0
        %8057 = vmatpush1.bf16.msra.mxu0 %v8040
        %8058 = vmatprep.subr.bf16.mxu0 0
        %8059 = vmatpush1.bf16.msra.mxu0 %v8041
        %8060 = vmatprep.subr.bf16.mxu0 0
        %8061 = vmatpush1.bf16.msra.mxu0 %v8042
        %8062 = vmatprep.subr.bf16.mxu0 0
        %8063 = vmatpush1.bf16.msra.mxu0 %v8043
        %8064 = vmatprep.subr.bf16.mxu0 0
        %8065 = vmatpush1.bf16.msra.mxu0 %v8044
        %8066 = vmatprep.subr.bf16.mxu0 0
        %8067 = vmatpush1.bf16.msra.mxu0 %v8045
        %8068 = vmatprep.subr.bf16.mxu0 0
        %8069 = vmatpush1.bf16.msra.mxu0 %v8046
        %8070 = vmatprep.subr.bf16.mxu0 0
        %8071 = vmatpush1.bf16.msra.mxu0 %v8047
        %8072 = vmatprep.subr.bf16.mxu0 0
        %8073 = vmatpush1.bf16.msra.mxu0 0
        %8074 = vmatprep.subr.bf16.mxu0 0
        %8075 = vmatpush1.bf16.msra.mxu0 0
        %8076 = vmatprep.subr.bf16.mxu0 0
        %8077 = vmatpush1.bf16.msra.mxu0 0
        %8078 = vmatprep.subr.bf16.mxu0 0
        %8079 = vmatpush1.bf16.msra.mxu0 0
        %8080 = vmatprep.subr.bf16.mxu0 0
        %8081 = vmatpush1.bf16.msra.mxu0 0
        %8082 = vmatprep.subr.bf16.mxu0 0
        %8083 = vmatpush1.bf16.msra.mxu0 0
        %8084 = vmatprep.subr.bf16.mxu0 0
        %8085 = vmatpush1.bf16.msra.mxu0 0
        %8086 = vmatprep.subr.bf16.mxu0 0
        %8087 = vmatpush1.bf16.msra.mxu0 0
        %8088 = vmatprep.mubr.bf16.mxu0 0
        %8089 = vmatmul.mubr.bf16.gmra.mrb[0].mxu0 %v8002
        %v8090 = vpop.f32.mrb[0].mxu0
        %v8091 = vadd.f32 %v8007, %v8090
        %v8092 = vpop.f32.mrb[0].mxu0
        %v8093 = vpop.f32.mrb[0].mxu0
        %v8094 = vadd.f32 %v8007, %v8093
        %v8095 = vpop.f32.mrb[0].mxu0
        %8096 = vdwg.mxu0
        %v8097 = vadd.f32 %v7860, %v8091
        %v8098 = vadd.f32 %v7861, %v8094
        %v8099 = vld [vmem:[%s2 + $0x34] sm:$0x1]
        %v8100 = vld [vmem:[%s2 + $0x35] sm:$0x1]
        %v8101 = vsel %vm320, %v8097, 0.0
        %8102 = vadd.xlane.f32.xlu0 %v8101
        %v8103 = vpop.xlane.xlu0 %8102
        %v8104 = vsel %vm320, %v8098, 0.0
        %8105 = vadd.xlane.f32.xlu0 %v8104
        %v8106 = vpop.xlane.xlu0 %8105
        %v8107 = vmul.f32 %v8103, %v333
        %v8108 = vmul.f32 %v8106, %v333
        %v8109 = vsub.f32 %v8097, %v8107
        %v8110 = vsub.f32 %v8098, %v8108
        %v8111 = vmul.f32 %v8109, %v8109
        %v8112 = vmul.f32 %v8110, %v8110
        %v8113 = vsel %vm320, %v8111, 0.0
        %8114 = vadd.xlane.f32.xlu0 %v8113
        %v8115 = vpop.xlane.xlu0 %8114
        %v8116 = vsel %vm320, %v8112, 0.0
        %8117 = vadd.xlane.f32.xlu0 %v8116
        %v8118 = vpop.xlane.xlu0 %8117
        %v8119 = vmul.f32 %v8115, %v333
        %v8120 = vmul.f32 %v8118, %v333
        %v8121 = vadd.f32 %v8119, 1e-05
        %v8122 = vadd.f32 %v8120, 1e-05
        %v8123 = vrsqrt.pop %v8121
        %v8124 = vrsqrt.pop %v8122
        %v8125 = vmul.f32 %v8109, %v8123
        %v8126 = vmul.f32 %v8110, %v8124
        %v8127 = vlaneseq
        %v8128 = vshrl.u32 %v8127, 7
        %v8129 = vsub.s32 0, %v8128
        %v8130 = vrot.slane %v8099, %v8129
        %v8131 = vmul.f32 %v8125, %v8130
        %v8132 = vmul.f32 %v8126, %v8130
        %v8133 = vlaneseq
        %v8134 = vshrl.u32 %v8133, 7
        %v8135 = vsub.s32 0, %v8134
        %v8136 = vrot.slane %v8100, %v8135
        %v8137 = vadd.f32 %v8131, %v8136
        %v8138 = vadd.f32 %v8132, %v8136
        %v8139 = vld [vmem:[%s1 + $0x2d0] sm:$0xf]
        %v8140 = vld [vmem:[%s1 + $0x2d4] sm:$0xf]
        %v8141 = vld [vmem:[%s1 + $0x2d8] sm:$0xf]
        %v8142 = vld [vmem:[%s1 + $0x2dc] sm:$0xf]
        %v8143 = vpack.c.bf16 %v8138, %v8137
        %v8144 = vld [vmem:[%s2 + $0x36] sm:$0x1]
        %v8145 = vlaneseq
        %v8146 = vshrl.u32 %v8145, 7
        %v8147 = vsub.s32 0, %v8146
        %v8148 = vrot.slane %v8144, %v8147
        %v8153 = vunpack.c.l.b16 %v8139
        %v8154 = vunpack.c.l.b16 %v8140
        %v8155 = vunpack.c.l.b16 %v8141
        %v8156 = vunpack.c.l.b16 %v8142
        %v8157 = vpack.c.b16 %v8154, %v8153
        %v8158 = vpack.c.b16 %v8156, %v8155
        %v8162 = vsel %vm320, %v8143, 0
        %8164 = vmatprep.subr.bf16.mxu0 0
        %8165 = vmatpush1.bf16.msra.mxu0 %v8157
        %8166 = vmatprep.subr.bf16.mxu0 0
        %8167 = vmatpush1.bf16.msra.mxu0 %v8158
        %8168 = vmatprep.subr.bf16.mxu0 0
        %8169 = vmatpush1.bf16.msra.mxu0 0
        %8170 = vmatprep.subr.bf16.mxu0 0
        %8171 = vmatpush1.bf16.msra.mxu0 0
        %8172 = vmatprep.subr.bf16.mxu0 0
        %8173 = vmatpush1.bf16.msra.mxu0 0
        %8174 = vmatprep.subr.bf16.mxu0 0
        %8175 = vmatpush1.bf16.msra.mxu0 0
        %8176 = vmatprep.subr.bf16.mxu0 0
        %8177 = vmatpush1.bf16.msra.mxu0 0
        %8178 = vmatprep.subr.bf16.mxu0 0
        %8179 = vmatpush1.bf16.msra.mxu0 0
        %8180 = vmatprep.subr.bf16.mxu0 0
        %8181 = vmatpush1.bf16.msra.mxu0 0
        %8182 = vmatprep.subr.bf16.mxu0 0
        %8183 = vmatpush1.bf16.msra.mxu0 0
        %8184 = vmatprep.subr.bf16.mxu0 0
        %8185 = vmatpush1.bf16.msra.mxu0 0
        %8186 = vmatprep.subr.bf16.mxu0 0
        %8187 = vmatpush1.bf16.msra.mxu0 0
        %8188 = vmatprep.subr.bf16.mxu0 0
        %8189 = vmatpush1.bf16.msra.mxu0 0
        %8190 = vmatprep.subr.bf16.mxu0 0
        %8191 = vmatpush1.bf16.msra.mxu0 0
        %8192 = vmatprep.subr.bf16.mxu0 0
        %8193 = vmatpush1.bf16.msra.mxu0 0
        %8194 = vmatprep.subr.bf16.mxu0 0
        %8195 = vmatpush1.bf16.msra.mxu0 0
        %8196 = vmatprep.mubr.bf16.mxu0 0
        %8197 = vmatmul.mubr.bf16.gmra.mrb[0].mxu0 %v8162
        %v8198 = vpop.f32.mrb[0].mxu0
        %v8199 = vadd.f32 %v8148, %v8198
        %v8200 = vpop.f32.mrb[0].mxu0
        %v8201 = vpop.f32.mrb[0].mxu0
        %v8202 = vadd.f32 %v8148, %v8201
        %v8203 = vpop.f32.mrb[0].mxu0
        %8204 = vdwg.mxu0
        %8205 = vst [vmem:[%s166] sm:$0xff] %v8199
        %8206 = vst [vmem:[%s166 + $0x8] sm:$0xff] %v8202
        %s8207 = sand.u32 %s93, 1
        %s8208 = scalar_lea.sflag [#allocation3], %s8207
        %s8209 = sand.u32 %s93, 1
        %s8210 = smul.addr %s8209, 16
        %s8211 = scalar_lea.vmem [#allocation2], %s8210
        // Predicated region
        $region33: #{forward.1} parent=31 // pred_check
          %p8212 = pneg %p103
        $region34: #{forward.1} parent=31 // pred_check_branch
          %8214 = sbr.rel (%p8212) target = $region36
        $region35: #{forward.1} parent=31 // pred_region
          %s8215 = smul.u32 2, %s17
          %s8217 = ssub.s32 256, 256
          %8218 = vsyncadd %s8208, %s8217
          %s8219 = smul.addr %s8215, 128
          %s8220 = scalar_lea.hbm %s3, %s8219
          %s8221 = sshll.u32 %s8211, 4
          %s8222 = int_to_ptr.vmem [resolvable:$true] %s8221
          %8227 = dma.vmem_to_hbm [thread:$0]  %s8222, 256, %s8220, %s8208, 128, 128, 8
        $region36: #{forward.1} parent=31 // pred_fallthru
          _
      $region32: #{forward.1} parent=5 // pred_fallthru
        _
      %p8228 = scmp.le.s32.totalorder 2, %s12
      // Predicated region
      $region37: #{forward.1} parent=5 // pred_check
        %p8229 = pneg %p8228
      $region38: #{forward.1} parent=5 // pred_check_branch
        %8231 = sbr.rel (%p8229) target = $region40
      $region39: #{forward.1} parent=5 // pred_region
        %s8232 = ssub.s32 %s12, 2
        // Predicated region
        $region41: #{forward.1} parent=39 // pred_check
          %p8233 = pneg %p109
        $region42: #{forward.1} parent=39 // pred_check_branch
          %8235 = sbr.rel (%p8233) target = $region44
        $region43: #{forward.1} parent=39 // pred_region
          %s8236 = sand.u32 %s94, 1
          %s8237 = scalar_lea.sflag [#allocation3], %s8236
          %s8238 = sand.u32 %s94, 1
          %s8239 = smul.addr %s8238, 16
          %s8240 = scalar_lea.vmem [#allocation2], %s8239
          %8241 = dma.done %s8237, 256
        $region44: #{forward.1} parent=39 // pred_fallthru
          _
      $region40: #{forward.1} parent=5 // pred_fallthru
        _
    $region6: #{forward.1} parent=1 // loop_footer
      %s16 = sadd.s32 1, %s12
    $region7: #{forward.1} parent=1 // loop_footer_branch
      %11 = sbr.rel target = $region3
    $region8: #{forward.1} parent=1 // loop_exit
      _
    %8242 = vsyncpa [#allocation3], 1
    %s8243 = scalar_lea.sflag [#allocation3], 1
    %8244 = vsyncpa %s8243, 1

</llo_original>
